<compile_context>
chip_gen: v7x
topology: tpu7x:2x2x1
jax: 0.10.0
libtpu: 0.0.40
codegen_flags: <defaults>
</compile_context>

<pallas_src>
import numpy as np
import jax
import jax.numpy as jnp
from jax.experimental import pallas as pl
from jax.experimental.pallas import tpu as pltpu

EPS = 1e-5

# MXU operand dtype for the conv matmuls (accumulation is always f32 via
# preferred_element_type).  bf16 doubles MXU throughput on v5e/v6e/v7x and
# halves the padded-activation staging scratch + weight DMA bytes.
CONV_DTYPE = jnp.bfloat16

# HBM dtype of the per-layer intermediates (conv1 output y, conv2 output z).
# f32 keeps the demo correctness check tight; flip to bf16 to halve the
# intermediate HBM traffic at production shapes.
STAGE_DTYPE = jnp.float32

VMEM_LIMIT_BYTES = 32 * 1024 * 1024


def _build_layer_calls(N, H, W, Ch, Cr, NB):
    """Build the three per-layer pallas_calls for static shapes.

    The grid tiles the batch axis (NB images per step): halo-free for the 3x3
    conv, double-buffered by the BlockSpec pipeline, 'parallel' so both
    TensorCores of a v7x chip split the tiles.
    """
    assert N % NB == 0
    T = N // NB
    R = NB * H * W
    cparams = pltpu.CompilerParams(
        dimension_semantics=("parallel",),
        vmem_limit_bytes=VMEM_LIMIT_BYTES,
    )

    # ---- kernel 1: ReLU -> 3x3 conv (9 accumulating tap matmuls) + partial BN stats
    def conv3x3_stats_kernel(x_ref, w1_ref, y_ref, st_ref, apad_ref):
        # x_ref : (NB, H, W, Ch)       f32   residual-stream tile
        # w1_ref: (9, Ch, Cr)          bf16  3x3 taps (tap-major)
        # y_ref : (NB, H, W, Cr)             conv output tile (pre-BN)
        # st_ref: (1, 2, Cr)           f32   per-tile [sum(y); sum(y*y)]
        # apad  : (NB, H+2, W+2, Ch)   bf16  zero-padded ReLU(x) staging scratch

        # Zero only the four thin border strips; the interior is fully
        # overwritten below (megacore-safe: no cross-tile scratch state).
        apad_ref[:, 0:1, :, :] = jnp.zeros((NB, 1, W + 2, Ch), CONV_DTYPE)
        apad_ref[:, H + 1:H + 2, :, :] = jnp.zeros((NB, 1, W + 2, Ch), CONV_DTYPE)
        apad_ref[:, :, 0:1, :] = jnp.zeros((NB, H + 2, 1, Ch), CONV_DTYPE)
        apad_ref[:, :, W + 1:W + 2, :] = jnp.zeros((NB, H + 2, 1, Ch), CONV_DTYPE)

        # ReLU + cast to the MXU operand dtype, written into the interior
        # (padding commutes with ReLU since ReLU(0) == 0).
        # TODO(synk): the W offset-by-1 write / kj-shifted reads below are
        # sublane-misaligned; a pltpu.roll-based kj shift would move that cost
        # to the XLU (small-to-moderate win, largest on v5e's single vst slot).
        apad_ref[:, 1:H + 1, 1:W + 1, :] = (
            jnp.maximum(x_ref[...], 0.0).astype(CONV_DTYPE))

        # 3x3 "same" conv as 9 accumulating tap matmuls straight from the
        # padded scratch (no materialized im2col patch matrix).  Conv bias is
        # omitted: it cancels exactly inside training-mode BatchNorm.
        def tap(k):
            ki, kj = divmod(k, 3)
            slab = apad_ref[:, ki:ki + H, kj:kj + W, :].reshape(R, Ch)
            return jnp.dot(slab, w1_ref[k], preferred_element_type=jnp.float32)

        acc = tap(0)
        for k in range(1, 9):
            acc = acc + tap(k)

        y_ref[...] = acc.reshape(NB, H, W, Cr).astype(y_ref.dtype)
        # Per-tile BN partial statistics: single pass, XLU row reductions.
        # TODO(synk): single-pass var (E[x^2]-mean^2) is fine with f32 sums at
        # these row counts; use a shifted/two-pass formulation for huge R.
        st_ref[:, 0:1, :] = jnp.sum(acc, axis=0, keepdims=True).reshape(1, 1, Cr)
        st_ref[:, 1:2, :] = jnp.sum(acc * acc, axis=0, keepdims=True).reshape(1, 1, Cr)

    conv3x3_stats = pl.pallas_call(
        conv3x3_stats_kernel,
        out_shape=(jax.ShapeDtypeStruct((N, H, W, Cr), STAGE_DTYPE),
                   jax.ShapeDtypeStruct((T, 2, Cr), jnp.float32)),
        grid=(T,),
        in_specs=[pl.BlockSpec((NB, H, W, Ch), lambda t: (t, 0, 0, 0)),
                  pl.BlockSpec((9, Ch, Cr), lambda t: (0, 0, 0))],
        out_specs=[pl.BlockSpec((NB, H, W, Cr), lambda t: (t, 0, 0, 0)),
                   pl.BlockSpec((1, 2, Cr), lambda t: (t, 0, 0))],
        scratch_shapes=[pltpu.VMEM((NB, H + 2, W + 2, Ch), CONV_DTYPE)],
        compiler_params=cparams,
    )

    # ---- kernel 2: BN1-apply -> ReLU -> 1x1 conv + partial BN stats
    def bn_relu_conv1x1_stats_kernel(y_ref, sc_ref, sh_ref, w2_ref, z_ref, st_ref):
        y = y_ref[...].reshape(R, Cr)
        h = jnp.maximum(y * sc_ref[...] + sh_ref[...], 0.0).astype(CONV_DTYPE)
        z = jnp.dot(h, w2_ref[...], preferred_element_type=jnp.float32)
        z_ref[...] = z.reshape(NB, H, W, Ch).astype(z_ref.dtype)
        st_ref[:, 0:1, :] = jnp.sum(z, axis=0, keepdims=True).reshape(1, 1, Ch)
        st_ref[:, 1:2, :] = jnp.sum(z * z, axis=0, keepdims=True).reshape(1, 1, Ch)

    bn_relu_conv1x1_stats = pl.pallas_call(
        bn_relu_conv1x1_stats_kernel,
        out_shape=(jax.ShapeDtypeStruct((N, H, W, Ch), STAGE_DTYPE),
                   jax.ShapeDtypeStruct((T, 2, Ch), jnp.float32)),
        grid=(T,),
        in_specs=[pl.BlockSpec((NB, H, W, Cr), lambda t: (t, 0, 0, 0)),
                  pl.BlockSpec((1, Cr), lambda t: (0, 0)),
                  pl.BlockSpec((1, Cr), lambda t: (0, 0)),
                  pl.BlockSpec((Cr, Ch), lambda t: (0, 0))],
        out_specs=[pl.BlockSpec((NB, H, W, Ch), lambda t: (t, 0, 0, 0)),
                   pl.BlockSpec((1, 2, Ch), lambda t: (t, 0, 0))],
        compiler_params=cparams,
    )

    # ---- kernel 3: BN2-apply + residual add
    def bn_residual_kernel(x_ref, z_ref, sc_ref, sh_ref, o_ref):
        x = x_ref[...].reshape(R, Ch)
        z = z_ref[...].reshape(R, Ch).astype(jnp.float32)
        o_ref[...] = (x + z * sc_ref[...] + sh_ref[...]).reshape(NB, H, W, Ch)

    bn_residual = pl.pallas_call(
        bn_residual_kernel,
        out_shape=jax.ShapeDtypeStruct((N, H, W, Ch), jnp.float32),
        grid=(T,),
        in_specs=[pl.BlockSpec((NB, H, W, Ch), lambda t: (t, 0, 0, 0)),
                  pl.BlockSpec((NB, H, W, Ch), lambda t: (t, 0, 0, 0)),
                  pl.BlockSpec((1, Ch), lambda t: (0, 0)),
                  pl.BlockSpec((1, Ch), lambda t: (0, 0))],
        out_specs=pl.BlockSpec((NB, H, W, Ch), lambda t: (t, 0, 0, 0)),
        compiler_params=cparams,
    )

    return conv3x3_stats, bn_relu_conv1x1_stats, bn_residual


def _bn_scale_shift(partial_stats, count, gamma, beta):
    """Fold per-tile [sum, sumsq] partials into per-channel BN scale/shift.

    This is the tiny O(C) 'phase 2' glue between the tiled Pallas passes
    (training-mode BatchNorm, biased variance).
    """
    s = jnp.sum(partial_stats, axis=0)          # (2, C), summed over tiles
    inv = 1.0 / count
    mean = s[0] * inv
    var = s[1] * inv - mean * mean
    scale = (gamma * jax.lax.rsqrt(var + EPS)).astype(jnp.float32)   # (1, C)
    shift = (beta - mean * scale).astype(jnp.float32)                # (1, C)
    return scale, shift


@jax.jit
def residual_block(x_nchw, params):
    """Fused ResidualBlock forward: NCHW in, NCHW out."""
    N, Ch, H, W = x_nchw.shape
    Cr = params[0]["w1"].shape[-1]
    NB = 1     # batch-tile size; batch tiling is halo-free for the 3x3 conv
    # TODO(synk): for small-batch / large-spatial inputs tile H with a 1-row
    # halo instead of (or in addition to) the batch axis.
    # TODO(synk): BatchNorm running_mean/running_var (momentum buffers) are not
    # updated; the training-mode forward output does not depend on them.
    count = float(N * H * W)

    conv3x3_stats, bn_relu_conv1x1_stats, bn_residual = _build_layer_calls(
        N, H, W, Ch, Cr, NB)

    x = jnp.transpose(x_nchw, (0, 2, 3, 1)).astype(jnp.float32)   # NHWC residual stream
    for p in params:        # per-layer weights stream call-by-call (no stacking)
        w1 = p["w1"].astype(CONV_DTYPE)      # (9, Ch, Cr)
        w2 = p["w2"].astype(CONV_DTYPE)      # (Cr, Ch)
        # Phase A: ReLU + 3x3 conv + partial BN1 stats (tiled, pipelined).
        y, st1 = conv3x3_stats(x, w1)
        sc1, sh1 = _bn_scale_shift(st1, count, p["g1"], p["be1"])
        # Phase B: BN1-apply + ReLU + 1x1 conv + partial BN2 stats.
        z, st2 = bn_relu_conv1x1_stats(y, sc1, sh1, w2)
        sc2, sh2 = _bn_scale_shift(st2, count, p["g2"], p["be2"])
        # Phase C: BN2-apply + residual add -> next layer's residual stream.
        x = bn_residual(x, z, sc2, sh2)
    return jnp.transpose(x, (0, 3, 1, 2))


# ---------------- deterministic parameter init (synthetic) ----------------
def init_params(key, num_hiddens, num_residual_hiddens, num_residual_layers):
    params = []
    Ch, Cr = num_hiddens, num_residual_hiddens
    for l in range(num_residual_layers):
        ks = jax.random.split(jax.random.fold_in(key, l), 8)
        w1_hwio = jax.random.normal(ks[0], (3, 3, Ch, Cr), jnp.float32) / np.sqrt(9 * Ch)
        cb1 = 0.1 * jax.random.normal(ks[1], (1, Cr), jnp.float32)
        g1 = 1.0 + 0.1 * jax.random.normal(ks[2], (1, Cr), jnp.float32)
        be1 = 0.1 * jax.random.normal(ks[3], (1, Cr), jnp.float32)
        w2 = jax.random.normal(ks[4], (Cr, Ch), jnp.float32) / np.sqrt(Cr)
        cb2 = 0.1 * jax.random.normal(ks[5], (1, Ch), jnp.float32)
        g2 = 1.0 + 0.1 * jax.random.normal(ks[6], (1, Ch), jnp.float32)
        be2 = 0.1 * jax.random.normal(ks[7], (1, Ch), jnp.float32)
        params.append(dict(
            w1=w1_hwio.reshape(9, Ch, Cr),   # tap-major layout for the kernel
            w1_hwio=w1_hwio,                 # reference only
            cb1=cb1, g1=g1, be1=be1,         # conv biases kept for the reference
            w2=w2, cb2=cb2, g2=g2, be2=be2))
    return params


# ---------------- pure-JAX reference for correctness check ----------------
# Keeps the conv biases and the two-pass variance, so it also validates the
# bias-cancellation argument and the single-pass BN statistics.
def ref_layer(x, p, conv_dtype):
    cd = lambda a: a.astype(conv_dtype)
    a = jnp.maximum(x, 0.0)
    y = jax.lax.conv_general_dilated(
        cd(a), cd(p["w1_hwio"]), (1, 1), "SAME",
        dimension_numbers=("NHWC", "HWIO", "NHWC"),
        preferred_element_type=jnp.float32) + p["cb1"].reshape(1, 1, 1, -1)
    mu = jnp.mean(y, axis=(0, 1, 2), keepdims=True)
    var = jnp.mean((y - mu) ** 2, axis=(0, 1, 2), keepdims=True)
    y = (y - mu) * jax.lax.rsqrt(var + EPS) * p["g1"].reshape(1, 1, 1, -1) \
        + p["be1"].reshape(1, 1, 1, -1)
    h = jnp.maximum(y, 0.0)
    z = jnp.einsum("nhwc,cd->nhwd", cd(h), cd(p["w2"]),
                   preferred_element_type=jnp.float32) + p["cb2"].reshape(1, 1, 1, -1)
    mu2 = jnp.mean(z, axis=(0, 1, 2), keepdims=True)
    var2 = jnp.mean((z - mu2) ** 2, axis=(0, 1, 2), keepdims=True)
    z = (z - mu2) * jax.lax.rsqrt(var2 + EPS) * p["g2"].reshape(1, 1, 1, -1) \
        + p["be2"].reshape(1, 1, 1, -1)
    return x + z


if __name__ == "__main__":
    key = jax.random.PRNGKey(0)
    N, H, W = 4, 16, 16
    num_hiddens, num_residual_hiddens, num_residual_layers = 8, 16, 2

    params = init_params(key, num_hiddens, num_residual_hiddens, num_residual_layers)
    x_nchw = jax.random.normal(jax.random.fold_in(key, 123),
                               (N, num_hiddens, H, W), jnp.float32)

    out = jax.block_until_ready(residual_block(x_nchw, params))
    assert out.shape == x_nchw.shape

    # References: (a) same conv-operand dtype as the kernel -> tight check of
    # the kernel math; (b) full f32 -> loose check (the difference is the
    # expected bf16 conv-operand quantization, not a bug).
    x_nhwc = jnp.transpose(x_nchw, (0, 2, 3, 1))
    ref_match, ref_f32 = x_nhwc, x_nhwc
    for p in params:
        ref_match = ref_layer(ref_match, p, CONV_DTYPE)
        ref_f32 = ref_layer(ref_f32, p, jnp.float32)
    ref_match = jnp.transpose(ref_match, (0, 3, 1, 2))
    ref_f32 = jnp.transpose(ref_f32, (0, 3, 1, 2))

    err_match = float(jnp.max(jnp.abs(out - ref_match)))
    err_f32 = float(jnp.max(jnp.abs(out - ref_f32)))
    assert err_match < 1e-2, ("dtype-matched reference mismatch", err_match)
    assert err_f32 < 1e-1, ("f32 reference mismatch", err_f32)

    print("KERNEL_OK")
</pallas_src>

<mosaic_0001>
module attributes {stable_mosaic.version = 11 : i64} {
  func.func @conv3x3_stats_kernel(%arg0: i32, %arg1: memref<1x16x16x8xf32, #tpu.memory_space<vmem>>, %arg2: memref<9x8x16xbf16, #tpu.memory_space<vmem>>, %arg3: memref<1x16x16x16xf32, #tpu.memory_space<vmem>>, %arg4: memref<1x2x16xf32, #tpu.memory_space<vmem>>, %arg5: memref<1x18x18x8xbf16, #tpu.memory_space<vmem>>) attributes {dimension_semantics = [#tpu.dimension_semantics<parallel>], iteration_bounds = array<i64: 4>, scalar_prefetch = 0 : i64, scratch_operands = 1 : i64, tpu.core_type = #tpu.core_type<tc>, window_params = [{transform_indices = @transform_0, window_bounds = array<i64: 1, 16, 16, 8>}, {pipeline_mode = #tpu.pipeline_mode<synchronous>, transform_indices = @transform_1, window_bounds = array<i64: 9, 8, 16>}, {transform_indices = @transform_2, window_bounds = array<i64: 1, 16, 16, 16>}, {transform_indices = @transform_3, window_bounds = array<i64: 1, 2, 16>}]} {
    %cst = arith.constant 0.000000e+00 : bf16
    %0 = vector.broadcast %cst : bf16 to vector<1x1x18x8xbf16>
    %c0 = arith.constant 0 : index
    %c0_0 = arith.constant 0 : index
    %c0_1 = arith.constant 0 : index
    %c0_2 = arith.constant 0 : index
    %1 = vector.load %arg5[%c0, %c0_0, %c0_1, %c0_2] : memref<1x18x18x8xbf16, #tpu.memory_space<vmem>>, vector<1x1x18x8xbf16>
    tpu.vector_store %arg5[%c0, %c0_0, %c0_1, %c0_2], %0 {strides = array<i32>} : memref<1x18x18x8xbf16, #tpu.memory_space<vmem>>, vector<1x1x18x8xbf16>,
    %cst_3 = arith.constant 0.000000e+00 : bf16
    %2 = vector.broadcast %cst_3 : bf16 to vector<1x1x18x8xbf16>
    %c0_4 = arith.constant 0 : index
    %c17 = arith.constant 17 : index
    %c0_5 = arith.constant 0 : index
    %c0_6 = arith.constant 0 : index
    %3 = vector.load %arg5[%c0_4, %c17, %c0_5, %c0_6] : memref<1x18x18x8xbf16, #tpu.memory_space<vmem>>, vector<1x1x18x8xbf16>
    tpu.vector_store %arg5[%c0_4, %c17, %c0_5, %c0_6], %2 {strides = array<i32>} : memref<1x18x18x8xbf16, #tpu.memory_space<vmem>>, vector<1x1x18x8xbf16>,
    %cst_7 = arith.constant 0.000000e+00 : bf16
    %4 = vector.broadcast %cst_7 : bf16 to vector<1x18x1x8xbf16>
    %c0_8 = arith.constant 0 : index
    %c0_9 = arith.constant 0 : index
    %c0_10 = arith.constant 0 : index
    %c0_11 = arith.constant 0 : index
    %5 = vector.load %arg5[%c0_8, %c0_9, %c0_10, %c0_11] : memref<1x18x18x8xbf16, #tpu.memory_space<vmem>>, vector<1x18x1x8xbf16>
    tpu.vector_store %arg5[%c0_8, %c0_9, %c0_10, %c0_11], %4 {strides = array<i32>} : memref<1x18x18x8xbf16, #tpu.memory_space<vmem>>, vector<1x18x1x8xbf16>,
    %cst_12 = arith.constant 0.000000e+00 : bf16
    %6 = vector.broadcast %cst_12 : bf16 to vector<1x18x1x8xbf16>
    %c0_13 = arith.constant 0 : index
    %c0_14 = arith.constant 0 : index
    %c17_15 = arith.constant 17 : index
    %c0_16 = arith.constant 0 : index
    %7 = vector.load %arg5[%c0_13, %c0_14, %c17_15, %c0_16] : memref<1x18x18x8xbf16, #tpu.memory_space<vmem>>, vector<1x18x1x8xbf16>
    tpu.vector_store %arg5[%c0_13, %c0_14, %c17_15, %c0_16], %6 {strides = array<i32>} : memref<1x18x18x8xbf16, #tpu.memory_space<vmem>>, vector<1x18x1x8xbf16>,
    %c0_17 = arith.constant 0 : index
    %c0_18 = arith.constant 0 : index
    %c0_19 = arith.constant 0 : index
    %c0_20 = arith.constant 0 : index
    %8 = vector.load %arg1[%c0_17, %c0_18, %c0_19, %c0_20] : memref<1x16x16x8xf32, #tpu.memory_space<vmem>>, vector<1x16x16x8xf32>
    %cst_21 = arith.constant 0.000000e+00 : f32
    %9 = vector.broadcast %cst_21 : f32 to vector<1x16x16x8xf32>
    %10 = arith.maximumf %8, %9 : vector<1x16x16x8xf32>
    %11 = arith.truncf %10 : vector<1x16x16x8xf32> to vector<1x16x16x8xbf16>
    %c0_22 = arith.constant 0 : index
    %c1 = arith.constant 1 : index
    %c1_23 = arith.constant 1 : index
    %c0_24 = arith.constant 0 : index
    %12 = vector.load %arg5[%c0_22, %c1, %c1_23, %c0_24] : memref<1x18x18x8xbf16, #tpu.memory_space<vmem>>, vector<1x16x16x8xbf16>
    tpu.vector_store %arg5[%c0_22, %c1, %c1_23, %c0_24], %11 {strides = array<i32>} : memref<1x18x18x8xbf16, #tpu.memory_space<vmem>>, vector<1x16x16x8xbf16>,
    %c0_25 = arith.constant 0 : index
    %c0_26 = arith.constant 0 : index
    %c0_27 = arith.constant 0 : index
    %c0_28 = arith.constant 0 : index
    %13 = vector.load %arg5[%c0_25, %c0_26, %c0_27, %c0_28] : memref<1x18x18x8xbf16, #tpu.memory_space<vmem>>, vector<1x16x16x8xbf16>
    %14 = vector.shape_cast %13 : vector<1x16x16x8xbf16> to vector<256x8xbf16>
    %c0_29 = arith.constant 0 : index
    %c0_30 = arith.constant 0 : index
    %c0_31 = arith.constant 0 : index
    %15 = vector.load %arg2[%c0_29, %c0_30, %c0_31] : memref<9x8x16xbf16, #tpu.memory_space<vmem>>, vector<1x8x16xbf16>
    %16 = vector.shape_cast %15 : vector<1x8x16xbf16> to vector<8x16xbf16>
    %cst_32 = arith.constant dense<0.000000e+00> : vector<256x16xf32>
    %17 = tpu.matmul %14, %16, %cst_32 {dimension_numbers = #tpu.dot_dimension_numbers<[1], [0], [0], [1], [0, 0, 1, 1], [], []>} : vector<256x8xbf16>, vector<8x16xbf16>, vector<256x16xf32> -> vector<256x16xf32>
    %c0_33 = arith.constant 0 : index
    %c0_34 = arith.constant 0 : index
    %c1_35 = arith.constant 1 : index
    %c0_36 = arith.constant 0 : index
    %18 = vector.load %arg5[%c0_33, %c0_34, %c1_35, %c0_36] : memref<1x18x18x8xbf16, #tpu.memory_space<vmem>>, vector<1x16x16x8xbf16>
    %19 = vector.shape_cast %18 : vector<1x16x16x8xbf16> to vector<256x8xbf16>
    %c1_37 = arith.constant 1 : index
    %c0_38 = arith.constant 0 : index
    %c0_39 = arith.constant 0 : index
    %20 = vector.load %arg2[%c1_37, %c0_38, %c0_39] : memref<9x8x16xbf16, #tpu.memory_space<vmem>>, vector<1x8x16xbf16>
    %21 = vector.shape_cast %20 : vector<1x8x16xbf16> to vector<8x16xbf16>
    %cst_40 = arith.constant dense<0.000000e+00> : vector<256x16xf32>
    %22 = tpu.matmul %19, %21, %cst_40 {dimension_numbers = #tpu.dot_dimension_numbers<[1], [0], [0], [1], [0, 0, 1, 1], [], []>} : vector<256x8xbf16>, vector<8x16xbf16>, vector<256x16xf32> -> vector<256x16xf32>
    %23 = arith.addf %17, %22 : vector<256x16xf32>
    %c0_41 = arith.constant 0 : index
    %c0_42 = arith.constant 0 : index
    %c2 = arith.constant 2 : index
    %c0_43 = arith.constant 0 : index
    %24 = vector.load %arg5[%c0_41, %c0_42, %c2, %c0_43] : memref<1x18x18x8xbf16, #tpu.memory_space<vmem>>, vector<1x16x16x8xbf16>
    %25 = vector.shape_cast %24 : vector<1x16x16x8xbf16> to vector<256x8xbf16>
    %c2_44 = arith.constant 2 : index
    %c0_45 = arith.constant 0 : index
    %c0_46 = arith.constant 0 : index
    %26 = vector.load %arg2[%c2_44, %c0_45, %c0_46] : memref<9x8x16xbf16, #tpu.memory_space<vmem>>, vector<1x8x16xbf16>
    %27 = vector.shape_cast %26 : vector<1x8x16xbf16> to vector<8x16xbf16>
    %cst_47 = arith.constant dense<0.000000e+00> : vector<256x16xf32>
    %28 = tpu.matmul %25, %27, %cst_47 {dimension_numbers = #tpu.dot_dimension_numbers<[1], [0], [0], [1], [0, 0, 1, 1], [], []>} : vector<256x8xbf16>, vector<8x16xbf16>, vector<256x16xf32> -> vector<256x16xf32>
    %29 = arith.addf %23, %28 : vector<256x16xf32>
    %c0_48 = arith.constant 0 : index
    %c1_49 = arith.constant 1 : index
    %c0_50 = arith.constant 0 : index
    %c0_51 = arith.constant 0 : index
    %30 = vector.load %arg5[%c0_48, %c1_49, %c0_50, %c0_51] : memref<1x18x18x8xbf16, #tpu.memory_space<vmem>>, vector<1x16x16x8xbf16>
    %31 = vector.shape_cast %30 : vector<1x16x16x8xbf16> to vector<256x8xbf16>
    %c3 = arith.constant 3 : index
    %c0_52 = arith.constant 0 : index
    %c0_53 = arith.constant 0 : index
    %32 = vector.load %arg2[%c3, %c0_52, %c0_53] : memref<9x8x16xbf16, #tpu.memory_space<vmem>>, vector<1x8x16xbf16>
    %33 = vector.shape_cast %32 : vector<1x8x16xbf16> to vector<8x16xbf16>
    %cst_54 = arith.constant dense<0.000000e+00> : vector<256x16xf32>
    %34 = tpu.matmul %31, %33, %cst_54 {dimension_numbers = #tpu.dot_dimension_numbers<[1], [0], [0], [1], [0, 0, 1, 1], [], []>} : vector<256x8xbf16>, vector<8x16xbf16>, vector<256x16xf32> -> vector<256x16xf32>
    %35 = arith.addf %29, %34 : vector<256x16xf32>
    %c0_55 = arith.constant 0 : index
    %c1_56 = arith.constant 1 : index
    %c1_57 = arith.constant 1 : index
    %c0_58 = arith.constant 0 : index
    %36 = vector.load %arg5[%c0_55, %c1_56, %c1_57, %c0_58] : memref<1x18x18x8xbf16, #tpu.memory_space<vmem>>, vector<1x16x16x8xbf16>
    %37 = vector.shape_cast %36 : vector<1x16x16x8xbf16> to vector<256x8xbf16>
    %c4 = arith.constant 4 : index
    %c0_59 = arith.constant 0 : index
    %c0_60 = arith.constant 0 : index
    %38 = vector.load %arg2[%c4, %c0_59, %c0_60] : memref<9x8x16xbf16, #tpu.memory_space<vmem>>, vector<1x8x16xbf16>
    %39 = vector.shape_cast %38 : vector<1x8x16xbf16> to vector<8x16xbf16>
    %cst_61 = arith.constant dense<0.000000e+00> : vector<256x16xf32>
    %40 = tpu.matmul %37, %39, %cst_61 {dimension_numbers = #tpu.dot_dimension_numbers<[1], [0], [0], [1], [0, 0, 1, 1], [], []>} : vector<256x8xbf16>, vector<8x16xbf16>, vector<256x16xf32> -> vector<256x16xf32>
    %41 = arith.addf %35, %40 : vector<256x16xf32>
    %c0_62 = arith.constant 0 : index
    %c1_63 = arith.constant 1 : index
    %c2_64 = arith.constant 2 : index
    %c0_65 = arith.constant 0 : index
    %42 = vector.load %arg5[%c0_62, %c1_63, %c2_64, %c0_65] : memref<1x18x18x8xbf16, #tpu.memory_space<vmem>>, vector<1x16x16x8xbf16>
    %43 = vector.shape_cast %42 : vector<1x16x16x8xbf16> to vector<256x8xbf16>
    %c5 = arith.constant 5 : index
    %c0_66 = arith.constant 0 : index
    %c0_67 = arith.constant 0 : index
    %44 = vector.load %arg2[%c5, %c0_66, %c0_67] : memref<9x8x16xbf16, #tpu.memory_space<vmem>>, vector<1x8x16xbf16>
    %45 = vector.shape_cast %44 : vector<1x8x16xbf16> to vector<8x16xbf16>
    %cst_68 = arith.constant dense<0.000000e+00> : vector<256x16xf32>
    %46 = tpu.matmul %43, %45, %cst_68 {dimension_numbers = #tpu.dot_dimension_numbers<[1], [0], [0], [1], [0, 0, 1, 1], [], []>} : vector<256x8xbf16>, vector<8x16xbf16>, vector<256x16xf32> -> vector<256x16xf32>
    %47 = arith.addf %41, %46 : vector<256x16xf32>
    %c0_69 = arith.constant 0 : index
    %c2_70 = arith.constant 2 : index
    %c0_71 = arith.constant 0 : index
    %c0_72 = arith.constant 0 : index
    %48 = vector.load %arg5[%c0_69, %c2_70, %c0_71, %c0_72] : memref<1x18x18x8xbf16, #tpu.memory_space<vmem>>, vector<1x16x16x8xbf16>
    %49 = vector.shape_cast %48 : vector<1x16x16x8xbf16> to vector<256x8xbf16>
    %c6 = arith.constant 6 : index
    %c0_73 = arith.constant 0 : index
    %c0_74 = arith.constant 0 : index
    %50 = vector.load %arg2[%c6, %c0_73, %c0_74] : memref<9x8x16xbf16, #tpu.memory_space<vmem>>, vector<1x8x16xbf16>
    %51 = vector.shape_cast %50 : vector<1x8x16xbf16> to vector<8x16xbf16>
    %cst_75 = arith.constant dense<0.000000e+00> : vector<256x16xf32>
    %52 = tpu.matmul %49, %51, %cst_75 {dimension_numbers = #tpu.dot_dimension_numbers<[1], [0], [0], [1], [0, 0, 1, 1], [], []>} : vector<256x8xbf16>, vector<8x16xbf16>, vector<256x16xf32> -> vector<256x16xf32>
    %53 = arith.addf %47, %52 : vector<256x16xf32>
    %c0_76 = arith.constant 0 : index
    %c2_77 = arith.constant 2 : index
    %c1_78 = arith.constant 1 : index
    %c0_79 = arith.constant 0 : index
    %54 = vector.load %arg5[%c0_76, %c2_77, %c1_78, %c0_79] : memref<1x18x18x8xbf16, #tpu.memory_space<vmem>>, vector<1x16x16x8xbf16>
    %55 = vector.shape_cast %54 : vector<1x16x16x8xbf16> to vector<256x8xbf16>
    %c7 = arith.constant 7 : index
    %c0_80 = arith.constant 0 : index
    %c0_81 = arith.constant 0 : index
    %56 = vector.load %arg2[%c7, %c0_80, %c0_81] : memref<9x8x16xbf16, #tpu.memory_space<vmem>>, vector<1x8x16xbf16>
    %57 = vector.shape_cast %56 : vector<1x8x16xbf16> to vector<8x16xbf16>
    %cst_82 = arith.constant dense<0.000000e+00> : vector<256x16xf32>
    %58 = tpu.matmul %55, %57, %cst_82 {dimension_numbers = #tpu.dot_dimension_numbers<[1], [0], [0], [1], [0, 0, 1, 1], [], []>} : vector<256x8xbf16>, vector<8x16xbf16>, vector<256x16xf32> -> vector<256x16xf32>
    %59 = arith.addf %53, %58 : vector<256x16xf32>
    %c0_83 = arith.constant 0 : index
    %c2_84 = arith.constant 2 : index
    %c2_85 = arith.constant 2 : index
    %c0_86 = arith.constant 0 : index
    %60 = vector.load %arg5[%c0_83, %c2_84, %c2_85, %c0_86] : memref<1x18x18x8xbf16, #tpu.memory_space<vmem>>, vector<1x16x16x8xbf16>
    %61 = vector.shape_cast %60 : vector<1x16x16x8xbf16> to vector<256x8xbf16>
    %c8 = arith.constant 8 : index
    %c0_87 = arith.constant 0 : index
    %c0_88 = arith.constant 0 : index
    %62 = vector.load %arg2[%c8, %c0_87, %c0_88] : memref<9x8x16xbf16, #tpu.memory_space<vmem>>, vector<1x8x16xbf16>
    %63 = vector.shape_cast %62 : vector<1x8x16xbf16> to vector<8x16xbf16>
    %cst_89 = arith.constant dense<0.000000e+00> : vector<256x16xf32>
    %64 = tpu.matmul %61, %63, %cst_89 {dimension_numbers = #tpu.dot_dimension_numbers<[1], [0], [0], [1], [0, 0, 1, 1], [], []>} : vector<256x8xbf16>, vector<8x16xbf16>, vector<256x16xf32> -> vector<256x16xf32>
    %65 = arith.addf %59, %64 : vector<256x16xf32>
    %66 = vector.shape_cast %65 : vector<256x16xf32> to vector<1x16x16x16xf32>
    %c0_90 = arith.constant 0 : index
    %c0_91 = arith.constant 0 : index
    %c0_92 = arith.constant 0 : index
    %c0_93 = arith.constant 0 : index
    %67 = vector.load %arg3[%c0_90, %c0_91, %c0_92, %c0_93] : memref<1x16x16x16xf32, #tpu.memory_space<vmem>>, vector<1x16x16x16xf32>
    tpu.vector_store %arg3[%c0_90, %c0_91, %c0_92, %c0_93], %66 {strides = array<i32>} : memref<1x16x16x16xf32, #tpu.memory_space<vmem>>, vector<1x16x16x16xf32>,
    %cst_94 = arith.constant dense<0.000000e+00> : vector<16xf32>
    %68 = vector.multi_reduction <add>, %65, %cst_94 [0] : vector<256x16xf32> to vector<16xf32>
    %69 = vector.shape_cast %68 : vector<16xf32> to vector<1x16xf32>
    %70 = vector.shape_cast %69 : vector<1x16xf32> to vector<1x1x16xf32>
    %c0_95 = arith.constant 0 : index
    %c0_96 = arith.constant 0 : index
    %c0_97 = arith.constant 0 : index
    %71 = vector.load %arg4[%c0_95, %c0_96, %c0_97] : memref<1x2x16xf32, #tpu.memory_space<vmem>>, vector<1x1x16xf32>
    tpu.vector_store %arg4[%c0_95, %c0_96, %c0_97], %70 {strides = array<i32>} : memref<1x2x16xf32, #tpu.memory_space<vmem>>, vector<1x1x16xf32>,
    %72 = arith.mulf %65, %65 : vector<256x16xf32>
    %cst_98 = arith.constant dense<0.000000e+00> : vector<16xf32>
    %73 = vector.multi_reduction <add>, %72, %cst_98 [0] : vector<256x16xf32> to vector<16xf32>
    %74 = vector.shape_cast %73 : vector<16xf32> to vector<1x16xf32>
    %75 = vector.shape_cast %74 : vector<1x16xf32> to vector<1x1x16xf32>
    %c0_99 = arith.constant 0 : index
    %c1_100 = arith.constant 1 : index
    %c0_101 = arith.constant 0 : index
    %76 = vector.load %arg4[%c0_99, %c1_100, %c0_101] : memref<1x2x16xf32, #tpu.memory_space<vmem>>, vector<1x1x16xf32>
    tpu.vector_store %arg4[%c0_99, %c1_100, %c0_101], %75 {strides = array<i32>} : memref<1x2x16xf32, #tpu.memory_space<vmem>>, vector<1x1x16xf32>,
    return
  }
  func.func @transform_0(%arg0: i32) -> (i32, i32, i32, i32) {
    %c0_i32 = arith.constant 0 : i32
    %c0_i32_0 = arith.constant 0 : i32
    %c0_i32_1 = arith.constant 0 : i32
    %c0_i32_2 = arith.constant 0 : i32
    return %arg0, %c0_i32, %c0_i32_0, %c0_i32_1 : i32, i32, i32, i32
  }
  func.func @transform_1(%arg0: i32) -> (i32, i32, i32) {
    %c0_i32 = arith.constant 0 : i32
    %c0_i32_0 = arith.constant 0 : i32
    %c0_i32_1 = arith.constant 0 : i32
    %c0_i32_2 = arith.constant 0 : i32
    return %c0_i32, %c0_i32_0, %c0_i32_1 : i32, i32, i32
  }
  func.func @transform_2(%arg0: i32) -> (i32, i32, i32, i32) {
    %c0_i32 = arith.constant 0 : i32
    %c0_i32_0 = arith.constant 0 : i32
    %c0_i32_1 = arith.constant 0 : i32
    %c0_i32_2 = arith.constant 0 : i32
    return %arg0, %c0_i32, %c0_i32_0, %c0_i32_1 : i32, i32, i32, i32
  }
  func.func @transform_3(%arg0: i32) -> (i32, i32, i32) {
    %c0_i32 = arith.constant 0 : i32
    %c0_i32_0 = arith.constant 0 : i32
    %c0_i32_1 = arith.constant 0 : i32
    return %arg0, %c0_i32, %c0_i32_0 : i32, i32, i32
  }
}

module attributes {stable_mosaic.version = 11 : i64} {
  func.func @bn_relu_conv1x1_stats_kernel(%arg0: i32, %arg1: memref<1x16x16x16xf32, #tpu.memory_space<vmem>>, %arg2: memref<1x16xf32, #tpu.memory_space<vmem>>, %arg3: memref<1x16xf32, #tpu.memory_space<vmem>>, %arg4: memref<16x8xbf16, #tpu.memory_space<vmem>>, %arg5: memref<1x16x16x8xf32, #tpu.memory_space<vmem>>, %arg6: memref<1x2x8xf32, #tpu.memory_space<vmem>>) attributes {dimension_semantics = [#tpu.dimension_semantics<parallel>], iteration_bounds = array<i64: 4>, scalar_prefetch = 0 : i64, scratch_operands = 0 : i64, tpu.core_type = #tpu.core_type<tc>, window_params = [{transform_indices = @transform_0, window_bounds = array<i64: 1, 16, 16, 16>}, {pipeline_mode = #tpu.pipeline_mode<synchronous>, transform_indices = @transform_1, window_bounds = array<i64: 1, 16>}, {pipeline_mode = #tpu.pipeline_mode<synchronous>, transform_indices = @transform_2, window_bounds = array<i64: 1, 16>}, {pipeline_mode = #tpu.pipeline_mode<synchronous>, transform_indices = @transform_3, window_bounds = array<i64: 16, 8>}, {transform_indices = @transform_4, window_bounds = array<i64: 1, 16, 16, 8>}, {transform_indices = @transform_5, window_bounds = array<i64: 1, 2, 8>}]} {
    %c0 = arith.constant 0 : index
    %c0_0 = arith.constant 0 : index
    %c0_1 = arith.constant 0 : index
    %c0_2 = arith.constant 0 : index
    %0 = vector.load %arg1[%c0, %c0_0, %c0_1, %c0_2] : memref<1x16x16x16xf32, #tpu.memory_space<vmem>>, vector<1x16x16x16xf32>
    %1 = vector.shape_cast %0 : vector<1x16x16x16xf32> to vector<256x16xf32>
    %c0_3 = arith.constant 0 : index
    %c0_4 = arith.constant 0 : index
    %2 = vector.load %arg2[%c0_3, %c0_4] : memref<1x16xf32, #tpu.memory_space<vmem>>, vector<1x16xf32>
    %3 = vector.broadcast %2 : vector<1x16xf32> to vector<256x16xf32>
    %4 = arith.mulf %1, %3 : vector<256x16xf32>
    %c0_5 = arith.constant 0 : index
    %c0_6 = arith.constant 0 : index
    %5 = vector.load %arg3[%c0_5, %c0_6] : memref<1x16xf32, #tpu.memory_space<vmem>>, vector<1x16xf32>
    %6 = vector.broadcast %5 : vector<1x16xf32> to vector<256x16xf32>
    %7 = arith.addf %4, %6 : vector<256x16xf32>
    %cst = arith.constant 0.000000e+00 : f32
    %8 = vector.broadcast %cst : f32 to vector<256x16xf32>
    %9 = arith.maximumf %7, %8 : vector<256x16xf32>
    %10 = arith.truncf %9 : vector<256x16xf32> to vector<256x16xbf16>
    %c0_7 = arith.constant 0 : index
    %c0_8 = arith.constant 0 : index
    %11 = vector.load %arg4[%c0_7, %c0_8] : memref<16x8xbf16, #tpu.memory_space<vmem>>, vector<16x8xbf16>
    %cst_9 = arith.constant dense<0.000000e+00> : vector<256x8xf32>
    %12 = tpu.matmul %10, %11, %cst_9 {dimension_numbers = #tpu.dot_dimension_numbers<[1], [0], [0], [1], [0, 0, 1, 1], [], []>} : vector<256x16xbf16>, vector<16x8xbf16>, vector<256x8xf32> -> vector<256x8xf32>
    %13 = vector.shape_cast %12 : vector<256x8xf32> to vector<1x16x16x8xf32>
    %c0_10 = arith.constant 0 : index
    %c0_11 = arith.constant 0 : index
    %c0_12 = arith.constant 0 : index
    %c0_13 = arith.constant 0 : index
    %14 = vector.load %arg5[%c0_10, %c0_11, %c0_12, %c0_13] : memref<1x16x16x8xf32, #tpu.memory_space<vmem>>, vector<1x16x16x8xf32>
    tpu.vector_store %arg5[%c0_10, %c0_11, %c0_12, %c0_13], %13 {strides = array<i32>} : memref<1x16x16x8xf32, #tpu.memory_space<vmem>>, vector<1x16x16x8xf32>,
    %cst_14 = arith.constant dense<0.000000e+00> : vector<8xf32>
    %15 = vector.multi_reduction <add>, %12, %cst_14 [0] : vector<256x8xf32> to vector<8xf32>
    %16 = vector.shape_cast %15 : vector<8xf32> to vector<1x8xf32>
    %17 = vector.shape_cast %16 : vector<1x8xf32> to vector<1x1x8xf32>
    %c0_15 = arith.constant 0 : index
    %c0_16 = arith.constant 0 : index
    %c0_17 = arith.constant 0 : index
    %18 = vector.load %arg6[%c0_15, %c0_16, %c0_17] : memref<1x2x8xf32, #tpu.memory_space<vmem>>, vector<1x1x8xf32>
    tpu.vector_store %arg6[%c0_15, %c0_16, %c0_17], %17 {strides = array<i32>} : memref<1x2x8xf32, #tpu.memory_space<vmem>>, vector<1x1x8xf32>,
    %19 = arith.mulf %12, %12 : vector<256x8xf32>
    %cst_18 = arith.constant dense<0.000000e+00> : vector<8xf32>
    %20 = vector.multi_reduction <add>, %19, %cst_18 [0] : vector<256x8xf32> to vector<8xf32>
    %21 = vector.shape_cast %20 : vector<8xf32> to vector<1x8xf32>
    %22 = vector.shape_cast %21 : vector<1x8xf32> to vector<1x1x8xf32>
    %c0_19 = arith.constant 0 : index
    %c1 = arith.constant 1 : index
    %c0_20 = arith.constant 0 : index
    %23 = vector.load %arg6[%c0_19, %c1, %c0_20] : memref<1x2x8xf32, #tpu.memory_space<vmem>>, vector<1x1x8xf32>
    tpu.vector_store %arg6[%c0_19, %c1, %c0_20], %22 {strides = array<i32>} : memref<1x2x8xf32, #tpu.memory_space<vmem>>, vector<1x1x8xf32>,
    return
  }
  func.func @transform_0(%arg0: i32) -> (i32, i32, i32, i32) {
    %c0_i32 = arith.constant 0 : i32
    %c0_i32_0 = arith.constant 0 : i32
    %c0_i32_1 = arith.constant 0 : i32
    %c0_i32_2 = arith.constant 0 : i32
    return %arg0, %c0_i32, %c0_i32_0, %c0_i32_1 : i32, i32, i32, i32
  }
  func.func @transform_1(%arg0: i32) -> (i32, i32) {
    %c0_i32 = arith.constant 0 : i32
    %c0_i32_0 = arith.constant 0 : i32
    %c0_i32_1 = arith.constant 0 : i32
    return %c0_i32, %c0_i32_0 : i32, i32
  }
  func.func @transform_2(%arg0: i32) -> (i32, i32) {
    %c0_i32 = arith.constant 0 : i32
    %c0_i32_0 = arith.constant 0 : i32
    %c0_i32_1 = arith.constant 0 : i32
    return %c0_i32, %c0_i32_0 : i32, i32
  }
  func.func @transform_3(%arg0: i32) -> (i32, i32) {
    %c0_i32 = arith.constant 0 : i32
    %c0_i32_0 = arith.constant 0 : i32
    %c0_i32_1 = arith.constant 0 : i32
    return %c0_i32, %c0_i32_0 : i32, i32
  }
  func.func @transform_4(%arg0: i32) -> (i32, i32, i32, i32) {
    %c0_i32 = arith.constant 0 : i32
    %c0_i32_0 = arith.constant 0 : i32
    %c0_i32_1 = arith.constant 0 : i32
    %c0_i32_2 = arith.constant 0 : i32
    return %arg0, %c0_i32, %c0_i32_0, %c0_i32_1 : i32, i32, i32, i32
  }
  func.func @transform_5(%arg0: i32) -> (i32, i32, i32) {
    %c0_i32 = arith.constant 0 : i32
    %c0_i32_0 = arith.constant 0 : i32
    %c0_i32_1 = arith.constant 0 : i32
    return %arg0, %c0_i32, %c0_i32_0 : i32, i32, i32
  }
}

module attributes {stable_mosaic.version = 11 : i64} {
  func.func @bn_residual_kernel(%arg0: i32, %arg1: memref<1x16x16x8xf32, #tpu.memory_space<vmem>>, %arg2: memref<1x16x16x8xf32, #tpu.memory_space<vmem>>, %arg3: memref<1x8xf32, #tpu.memory_space<vmem>>, %arg4: memref<1x8xf32, #tpu.memory_space<vmem>>, %arg5: memref<1x16x16x8xf32, #tpu.memory_space<vmem>>) attributes {dimension_semantics = [#tpu.dimension_semantics<parallel>], iteration_bounds = array<i64: 4>, scalar_prefetch = 0 : i64, scratch_operands = 0 : i64, tpu.core_type = #tpu.core_type<tc>, window_params = [{transform_indices = @transform_0, window_bounds = array<i64: 1, 16, 16, 8>}, {transform_indices = @transform_1, window_bounds = array<i64: 1, 16, 16, 8>}, {pipeline_mode = #tpu.pipeline_mode<synchronous>, transform_indices = @transform_2, window_bounds = array<i64: 1, 8>}, {pipeline_mode = #tpu.pipeline_mode<synchronous>, transform_indices = @transform_3, window_bounds = array<i64: 1, 8>}, {transform_indices = @transform_4, window_bounds = array<i64: 1, 16, 16, 8>}]} {
    %c0 = arith.constant 0 : index
    %c0_0 = arith.constant 0 : index
    %c0_1 = arith.constant 0 : index
    %c0_2 = arith.constant 0 : index
    %0 = vector.load %arg1[%c0, %c0_0, %c0_1, %c0_2] : memref<1x16x16x8xf32, #tpu.memory_space<vmem>>, vector<1x16x16x8xf32>
    %1 = vector.shape_cast %0 : vector<1x16x16x8xf32> to vector<256x8xf32>
    %c0_3 = arith.constant 0 : index
    %c0_4 = arith.constant 0 : index
    %c0_5 = arith.constant 0 : index
    %c0_6 = arith.constant 0 : index
    %2 = vector.load %arg2[%c0_3, %c0_4, %c0_5, %c0_6] : memref<1x16x16x8xf32, #tpu.memory_space<vmem>>, vector<1x16x16x8xf32>
    %3 = vector.shape_cast %2 : vector<1x16x16x8xf32> to vector<256x8xf32>
    %c0_7 = arith.constant 0 : index
    %c0_8 = arith.constant 0 : index
    %4 = vector.load %arg3[%c0_7, %c0_8] : memref<1x8xf32, #tpu.memory_space<vmem>>, vector<1x8xf32>
    %5 = vector.broadcast %4 : vector<1x8xf32> to vector<256x8xf32>
    %6 = arith.mulf %3, %5 : vector<256x8xf32>
    %7 = arith.addf %1, %6 : vector<256x8xf32>
    %c0_9 = arith.constant 0 : index
    %c0_10 = arith.constant 0 : index
    %8 = vector.load %arg4[%c0_9, %c0_10] : memref<1x8xf32, #tpu.memory_space<vmem>>, vector<1x8xf32>
    %9 = vector.broadcast %8 : vector<1x8xf32> to vector<256x8xf32>
    %10 = arith.addf %7, %9 : vector<256x8xf32>
    %11 = vector.shape_cast %10 : vector<256x8xf32> to vector<1x16x16x8xf32>
    %c0_11 = arith.constant 0 : index
    %c0_12 = arith.constant 0 : index
    %c0_13 = arith.constant 0 : index
    %c0_14 = arith.constant 0 : index
    %12 = vector.load %arg5[%c0_11, %c0_12, %c0_13, %c0_14] : memref<1x16x16x8xf32, #tpu.memory_space<vmem>>, vector<1x16x16x8xf32>
    tpu.vector_store %arg5[%c0_11, %c0_12, %c0_13, %c0_14], %11 {strides = array<i32>} : memref<1x16x16x8xf32, #tpu.memory_space<vmem>>, vector<1x16x16x8xf32>,
    return
  }
  func.func @transform_0(%arg0: i32) -> (i32, i32, i32, i32) {
    %c0_i32 = arith.constant 0 : i32
    %c0_i32_0 = arith.constant 0 : i32
    %c0_i32_1 = arith.constant 0 : i32
    %c0_i32_2 = arith.constant 0 : i32
    return %arg0, %c0_i32, %c0_i32_0, %c0_i32_1 : i32, i32, i32, i32
  }
  func.func @transform_1(%arg0: i32) -> (i32, i32, i32, i32) {
    %c0_i32 = arith.constant 0 : i32
    %c0_i32_0 = arith.constant 0 : i32
    %c0_i32_1 = arith.constant 0 : i32
    %c0_i32_2 = arith.constant 0 : i32
    return %arg0, %c0_i32, %c0_i32_0, %c0_i32_1 : i32, i32, i32, i32
  }
  func.func @transform_2(%arg0: i32) -> (i32, i32) {
    %c0_i32 = arith.constant 0 : i32
    %c0_i32_0 = arith.constant 0 : i32
    %c0_i32_1 = arith.constant 0 : i32
    return %c0_i32, %c0_i32_0 : i32, i32
  }
  func.func @transform_3(%arg0: i32) -> (i32, i32) {
    %c0_i32 = arith.constant 0 : i32
    %c0_i32_0 = arith.constant 0 : i32
    %c0_i32_1 = arith.constant 0 : i32
    return %c0_i32, %c0_i32_0 : i32, i32
  }
  func.func @transform_4(%arg0: i32) -> (i32, i32, i32, i32) {
    %c0_i32 = arith.constant 0 : i32
    %c0_i32_0 = arith.constant 0 : i32
    %c0_i32_1 = arith.constant 0 : i32
    %c0_i32_2 = arith.constant 0 : i32
    return %arg0, %c0_i32, %c0_i32_0, %c0_i32_1 : i32, i32, i32, i32
  }
}

</mosaic_0001>

<llo_original>
// kernel: residual_block.8
$region0: #{residual_block.8}
  #allocation0 [shape = 'u32[]', space=smem, size = 0x4, offset = 0x4, fixed_abs, tag = 'smem constant byte address 0x4 - core index']
  #allocation1 [shape = 'u32[144,128]{1,0:T(1,128)}', space=vmem, size = 0x12000, scoped, tag = 'internal scratch']
  %s0 = inlined_call_operand.vmem [shape: f32[4,16,16,8], index: 0, kind: input, shape index: {}]
  %s1 = inlined_call_operand.vmem [shape: f32[4,16,16,8], index: 1, kind: input, shape index: {}]
  %s2 = inlined_call_operand.vmem [shape: f32[1,8], index: 2, kind: input, shape index: {}]
  %s3 = inlined_call_operand.vmem [shape: f32[1,8], index: 3, kind: input, shape index: {}]
  %s4 = inlined_call_operand.vmem [shape: f32[4,16,16,8], index: 4, kind: output, shape index: {}]
  %s5 = sld [smem:[#allocation0]]
  $region49: #{residual_block.8} parent=0
    _
  %s7 = ssub.s32 1, %s5
  %s8 = scalar_select 0, %s7, %s5
  loop: start=0, step=1, limit=6
  $region2: #{residual_block.8} parent=0 // loop_pre_header
    _
  $region3: #{residual_block.8} parent=0 // loop_header
    %s10 = sphi 0, %s14
    %p11 = scmp.ge.s32.totalorder %s10, 6
    %s20 = sphi 0, %s22
    %s23 = sphi 0, %s20
    %s24 = sphi 0, %s23
    %s40 = sphi 0, %s24
    %s46 = sphi 0, %s48
    %s49 = sphi 0, %s46
    %s50 = sphi 0, %s49
    %s66 = sphi 0, %s50
    %s70 = sphi 0, %s70
    %s72 = sphi 0, %s70
    %s73 = sphi 0, %s72
    %s87 = sphi 0, %s73
    %s91 = sphi 0, %s91
    %s93 = sphi 0, %s91
    %s94 = sphi 0, %s93
    %s108 = sphi 0, %s94
    %s114 = sphi 0, %s116
    %s117 = sphi 0, %s114
    %s118 = sphi 0, %s117
    %s134 = sphi 0, %s118
  $region4: #{residual_block.8} parent=0 // loop_header_branch
    %13 = sbr.rel (%p11) target = $region8
  $region5: #{residual_block.8} parent=0 // loop_body
    %s15 = ssub.s32 %s10, 1
    %s16 = ssub.s32 %s10, 2
    %s17 = sadd.s32 %s10, 1
    %s18 = ssub.s32 %s10, %s17
    %p19 = scmp.eq.s32.totalorder %s18, 0
    %s21 = sadd.s32 %s20, 1
    %s22 = scalar_select %p19, %s20, %s21
    %p25 = pneg %p19
    %p26 = scmp.eq.s32.totalorder %s10, 3
    %p27 = por %p25, %p26
    %p28 = scmp.ne.s32.totalorder %s20, %s23
    %p29 = scmp.eq.s32.totalorder %s10, 0
    %p30 = por %p28, %p29
    %p31 = scmp.ne.s32.totalorder %s20, %s23
    %p32 = scmp.eq.s32.totalorder %s15, 3
    %p33 = por %p31, %p32
    %p34 = scmp.ne.s32.totalorder %s23, %s24
    %p35 = scmp.eq.s32.totalorder %s15, 0
    %p36 = por %p34, %p35
    %p37 = scmp.ne.s32.totalorder %s23, %s24
    %p38 = scmp.eq.s32.totalorder %s16, 3
    %p39 = por %p37, %p38
    %p41 = scmp.ne.s32.totalorder %s24, %s40
    %p42 = scmp.eq.s32.totalorder %s16, 0
    %p43 = por %p41, %p42
    %s44 = ssub.s32 %s10, %s17
    %p45 = scmp.eq.s32.totalorder %s44, 0
    %s47 = sadd.s32 %s46, 1
    %s48 = scalar_select %p45, %s46, %s47
    %p51 = pneg %p45
    %p52 = scmp.eq.s32.totalorder %s10, 3
    %p53 = por %p51, %p52
    %p54 = scmp.ne.s32.totalorder %s46, %s49
    %p55 = scmp.eq.s32.totalorder %s10, 0
    %p56 = por %p54, %p55
    %p57 = scmp.ne.s32.totalorder %s46, %s49
    %p58 = scmp.eq.s32.totalorder %s15, 3
    %p59 = por %p57, %p58
    %p60 = scmp.ne.s32.totalorder %s49, %s50
    %p61 = scmp.eq.s32.totalorder %s15, 0
    %p62 = por %p60, %p61
    %p63 = scmp.ne.s32.totalorder %s49, %s50
    %p64 = scmp.eq.s32.totalorder %s16, 3
    %p65 = por %p63, %p64
    %p67 = scmp.ne.s32.totalorder %s50, %s66
    %p68 = scmp.eq.s32.totalorder %s16, 0
    %p69 = por %p67, %p68
    %s71 = sadd.s32 %s70, 1
    %p74 = scmp.eq.s32.totalorder %s10, 3
    %p75 = scmp.ne.s32.totalorder %s70, %s72
    %p76 = scmp.eq.s32.totalorder %s10, 0
    %p77 = por %p75, %p76
    %p78 = scmp.ne.s32.totalorder %s70, %s72
    %p79 = scmp.eq.s32.totalorder %s15, 3
    %p80 = por %p78, %p79
    %p81 = scmp.ne.s32.totalorder %s72, %s73
    %p82 = scmp.eq.s32.totalorder %s15, 0
    %p83 = por %p81, %p82
    %p84 = scmp.ne.s32.totalorder %s72, %s73
    %p85 = scmp.eq.s32.totalorder %s16, 3
    %p86 = por %p84, %p85
    %p88 = scmp.ne.s32.totalorder %s73, %s87
    %p89 = scmp.eq.s32.totalorder %s16, 0
    %p90 = por %p88, %p89
    %s92 = sadd.s32 %s91, 1
    %p95 = scmp.eq.s32.totalorder %s10, 3
    %p96 = scmp.ne.s32.totalorder %s91, %s93
    %p97 = scmp.eq.s32.totalorder %s10, 0
    %p98 = por %p96, %p97
    %p99 = scmp.ne.s32.totalorder %s91, %s93
    %p100 = scmp.eq.s32.totalorder %s15, 3
    %p101 = por %p99, %p100
    %p102 = scmp.ne.s32.totalorder %s93, %s94
    %p103 = scmp.eq.s32.totalorder %s15, 0
    %p104 = por %p102, %p103
    %p105 = scmp.ne.s32.totalorder %s93, %s94
    %p106 = scmp.eq.s32.totalorder %s16, 3
    %p107 = por %p105, %p106
    %p109 = scmp.ne.s32.totalorder %s94, %s108
    %p110 = scmp.eq.s32.totalorder %s16, 0
    %p111 = por %p109, %p110
    %s112 = ssub.s32 %s10, %s17
    %p113 = scmp.eq.s32.totalorder %s112, 0
    %s115 = sadd.s32 %s114, 1
    %s116 = scalar_select %p113, %s114, %s115
    %p119 = pneg %p113
    %p120 = scmp.eq.s32.totalorder %s10, 3
    %p121 = por %p119, %p120
    %p122 = scmp.ne.s32.totalorder %s114, %s117
    %p123 = scmp.eq.s32.totalorder %s10, 0
    %p124 = por %p122, %p123
    %p125 = scmp.ne.s32.totalorder %s114, %s117
    %p126 = scmp.eq.s32.totalorder %s15, 3
    %p127 = por %p125, %p126
    %p128 = scmp.ne.s32.totalorder %s117, %s118
    %p129 = scmp.eq.s32.totalorder %s15, 0
    %p130 = por %p128, %p129
    %p131 = scmp.ne.s32.totalorder %s117, %s118
    %p132 = scmp.eq.s32.totalorder %s16, 3
    %p133 = por %p131, %p132
    %p135 = scmp.ne.s32.totalorder %s118, %s134
    %p136 = scmp.eq.s32.totalorder %s16, 0
    %p137 = por %p135, %p136
    %p138 = scmp.le.s32.totalorder 1, %s10
    %p139 = scmp.lt.s32.totalorder %s10, 5
    %p140 = pnand %p138, %p139
    %p141 = pneg %p140
    // Predicated region
    $region9: #{residual_block.8} parent=5 // pred_check
      _
    $region10: #{residual_block.8} parent=5 // pred_check_branch
      %143 = sbr.rel (%p140) target = $region12
    $region11: #{residual_block.8} parent=5 // pred_region
      %s144 = ssub.s32 %s10, 1
      // Predicated region
      $region13: #{residual_block.8} parent=11 // pred_check
        %p145 = pneg %p83
      $region14: #{residual_block.8} parent=11 // pred_check_branch
        %147 = sbr.rel (%p145) target = $region16
      $region15: #{residual_block.8} parent=11 // pred_region
        _
      $region16: #{residual_block.8} parent=11 // pred_fallthru
        _
      // Predicated region
      $region17: #{residual_block.8} parent=11 // pred_check
        %p148 = pneg %p104
      $region18: #{residual_block.8} parent=11 // pred_check_branch
        %150 = sbr.rel (%p148) target = $region20
      $region19: #{residual_block.8} parent=11 // pred_region
        _
      $region20: #{residual_block.8} parent=11 // pred_fallthru
        _
    $region12: #{residual_block.8} parent=5 // pred_fallthru
      _
    %p151 = scmp.lt.s32.totalorder %s10, 4
    // Predicated region
    $region21: #{residual_block.8} parent=5 // pred_check
      %p152 = pneg %p151
    $region22: #{residual_block.8} parent=5 // pred_check_branch
      %154 = sbr.rel (%p152) target = $region24
    $region23: #{residual_block.8} parent=5 // pred_region
      // Predicated region
      $region25: #{residual_block.8} parent=23 // pred_check
        %p155 = pneg %p30
      $region26: #{residual_block.8} parent=23 // pred_check_branch
        %157 = sbr.rel (%p155) target = $region28
      $region27: #{residual_block.8} parent=23 // pred_region
        %p158 = scmp.lt.s32.totalorder %s10, 3
        %s159 = scalar_select %p158, %s10, 3
        %s160 = smul.addr %s159, 32
        %s161 = smul.addr %s160, 8
        %s162 = scalar_lea.vmem %s0, %s161
      $region28: #{residual_block.8} parent=23 // pred_fallthru
        _
      // Predicated region
      $region29: #{residual_block.8} parent=23 // pred_check
        %p163 = pneg %p56
      $region30: #{residual_block.8} parent=23 // pred_check_branch
        %165 = sbr.rel (%p163) target = $region32
      $region31: #{residual_block.8} parent=23 // pred_region
        %p166 = scmp.lt.s32.totalorder %s10, 3
        %s167 = scalar_select %p166, %s10, 3
        %s168 = smul.addr %s167, 32
        %s169 = smul.addr %s168, 8
        %s170 = scalar_lea.vmem %s1, %s169
      $region32: #{residual_block.8} parent=23 // pred_fallthru
        _
    $region24: #{residual_block.8} parent=5 // pred_fallthru
      _
    %p171 = scmp.le.s32.totalorder 1, %s10
    %p172 = scmp.lt.s32.totalorder %s10, 5
    %p173 = pnand %p171, %p172
    %p174 = pneg %p173
    // Predicated region
    $region33: #{residual_block.8} parent=5 // pred_check
      _
    $region34: #{residual_block.8} parent=5 // pred_check_branch
      %176 = sbr.rel (%p173) target = $region36
    $region35: #{residual_block.8} parent=5 // pred_region
      %s177 = ssub.s32 %s10, 1
      %p178 = scmp.lt.s32.totalorder %s15, 3
      %s179 = scalar_select %p178, %s15, 3
      %s180 = smul.addr %s179, 32
      %s181 = smul.addr %s180, 8
      %s182 = scalar_lea.vmem %s0, %s181
      %p183 = pneg %p36
      %p184 = pneg %p33
      %p185 = scmp.lt.s32.totalorder %s15, 3
      %s186 = scalar_select %p185, %s15, 3
      %s187 = smul.addr %s186, 32
      %s188 = smul.addr %s187, 8
      %s189 = scalar_lea.vmem %s1, %s188
      %p190 = pneg %p62
      %p191 = pneg %p59
      %p192 = pneg %p83
      %p193 = pneg %p80
      %p194 = pneg %p104
      %p195 = pneg %p101
      %p196 = pneg %p130
      %p197 = pneg %p127
      %p198 = scmp.lt.s32.totalorder %s15, 3
      %s199 = scalar_select %p198, %s15, 3
      %s200 = smul.addr %s199, 32
      %s201 = smul.addr %s200, 8
      %s202 = scalar_lea.vmem %s4, %s201
      %p203 = scmp.lt.s32.totalorder %s15, 3
      %s204 = scalar_select %p203, %s15, 3
      %s205 = smul.addr %s204, 32
      %s206 = smul.addr %s205, 8
      %s207 = scalar_lea.vmem %s0, %s206
      %p208 = scmp.lt.s32.totalorder %s15, 3
      %s209 = scalar_select %p208, %s15, 3
      %s210 = smul.addr %s209, 32
      %s211 = smul.addr %s210, 8
      %s212 = scalar_lea.vmem %s1, %s211
      %p213 = scmp.lt.s32.totalorder %s15, 3
      %s214 = scalar_select %p213, %s15, 3
      %s215 = smul.addr %s214, 32
      %s216 = smul.addr %s215, 8
      %s217 = scalar_lea.vmem %s4, %s216
      %v218 = vld [vmem:[%s207] sm:$0xff]
      %v219 = vld [vmem:[%s207 + $0x8] sm:$0xff]
      %v220 = vld [vmem:[%s207 + $0x10] sm:$0xff]
      %v221 = vld [vmem:[%s207 + $0x18] sm:$0xff]
      %v222 = vld [vmem:[%s207 + $0x20] sm:$0xff]
      %v223 = vld [vmem:[%s207 + $0x28] sm:$0xff]
      %v224 = vld [vmem:[%s207 + $0x30] sm:$0xff]
      %v225 = vld [vmem:[%s207 + $0x38] sm:$0xff]
      %v226 = vld [vmem:[%s207 + $0x40] sm:$0xff]
      %v227 = vld [vmem:[%s207 + $0x48] sm:$0xff]
      %v228 = vld [vmem:[%s207 + $0x50] sm:$0xff]
      %v229 = vld [vmem:[%s207 + $0x58] sm:$0xff]
      %v230 = vld [vmem:[%s207 + $0x60] sm:$0xff]
      %v231 = vld [vmem:[%s207 + $0x68] sm:$0xff]
      %v232 = vld [vmem:[%s207 + $0x70] sm:$0xff]
      %v233 = vld [vmem:[%s207 + $0x78] sm:$0xff]
      %v234 = vld [vmem:[%s207 + $0x80] sm:$0xff]
      %v235 = vld [vmem:[%s207 + $0x88] sm:$0xff]
      %v236 = vld [vmem:[%s207 + $0x90] sm:$0xff]
      %v237 = vld [vmem:[%s207 + $0x98] sm:$0xff]
      %v238 = vld [vmem:[%s207 + $0xa0] sm:$0xff]
      %v239 = vld [vmem:[%s207 + $0xa8] sm:$0xff]
      %v240 = vld [vmem:[%s207 + $0xb0] sm:$0xff]
      %v241 = vld [vmem:[%s207 + $0xb8] sm:$0xff]
      %v242 = vld [vmem:[%s207 + $0xc0] sm:$0xff]
      %v243 = vld [vmem:[%s207 + $0xc8] sm:$0xff]
      %v244 = vld [vmem:[%s207 + $0xd0] sm:$0xff]
      %v245 = vld [vmem:[%s207 + $0xd8] sm:$0xff]
      %v246 = vld [vmem:[%s207 + $0xe0] sm:$0xff]
      %v247 = vld [vmem:[%s207 + $0xe8] sm:$0xff]
      %v248 = vld [vmem:[%s207 + $0xf0] sm:$0xff]
      %v249 = vld [vmem:[%s207 + $0xf8] sm:$0xff]
      %v250 = vld [vmem:[%s212] sm:$0xff]
      %v251 = vld [vmem:[%s212 + $0x8] sm:$0xff]
      %v252 = vld [vmem:[%s212 + $0x10] sm:$0xff]
      %v253 = vld [vmem:[%s212 + $0x18] sm:$0xff]
      %v254 = vld [vmem:[%s212 + $0x20] sm:$0xff]
      %v255 = vld [vmem:[%s212 + $0x28] sm:$0xff]
      %v256 = vld [vmem:[%s212 + $0x30] sm:$0xff]
      %v257 = vld [vmem:[%s212 + $0x38] sm:$0xff]
      %v258 = vld [vmem:[%s212 + $0x40] sm:$0xff]
      %v259 = vld [vmem:[%s212 + $0x48] sm:$0xff]
      %v260 = vld [vmem:[%s212 + $0x50] sm:$0xff]
      %v261 = vld [vmem:[%s212 + $0x58] sm:$0xff]
      %v262 = vld [vmem:[%s212 + $0x60] sm:$0xff]
      %v263 = vld [vmem:[%s212 + $0x68] sm:$0xff]
      %v264 = vld [vmem:[%s212 + $0x70] sm:$0xff]
      %v265 = vld [vmem:[%s212 + $0x78] sm:$0xff]
      %v266 = vld [vmem:[%s212 + $0x80] sm:$0xff]
      %v267 = vld [vmem:[%s212 + $0x88] sm:$0xff]
      %v268 = vld [vmem:[%s212 + $0x90] sm:$0xff]
      %v269 = vld [vmem:[%s212 + $0x98] sm:$0xff]
      %v270 = vld [vmem:[%s212 + $0xa0] sm:$0xff]
      %v271 = vld [vmem:[%s212 + $0xa8] sm:$0xff]
      %v272 = vld [vmem:[%s212 + $0xb0] sm:$0xff]
      %v273 = vld [vmem:[%s212 + $0xb8] sm:$0xff]
      %v274 = vld [vmem:[%s212 + $0xc0] sm:$0xff]
      %v275 = vld [vmem:[%s212 + $0xc8] sm:$0xff]
      %v276 = vld [vmem:[%s212 + $0xd0] sm:$0xff]
      %v277 = vld [vmem:[%s212 + $0xd8] sm:$0xff]
      %v278 = vld [vmem:[%s212 + $0xe0] sm:$0xff]
      %v279 = vld [vmem:[%s212 + $0xe8] sm:$0xff]
      %v280 = vld [vmem:[%s212 + $0xf0] sm:$0xff]
      %v281 = vld [vmem:[%s212 + $0xf8] sm:$0xff]
      %v282 = vld [vmem:[%s2] sm:$0x1]
      %v284 = vlaneseq
      %v285 = vshrl.u32 %v284, 7
      %v286 = vsub.s32 0, %v285
      %v287 = vrot.slane %v282, %v286
      %v289 = vmul.f32 %v250, %v287
      %v290 = vmul.f32 %v251, %v287
      %v291 = vmul.f32 %v252, %v287
      %v292 = vmul.f32 %v253, %v287
      %v293 = vmul.f32 %v254, %v287
      %v294 = vmul.f32 %v255, %v287
      %v295 = vmul.f32 %v256, %v287
      %v296 = vmul.f32 %v257, %v287
      %v297 = vmul.f32 %v258, %v287
      %v298 = vmul.f32 %v259, %v287
      %v299 = vmul.f32 %v260, %v287
      %v300 = vmul.f32 %v261, %v287
      %v301 = vmul.f32 %v262, %v287
      %v302 = vmul.f32 %v263, %v287
      %v303 = vmul.f32 %v264, %v287
      %v304 = vmul.f32 %v265, %v287
      %v305 = vmul.f32 %v266, %v287
      %v306 = vmul.f32 %v267, %v287
      %v307 = vmul.f32 %v268, %v287
      %v308 = vmul.f32 %v269, %v287
      %v309 = vmul.f32 %v270, %v287
      %v310 = vmul.f32 %v271, %v287
      %v311 = vmul.f32 %v272, %v287
      %v312 = vmul.f32 %v273, %v287
      %v313 = vmul.f32 %v274, %v287
      %v314 = vmul.f32 %v275, %v287
      %v315 = vmul.f32 %v276, %v287
      %v316 = vmul.f32 %v277, %v287
      %v317 = vmul.f32 %v278, %v287
      %v318 = vmul.f32 %v279, %v287
      %v319 = vmul.f32 %v280, %v287
      %v320 = vmul.f32 %v281, %v287
      %v321 = vadd.f32 %v218, %v289
      %v322 = vadd.f32 %v219, %v290
      %v323 = vadd.f32 %v220, %v291
      %v324 = vadd.f32 %v221, %v292
      %v325 = vadd.f32 %v222, %v293
      %v326 = vadd.f32 %v223, %v294
      %v327 = vadd.f32 %v224, %v295
      %v328 = vadd.f32 %v225, %v296
      %v329 = vadd.f32 %v226, %v297
      %v330 = vadd.f32 %v227, %v298
      %v331 = vadd.f32 %v228, %v299
      %v332 = vadd.f32 %v229, %v300
      %v333 = vadd.f32 %v230, %v301
      %v334 = vadd.f32 %v231, %v302
      %v335 = vadd.f32 %v232, %v303
      %v336 = vadd.f32 %v233, %v304
      %v337 = vadd.f32 %v234, %v305
      %v338 = vadd.f32 %v235, %v306
      %v339 = vadd.f32 %v236, %v307
      %v340 = vadd.f32 %v237, %v308
      %v341 = vadd.f32 %v238, %v309
      %v342 = vadd.f32 %v239, %v310
      %v343 = vadd.f32 %v240, %v311
      %v344 = vadd.f32 %v241, %v312
      %v345 = vadd.f32 %v242, %v313
      %v346 = vadd.f32 %v243, %v314
      %v347 = vadd.f32 %v244, %v315
      %v348 = vadd.f32 %v245, %v316
      %v349 = vadd.f32 %v246, %v317
      %v350 = vadd.f32 %v247, %v318
      %v351 = vadd.f32 %v248, %v319
      %v352 = vadd.f32 %v249, %v320
      %v353 = vld [vmem:[%s3] sm:$0x1]
      %v355 = vlaneseq
      %v356 = vshrl.u32 %v355, 7
      %v357 = vsub.s32 0, %v356
      %v358 = vrot.slane %v353, %v357
      %v360 = vadd.f32 %v321, %v358
      %v361 = vadd.f32 %v322, %v358
      %v362 = vadd.f32 %v323, %v358
      %v363 = vadd.f32 %v324, %v358
      %v364 = vadd.f32 %v325, %v358
      %v365 = vadd.f32 %v326, %v358
      %v366 = vadd.f32 %v327, %v358
      %v367 = vadd.f32 %v328, %v358
      %v368 = vadd.f32 %v329, %v358
      %v369 = vadd.f32 %v330, %v358
      %v370 = vadd.f32 %v331, %v358
      %v371 = vadd.f32 %v332, %v358
      %v372 = vadd.f32 %v333, %v358
      %v373 = vadd.f32 %v334, %v358
      %v374 = vadd.f32 %v335, %v358
      %v375 = vadd.f32 %v336, %v358
      %v376 = vadd.f32 %v337, %v358
      %v377 = vadd.f32 %v338, %v358
      %v378 = vadd.f32 %v339, %v358
      %v379 = vadd.f32 %v340, %v358
      %v380 = vadd.f32 %v341, %v358
      %v381 = vadd.f32 %v342, %v358
      %v382 = vadd.f32 %v343, %v358
      %v383 = vadd.f32 %v344, %v358
      %v384 = vadd.f32 %v345, %v358
      %v385 = vadd.f32 %v346, %v358
      %v386 = vadd.f32 %v347, %v358
      %v387 = vadd.f32 %v348, %v358
      %v388 = vadd.f32 %v349, %v358
      %v389 = vadd.f32 %v350, %v358
      %v390 = vadd.f32 %v351, %v358
      %v391 = vadd.f32 %v352, %v358
      %vm392 = vcmask 64512
      %393 = vst.msk [vmem:[%s217] sm:$0xff] %vm392, %v360
      %394 = vst.msk [vmem:[%s217 + $0x8] sm:$0xff] %vm392, %v361
      %395 = vst.msk [vmem:[%s217 + $0x10] sm:$0xff] %vm392, %v362
      %396 = vst.msk [vmem:[%s217 + $0x18] sm:$0xff] %vm392, %v363
      %397 = vst.msk [vmem:[%s217 + $0x20] sm:$0xff] %vm392, %v364
      %398 = vst.msk [vmem:[%s217 + $0x28] sm:$0xff] %vm392, %v365
      %399 = vst.msk [vmem:[%s217 + $0x30] sm:$0xff] %vm392, %v366
      %400 = vst.msk [vmem:[%s217 + $0x38] sm:$0xff] %vm392, %v367
      %401 = vst.msk [vmem:[%s217 + $0x40] sm:$0xff] %vm392, %v368
      %402 = vst.msk [vmem:[%s217 + $0x48] sm:$0xff] %vm392, %v369
      %403 = vst.msk [vmem:[%s217 + $0x50] sm:$0xff] %vm392, %v370
      %404 = vst.msk [vmem:[%s217 + $0x58] sm:$0xff] %vm392, %v371
      %405 = vst.msk [vmem:[%s217 + $0x60] sm:$0xff] %vm392, %v372
      %406 = vst.msk [vmem:[%s217 + $0x68] sm:$0xff] %vm392, %v373
      %407 = vst.msk [vmem:[%s217 + $0x70] sm:$0xff] %vm392, %v374
      %408 = vst.msk [vmem:[%s217 + $0x78] sm:$0xff] %vm392, %v375
      %409 = vst.msk [vmem:[%s217 + $0x80] sm:$0xff] %vm392, %v376
      %410 = vst.msk [vmem:[%s217 + $0x88] sm:$0xff] %vm392, %v377
      %411 = vst.msk [vmem:[%s217 + $0x90] sm:$0xff] %vm392, %v378
      %412 = vst.msk [vmem:[%s217 + $0x98] sm:$0xff] %vm392, %v379
      %413 = vst.msk [vmem:[%s217 + $0xa0] sm:$0xff] %vm392, %v380
      %414 = vst.msk [vmem:[%s217 + $0xa8] sm:$0xff] %vm392, %v381
      %415 = vst.msk [vmem:[%s217 + $0xb0] sm:$0xff] %vm392, %v382
      %416 = vst.msk [vmem:[%s217 + $0xb8] sm:$0xff] %vm392, %v383
      %417 = vst.msk [vmem:[%s217 + $0xc0] sm:$0xff] %vm392, %v384
      %418 = vst.msk [vmem:[%s217 + $0xc8] sm:$0xff] %vm392, %v385
      %419 = vst.msk [vmem:[%s217 + $0xd0] sm:$0xff] %vm392, %v386
      %420 = vst.msk [vmem:[%s217 + $0xd8] sm:$0xff] %vm392, %v387
      %421 = vst.msk [vmem:[%s217 + $0xe0] sm:$0xff] %vm392, %v388
      %422 = vst.msk [vmem:[%s217 + $0xe8] sm:$0xff] %vm392, %v389
      %423 = vst.msk [vmem:[%s217 + $0xf0] sm:$0xff] %vm392, %v390
      %424 = vst.msk [vmem:[%s217 + $0xf8] sm:$0xff] %vm392, %v391
      %p425 = scmp.lt.s32.totalorder %s15, 3
      %s426 = scalar_select %p425, %s15, 3
      %s427 = smul.addr %s426, 32
      %s428 = smul.addr %s427, 8
      %s429 = scalar_lea.vmem %s4, %s428
      // Predicated region
      $region37: #{residual_block.8} parent=35 // pred_check
        %p430 = pneg %p127
      $region38: #{residual_block.8} parent=35 // pred_check_branch
        %432 = sbr.rel (%p430) target = $region40
      $region39: #{residual_block.8} parent=35 // pred_region
        _
      $region40: #{residual_block.8} parent=35 // pred_fallthru
        _
    $region36: #{residual_block.8} parent=5 // pred_fallthru
      _
    %p433 = scmp.le.s32.totalorder 2, %s10
    // Predicated region
    $region41: #{residual_block.8} parent=5 // pred_check
      %p434 = pneg %p433
    $region42: #{residual_block.8} parent=5 // pred_check_branch
      %436 = sbr.rel (%p434) target = $region44
    $region43: #{residual_block.8} parent=5 // pred_region
      %s437 = ssub.s32 %s10, 2
      // Predicated region
      $region45: #{residual_block.8} parent=43 // pred_check
        %p438 = pneg %p133
      $region46: #{residual_block.8} parent=43 // pred_check_branch
        %440 = sbr.rel (%p438) target = $region48
      $region47: #{residual_block.8} parent=43 // pred_region
        %p441 = scmp.lt.s32.totalorder %s16, 3
        %s442 = scalar_select %p441, %s16, 3
        %s443 = smul.addr %s442, 32
        %s444 = smul.addr %s443, 8
        %s445 = scalar_lea.vmem %s4, %s444
      $region48: #{residual_block.8} parent=43 // pred_fallthru
        _
    $region44: #{residual_block.8} parent=5 // pred_fallthru
      _
  $region6: #{residual_block.8} parent=0 // loop_footer
    %s14 = sadd.s32 1, %s10
  $region7: #{residual_block.8} parent=0 // loop_footer_branch
    %9 = sbr.rel target = $region3
  $region8: #{residual_block.8} parent=0 // loop_exit
    _

// kernel: residual_block.7
$region0: #{residual_block.7}
  #allocation0 [shape = 'u32[]', space=smem, size = 0x4, offset = 0x4, fixed_abs, tag = 'smem constant byte address 0x4 - core index']
  #allocation1 [shape = 'u32[144,128]{1,0:T(1,128)}', space=vmem, size = 0x12000, scoped, tag = 'internal scratch']
  %s0 = inlined_call_operand.vmem [shape: f32[4,16,16,16], index: 0, kind: input, shape index: {}]
  %s1 = inlined_call_operand.vmem [shape: f32[1,16], index: 1, kind: input, shape index: {}]
  %s2 = inlined_call_operand.vmem [shape: f32[1,16], index: 2, kind: input, shape index: {}]
  %s3 = inlined_call_operand.vmem [shape: bf16[16,8], index: 3, kind: input, shape index: {}]
  %s4 = inlined_call_operand.vmem [shape: f32[4,16,16,8], index: 4, kind: output, shape index: {0}]
  %s5 = inlined_call_operand.vmem [shape: f32[4,2,8], index: 5, kind: output, shape index: {1}]
  %6 = xla_tuple %s4, %s5
  %s7 = sld [smem:[#allocation0]]
  $region57: #{residual_block.7} parent=0
    _
  %s9 = ssub.s32 1, %s7
  %s10 = scalar_select 0, %s9, %s7
  loop: start=0, step=1, limit=6
  $region2: #{residual_block.7} parent=0 // loop_pre_header
    _
  $region3: #{residual_block.7} parent=0 // loop_header
    %s12 = sphi 0, %s16
    %p13 = scmp.ge.s32.totalorder %s12, 6
    %s22 = sphi 0, %s24
    %s25 = sphi 0, %s22
    %s26 = sphi 0, %s25
    %s42 = sphi 0, %s26
    %s46 = sphi 0, %s46
    %s48 = sphi 0, %s46
    %s49 = sphi 0, %s48
    %s63 = sphi 0, %s49
    %s67 = sphi 0, %s67
    %s69 = sphi 0, %s67
    %s70 = sphi 0, %s69
    %s84 = sphi 0, %s70
    %s88 = sphi 0, %s88
    %s90 = sphi 0, %s88
    %s91 = sphi 0, %s90
    %s105 = sphi 0, %s91
    %s111 = sphi 0, %s113
    %s114 = sphi 0, %s111
    %s115 = sphi 0, %s114
    %s131 = sphi 0, %s115
    %s137 = sphi 0, %s139
    %s140 = sphi 0, %s137
    %s141 = sphi 0, %s140
    %s157 = sphi 0, %s141
  $region4: #{residual_block.7} parent=0 // loop_header_branch
    %15 = sbr.rel (%p13) target = $region8
  $region5: #{residual_block.7} parent=0 // loop_body
    %s17 = ssub.s32 %s12, 1
    %s18 = ssub.s32 %s12, 2
    %s19 = sadd.s32 %s12, 1
    %s20 = ssub.s32 %s12, %s19
    %p21 = scmp.eq.s32.totalorder %s20, 0
    %s23 = sadd.s32 %s22, 1
    %s24 = scalar_select %p21, %s22, %s23
    %p27 = pneg %p21
    %p28 = scmp.eq.s32.totalorder %s12, 3
    %p29 = por %p27, %p28
    %p30 = scmp.ne.s32.totalorder %s22, %s25
    %p31 = scmp.eq.s32.totalorder %s12, 0
    %p32 = por %p30, %p31
    %p33 = scmp.ne.s32.totalorder %s22, %s25
    %p34 = scmp.eq.s32.totalorder %s17, 3
    %p35 = por %p33, %p34
    %p36 = scmp.ne.s32.totalorder %s25, %s26
    %p37 = scmp.eq.s32.totalorder %s17, 0
    %p38 = por %p36, %p37
    %p39 = scmp.ne.s32.totalorder %s25, %s26
    %p40 = scmp.eq.s32.totalorder %s18, 3
    %p41 = por %p39, %p40
    %p43 = scmp.ne.s32.totalorder %s26, %s42
    %p44 = scmp.eq.s32.totalorder %s18, 0
    %p45 = por %p43, %p44
    %s47 = sadd.s32 %s46, 1
    %p50 = scmp.eq.s32.totalorder %s12, 3
    %p51 = scmp.ne.s32.totalorder %s46, %s48
    %p52 = scmp.eq.s32.totalorder %s12, 0
    %p53 = por %p51, %p52
    %p54 = scmp.ne.s32.totalorder %s46, %s48
    %p55 = scmp.eq.s32.totalorder %s17, 3
    %p56 = por %p54, %p55
    %p57 = scmp.ne.s32.totalorder %s48, %s49
    %p58 = scmp.eq.s32.totalorder %s17, 0
    %p59 = por %p57, %p58
    %p60 = scmp.ne.s32.totalorder %s48, %s49
    %p61 = scmp.eq.s32.totalorder %s18, 3
    %p62 = por %p60, %p61
    %p64 = scmp.ne.s32.totalorder %s49, %s63
    %p65 = scmp.eq.s32.totalorder %s18, 0
    %p66 = por %p64, %p65
    %s68 = sadd.s32 %s67, 1
    %p71 = scmp.eq.s32.totalorder %s12, 3
    %p72 = scmp.ne.s32.totalorder %s67, %s69
    %p73 = scmp.eq.s32.totalorder %s12, 0
    %p74 = por %p72, %p73
    %p75 = scmp.ne.s32.totalorder %s67, %s69
    %p76 = scmp.eq.s32.totalorder %s17, 3
    %p77 = por %p75, %p76
    %p78 = scmp.ne.s32.totalorder %s69, %s70
    %p79 = scmp.eq.s32.totalorder %s17, 0
    %p80 = por %p78, %p79
    %p81 = scmp.ne.s32.totalorder %s69, %s70
    %p82 = scmp.eq.s32.totalorder %s18, 3
    %p83 = por %p81, %p82
    %p85 = scmp.ne.s32.totalorder %s70, %s84
    %p86 = scmp.eq.s32.totalorder %s18, 0
    %p87 = por %p85, %p86
    %s89 = sadd.s32 %s88, 1
    %p92 = scmp.eq.s32.totalorder %s12, 3
    %p93 = scmp.ne.s32.totalorder %s88, %s90
    %p94 = scmp.eq.s32.totalorder %s12, 0
    %p95 = por %p93, %p94
    %p96 = scmp.ne.s32.totalorder %s88, %s90
    %p97 = scmp.eq.s32.totalorder %s17, 3
    %p98 = por %p96, %p97
    %p99 = scmp.ne.s32.totalorder %s90, %s91
    %p100 = scmp.eq.s32.totalorder %s17, 0
    %p101 = por %p99, %p100
    %p102 = scmp.ne.s32.totalorder %s90, %s91
    %p103 = scmp.eq.s32.totalorder %s18, 3
    %p104 = por %p102, %p103
    %p106 = scmp.ne.s32.totalorder %s91, %s105
    %p107 = scmp.eq.s32.totalorder %s18, 0
    %p108 = por %p106, %p107
    %s109 = ssub.s32 %s12, %s19
    %p110 = scmp.eq.s32.totalorder %s109, 0
    %s112 = sadd.s32 %s111, 1
    %s113 = scalar_select %p110, %s111, %s112
    %p116 = pneg %p110
    %p117 = scmp.eq.s32.totalorder %s12, 3
    %p118 = por %p116, %p117
    %p119 = scmp.ne.s32.totalorder %s111, %s114
    %p120 = scmp.eq.s32.totalorder %s12, 0
    %p121 = por %p119, %p120
    %p122 = scmp.ne.s32.totalorder %s111, %s114
    %p123 = scmp.eq.s32.totalorder %s17, 3
    %p124 = por %p122, %p123
    %p125 = scmp.ne.s32.totalorder %s114, %s115
    %p126 = scmp.eq.s32.totalorder %s17, 0
    %p127 = por %p125, %p126
    %p128 = scmp.ne.s32.totalorder %s114, %s115
    %p129 = scmp.eq.s32.totalorder %s18, 3
    %p130 = por %p128, %p129
    %p132 = scmp.ne.s32.totalorder %s115, %s131
    %p133 = scmp.eq.s32.totalorder %s18, 0
    %p134 = por %p132, %p133
    %s135 = ssub.s32 %s12, %s19
    %p136 = scmp.eq.s32.totalorder %s135, 0
    %s138 = sadd.s32 %s137, 1
    %s139 = scalar_select %p136, %s137, %s138
    %p142 = pneg %p136
    %p143 = scmp.eq.s32.totalorder %s12, 3
    %p144 = por %p142, %p143
    %p145 = scmp.ne.s32.totalorder %s137, %s140
    %p146 = scmp.eq.s32.totalorder %s12, 0
    %p147 = por %p145, %p146
    %p148 = scmp.ne.s32.totalorder %s137, %s140
    %p149 = scmp.eq.s32.totalorder %s17, 3
    %p150 = por %p148, %p149
    %p151 = scmp.ne.s32.totalorder %s140, %s141
    %p152 = scmp.eq.s32.totalorder %s17, 0
    %p153 = por %p151, %p152
    %p154 = scmp.ne.s32.totalorder %s140, %s141
    %p155 = scmp.eq.s32.totalorder %s18, 3
    %p156 = por %p154, %p155
    %p158 = scmp.ne.s32.totalorder %s141, %s157
    %p159 = scmp.eq.s32.totalorder %s18, 0
    %p160 = por %p158, %p159
    %p161 = scmp.le.s32.totalorder 1, %s12
    %p162 = scmp.lt.s32.totalorder %s12, 5
    %p163 = pnand %p161, %p162
    %p164 = pneg %p163
    // Predicated region
    $region9: #{residual_block.7} parent=5 // pred_check
      _
    $region10: #{residual_block.7} parent=5 // pred_check_branch
      %166 = sbr.rel (%p163) target = $region12
    $region11: #{residual_block.7} parent=5 // pred_region
      %s167 = ssub.s32 %s12, 1
      // Predicated region
      $region13: #{residual_block.7} parent=11 // pred_check
        %p168 = pneg %p59
      $region14: #{residual_block.7} parent=11 // pred_check_branch
        %170 = sbr.rel (%p168) target = $region16
      $region15: #{residual_block.7} parent=11 // pred_region
        _
      $region16: #{residual_block.7} parent=11 // pred_fallthru
        _
      // Predicated region
      $region17: #{residual_block.7} parent=11 // pred_check
        %p171 = pneg %p80
      $region18: #{residual_block.7} parent=11 // pred_check_branch
        %173 = sbr.rel (%p171) target = $region20
      $region19: #{residual_block.7} parent=11 // pred_region
        _
      $region20: #{residual_block.7} parent=11 // pred_fallthru
        _
      // Predicated region
      $region21: #{residual_block.7} parent=11 // pred_check
        %p174 = pneg %p101
      $region22: #{residual_block.7} parent=11 // pred_check_branch
        %176 = sbr.rel (%p174) target = $region24
      $region23: #{residual_block.7} parent=11 // pred_region
        _
      $region24: #{residual_block.7} parent=11 // pred_fallthru
        _
    $region12: #{residual_block.7} parent=5 // pred_fallthru
      _
    %p177 = scmp.lt.s32.totalorder %s12, 4
    // Predicated region
    $region25: #{residual_block.7} parent=5 // pred_check
      %p178 = pneg %p177
    $region26: #{residual_block.7} parent=5 // pred_check_branch
      %180 = sbr.rel (%p178) target = $region28
    $region27: #{residual_block.7} parent=5 // pred_region
      // Predicated region
      $region29: #{residual_block.7} parent=27 // pred_check
        %p181 = pneg %p32
      $region30: #{residual_block.7} parent=27 // pred_check_branch
        %183 = sbr.rel (%p181) target = $region32
      $region31: #{residual_block.7} parent=27 // pred_region
        %p184 = scmp.lt.s32.totalorder %s12, 3
        %s185 = scalar_select %p184, %s12, 3
        %s186 = smul.addr %s185, 32
        %s187 = smul.addr %s186, 8
        %s188 = scalar_lea.vmem %s0, %s187
      $region32: #{residual_block.7} parent=27 // pred_fallthru
        _
    $region28: #{residual_block.7} parent=5 // pred_fallthru
      _
    %p189 = scmp.le.s32.totalorder 1, %s12
    %p190 = scmp.lt.s32.totalorder %s12, 5
    %p191 = pnand %p189, %p190
    %p192 = pneg %p191
    // Predicated region
    $region33: #{residual_block.7} parent=5 // pred_check
      _
    $region34: #{residual_block.7} parent=5 // pred_check_branch
      %194 = sbr.rel (%p191) target = $region36
    $region35: #{residual_block.7} parent=5 // pred_region
      %s195 = ssub.s32 %s12, 1
      %p196 = scmp.lt.s32.totalorder %s17, 3
      %s197 = scalar_select %p196, %s17, 3
      %s198 = smul.addr %s197, 32
      %s199 = smul.addr %s198, 8
      %s200 = scalar_lea.vmem %s0, %s199
      %p201 = pneg %p38
      %p202 = pneg %p35
      %p203 = pneg %p59
      %p204 = pneg %p56
      %p205 = pneg %p80
      %p206 = pneg %p77
      %p207 = pneg %p101
      %p208 = pneg %p98
      %p209 = pneg %p127
      %p210 = pneg %p124
      %p211 = scmp.lt.s32.totalorder %s17, 3
      %s212 = scalar_select %p211, %s17, 3
      %s213 = smul.addr %s212, 32
      %s214 = smul.addr %s213, 8
      %s215 = scalar_lea.vmem %s4, %s214
      %p216 = pneg %p153
      %p217 = pneg %p150
      %p218 = scmp.lt.s32.totalorder %s17, 3
      %s219 = scalar_select %p218, %s17, 3
      %s220 = smul.addr %s219, 2
      %s221 = scalar_lea.vmem %s5, %s220
      %p222 = scmp.lt.s32.totalorder %s17, 3
      %s223 = scalar_select %p222, %s17, 3
      %s224 = smul.addr %s223, 32
      %s225 = smul.addr %s224, 8
      %s226 = scalar_lea.vmem %s0, %s225
      %p227 = scmp.lt.s32.totalorder %s17, 3
      %s228 = scalar_select %p227, %s17, 3
      %s229 = smul.addr %s228, 32
      %s230 = smul.addr %s229, 8
      %s231 = scalar_lea.vmem %s4, %s230
      %p232 = scmp.lt.s32.totalorder %s17, 3
      %s233 = scalar_select %p232, %s17, 3
      %s234 = smul.addr %s233, 2
      %s235 = scalar_lea.vmem %s5, %s234
      %v237 = vld [vmem:[%s226] sm:$0xff]
      %v238 = vld [vmem:[%s226 + $0x8] sm:$0xff]
      %v239 = vld [vmem:[%s226 + $0x10] sm:$0xff]
      %v240 = vld [vmem:[%s226 + $0x18] sm:$0xff]
      %v241 = vld [vmem:[%s226 + $0x20] sm:$0xff]
      %v242 = vld [vmem:[%s226 + $0x28] sm:$0xff]
      %v243 = vld [vmem:[%s226 + $0x30] sm:$0xff]
      %v244 = vld [vmem:[%s226 + $0x38] sm:$0xff]
      %v245 = vld [vmem:[%s226 + $0x40] sm:$0xff]
      %v246 = vld [vmem:[%s226 + $0x48] sm:$0xff]
      %v247 = vld [vmem:[%s226 + $0x50] sm:$0xff]
      %v248 = vld [vmem:[%s226 + $0x58] sm:$0xff]
      %v249 = vld [vmem:[%s226 + $0x60] sm:$0xff]
      %v250 = vld [vmem:[%s226 + $0x68] sm:$0xff]
      %v251 = vld [vmem:[%s226 + $0x70] sm:$0xff]
      %v252 = vld [vmem:[%s226 + $0x78] sm:$0xff]
      %v253 = vld [vmem:[%s226 + $0x80] sm:$0xff]
      %v254 = vld [vmem:[%s226 + $0x88] sm:$0xff]
      %v255 = vld [vmem:[%s226 + $0x90] sm:$0xff]
      %v256 = vld [vmem:[%s226 + $0x98] sm:$0xff]
      %v257 = vld [vmem:[%s226 + $0xa0] sm:$0xff]
      %v258 = vld [vmem:[%s226 + $0xa8] sm:$0xff]
      %v259 = vld [vmem:[%s226 + $0xb0] sm:$0xff]
      %v260 = vld [vmem:[%s226 + $0xb8] sm:$0xff]
      %v261 = vld [vmem:[%s226 + $0xc0] sm:$0xff]
      %v262 = vld [vmem:[%s226 + $0xc8] sm:$0xff]
      %v263 = vld [vmem:[%s226 + $0xd0] sm:$0xff]
      %v264 = vld [vmem:[%s226 + $0xd8] sm:$0xff]
      %v265 = vld [vmem:[%s226 + $0xe0] sm:$0xff]
      %v266 = vld [vmem:[%s226 + $0xe8] sm:$0xff]
      %v267 = vld [vmem:[%s226 + $0xf0] sm:$0xff]
      %v268 = vld [vmem:[%s226 + $0xf8] sm:$0xff]
      %v269 = vld [vmem:[%s1] sm:$0x1]
      %v271 = vlaneseq
      %v272 = vshrl.u32 %v271, 7
      %v273 = vsub.s32 0, %v272
      %v274 = vrot.slane %v269, %v273
      %v276 = vmul.f32 %v237, %v274
      %v277 = vmul.f32 %v238, %v274
      %v278 = vmul.f32 %v239, %v274
      %v279 = vmul.f32 %v240, %v274
      %v280 = vmul.f32 %v241, %v274
      %v281 = vmul.f32 %v242, %v274
      %v282 = vmul.f32 %v243, %v274
      %v283 = vmul.f32 %v244, %v274
      %v284 = vmul.f32 %v245, %v274
      %v285 = vmul.f32 %v246, %v274
      %v286 = vmul.f32 %v247, %v274
      %v287 = vmul.f32 %v248, %v274
      %v288 = vmul.f32 %v249, %v274
      %v289 = vmul.f32 %v250, %v274
      %v290 = vmul.f32 %v251, %v274
      %v291 = vmul.f32 %v252, %v274
      %v292 = vmul.f32 %v253, %v274
      %v293 = vmul.f32 %v254, %v274
      %v294 = vmul.f32 %v255, %v274
      %v295 = vmul.f32 %v256, %v274
      %v296 = vmul.f32 %v257, %v274
      %v297 = vmul.f32 %v258, %v274
      %v298 = vmul.f32 %v259, %v274
      %v299 = vmul.f32 %v260, %v274
      %v300 = vmul.f32 %v261, %v274
      %v301 = vmul.f32 %v262, %v274
      %v302 = vmul.f32 %v263, %v274
      %v303 = vmul.f32 %v264, %v274
      %v304 = vmul.f32 %v265, %v274
      %v305 = vmul.f32 %v266, %v274
      %v306 = vmul.f32 %v267, %v274
      %v307 = vmul.f32 %v268, %v274
      %v308 = vld [vmem:[%s2] sm:$0x1]
      %v310 = vlaneseq
      %v311 = vshrl.u32 %v310, 7
      %v312 = vsub.s32 0, %v311
      %v313 = vrot.slane %v308, %v312
      %v315 = vadd.f32 %v276, %v313
      %v316 = vadd.f32 %v277, %v313
      %v317 = vadd.f32 %v278, %v313
      %v318 = vadd.f32 %v279, %v313
      %v319 = vadd.f32 %v280, %v313
      %v320 = vadd.f32 %v281, %v313
      %v321 = vadd.f32 %v282, %v313
      %v322 = vadd.f32 %v283, %v313
      %v323 = vadd.f32 %v284, %v313
      %v324 = vadd.f32 %v285, %v313
      %v325 = vadd.f32 %v286, %v313
      %v326 = vadd.f32 %v287, %v313
      %v327 = vadd.f32 %v288, %v313
      %v328 = vadd.f32 %v289, %v313
      %v329 = vadd.f32 %v290, %v313
      %v330 = vadd.f32 %v291, %v313
      %v331 = vadd.f32 %v292, %v313
      %v332 = vadd.f32 %v293, %v313
      %v333 = vadd.f32 %v294, %v313
      %v334 = vadd.f32 %v295, %v313
      %v335 = vadd.f32 %v296, %v313
      %v336 = vadd.f32 %v297, %v313
      %v337 = vadd.f32 %v298, %v313
      %v338 = vadd.f32 %v299, %v313
      %v339 = vadd.f32 %v300, %v313
      %v340 = vadd.f32 %v301, %v313
      %v341 = vadd.f32 %v302, %v313
      %v342 = vadd.f32 %v303, %v313
      %v343 = vadd.f32 %v304, %v313
      %v344 = vadd.f32 %v305, %v313
      %v345 = vadd.f32 %v306, %v313
      %v346 = vadd.f32 %v307, %v313
      %v347 = vmax.f32 %v315, 0.0
      %v348 = vmax.f32 %v316, 0.0
      %v349 = vmax.f32 %v317, 0.0
      %v350 = vmax.f32 %v318, 0.0
      %v351 = vmax.f32 %v319, 0.0
      %v352 = vmax.f32 %v320, 0.0
      %v353 = vmax.f32 %v321, 0.0
      %v354 = vmax.f32 %v322, 0.0
      %v355 = vmax.f32 %v323, 0.0
      %v356 = vmax.f32 %v324, 0.0
      %v357 = vmax.f32 %v325, 0.0
      %v358 = vmax.f32 %v326, 0.0
      %v359 = vmax.f32 %v327, 0.0
      %v360 = vmax.f32 %v328, 0.0
      %v361 = vmax.f32 %v329, 0.0
      %v362 = vmax.f32 %v330, 0.0
      %v363 = vmax.f32 %v331, 0.0
      %v364 = vmax.f32 %v332, 0.0
      %v365 = vmax.f32 %v333, 0.0
      %v366 = vmax.f32 %v334, 0.0
      %v367 = vmax.f32 %v335, 0.0
      %v368 = vmax.f32 %v336, 0.0
      %v369 = vmax.f32 %v337, 0.0
      %v370 = vmax.f32 %v338, 0.0
      %v371 = vmax.f32 %v339, 0.0
      %v372 = vmax.f32 %v340, 0.0
      %v373 = vmax.f32 %v341, 0.0
      %v374 = vmax.f32 %v342, 0.0
      %v375 = vmax.f32 %v343, 0.0
      %v376 = vmax.f32 %v344, 0.0
      %v377 = vmax.f32 %v345, 0.0
      %v378 = vmax.f32 %v346, 0.0
      %v379 = vpack.c.bf16 %v348, %v347
      %v380 = vpack.c.bf16 %v350, %v349
      %v381 = vpack.c.bf16 %v352, %v351
      %v382 = vpack.c.bf16 %v354, %v353
      %v383 = vpack.c.bf16 %v356, %v355
      %v384 = vpack.c.bf16 %v358, %v357
      %v385 = vpack.c.bf16 %v360, %v359
      %v386 = vpack.c.bf16 %v362, %v361
      %v387 = vpack.c.bf16 %v364, %v363
      %v388 = vpack.c.bf16 %v366, %v365
      %v389 = vpack.c.bf16 %v368, %v367
      %v390 = vpack.c.bf16 %v370, %v369
      %v391 = vpack.c.bf16 %v372, %v371
      %v392 = vpack.c.bf16 %v374, %v373
      %v393 = vpack.c.bf16 %v376, %v375
      %v394 = vpack.c.bf16 %v378, %v377
      %v395 = vld [vmem:[%s3] sm:$0xf]
      %v396 = vld [vmem:[%s3 + $0x4] sm:$0xf]
      %v399 = vunpack.c.l.b16 %v395
      %v400 = vunpack.c.l.b16 %v396
      %v401 = vpack.c.b16 %v400, %v399
      %vm403 = vcmask 130048
      %v405 = vsel %vm403, %v379, 0
      %v408 = vsel %vm403, %v380, 0
      %v411 = vsel %vm403, %v381, 0
      %v414 = vsel %vm403, %v382, 0
      %v417 = vsel %vm403, %v383, 0
      %v420 = vsel %vm403, %v384, 0
      %v423 = vsel %vm403, %v385, 0
      %v426 = vsel %vm403, %v386, 0
      %v429 = vsel %vm403, %v387, 0
      %v432 = vsel %vm403, %v388, 0
      %v435 = vsel %vm403, %v389, 0
      %v438 = vsel %vm403, %v390, 0
      %v441 = vsel %vm403, %v391, 0
      %v444 = vsel %vm403, %v392, 0
      %v447 = vsel %vm403, %v393, 0
      %v450 = vsel %vm403, %v394, 0
      %452 = vmatprep.subr.bf16.mxu0 0
      %453 = vmatpush1.bf16.msra.mxu0 %v401
      %454 = vmatprep.subr.bf16.mxu0 0
      %455 = vmatpush1.bf16.msra.mxu0 0
      %456 = vmatprep.subr.bf16.mxu0 0
      %457 = vmatpush1.bf16.msra.mxu0 0
      %458 = vmatprep.subr.bf16.mxu0 0
      %459 = vmatpush1.bf16.msra.mxu0 0
      %460 = vmatprep.subr.bf16.mxu0 0
      %461 = vmatpush1.bf16.msra.mxu0 0
      %462 = vmatprep.subr.bf16.mxu0 0
      %463 = vmatpush1.bf16.msra.mxu0 0
      %464 = vmatprep.subr.bf16.mxu0 0
      %465 = vmatpush1.bf16.msra.mxu0 0
      %466 = vmatprep.subr.bf16.mxu0 0
      %467 = vmatpush1.bf16.msra.mxu0 0
      %468 = vmatprep.subr.bf16.mxu0 0
      %469 = vmatpush1.bf16.msra.mxu0 0
      %470 = vmatprep.subr.bf16.mxu0 0
      %471 = vmatpush1.bf16.msra.mxu0 0
      %472 = vmatprep.subr.bf16.mxu0 0
      %473 = vmatpush1.bf16.msra.mxu0 0
      %474 = vmatprep.subr.bf16.mxu0 0
      %475 = vmatpush1.bf16.msra.mxu0 0
      %476 = vmatprep.subr.bf16.mxu0 0
      %477 = vmatpush1.bf16.msra.mxu0 0
      %478 = vmatprep.subr.bf16.mxu0 0
      %479 = vmatpush1.bf16.msra.mxu0 0
      %480 = vmatprep.subr.bf16.mxu0 0
      %481 = vmatpush1.bf16.msra.mxu0 0
      %482 = vmatprep.subr.bf16.mxu0 0
      %483 = vmatpush1.bf16.msra.mxu0 0
      %484 = vmatprep.mubr.bf16.mxu0 0
      %485 = vmatmul.mubr.bf16.gmra.mrb[0].mxu0 %v405
      %v486 = vpop.f32.mrb[0].mxu0
      %v487 = vadd.f32 0.0, %v486
      %v488 = vpop.f32.mrb[0].mxu0
      %v489 = vpop.f32.mrb[0].mxu0
      %v490 = vadd.f32 0.0, %v489
      %v491 = vpop.f32.mrb[0].mxu0
      %492 = vmatprep.mubr.bf16.mxu0 0
      %493 = vmatmul.mubr.bf16.gmra.mrb[0].mxu0 %v408
      %v494 = vpop.f32.mrb[0].mxu0
      %v495 = vadd.f32 0.0, %v494
      %v496 = vpop.f32.mrb[0].mxu0
      %v497 = vpop.f32.mrb[0].mxu0
      %v498 = vadd.f32 0.0, %v497
      %v499 = vpop.f32.mrb[0].mxu0
      %500 = vmatprep.mubr.bf16.mxu0 0
      %501 = vmatmul.mubr.bf16.gmra.mrb[0].mxu0 %v411
      %v502 = vpop.f32.mrb[0].mxu0
      %v503 = vadd.f32 0.0, %v502
      %v504 = vpop.f32.mrb[0].mxu0
      %v505 = vpop.f32.mrb[0].mxu0
      %v506 = vadd.f32 0.0, %v505
      %v507 = vpop.f32.mrb[0].mxu0
      %508 = vmatprep.mubr.bf16.mxu0 0
      %509 = vmatmul.mubr.bf16.gmra.mrb[0].mxu0 %v414
      %v510 = vpop.f32.mrb[0].mxu0
      %v511 = vadd.f32 0.0, %v510
      %v512 = vpop.f32.mrb[0].mxu0
      %v513 = vpop.f32.mrb[0].mxu0
      %v514 = vadd.f32 0.0, %v513
      %v515 = vpop.f32.mrb[0].mxu0
      %516 = vmatprep.mubr.bf16.mxu0 0
      %517 = vmatmul.mubr.bf16.gmra.mrb[0].mxu0 %v417
      %v518 = vpop.f32.mrb[0].mxu0
      %v519 = vadd.f32 0.0, %v518
      %v520 = vpop.f32.mrb[0].mxu0
      %v521 = vpop.f32.mrb[0].mxu0
      %v522 = vadd.f32 0.0, %v521
      %v523 = vpop.f32.mrb[0].mxu0
      %524 = vmatprep.mubr.bf16.mxu0 0
      %525 = vmatmul.mubr.bf16.gmra.mrb[0].mxu0 %v420
      %v526 = vpop.f32.mrb[0].mxu0
      %v527 = vadd.f32 0.0, %v526
      %v528 = vpop.f32.mrb[0].mxu0
      %v529 = vpop.f32.mrb[0].mxu0
      %v530 = vadd.f32 0.0, %v529
      %v531 = vpop.f32.mrb[0].mxu0
      %532 = vmatprep.mubr.bf16.mxu0 0
      %533 = vmatmul.mubr.bf16.gmra.mrb[0].mxu0 %v423
      %v534 = vpop.f32.mrb[0].mxu0
      %v535 = vadd.f32 0.0, %v534
      %v536 = vpop.f32.mrb[0].mxu0
      %v537 = vpop.f32.mrb[0].mxu0
      %v538 = vadd.f32 0.0, %v537
      %v539 = vpop.f32.mrb[0].mxu0
      %540 = vmatprep.mubr.bf16.mxu0 0
      %541 = vmatmul.mubr.bf16.gmra.mrb[0].mxu0 %v426
      %v542 = vpop.f32.mrb[0].mxu0
      %v543 = vadd.f32 0.0, %v542
      %v544 = vpop.f32.mrb[0].mxu0
      %v545 = vpop.f32.mrb[0].mxu0
      %v546 = vadd.f32 0.0, %v545
      %v547 = vpop.f32.mrb[0].mxu0
      %548 = vmatprep.mubr.bf16.mxu0 0
      %549 = vmatmul.mubr.bf16.gmra.mrb[0].mxu0 %v429
      %v550 = vpop.f32.mrb[0].mxu0
      %v551 = vadd.f32 0.0, %v550
      %v552 = vpop.f32.mrb[0].mxu0
      %v553 = vpop.f32.mrb[0].mxu0
      %v554 = vadd.f32 0.0, %v553
      %v555 = vpop.f32.mrb[0].mxu0
      %556 = vmatprep.mubr.bf16.mxu0 0
      %557 = vmatmul.mubr.bf16.gmra.mrb[0].mxu0 %v432
      %v558 = vpop.f32.mrb[0].mxu0
      %v559 = vadd.f32 0.0, %v558
      %v560 = vpop.f32.mrb[0].mxu0
      %v561 = vpop.f32.mrb[0].mxu0
      %v562 = vadd.f32 0.0, %v561
      %v563 = vpop.f32.mrb[0].mxu0
      %564 = vmatprep.mubr.bf16.mxu0 0
      %565 = vmatmul.mubr.bf16.gmra.mrb[0].mxu0 %v435
      %v566 = vpop.f32.mrb[0].mxu0
      %v567 = vadd.f32 0.0, %v566
      %v568 = vpop.f32.mrb[0].mxu0
      %v569 = vpop.f32.mrb[0].mxu0
      %v570 = vadd.f32 0.0, %v569
      %v571 = vpop.f32.mrb[0].mxu0
      %572 = vmatprep.mubr.bf16.mxu0 0
      %573 = vmatmul.mubr.bf16.gmra.mrb[0].mxu0 %v438
      %v574 = vpop.f32.mrb[0].mxu0
      %v575 = vadd.f32 0.0, %v574
      %v576 = vpop.f32.mrb[0].mxu0
      %v577 = vpop.f32.mrb[0].mxu0
      %v578 = vadd.f32 0.0, %v577
      %v579 = vpop.f32.mrb[0].mxu0
      %580 = vmatprep.mubr.bf16.mxu0 0
      %581 = vmatmul.mubr.bf16.gmra.mrb[0].mxu0 %v441
      %v582 = vpop.f32.mrb[0].mxu0
      %v583 = vadd.f32 0.0, %v582
      %v584 = vpop.f32.mrb[0].mxu0
      %v585 = vpop.f32.mrb[0].mxu0
      %v586 = vadd.f32 0.0, %v585
      %v587 = vpop.f32.mrb[0].mxu0
      %588 = vmatprep.mubr.bf16.mxu0 0
      %589 = vmatmul.mubr.bf16.gmra.mrb[0].mxu0 %v444
      %v590 = vpop.f32.mrb[0].mxu0
      %v591 = vadd.f32 0.0, %v590
      %v592 = vpop.f32.mrb[0].mxu0
      %v593 = vpop.f32.mrb[0].mxu0
      %v594 = vadd.f32 0.0, %v593
      %v595 = vpop.f32.mrb[0].mxu0
      %596 = vmatprep.mubr.bf16.mxu0 0
      %597 = vmatmul.mubr.bf16.gmra.mrb[0].mxu0 %v447
      %v598 = vpop.f32.mrb[0].mxu0
      %v599 = vadd.f32 0.0, %v598
      %v600 = vpop.f32.mrb[0].mxu0
      %v601 = vpop.f32.mrb[0].mxu0
      %v602 = vadd.f32 0.0, %v601
      %v603 = vpop.f32.mrb[0].mxu0
      %604 = vmatprep.mubr.bf16.mxu0 0
      %605 = vmatmul.mubr.bf16.gmra.mrb[0].mxu0 %v450
      %v606 = vpop.f32.mrb[0].mxu0
      %v607 = vadd.f32 0.0, %v606
      %v608 = vpop.f32.mrb[0].mxu0
      %v609 = vpop.f32.mrb[0].mxu0
      %v610 = vadd.f32 0.0, %v609
      %v611 = vpop.f32.mrb[0].mxu0
      %612 = vdwg.mxu0
      %vm613 = vcmask 64512
      %614 = vst.msk [vmem:[%s231] sm:$0xff] %vm613, %v487
      %615 = vst.msk [vmem:[%s231 + $0x8] sm:$0xff] %vm613, %v490
      %616 = vst.msk [vmem:[%s231 + $0x10] sm:$0xff] %vm613, %v495
      %617 = vst.msk [vmem:[%s231 + $0x18] sm:$0xff] %vm613, %v498
      %618 = vst.msk [vmem:[%s231 + $0x20] sm:$0xff] %vm613, %v503
      %619 = vst.msk [vmem:[%s231 + $0x28] sm:$0xff] %vm613, %v506
      %620 = vst.msk [vmem:[%s231 + $0x30] sm:$0xff] %vm613, %v511
      %621 = vst.msk [vmem:[%s231 + $0x38] sm:$0xff] %vm613, %v514
      %622 = vst.msk [vmem:[%s231 + $0x40] sm:$0xff] %vm613, %v519
      %623 = vst.msk [vmem:[%s231 + $0x48] sm:$0xff] %vm613, %v522
      %624 = vst.msk [vmem:[%s231 + $0x50] sm:$0xff] %vm613, %v527
      %625 = vst.msk [vmem:[%s231 + $0x58] sm:$0xff] %vm613, %v530
      %626 = vst.msk [vmem:[%s231 + $0x60] sm:$0xff] %vm613, %v535
      %627 = vst.msk [vmem:[%s231 + $0x68] sm:$0xff] %vm613, %v538
      %628 = vst.msk [vmem:[%s231 + $0x70] sm:$0xff] %vm613, %v543
      %629 = vst.msk [vmem:[%s231 + $0x78] sm:$0xff] %vm613, %v546
      %630 = vst.msk [vmem:[%s231 + $0x80] sm:$0xff] %vm613, %v551
      %631 = vst.msk [vmem:[%s231 + $0x88] sm:$0xff] %vm613, %v554
      %632 = vst.msk [vmem:[%s231 + $0x90] sm:$0xff] %vm613, %v559
      %633 = vst.msk [vmem:[%s231 + $0x98] sm:$0xff] %vm613, %v562
      %634 = vst.msk [vmem:[%s231 + $0xa0] sm:$0xff] %vm613, %v567
      %635 = vst.msk [vmem:[%s231 + $0xa8] sm:$0xff] %vm613, %v570
      %636 = vst.msk [vmem:[%s231 + $0xb0] sm:$0xff] %vm613, %v575
      %637 = vst.msk [vmem:[%s231 + $0xb8] sm:$0xff] %vm613, %v578
      %638 = vst.msk [vmem:[%s231 + $0xc0] sm:$0xff] %vm613, %v583
      %639 = vst.msk [vmem:[%s231 + $0xc8] sm:$0xff] %vm613, %v586
      %640 = vst.msk [vmem:[%s231 + $0xd0] sm:$0xff] %vm613, %v591
      %641 = vst.msk [vmem:[%s231 + $0xd8] sm:$0xff] %vm613, %v594
      %642 = vst.msk [vmem:[%s231 + $0xe0] sm:$0xff] %vm613, %v599
      %643 = vst.msk [vmem:[%s231 + $0xe8] sm:$0xff] %vm613, %v602
      %644 = vst.msk [vmem:[%s231 + $0xf0] sm:$0xff] %vm613, %v607
      %645 = vst.msk [vmem:[%s231 + $0xf8] sm:$0xff] %vm613, %v610
      %v646 = vsel %vm613, %v487, 0.0
      %v647 = vsel %vm613, %v490, 0.0
      %v648 = vadd.f32 %v646, %v647
      %v649 = vsel %vm613, %v495, 0.0
      %v650 = vadd.f32 %v648, %v649
      %v651 = vsel %vm613, %v498, 0.0
      %v652 = vadd.f32 %v650, %v651
      %v653 = vsel %vm613, %v503, 0.0
      %v654 = vadd.f32 %v652, %v653
      %v655 = vsel %vm613, %v506, 0.0
      %v656 = vadd.f32 %v654, %v655
      %v657 = vsel %vm613, %v511, 0.0
      %v658 = vadd.f32 %v656, %v657
      %v659 = vsel %vm613, %v514, 0.0
      %v660 = vadd.f32 %v658, %v659
      %v661 = vsel %vm613, %v519, 0.0
      %v662 = vadd.f32 %v660, %v661
      %v663 = vsel %vm613, %v522, 0.0
      %v664 = vadd.f32 %v662, %v663
      %v665 = vsel %vm613, %v527, 0.0
      %v666 = vadd.f32 %v664, %v665
      %v667 = vsel %vm613, %v530, 0.0
      %v668 = vadd.f32 %v666, %v667
      %v669 = vsel %vm613, %v535, 0.0
      %v670 = vadd.f32 %v668, %v669
      %v671 = vsel %vm613, %v538, 0.0
      %v672 = vadd.f32 %v670, %v671
      %v673 = vsel %vm613, %v543, 0.0
      %v674 = vadd.f32 %v672, %v673
      %v675 = vsel %vm613, %v546, 0.0
      %v676 = vadd.f32 %v674, %v675
      %v677 = vsel %vm613, %v551, 0.0
      %v678 = vadd.f32 %v676, %v677
      %v679 = vsel %vm613, %v554, 0.0
      %v680 = vadd.f32 %v678, %v679
      %v681 = vsel %vm613, %v559, 0.0
      %v682 = vadd.f32 %v680, %v681
      %v683 = vsel %vm613, %v562, 0.0
      %v684 = vadd.f32 %v682, %v683
      %v685 = vsel %vm613, %v567, 0.0
      %v686 = vadd.f32 %v684, %v685
      %v687 = vsel %vm613, %v570, 0.0
      %v688 = vadd.f32 %v686, %v687
      %v689 = vsel %vm613, %v575, 0.0
      %v690 = vadd.f32 %v688, %v689
      %v691 = vsel %vm613, %v578, 0.0
      %v692 = vadd.f32 %v690, %v691
      %v693 = vsel %vm613, %v583, 0.0
      %v694 = vadd.f32 %v692, %v693
      %v695 = vsel %vm613, %v586, 0.0
      %v696 = vadd.f32 %v694, %v695
      %v697 = vsel %vm613, %v591, 0.0
      %v698 = vadd.f32 %v696, %v697
      %v699 = vsel %vm613, %v594, 0.0
      %v700 = vadd.f32 %v698, %v699
      %v701 = vsel %vm613, %v599, 0.0
      %v702 = vadd.f32 %v700, %v701
      %v703 = vsel %vm613, %v602, 0.0
      %v704 = vadd.f32 %v702, %v703
      %v705 = vsel %vm613, %v607, 0.0
      %v706 = vadd.f32 %v704, %v705
      %v707 = vsel %vm613, %v610, 0.0
      %v708 = vadd.f32 %v706, %v707
      %v709 = vrot.slane %v708, 4
      %v710 = vadd.f32 %v708, %v709
      %v711 = vrot.slane %v710, 2
      %v712 = vadd.f32 %v710, %v711
      %v713 = vrot.slane %v712, 1
      %v714 = vadd.f32 %v712, %v713
      %vm715 = vcmask 57344
      %716 = vst.msk [vmem:[%s235] sm:$0x1] %vm715, %v714
      %v717 = vmul.f32 %v487, %v487
      %v718 = vmul.f32 %v490, %v490
      %v719 = vmul.f32 %v495, %v495
      %v720 = vmul.f32 %v498, %v498
      %v721 = vmul.f32 %v503, %v503
      %v722 = vmul.f32 %v506, %v506
      %v723 = vmul.f32 %v511, %v511
      %v724 = vmul.f32 %v514, %v514
      %v725 = vmul.f32 %v519, %v519
      %v726 = vmul.f32 %v522, %v522
      %v727 = vmul.f32 %v527, %v527
      %v728 = vmul.f32 %v530, %v530
      %v729 = vmul.f32 %v535, %v535
      %v730 = vmul.f32 %v538, %v538
      %v731 = vmul.f32 %v543, %v543
      %v732 = vmul.f32 %v546, %v546
      %v733 = vmul.f32 %v551, %v551
      %v734 = vmul.f32 %v554, %v554
      %v735 = vmul.f32 %v559, %v559
      %v736 = vmul.f32 %v562, %v562
      %v737 = vmul.f32 %v567, %v567
      %v738 = vmul.f32 %v570, %v570
      %v739 = vmul.f32 %v575, %v575
      %v740 = vmul.f32 %v578, %v578
      %v741 = vmul.f32 %v583, %v583
      %v742 = vmul.f32 %v586, %v586
      %v743 = vmul.f32 %v591, %v591
      %v744 = vmul.f32 %v594, %v594
      %v745 = vmul.f32 %v599, %v599
      %v746 = vmul.f32 %v602, %v602
      %v747 = vmul.f32 %v607, %v607
      %v748 = vmul.f32 %v610, %v610
      %v749 = vsel %vm613, %v717, 0.0
      %v750 = vsel %vm613, %v718, 0.0
      %v751 = vadd.f32 %v749, %v750
      %v752 = vsel %vm613, %v719, 0.0
      %v753 = vadd.f32 %v751, %v752
      %v754 = vsel %vm613, %v720, 0.0
      %v755 = vadd.f32 %v753, %v754
      %v756 = vsel %vm613, %v721, 0.0
      %v757 = vadd.f32 %v755, %v756
      %v758 = vsel %vm613, %v722, 0.0
      %v759 = vadd.f32 %v757, %v758
      %v760 = vsel %vm613, %v723, 0.0
      %v761 = vadd.f32 %v759, %v760
      %v762 = vsel %vm613, %v724, 0.0
      %v763 = vadd.f32 %v761, %v762
      %v764 = vsel %vm613, %v725, 0.0
      %v765 = vadd.f32 %v763, %v764
      %v766 = vsel %vm613, %v726, 0.0
      %v767 = vadd.f32 %v765, %v766
      %v768 = vsel %vm613, %v727, 0.0
      %v769 = vadd.f32 %v767, %v768
      %v770 = vsel %vm613, %v728, 0.0
      %v771 = vadd.f32 %v769, %v770
      %v772 = vsel %vm613, %v729, 0.0
      %v773 = vadd.f32 %v771, %v772
      %v774 = vsel %vm613, %v730, 0.0
      %v775 = vadd.f32 %v773, %v774
      %v776 = vsel %vm613, %v731, 0.0
      %v777 = vadd.f32 %v775, %v776
      %v778 = vsel %vm613, %v732, 0.0
      %v779 = vadd.f32 %v777, %v778
      %v780 = vsel %vm613, %v733, 0.0
      %v781 = vadd.f32 %v779, %v780
      %v782 = vsel %vm613, %v734, 0.0
      %v783 = vadd.f32 %v781, %v782
      %v784 = vsel %vm613, %v735, 0.0
      %v785 = vadd.f32 %v783, %v784
      %v786 = vsel %vm613, %v736, 0.0
      %v787 = vadd.f32 %v785, %v786
      %v788 = vsel %vm613, %v737, 0.0
      %v789 = vadd.f32 %v787, %v788
      %v790 = vsel %vm613, %v738, 0.0
      %v791 = vadd.f32 %v789, %v790
      %v792 = vsel %vm613, %v739, 0.0
      %v793 = vadd.f32 %v791, %v792
      %v794 = vsel %vm613, %v740, 0.0
      %v795 = vadd.f32 %v793, %v794
      %v796 = vsel %vm613, %v741, 0.0
      %v797 = vadd.f32 %v795, %v796
      %v798 = vsel %vm613, %v742, 0.0
      %v799 = vadd.f32 %v797, %v798
      %v800 = vsel %vm613, %v743, 0.0
      %v801 = vadd.f32 %v799, %v800
      %v802 = vsel %vm613, %v744, 0.0
      %v803 = vadd.f32 %v801, %v802
      %v804 = vsel %vm613, %v745, 0.0
      %v805 = vadd.f32 %v803, %v804
      %v806 = vsel %vm613, %v746, 0.0
      %v807 = vadd.f32 %v805, %v806
      %v808 = vsel %vm613, %v747, 0.0
      %v809 = vadd.f32 %v807, %v808
      %v810 = vsel %vm613, %v748, 0.0
      %v811 = vadd.f32 %v809, %v810
      %v812 = vrot.slane %v811, 4
      %v813 = vadd.f32 %v811, %v812
      %v814 = vrot.slane %v813, 2
      %v815 = vadd.f32 %v813, %v814
      %v816 = vrot.slane %v815, 1
      %v817 = vadd.f32 %v815, %v816
      %818 = vst.msk [vmem:[%s235 + $0x1] sm:$0x1] %vm715, %v817
      %p819 = scmp.lt.s32.totalorder %s17, 3
      %s820 = scalar_select %p819, %s17, 3
      %s821 = smul.addr %s820, 32
      %s822 = smul.addr %s821, 8
      %s823 = scalar_lea.vmem %s4, %s822
      %p824 = scmp.lt.s32.totalorder %s17, 3
      %s825 = scalar_select %p824, %s17, 3
      %s826 = smul.addr %s825, 2
      %s827 = scalar_lea.vmem %s5, %s826
      // Predicated region
      $region37: #{residual_block.7} parent=35 // pred_check
        %p828 = pneg %p124
      $region38: #{residual_block.7} parent=35 // pred_check_branch
        %830 = sbr.rel (%p828) target = $region40
      $region39: #{residual_block.7} parent=35 // pred_region
        _
      $region40: #{residual_block.7} parent=35 // pred_fallthru
        _
      // Predicated region
      $region41: #{residual_block.7} parent=35 // pred_check
        %p831 = pneg %p150
      $region42: #{residual_block.7} parent=35 // pred_check_branch
        %833 = sbr.rel (%p831) target = $region44
      $region43: #{residual_block.7} parent=35 // pred_region
        _
      $region44: #{residual_block.7} parent=35 // pred_fallthru
        _
    $region36: #{residual_block.7} parent=5 // pred_fallthru
      _
    %p834 = scmp.le.s32.totalorder 2, %s12
    // Predicated region
    $region45: #{residual_block.7} parent=5 // pred_check
      %p835 = pneg %p834
    $region46: #{residual_block.7} parent=5 // pred_check_branch
      %837 = sbr.rel (%p835) target = $region48
    $region47: #{residual_block.7} parent=5 // pred_region
      %s838 = ssub.s32 %s12, 2
      // Predicated region
      $region49: #{residual_block.7} parent=47 // pred_check
        %p839 = pneg %p130
      $region50: #{residual_block.7} parent=47 // pred_check_branch
        %841 = sbr.rel (%p839) target = $region52
      $region51: #{residual_block.7} parent=47 // pred_region
        %p842 = scmp.lt.s32.totalorder %s18, 3
        %s843 = scalar_select %p842, %s18, 3
        %s844 = smul.addr %s843, 32
        %s845 = smul.addr %s844, 8
        %s846 = scalar_lea.vmem %s4, %s845
      $region52: #{residual_block.7} parent=47 // pred_fallthru
        _
      // Predicated region
      $region53: #{residual_block.7} parent=47 // pred_check
        %p847 = pneg %p156
      $region54: #{residual_block.7} parent=47 // pred_check_branch
        %849 = sbr.rel (%p847) target = $region56
      $region55: #{residual_block.7} parent=47 // pred_region
        %p850 = scmp.lt.s32.totalorder %s18, 3
        %s851 = scalar_select %p850, %s18, 3
        %s852 = smul.addr %s851, 2
        %s853 = scalar_lea.vmem %s5, %s852
      $region56: #{residual_block.7} parent=47 // pred_fallthru
        _
    $region48: #{residual_block.7} parent=5 // pred_fallthru
      _
  $region6: #{residual_block.7} parent=0 // loop_footer
    %s16 = sadd.s32 1, %s12
  $region7: #{residual_block.7} parent=0 // loop_footer_branch
    %11 = sbr.rel target = $region3
  $region8: #{residual_block.7} parent=0 // loop_exit
    _

// kernel: residual_block.6
$region0: #{residual_block.6}
  #allocation0 [shape = 'u32[]', space=smem, size = 0x4, offset = 0x4, fixed_abs, tag = 'smem constant byte address 0x4 - core index']
  #allocation1 [shape = 'u32[144,128]{1,0:T(1,128)}', space=vmem, size = 0x12000, scoped, tag = 'internal scratch']
  #allocation2 [shape = 'bf16[1,18,18,8]{3,2,1,0:T(8,128)(2,1)}', space=vmem, size = 0x1b000, scoped, tag = 'scratch operand']
  %s0 = inlined_call_operand.vmem [shape: f32[4,16,16,8], index: 0, kind: input, shape index: {}]
  %s1 = inlined_call_operand.vmem [shape: bf16[9,8,16], index: 1, kind: input, shape index: {}]
  %s2 = inlined_call_operand.vmem [shape: f32[4,16,16,16], index: 2, kind: output, shape index: {0}]
  %s3 = inlined_call_operand.vmem [shape: f32[4,2,16], index: 3, kind: output, shape index: {1}]
  %4 = xla_tuple %s2, %s3
  %s5 = sld [smem:[#allocation0]]
  $region49: #{residual_block.6} parent=0
    _
  %s7 = ssub.s32 1, %s5
  %s8 = scalar_select 0, %s7, %s5
  loop: start=0, step=1, limit=6
  $region2: #{residual_block.6} parent=0 // loop_pre_header
    _
  $region3: #{residual_block.6} parent=0 // loop_header
    %s10 = sphi 0, %s14
    %p11 = scmp.ge.s32.totalorder %s10, 6
    %s20 = sphi 0, %s22
    %s23 = sphi 0, %s20
    %s24 = sphi 0, %s23
    %s40 = sphi 0, %s24
    %s44 = sphi 0, %s44
    %s46 = sphi 0, %s44
    %s47 = sphi 0, %s46
    %s61 = sphi 0, %s47
    %s67 = sphi 0, %s69
    %s70 = sphi 0, %s67
    %s71 = sphi 0, %s70
    %s87 = sphi 0, %s71
    %s93 = sphi 0, %s95
    %s96 = sphi 0, %s93
    %s97 = sphi 0, %s96
    %s113 = sphi 0, %s97
  $region4: #{residual_block.6} parent=0 // loop_header_branch
    %13 = sbr.rel (%p11) target = $region8
  $region5: #{residual_block.6} parent=0 // loop_body
    %s15 = ssub.s32 %s10, 1
    %s16 = ssub.s32 %s10, 2
    %s17 = sadd.s32 %s10, 1
    %s18 = ssub.s32 %s10, %s17
    %p19 = scmp.eq.s32.totalorder %s18, 0
    %s21 = sadd.s32 %s20, 1
    %s22 = scalar_select %p19, %s20, %s21
    %p25 = pneg %p19
    %p26 = scmp.eq.s32.totalorder %s10, 3
    %p27 = por %p25, %p26
    %p28 = scmp.ne.s32.totalorder %s20, %s23
    %p29 = scmp.eq.s32.totalorder %s10, 0
    %p30 = por %p28, %p29
    %p31 = scmp.ne.s32.totalorder %s20, %s23
    %p32 = scmp.eq.s32.totalorder %s15, 3
    %p33 = por %p31, %p32
    %p34 = scmp.ne.s32.totalorder %s23, %s24
    %p35 = scmp.eq.s32.totalorder %s15, 0
    %p36 = por %p34, %p35
    %p37 = scmp.ne.s32.totalorder %s23, %s24
    %p38 = scmp.eq.s32.totalorder %s16, 3
    %p39 = por %p37, %p38
    %p41 = scmp.ne.s32.totalorder %s24, %s40
    %p42 = scmp.eq.s32.totalorder %s16, 0
    %p43 = por %p41, %p42
    %s45 = sadd.s32 %s44, 1
    %p48 = scmp.eq.s32.totalorder %s10, 3
    %p49 = scmp.ne.s32.totalorder %s44, %s46
    %p50 = scmp.eq.s32.totalorder %s10, 0
    %p51 = por %p49, %p50
    %p52 = scmp.ne.s32.totalorder %s44, %s46
    %p53 = scmp.eq.s32.totalorder %s15, 3
    %p54 = por %p52, %p53
    %p55 = scmp.ne.s32.totalorder %s46, %s47
    %p56 = scmp.eq.s32.totalorder %s15, 0
    %p57 = por %p55, %p56
    %p58 = scmp.ne.s32.totalorder %s46, %s47
    %p59 = scmp.eq.s32.totalorder %s16, 3
    %p60 = por %p58, %p59
    %p62 = scmp.ne.s32.totalorder %s47, %s61
    %p63 = scmp.eq.s32.totalorder %s16, 0
    %p64 = por %p62, %p63
    %s65 = ssub.s32 %s10, %s17
    %p66 = scmp.eq.s32.totalorder %s65, 0
    %s68 = sadd.s32 %s67, 1
    %s69 = scalar_select %p66, %s67, %s68
    %p72 = pneg %p66
    %p73 = scmp.eq.s32.totalorder %s10, 3
    %p74 = por %p72, %p73
    %p75 = scmp.ne.s32.totalorder %s67, %s70
    %p76 = scmp.eq.s32.totalorder %s10, 0
    %p77 = por %p75, %p76
    %p78 = scmp.ne.s32.totalorder %s67, %s70
    %p79 = scmp.eq.s32.totalorder %s15, 3
    %p80 = por %p78, %p79
    %p81 = scmp.ne.s32.totalorder %s70, %s71
    %p82 = scmp.eq.s32.totalorder %s15, 0
    %p83 = por %p81, %p82
    %p84 = scmp.ne.s32.totalorder %s70, %s71
    %p85 = scmp.eq.s32.totalorder %s16, 3
    %p86 = por %p84, %p85
    %p88 = scmp.ne.s32.totalorder %s71, %s87
    %p89 = scmp.eq.s32.totalorder %s16, 0
    %p90 = por %p88, %p89
    %s91 = ssub.s32 %s10, %s17
    %p92 = scmp.eq.s32.totalorder %s91, 0
    %s94 = sadd.s32 %s93, 1
    %s95 = scalar_select %p92, %s93, %s94
    %p98 = pneg %p92
    %p99 = scmp.eq.s32.totalorder %s10, 3
    %p100 = por %p98, %p99
    %p101 = scmp.ne.s32.totalorder %s93, %s96
    %p102 = scmp.eq.s32.totalorder %s10, 0
    %p103 = por %p101, %p102
    %p104 = scmp.ne.s32.totalorder %s93, %s96
    %p105 = scmp.eq.s32.totalorder %s15, 3
    %p106 = por %p104, %p105
    %p107 = scmp.ne.s32.totalorder %s96, %s97
    %p108 = scmp.eq.s32.totalorder %s15, 0
    %p109 = por %p107, %p108
    %p110 = scmp.ne.s32.totalorder %s96, %s97
    %p111 = scmp.eq.s32.totalorder %s16, 3
    %p112 = por %p110, %p111
    %p114 = scmp.ne.s32.totalorder %s97, %s113
    %p115 = scmp.eq.s32.totalorder %s16, 0
    %p116 = por %p114, %p115
    %p117 = scmp.le.s32.totalorder 1, %s10
    %p118 = scmp.lt.s32.totalorder %s10, 5
    %p119 = pnand %p117, %p118
    %p120 = pneg %p119
    // Predicated region
    $region9: #{residual_block.6} parent=5 // pred_check
      _
    $region10: #{residual_block.6} parent=5 // pred_check_branch
      %122 = sbr.rel (%p119) target = $region12
    $region11: #{residual_block.6} parent=5 // pred_region
      %s123 = ssub.s32 %s10, 1
      // Predicated region
      $region13: #{residual_block.6} parent=11 // pred_check
        %p124 = pneg %p57
      $region14: #{residual_block.6} parent=11 // pred_check_branch
        %126 = sbr.rel (%p124) target = $region16
      $region15: #{residual_block.6} parent=11 // pred_region
        _
      $region16: #{residual_block.6} parent=11 // pred_fallthru
        _
    $region12: #{residual_block.6} parent=5 // pred_fallthru
      _
    %p127 = scmp.lt.s32.totalorder %s10, 4
    // Predicated region
    $region17: #{residual_block.6} parent=5 // pred_check
      %p128 = pneg %p127
    $region18: #{residual_block.6} parent=5 // pred_check_branch
      %130 = sbr.rel (%p128) target = $region20
    $region19: #{residual_block.6} parent=5 // pred_region
      // Predicated region
      $region21: #{residual_block.6} parent=19 // pred_check
        %p131 = pneg %p30
      $region22: #{residual_block.6} parent=19 // pred_check_branch
        %133 = sbr.rel (%p131) target = $region24
      $region23: #{residual_block.6} parent=19 // pred_region
        %p134 = scmp.lt.s32.totalorder %s10, 3
        %s135 = scalar_select %p134, %s10, 3
        %s136 = smul.addr %s135, 32
        %s137 = smul.addr %s136, 8
        %s138 = scalar_lea.vmem %s0, %s137
      $region24: #{residual_block.6} parent=19 // pred_fallthru
        _
    $region20: #{residual_block.6} parent=5 // pred_fallthru
      _
    %p139 = scmp.le.s32.totalorder 1, %s10
    %p140 = scmp.lt.s32.totalorder %s10, 5
    %p141 = pnand %p139, %p140
    %p142 = pneg %p141
    // Predicated region
    $region25: #{residual_block.6} parent=5 // pred_check
      _
    $region26: #{residual_block.6} parent=5 // pred_check_branch
      %144 = sbr.rel (%p141) target = $region28
    $region27: #{residual_block.6} parent=5 // pred_region
      %s145 = ssub.s32 %s10, 1
      %p146 = scmp.lt.s32.totalorder %s15, 3
      %s147 = scalar_select %p146, %s15, 3
      %s148 = smul.addr %s147, 32
      %s149 = smul.addr %s148, 8
      %s150 = scalar_lea.vmem %s0, %s149
      %p151 = pneg %p36
      %p152 = pneg %p33
      %p153 = pneg %p57
      %p154 = pneg %p54
      %p155 = pneg %p83
      %p156 = pneg %p80
      %p157 = scmp.lt.s32.totalorder %s15, 3
      %s158 = scalar_select %p157, %s15, 3
      %s159 = smul.addr %s158, 32
      %s160 = smul.addr %s159, 8
      %s161 = scalar_lea.vmem %s2, %s160
      %p162 = pneg %p109
      %p163 = pneg %p106
      %p164 = scmp.lt.s32.totalorder %s15, 3
      %s165 = scalar_select %p164, %s15, 3
      %s166 = smul.addr %s165, 2
      %s167 = scalar_lea.vmem %s3, %s166
      %p168 = scmp.lt.s32.totalorder %s15, 3
      %s169 = scalar_select %p168, %s15, 3
      %s170 = smul.addr %s169, 32
      %s171 = smul.addr %s170, 8
      %s172 = scalar_lea.vmem %s0, %s171
      %p173 = scmp.lt.s32.totalorder %s15, 3
      %s174 = scalar_select %p173, %s15, 3
      %s175 = smul.addr %s174, 32
      %s176 = smul.addr %s175, 8
      %s177 = scalar_lea.vmem %s2, %s176
      %p178 = scmp.lt.s32.totalorder %s15, 3
      %s179 = scalar_select %p178, %s15, 3
      %s180 = smul.addr %s179, 2
      %s181 = scalar_lea.vmem %s3, %s180
      %vm183 = vcmask 60416
      %184 = vst.msk [vmem:[#allocation2] sm:$0xf] %vm183, 0
      %185 = vst.msk [vmem:[#allocation2 + $0x4] sm:$0xf] %vm183, 0
      %vm186 = vcmask 57344
      %187 = vst.msk [vmem:[#allocation2 + $0x8] sm:$0x1] %vm186, 0
      %s188 = scalar_lea.vmem [#allocation2], 204
      %189 = vst.msk [vmem:[%s188] sm:$0xf] %vm183, 0
      %190 = vst.msk [vmem:[%s188 + $0x4] sm:$0xf] %vm183, 0
      %191 = vst.msk [vmem:[%s188 + $0x8] sm:$0x1] %vm186, 0
      %vm192 = vcmask 57344
      %vm193 = vsmask.f32 256
      %vm194 = vmand %vm192, %vm193
      %v195 = vld [vmem:[#allocation2] sm:$0x1]
      %v196 = vsel %vm194, 0, %v195
      %197 = vst [vmem:[#allocation2] sm:$0x1] %v196
      %v198 = vld [vmem:[#allocation2 + $0xc] sm:$0x1]
      %v199 = vsel %vm194, 0, %v198
      %200 = vst [vmem:[#allocation2 + $0xc] sm:$0x1] %v199
      %v201 = vld [vmem:[#allocation2 + $0x18] sm:$0x1]
      %v202 = vsel %vm194, 0, %v201
      %203 = vst [vmem:[#allocation2 + $0x18] sm:$0x1] %v202
      %v204 = vld [vmem:[#allocation2 + $0x24] sm:$0x1]
      %v205 = vsel %vm194, 0, %v204
      %206 = vst [vmem:[#allocation2 + $0x24] sm:$0x1] %v205
      %v207 = vld [vmem:[#allocation2 + $0x30] sm:$0x1]
      %v208 = vsel %vm194, 0, %v207
      %209 = vst [vmem:[#allocation2 + $0x30] sm:$0x1] %v208
      %v210 = vld [vmem:[#allocation2 + $0x3c] sm:$0x1]
      %v211 = vsel %vm194, 0, %v210
      %212 = vst [vmem:[#allocation2 + $0x3c] sm:$0x1] %v211
      %v213 = vld [vmem:[#allocation2 + $0x48] sm:$0x1]
      %v214 = vsel %vm194, 0, %v213
      %215 = vst [vmem:[#allocation2 + $0x48] sm:$0x1] %v214
      %v216 = vld [vmem:[#allocation2 + $0x54] sm:$0x1]
      %v217 = vsel %vm194, 0, %v216
      %218 = vst [vmem:[#allocation2 + $0x54] sm:$0x1] %v217
      %v219 = vld [vmem:[#allocation2 + $0x60] sm:$0x1]
      %v220 = vsel %vm194, 0, %v219
      %221 = vst [vmem:[#allocation2 + $0x60] sm:$0x1] %v220
      %v222 = vld [vmem:[#allocation2 + $0x6c] sm:$0x1]
      %v223 = vsel %vm194, 0, %v222
      %224 = vst [vmem:[#allocation2 + $0x6c] sm:$0x1] %v223
      %v225 = vld [vmem:[#allocation2 + $0x78] sm:$0x1]
      %v226 = vsel %vm194, 0, %v225
      %227 = vst [vmem:[#allocation2 + $0x78] sm:$0x1] %v226
      %v228 = vld [vmem:[#allocation2 + $0x84] sm:$0x1]
      %v229 = vsel %vm194, 0, %v228
      %230 = vst [vmem:[#allocation2 + $0x84] sm:$0x1] %v229
      %v231 = vld [vmem:[#allocation2 + $0x90] sm:$0x1]
      %v232 = vsel %vm194, 0, %v231
      %233 = vst [vmem:[#allocation2 + $0x90] sm:$0x1] %v232
      %v234 = vld [vmem:[#allocation2 + $0x9c] sm:$0x1]
      %v235 = vsel %vm194, 0, %v234
      %236 = vst [vmem:[#allocation2 + $0x9c] sm:$0x1] %v235
      %v237 = vld [vmem:[#allocation2 + $0xa8] sm:$0x1]
      %v238 = vsel %vm194, 0, %v237
      %239 = vst [vmem:[#allocation2 + $0xa8] sm:$0x1] %v238
      %v240 = vld [vmem:[#allocation2 + $0xb4] sm:$0x1]
      %v241 = vsel %vm194, 0, %v240
      %242 = vst [vmem:[#allocation2 + $0xb4] sm:$0x1] %v241
      %v243 = vld [vmem:[#allocation2 + $0xc0] sm:$0x1]
      %v244 = vsel %vm194, 0, %v243
      %245 = vst [vmem:[#allocation2 + $0xc0] sm:$0x1] %v244
      %v246 = vld [vmem:[#allocation2 + $0xcc] sm:$0x1]
      %v247 = vsel %vm194, 0, %v246
      %248 = vst [vmem:[#allocation2 + $0xcc] sm:$0x1] %v247
      %vm249 = vsmask.f32 7938
      %vm250 = vmand %vm192, %vm249
      %v251 = vld [vmem:[#allocation2 + $0x8] sm:$0x1]
      %v252 = vsel %vm250, 0, %v251
      %253 = vst [vmem:[#allocation2 + $0x8] sm:$0x1] %v252
      %v254 = vld [vmem:[#allocation2 + $0x14] sm:$0x1]
      %v255 = vsel %vm250, 0, %v254
      %256 = vst [vmem:[#allocation2 + $0x14] sm:$0x1] %v255
      %v257 = vld [vmem:[#allocation2 + $0x20] sm:$0x1]
      %v258 = vsel %vm250, 0, %v257
      %259 = vst [vmem:[#allocation2 + $0x20] sm:$0x1] %v258
      %v260 = vld [vmem:[#allocation2 + $0x2c] sm:$0x1]
      %v261 = vsel %vm250, 0, %v260
      %262 = vst [vmem:[#allocation2 + $0x2c] sm:$0x1] %v261
      %v263 = vld [vmem:[#allocation2 + $0x38] sm:$0x1]
      %v264 = vsel %vm250, 0, %v263
      %265 = vst [vmem:[#allocation2 + $0x38] sm:$0x1] %v264
      %v266 = vld [vmem:[#allocation2 + $0x44] sm:$0x1]
      %v267 = vsel %vm250, 0, %v266
      %268 = vst [vmem:[#allocation2 + $0x44] sm:$0x1] %v267
      %v269 = vld [vmem:[#allocation2 + $0x50] sm:$0x1]
      %v270 = vsel %vm250, 0, %v269
      %271 = vst [vmem:[#allocation2 + $0x50] sm:$0x1] %v270
      %v272 = vld [vmem:[#allocation2 + $0x5c] sm:$0x1]
      %v273 = vsel %vm250, 0, %v272
      %274 = vst [vmem:[#allocation2 + $0x5c] sm:$0x1] %v273
      %v275 = vld [vmem:[#allocation2 + $0x68] sm:$0x1]
      %v276 = vsel %vm250, 0, %v275
      %277 = vst [vmem:[#allocation2 + $0x68] sm:$0x1] %v276
      %v278 = vld [vmem:[#allocation2 + $0x74] sm:$0x1]
      %v279 = vsel %vm250, 0, %v278
      %280 = vst [vmem:[#allocation2 + $0x74] sm:$0x1] %v279
      %v281 = vld [vmem:[#allocation2 + $0x80] sm:$0x1]
      %v282 = vsel %vm250, 0, %v281
      %283 = vst [vmem:[#allocation2 + $0x80] sm:$0x1] %v282
      %v284 = vld [vmem:[#allocation2 + $0x8c] sm:$0x1]
      %v285 = vsel %vm250, 0, %v284
      %286 = vst [vmem:[#allocation2 + $0x8c] sm:$0x1] %v285
      %v287 = vld [vmem:[#allocation2 + $0x98] sm:$0x1]
      %v288 = vsel %vm250, 0, %v287
      %289 = vst [vmem:[#allocation2 + $0x98] sm:$0x1] %v288
      %v290 = vld [vmem:[#allocation2 + $0xa4] sm:$0x1]
      %v291 = vsel %vm250, 0, %v290
      %292 = vst [vmem:[#allocation2 + $0xa4] sm:$0x1] %v291
      %v293 = vld [vmem:[#allocation2 + $0xb0] sm:$0x1]
      %v294 = vsel %vm250, 0, %v293
      %295 = vst [vmem:[#allocation2 + $0xb0] sm:$0x1] %v294
      %v296 = vld [vmem:[#allocation2 + $0xbc] sm:$0x1]
      %v297 = vsel %vm250, 0, %v296
      %298 = vst [vmem:[#allocation2 + $0xbc] sm:$0x1] %v297
      %v299 = vld [vmem:[#allocation2 + $0xc8] sm:$0x1]
      %v300 = vsel %vm250, 0, %v299
      %301 = vst [vmem:[#allocation2 + $0xc8] sm:$0x1] %v300
      %v302 = vld [vmem:[#allocation2 + $0xd4] sm:$0x1]
      %v303 = vsel %vm250, 0, %v302
      %304 = vst [vmem:[#allocation2 + $0xd4] sm:$0x1] %v303
      %v305 = vld [vmem:[%s172] sm:$0xff]
      %v306 = vld [vmem:[%s172 + $0x8] sm:$0xff]
      %v307 = vld [vmem:[%s172 + $0x10] sm:$0xff]
      %v308 = vld [vmem:[%s172 + $0x18] sm:$0xff]
      %v309 = vld [vmem:[%s172 + $0x20] sm:$0xff]
      %v310 = vld [vmem:[%s172 + $0x28] sm:$0xff]
      %v311 = vld [vmem:[%s172 + $0x30] sm:$0xff]
      %v312 = vld [vmem:[%s172 + $0x38] sm:$0xff]
      %v313 = vld [vmem:[%s172 + $0x40] sm:$0xff]
      %v314 = vld [vmem:[%s172 + $0x48] sm:$0xff]
      %v315 = vld [vmem:[%s172 + $0x50] sm:$0xff]
      %v316 = vld [vmem:[%s172 + $0x58] sm:$0xff]
      %v317 = vld [vmem:[%s172 + $0x60] sm:$0xff]
      %v318 = vld [vmem:[%s172 + $0x68] sm:$0xff]
      %v319 = vld [vmem:[%s172 + $0x70] sm:$0xff]
      %v320 = vld [vmem:[%s172 + $0x78] sm:$0xff]
      %v321 = vld [vmem:[%s172 + $0x80] sm:$0xff]
      %v322 = vld [vmem:[%s172 + $0x88] sm:$0xff]
      %v323 = vld [vmem:[%s172 + $0x90] sm:$0xff]
      %v324 = vld [vmem:[%s172 + $0x98] sm:$0xff]
      %v325 = vld [vmem:[%s172 + $0xa0] sm:$0xff]
      %v326 = vld [vmem:[%s172 + $0xa8] sm:$0xff]
      %v327 = vld [vmem:[%s172 + $0xb0] sm:$0xff]
      %v328 = vld [vmem:[%s172 + $0xb8] sm:$0xff]
      %v329 = vld [vmem:[%s172 + $0xc0] sm:$0xff]
      %v330 = vld [vmem:[%s172 + $0xc8] sm:$0xff]
      %v331 = vld [vmem:[%s172 + $0xd0] sm:$0xff]
      %v332 = vld [vmem:[%s172 + $0xd8] sm:$0xff]
      %v333 = vld [vmem:[%s172 + $0xe0] sm:$0xff]
      %v334 = vld [vmem:[%s172 + $0xe8] sm:$0xff]
      %v335 = vld [vmem:[%s172 + $0xf0] sm:$0xff]
      %v336 = vld [vmem:[%s172 + $0xf8] sm:$0xff]
      %v337 = vmax.f32 %v305, 0.0
      %v338 = vmax.f32 %v306, 0.0
      %v339 = vmax.f32 %v307, 0.0
      %v340 = vmax.f32 %v308, 0.0
      %v341 = vmax.f32 %v309, 0.0
      %v342 = vmax.f32 %v310, 0.0
      %v343 = vmax.f32 %v311, 0.0
      %v344 = vmax.f32 %v312, 0.0
      %v345 = vmax.f32 %v313, 0.0
      %v346 = vmax.f32 %v314, 0.0
      %v347 = vmax.f32 %v315, 0.0
      %v348 = vmax.f32 %v316, 0.0
      %v349 = vmax.f32 %v317, 0.0
      %v350 = vmax.f32 %v318, 0.0
      %v351 = vmax.f32 %v319, 0.0
      %v352 = vmax.f32 %v320, 0.0
      %v353 = vmax.f32 %v321, 0.0
      %v354 = vmax.f32 %v322, 0.0
      %v355 = vmax.f32 %v323, 0.0
      %v356 = vmax.f32 %v324, 0.0
      %v357 = vmax.f32 %v325, 0.0
      %v358 = vmax.f32 %v326, 0.0
      %v359 = vmax.f32 %v327, 0.0
      %v360 = vmax.f32 %v328, 0.0
      %v361 = vmax.f32 %v329, 0.0
      %v362 = vmax.f32 %v330, 0.0
      %v363 = vmax.f32 %v331, 0.0
      %v364 = vmax.f32 %v332, 0.0
      %v365 = vmax.f32 %v333, 0.0
      %v366 = vmax.f32 %v334, 0.0
      %v367 = vmax.f32 %v335, 0.0
      %v368 = vmax.f32 %v336, 0.0
      %v369 = vpack.c.bf16 %v338, %v337
      %v370 = vpack.c.bf16 %v340, %v339
      %v371 = vpack.c.bf16 %v342, %v341
      %v372 = vpack.c.bf16 %v344, %v343
      %v373 = vpack.c.bf16 %v346, %v345
      %v374 = vpack.c.bf16 %v348, %v347
      %v375 = vpack.c.bf16 %v350, %v349
      %v376 = vpack.c.bf16 %v352, %v351
      %v377 = vpack.c.bf16 %v354, %v353
      %v378 = vpack.c.bf16 %v356, %v355
      %v379 = vpack.c.bf16 %v358, %v357
      %v380 = vpack.c.bf16 %v360, %v359
      %v381 = vpack.c.bf16 %v362, %v361
      %v382 = vpack.c.bf16 %v364, %v363
      %v383 = vpack.c.bf16 %v366, %v365
      %v384 = vpack.c.bf16 %v368, %v367
      %v401 = vunpack.c.l.b16 %v369
      %v402 = vunpack.c.h.b16 %v369
      %v403 = vunpack.c.l.b16 %v370
      %v404 = vunpack.c.h.b16 %v370
      %v405 = vunpack.c.l.b16 %v371
      %v406 = vunpack.c.h.b16 %v371
      %v407 = vunpack.c.l.b16 %v372
      %v408 = vunpack.c.h.b16 %v372
      %v409 = vunpack.c.l.b16 %v373
      %v410 = vunpack.c.h.b16 %v373
      %v411 = vunpack.c.l.b16 %v374
      %v412 = vunpack.c.h.b16 %v374
      %v413 = vunpack.c.l.b16 %v375
      %v414 = vunpack.c.h.b16 %v375
      %v415 = vunpack.c.l.b16 %v376
      %v416 = vunpack.c.h.b16 %v376
      %v417 = vunpack.c.l.b16 %v377
      %v418 = vunpack.c.h.b16 %v377
      %v419 = vunpack.c.l.b16 %v378
      %v420 = vunpack.c.h.b16 %v378
      %v421 = vunpack.c.l.b16 %v379
      %v422 = vunpack.c.h.b16 %v379
      %v423 = vunpack.c.l.b16 %v380
      %v424 = vunpack.c.h.b16 %v380
      %v425 = vunpack.c.l.b16 %v381
      %v426 = vunpack.c.h.b16 %v381
      %v427 = vunpack.c.l.b16 %v382
      %v428 = vunpack.c.h.b16 %v382
      %v429 = vunpack.c.l.b16 %v383
      %v430 = vunpack.c.h.b16 %v383
      %v431 = vunpack.c.l.b16 %v384
      %v432 = vunpack.c.h.b16 %v384
      %v433 = vpack.c.b16 %v401, %v401
      %v434 = vpack.c.b16 %v402, %v402
      %v435 = vpack.c.b16 %v403, %v403
      %v436 = vpack.c.b16 %v404, %v404
      %v437 = vpack.c.b16 %v405, %v405
      %v438 = vpack.c.b16 %v406, %v406
      %v439 = vpack.c.b16 %v407, %v407
      %v440 = vpack.c.b16 %v408, %v408
      %v441 = vpack.c.b16 %v409, %v409
      %v442 = vpack.c.b16 %v410, %v410
      %v443 = vpack.c.b16 %v411, %v411
      %v444 = vpack.c.b16 %v412, %v412
      %v445 = vpack.c.b16 %v413, %v413
      %v446 = vpack.c.b16 %v414, %v414
      %v447 = vpack.c.b16 %v415, %v415
      %v448 = vpack.c.b16 %v416, %v416
      %v449 = vpack.c.b16 %v417, %v417
      %v450 = vpack.c.b16 %v418, %v418
      %v451 = vpack.c.b16 %v419, %v419
      %v452 = vpack.c.b16 %v420, %v420
      %v453 = vpack.c.b16 %v421, %v421
      %v454 = vpack.c.b16 %v422, %v422
      %v455 = vpack.c.b16 %v423, %v423
      %v456 = vpack.c.b16 %v424, %v424
      %v457 = vpack.c.b16 %v425, %v425
      %v458 = vpack.c.b16 %v426, %v426
      %v459 = vpack.c.b16 %v427, %v427
      %v460 = vpack.c.b16 %v428, %v428
      %v461 = vpack.c.b16 %v429, %v429
      %v462 = vpack.c.b16 %v430, %v430
      %v463 = vpack.c.b16 %v431, %v431
      %v464 = vpack.c.b16 %v432, %v432
      %vm465 = vsmask.f32 4368
      %vm466 = vmor %vm193, %vm465
      %v468 = vshrl.u32 %v433, 16
      %v470 = vrot.slane %v468, 7
      %v471 = vshll.u32 %v433, 16
      %v473 = vor.u32 %v470, %v471
      %v474 = vrot.slane %v470, 4
      %v476 = vshrl.u32 %v434, 16
      %v478 = vrot.slane %v476, 7
      %v479 = vshll.u32 %v434, 16
      %v481 = vor.u32 %v478, %v479
      %v482 = vsel %vm466, %v474, %v481
      %v483 = vrot.slane %v478, 4
      %v485 = vshrl.u32 %v435, 16
      %v487 = vrot.slane %v485, 7
      %v488 = vshll.u32 %v435, 16
      %v490 = vor.u32 %v487, %v488
      %v491 = vrot.slane %v487, 4
      %v493 = vshrl.u32 %v436, 16
      %v495 = vrot.slane %v493, 7
      %v496 = vshll.u32 %v436, 16
      %v498 = vor.u32 %v495, %v496
      %v499 = vsel %vm466, %v491, %v498
      %v500 = vrot.slane %v495, 4
      %v502 = vshrl.u32 %v437, 16
      %v504 = vrot.slane %v502, 7
      %v505 = vshll.u32 %v437, 16
      %v507 = vor.u32 %v504, %v505
      %v508 = vrot.slane %v504, 4
      %v510 = vshrl.u32 %v438, 16
      %v512 = vrot.slane %v510, 7
      %v513 = vshll.u32 %v438, 16
      %v515 = vor.u32 %v512, %v513
      %v516 = vsel %vm466, %v508, %v515
      %v517 = vrot.slane %v512, 4
      %v519 = vshrl.u32 %v439, 16
      %v521 = vrot.slane %v519, 7
      %v522 = vshll.u32 %v439, 16
      %v524 = vor.u32 %v521, %v522
      %v525 = vrot.slane %v521, 4
      %v527 = vshrl.u32 %v440, 16
      %v529 = vrot.slane %v527, 7
      %v530 = vshll.u32 %v440, 16
      %v532 = vor.u32 %v529, %v530
      %v533 = vsel %vm466, %v525, %v532
      %v534 = vrot.slane %v529, 4
      %v536 = vshrl.u32 %v441, 16
      %v538 = vrot.slane %v536, 7
      %v539 = vshll.u32 %v441, 16
      %v541 = vor.u32 %v538, %v539
      %v542 = vrot.slane %v538, 4
      %v544 = vshrl.u32 %v442, 16
      %v546 = vrot.slane %v544, 7
      %v547 = vshll.u32 %v442, 16
      %v549 = vor.u32 %v546, %v547
      %v550 = vsel %vm466, %v542, %v549
      %v551 = vrot.slane %v546, 4
      %v553 = vshrl.u32 %v443, 16
      %v555 = vrot.slane %v553, 7
      %v556 = vshll.u32 %v443, 16
      %v558 = vor.u32 %v555, %v556
      %v559 = vrot.slane %v555, 4
      %v561 = vshrl.u32 %v444, 16
      %v563 = vrot.slane %v561, 7
      %v564 = vshll.u32 %v444, 16
      %v566 = vor.u32 %v563, %v564
      %v567 = vsel %vm466, %v559, %v566
      %v568 = vrot.slane %v563, 4
      %v570 = vshrl.u32 %v445, 16
      %v572 = vrot.slane %v570, 7
      %v573 = vshll.u32 %v445, 16
      %v575 = vor.u32 %v572, %v573
      %v576 = vrot.slane %v572, 4
      %v578 = vshrl.u32 %v446, 16
      %v580 = vrot.slane %v578, 7
      %v581 = vshll.u32 %v446, 16
      %v583 = vor.u32 %v580, %v581
      %v584 = vsel %vm466, %v576, %v583
      %v585 = vrot.slane %v580, 4
      %v587 = vshrl.u32 %v447, 16
      %v589 = vrot.slane %v587, 7
      %v590 = vshll.u32 %v447, 16
      %v592 = vor.u32 %v589, %v590
      %v593 = vrot.slane %v589, 4
      %v595 = vshrl.u32 %v448, 16
      %v597 = vrot.slane %v595, 7
      %v598 = vshll.u32 %v448, 16
      %v600 = vor.u32 %v597, %v598
      %v601 = vsel %vm466, %v593, %v600
      %v602 = vrot.slane %v597, 4
      %v604 = vshrl.u32 %v449, 16
      %v606 = vrot.slane %v604, 7
      %v607 = vshll.u32 %v449, 16
      %v609 = vor.u32 %v606, %v607
      %v610 = vrot.slane %v606, 4
      %v612 = vshrl.u32 %v450, 16
      %v614 = vrot.slane %v612, 7
      %v615 = vshll.u32 %v450, 16
      %v617 = vor.u32 %v614, %v615
      %v618 = vsel %vm466, %v610, %v617
      %v619 = vrot.slane %v614, 4
      %v621 = vshrl.u32 %v451, 16
      %v623 = vrot.slane %v621, 7
      %v624 = vshll.u32 %v451, 16
      %v626 = vor.u32 %v623, %v624
      %v627 = vrot.slane %v623, 4
      %v629 = vshrl.u32 %v452, 16
      %v631 = vrot.slane %v629, 7
      %v632 = vshll.u32 %v452, 16
      %v634 = vor.u32 %v631, %v632
      %v635 = vsel %vm466, %v627, %v634
      %v636 = vrot.slane %v631, 4
      %v638 = vshrl.u32 %v453, 16
      %v640 = vrot.slane %v638, 7
      %v641 = vshll.u32 %v453, 16
      %v643 = vor.u32 %v640, %v641
      %v644 = vrot.slane %v640, 4
      %v646 = vshrl.u32 %v454, 16
      %v648 = vrot.slane %v646, 7
      %v649 = vshll.u32 %v454, 16
      %v651 = vor.u32 %v648, %v649
      %v652 = vsel %vm466, %v644, %v651
      %v653 = vrot.slane %v648, 4
      %v655 = vshrl.u32 %v455, 16
      %v657 = vrot.slane %v655, 7
      %v658 = vshll.u32 %v455, 16
      %v660 = vor.u32 %v657, %v658
      %v661 = vrot.slane %v657, 4
      %v663 = vshrl.u32 %v456, 16
      %v665 = vrot.slane %v663, 7
      %v666 = vshll.u32 %v456, 16
      %v668 = vor.u32 %v665, %v666
      %v669 = vsel %vm466, %v661, %v668
      %v670 = vrot.slane %v665, 4
      %v672 = vshrl.u32 %v457, 16
      %v674 = vrot.slane %v672, 7
      %v675 = vshll.u32 %v457, 16
      %v677 = vor.u32 %v674, %v675
      %v678 = vrot.slane %v674, 4
      %v680 = vshrl.u32 %v458, 16
      %v682 = vrot.slane %v680, 7
      %v683 = vshll.u32 %v458, 16
      %v685 = vor.u32 %v682, %v683
      %v686 = vsel %vm466, %v678, %v685
      %v687 = vrot.slane %v682, 4
      %v689 = vshrl.u32 %v459, 16
      %v691 = vrot.slane %v689, 7
      %v692 = vshll.u32 %v459, 16
      %v694 = vor.u32 %v691, %v692
      %v695 = vrot.slane %v691, 4
      %v697 = vshrl.u32 %v460, 16
      %v699 = vrot.slane %v697, 7
      %v700 = vshll.u32 %v460, 16
      %v702 = vor.u32 %v699, %v700
      %v703 = vsel %vm466, %v695, %v702
      %v704 = vrot.slane %v699, 4
      %v706 = vshrl.u32 %v461, 16
      %v708 = vrot.slane %v706, 7
      %v709 = vshll.u32 %v461, 16
      %v711 = vor.u32 %v708, %v709
      %v712 = vrot.slane %v708, 4
      %v714 = vshrl.u32 %v462, 16
      %v716 = vrot.slane %v714, 7
      %v717 = vshll.u32 %v462, 16
      %v719 = vor.u32 %v716, %v717
      %v720 = vsel %vm466, %v712, %v719
      %v721 = vrot.slane %v716, 4
      %v723 = vshrl.u32 %v463, 16
      %v725 = vrot.slane %v723, 7
      %v726 = vshll.u32 %v463, 16
      %v728 = vor.u32 %v725, %v726
      %v729 = vrot.slane %v725, 4
      %v731 = vshrl.u32 %v464, 16
      %v733 = vrot.slane %v731, 7
      %v734 = vshll.u32 %v464, 16
      %v736 = vor.u32 %v733, %v734
      %v737 = vsel %vm466, %v729, %v736
      %v738 = vrot.slane %v733, 4
      %s787 = scalar_lea.vmem [#allocation2], 12
      %vm788 = vcmask 60416
      %vm789 = vmand %vm788, %vm249
      %v790 = vld [vmem:[%s787] sm:$0xf]
      %v791 = vsel %vm789, %v473, %v790
      %792 = vst [vmem:[%s787] sm:$0xf] %v791
      %793 = vst.msk [vmem:[%s787 + $0x4] sm:$0xf] %vm183, %v482
      %v794 = vld [vmem:[%s787 + $0x8] sm:$0x1]
      %v795 = vsel %vm194, %v483, %v794
      %796 = vst [vmem:[%s787 + $0x8] sm:$0x1] %v795
      %v797 = vld [vmem:[%s787 + $0xc] sm:$0xf]
      %v798 = vsel %vm789, %v490, %v797
      %799 = vst [vmem:[%s787 + $0xc] sm:$0xf] %v798
      %800 = vst.msk [vmem:[%s787 + $0x10] sm:$0xf] %vm183, %v499
      %v801 = vld [vmem:[%s787 + $0x14] sm:$0x1]
      %v802 = vsel %vm194, %v500, %v801
      %803 = vst [vmem:[%s787 + $0x14] sm:$0x1] %v802
      %v804 = vld [vmem:[%s787 + $0x18] sm:$0xf]
      %v805 = vsel %vm789, %v507, %v804
      %806 = vst [vmem:[%s787 + $0x18] sm:$0xf] %v805
      %807 = vst.msk [vmem:[%s787 + $0x1c] sm:$0xf] %vm183, %v516
      %v808 = vld [vmem:[%s787 + $0x20] sm:$0x1]
      %v809 = vsel %vm194, %v517, %v808
      %810 = vst [vmem:[%s787 + $0x20] sm:$0x1] %v809
      %v811 = vld [vmem:[%s787 + $0x24] sm:$0xf]
      %v812 = vsel %vm789, %v524, %v811
      %813 = vst [vmem:[%s787 + $0x24] sm:$0xf] %v812
      %814 = vst.msk [vmem:[%s787 + $0x28] sm:$0xf] %vm183, %v533
      %v815 = vld [vmem:[%s787 + $0x2c] sm:$0x1]
      %v816 = vsel %vm194, %v534, %v815
      %817 = vst [vmem:[%s787 + $0x2c] sm:$0x1] %v816
      %v818 = vld [vmem:[%s787 + $0x30] sm:$0xf]
      %v819 = vsel %vm789, %v541, %v818
      %820 = vst [vmem:[%s787 + $0x30] sm:$0xf] %v819
      %821 = vst.msk [vmem:[%s787 + $0x34] sm:$0xf] %vm183, %v550
      %v822 = vld [vmem:[%s787 + $0x38] sm:$0x1]
      %v823 = vsel %vm194, %v551, %v822
      %824 = vst [vmem:[%s787 + $0x38] sm:$0x1] %v823
      %v825 = vld [vmem:[%s787 + $0x3c] sm:$0xf]
      %v826 = vsel %vm789, %v558, %v825
      %827 = vst [vmem:[%s787 + $0x3c] sm:$0xf] %v826
      %828 = vst.msk [vmem:[%s787 + $0x40] sm:$0xf] %vm183, %v567
      %v829 = vld [vmem:[%s787 + $0x44] sm:$0x1]
      %v830 = vsel %vm194, %v568, %v829
      %831 = vst [vmem:[%s787 + $0x44] sm:$0x1] %v830
      %v832 = vld [vmem:[%s787 + $0x48] sm:$0xf]
      %v833 = vsel %vm789, %v575, %v832
      %834 = vst [vmem:[%s787 + $0x48] sm:$0xf] %v833
      %835 = vst.msk [vmem:[%s787 + $0x4c] sm:$0xf] %vm183, %v584
      %v836 = vld [vmem:[%s787 + $0x50] sm:$0x1]
      %v837 = vsel %vm194, %v585, %v836
      %838 = vst [vmem:[%s787 + $0x50] sm:$0x1] %v837
      %v839 = vld [vmem:[%s787 + $0x54] sm:$0xf]
      %v840 = vsel %vm789, %v592, %v839
      %841 = vst [vmem:[%s787 + $0x54] sm:$0xf] %v840
      %842 = vst.msk [vmem:[%s787 + $0x58] sm:$0xf] %vm183, %v601
      %v843 = vld [vmem:[%s787 + $0x5c] sm:$0x1]
      %v844 = vsel %vm194, %v602, %v843
      %845 = vst [vmem:[%s787 + $0x5c] sm:$0x1] %v844
      %v846 = vld [vmem:[%s787 + $0x60] sm:$0xf]
      %v847 = vsel %vm789, %v609, %v846
      %848 = vst [vmem:[%s787 + $0x60] sm:$0xf] %v847
      %849 = vst.msk [vmem:[%s787 + $0x64] sm:$0xf] %vm183, %v618
      %v850 = vld [vmem:[%s787 + $0x68] sm:$0x1]
      %v851 = vsel %vm194, %v619, %v850
      %852 = vst [vmem:[%s787 + $0x68] sm:$0x1] %v851
      %v853 = vld [vmem:[%s787 + $0x6c] sm:$0xf]
      %v854 = vsel %vm789, %v626, %v853
      %855 = vst [vmem:[%s787 + $0x6c] sm:$0xf] %v854
      %856 = vst.msk [vmem:[%s787 + $0x70] sm:$0xf] %vm183, %v635
      %v857 = vld [vmem:[%s787 + $0x74] sm:$0x1]
      %v858 = vsel %vm194, %v636, %v857
      %859 = vst [vmem:[%s787 + $0x74] sm:$0x1] %v858
      %v860 = vld [vmem:[%s787 + $0x78] sm:$0xf]
      %v861 = vsel %vm789, %v643, %v860
      %862 = vst [vmem:[%s787 + $0x78] sm:$0xf] %v861
      %863 = vst.msk [vmem:[%s787 + $0x7c] sm:$0xf] %vm183, %v652
      %v864 = vld [vmem:[%s787 + $0x80] sm:$0x1]
      %v865 = vsel %vm194, %v653, %v864
      %866 = vst [vmem:[%s787 + $0x80] sm:$0x1] %v865
      %v867 = vld [vmem:[%s787 + $0x84] sm:$0xf]
      %v868 = vsel %vm789, %v660, %v867
      %869 = vst [vmem:[%s787 + $0x84] sm:$0xf] %v868
      %870 = vst.msk [vmem:[%s787 + $0x88] sm:$0xf] %vm183, %v669
      %v871 = vld [vmem:[%s787 + $0x8c] sm:$0x1]
      %v872 = vsel %vm194, %v670, %v871
      %873 = vst [vmem:[%s787 + $0x8c] sm:$0x1] %v872
      %v874 = vld [vmem:[%s787 + $0x90] sm:$0xf]
      %v875 = vsel %vm789, %v677, %v874
      %876 = vst [vmem:[%s787 + $0x90] sm:$0xf] %v875
      %877 = vst.msk [vmem:[%s787 + $0x94] sm:$0xf] %vm183, %v686
      %v878 = vld [vmem:[%s787 + $0x98] sm:$0x1]
      %v879 = vsel %vm194, %v687, %v878
      %880 = vst [vmem:[%s787 + $0x98] sm:$0x1] %v879
      %v881 = vld [vmem:[%s787 + $0x9c] sm:$0xf]
      %v882 = vsel %vm789, %v694, %v881
      %883 = vst [vmem:[%s787 + $0x9c] sm:$0xf] %v882
      %884 = vst.msk [vmem:[%s787 + $0xa0] sm:$0xf] %vm183, %v703
      %v885 = vld [vmem:[%s787 + $0xa4] sm:$0x1]
      %v886 = vsel %vm194, %v704, %v885
      %887 = vst [vmem:[%s787 + $0xa4] sm:$0x1] %v886
      %v888 = vld [vmem:[%s787 + $0xa8] sm:$0xf]
      %v889 = vsel %vm789, %v711, %v888
      %890 = vst [vmem:[%s787 + $0xa8] sm:$0xf] %v889
      %891 = vst.msk [vmem:[%s787 + $0xac] sm:$0xf] %vm183, %v720
      %v892 = vld [vmem:[%s787 + $0xb0] sm:$0x1]
      %v893 = vsel %vm194, %v721, %v892
      %894 = vst [vmem:[%s787 + $0xb0] sm:$0x1] %v893
      %v895 = vld [vmem:[%s787 + $0xb4] sm:$0xf]
      %v896 = vsel %vm789, %v728, %v895
      %897 = vst [vmem:[%s787 + $0xb4] sm:$0xf] %v896
      %898 = vst.msk [vmem:[%s787 + $0xb8] sm:$0xf] %vm183, %v737
      %v899 = vld [vmem:[%s787 + $0xbc] sm:$0x1]
      %v900 = vsel %vm194, %v738, %v899
      %901 = vst [vmem:[%s787 + $0xbc] sm:$0x1] %v900
      %v902 = vld [vmem:[#allocation2] sm:$0xf]
      %v903 = vld [vmem:[#allocation2 + $0x4] sm:$0xf]
      %v904 = vld [vmem:[#allocation2 + $0xc] sm:$0xf]
      %v905 = vld [vmem:[#allocation2 + $0x10] sm:$0xf]
      %v906 = vld [vmem:[#allocation2 + $0x18] sm:$0xf]
      %v907 = vld [vmem:[#allocation2 + $0x1c] sm:$0xf]
      %v908 = vld [vmem:[#allocation2 + $0x24] sm:$0xf]
      %v909 = vld [vmem:[#allocation2 + $0x28] sm:$0xf]
      %v910 = vld [vmem:[#allocation2 + $0x30] sm:$0xf]
      %v911 = vld [vmem:[#allocation2 + $0x34] sm:$0xf]
      %v912 = vld [vmem:[#allocation2 + $0x3c] sm:$0xf]
      %v913 = vld [vmem:[#allocation2 + $0x40] sm:$0xf]
      %v914 = vld [vmem:[#allocation2 + $0x48] sm:$0xf]
      %v915 = vld [vmem:[#allocation2 + $0x4c] sm:$0xf]
      %v916 = vld [vmem:[#allocation2 + $0x54] sm:$0xf]
      %v917 = vld [vmem:[#allocation2 + $0x58] sm:$0xf]
      %v918 = vld [vmem:[#allocation2 + $0x60] sm:$0xf]
      %v919 = vld [vmem:[#allocation2 + $0x64] sm:$0xf]
      %v920 = vld [vmem:[#allocation2 + $0x6c] sm:$0xf]
      %v921 = vld [vmem:[#allocation2 + $0x70] sm:$0xf]
      %v922 = vld [vmem:[#allocation2 + $0x78] sm:$0xf]
      %v923 = vld [vmem:[#allocation2 + $0x7c] sm:$0xf]
      %v924 = vld [vmem:[#allocation2 + $0x84] sm:$0xf]
      %v925 = vld [vmem:[#allocation2 + $0x88] sm:$0xf]
      %v926 = vld [vmem:[#allocation2 + $0x90] sm:$0xf]
      %v927 = vld [vmem:[#allocation2 + $0x94] sm:$0xf]
      %v928 = vld [vmem:[#allocation2 + $0x9c] sm:$0xf]
      %v929 = vld [vmem:[#allocation2 + $0xa0] sm:$0xf]
      %v930 = vld [vmem:[#allocation2 + $0xa8] sm:$0xf]
      %v931 = vld [vmem:[#allocation2 + $0xac] sm:$0xf]
      %v932 = vld [vmem:[#allocation2 + $0xb4] sm:$0xf]
      %v933 = vld [vmem:[#allocation2 + $0xb8] sm:$0xf]
      %v934 = vld [vmem:[%s1] sm:$0xf]
      %v935 = vld [vmem:[#allocation2 + $0x8] sm:$0x1]
      %v936 = vld [vmem:[#allocation2 + $0x14] sm:$0x1]
      %v937 = vld [vmem:[#allocation2 + $0x20] sm:$0x1]
      %v938 = vld [vmem:[#allocation2 + $0x2c] sm:$0x1]
      %v939 = vld [vmem:[#allocation2 + $0x38] sm:$0x1]
      %v940 = vld [vmem:[#allocation2 + $0x44] sm:$0x1]
      %v941 = vld [vmem:[#allocation2 + $0x50] sm:$0x1]
      %v942 = vld [vmem:[#allocation2 + $0x5c] sm:$0x1]
      %v943 = vld [vmem:[#allocation2 + $0x68] sm:$0x1]
      %v944 = vld [vmem:[#allocation2 + $0x74] sm:$0x1]
      %v945 = vld [vmem:[#allocation2 + $0x80] sm:$0x1]
      %v946 = vld [vmem:[#allocation2 + $0x8c] sm:$0x1]
      %v947 = vld [vmem:[#allocation2 + $0x98] sm:$0x1]
      %v948 = vld [vmem:[#allocation2 + $0xa4] sm:$0x1]
      %v949 = vld [vmem:[#allocation2 + $0xb0] sm:$0x1]
      %v950 = vld [vmem:[#allocation2 + $0xbc] sm:$0x1]
      %vm951 = vsmask.f32 3328
      %vm952 = vsmask.f32 7440
      %vm953 = vmor %vm951, %vm952
      %v955 = vshrl.u32 %v902, 16
      %v957 = vrot.slane %v955, 4
      %v958 = vshll.u32 %v902, 16
      %v960 = vrot.slane %v958, 5
      %v961 = vor.u32 %v957, %v960
      %v962 = vrot.slane %v961, 4
      %v964 = vshll.u32 %v903, 16
      %v966 = vrot.slane %v964, 5
      %v967 = vsel %vm953, %v962, %v966
      %v968 = vshrl.u32 %v903, 16
      %v970 = vrot.slane %v968, 4
      %v971 = vor.u32 %v970, %v966
      %v972 = vrot.slane %v971, 4
      %v974 = vshll.u32 %v935, 16
      %v976 = vrot.slane %v974, 5
      %v977 = vsel %vm953, %v972, %v976
      %v979 = vshrl.u32 %v904, 16
      %v981 = vrot.slane %v979, 4
      %v982 = vshll.u32 %v904, 16
      %v984 = vrot.slane %v982, 5
      %v985 = vor.u32 %v981, %v984
      %v986 = vrot.slane %v985, 4
      %v988 = vshll.u32 %v905, 16
      %v990 = vrot.slane %v988, 5
      %v991 = vsel %vm953, %v986, %v990
      %v992 = vshrl.u32 %v905, 16
      %v994 = vrot.slane %v992, 4
      %v995 = vor.u32 %v994, %v990
      %v996 = vrot.slane %v995, 4
      %v998 = vshll.u32 %v936, 16
      %v1000 = vrot.slane %v998, 5
      %v1001 = vsel %vm953, %v996, %v1000
      %v1003 = vshrl.u32 %v906, 16
      %v1005 = vrot.slane %v1003, 4
      %v1006 = vshll.u32 %v906, 16
      %v1008 = vrot.slane %v1006, 5
      %v1009 = vor.u32 %v1005, %v1008
      %v1010 = vrot.slane %v1009, 4
      %v1012 = vshll.u32 %v907, 16
      %v1014 = vrot.slane %v1012, 5
      %v1015 = vsel %vm953, %v1010, %v1014
      %v1016 = vshrl.u32 %v907, 16
      %v1018 = vrot.slane %v1016, 4
      %v1019 = vor.u32 %v1018, %v1014
      %v1020 = vrot.slane %v1019, 4
      %v1022 = vshll.u32 %v937, 16
      %v1024 = vrot.slane %v1022, 5
      %v1025 = vsel %vm953, %v1020, %v1024
      %v1027 = vshrl.u32 %v908, 16
      %v1029 = vrot.slane %v1027, 4
      %v1030 = vshll.u32 %v908, 16
      %v1032 = vrot.slane %v1030, 5
      %v1033 = vor.u32 %v1029, %v1032
      %v1034 = vrot.slane %v1033, 4
      %v1036 = vshll.u32 %v909, 16
      %v1038 = vrot.slane %v1036, 5
      %v1039 = vsel %vm953, %v1034, %v1038
      %v1040 = vshrl.u32 %v909, 16
      %v1042 = vrot.slane %v1040, 4
      %v1043 = vor.u32 %v1042, %v1038
      %v1044 = vrot.slane %v1043, 4
      %v1046 = vshll.u32 %v938, 16
      %v1048 = vrot.slane %v1046, 5
      %v1049 = vsel %vm953, %v1044, %v1048
      %v1051 = vshrl.u32 %v910, 16
      %v1053 = vrot.slane %v1051, 4
      %v1054 = vshll.u32 %v910, 16
      %v1056 = vrot.slane %v1054, 5
      %v1057 = vor.u32 %v1053, %v1056
      %v1058 = vrot.slane %v1057, 4
      %v1060 = vshll.u32 %v911, 16
      %v1062 = vrot.slane %v1060, 5
      %v1063 = vsel %vm953, %v1058, %v1062
      %v1064 = vshrl.u32 %v911, 16
      %v1066 = vrot.slane %v1064, 4
      %v1067 = vor.u32 %v1066, %v1062
      %v1068 = vrot.slane %v1067, 4
      %v1070 = vshll.u32 %v939, 16
      %v1072 = vrot.slane %v1070, 5
      %v1073 = vsel %vm953, %v1068, %v1072
      %v1075 = vshrl.u32 %v912, 16
      %v1077 = vrot.slane %v1075, 4
      %v1078 = vshll.u32 %v912, 16
      %v1080 = vrot.slane %v1078, 5
      %v1081 = vor.u32 %v1077, %v1080
      %v1082 = vrot.slane %v1081, 4
      %v1084 = vshll.u32 %v913, 16
      %v1086 = vrot.slane %v1084, 5
      %v1087 = vsel %vm953, %v1082, %v1086
      %v1088 = vshrl.u32 %v913, 16
      %v1090 = vrot.slane %v1088, 4
      %v1091 = vor.u32 %v1090, %v1086
      %v1092 = vrot.slane %v1091, 4
      %v1094 = vshll.u32 %v940, 16
      %v1096 = vrot.slane %v1094, 5
      %v1097 = vsel %vm953, %v1092, %v1096
      %v1099 = vshrl.u32 %v914, 16
      %v1101 = vrot.slane %v1099, 4
      %v1102 = vshll.u32 %v914, 16
      %v1104 = vrot.slane %v1102, 5
      %v1105 = vor.u32 %v1101, %v1104
      %v1106 = vrot.slane %v1105, 4
      %v1108 = vshll.u32 %v915, 16
      %v1110 = vrot.slane %v1108, 5
      %v1111 = vsel %vm953, %v1106, %v1110
      %v1112 = vshrl.u32 %v915, 16
      %v1114 = vrot.slane %v1112, 4
      %v1115 = vor.u32 %v1114, %v1110
      %v1116 = vrot.slane %v1115, 4
      %v1118 = vshll.u32 %v941, 16
      %v1120 = vrot.slane %v1118, 5
      %v1121 = vsel %vm953, %v1116, %v1120
      %v1123 = vshrl.u32 %v916, 16
      %v1125 = vrot.slane %v1123, 4
      %v1126 = vshll.u32 %v916, 16
      %v1128 = vrot.slane %v1126, 5
      %v1129 = vor.u32 %v1125, %v1128
      %v1130 = vrot.slane %v1129, 4
      %v1132 = vshll.u32 %v917, 16
      %v1134 = vrot.slane %v1132, 5
      %v1135 = vsel %vm953, %v1130, %v1134
      %v1136 = vshrl.u32 %v917, 16
      %v1138 = vrot.slane %v1136, 4
      %v1139 = vor.u32 %v1138, %v1134
      %v1140 = vrot.slane %v1139, 4
      %v1142 = vshll.u32 %v942, 16
      %v1144 = vrot.slane %v1142, 5
      %v1145 = vsel %vm953, %v1140, %v1144
      %v1147 = vshrl.u32 %v918, 16
      %v1149 = vrot.slane %v1147, 4
      %v1150 = vshll.u32 %v918, 16
      %v1152 = vrot.slane %v1150, 5
      %v1153 = vor.u32 %v1149, %v1152
      %v1154 = vrot.slane %v1153, 4
      %v1156 = vshll.u32 %v919, 16
      %v1158 = vrot.slane %v1156, 5
      %v1159 = vsel %vm953, %v1154, %v1158
      %v1160 = vshrl.u32 %v919, 16
      %v1162 = vrot.slane %v1160, 4
      %v1163 = vor.u32 %v1162, %v1158
      %v1164 = vrot.slane %v1163, 4
      %v1166 = vshll.u32 %v943, 16
      %v1168 = vrot.slane %v1166, 5
      %v1169 = vsel %vm953, %v1164, %v1168
      %v1171 = vshrl.u32 %v920, 16
      %v1173 = vrot.slane %v1171, 4
      %v1174 = vshll.u32 %v920, 16
      %v1176 = vrot.slane %v1174, 5
      %v1177 = vor.u32 %v1173, %v1176
      %v1178 = vrot.slane %v1177, 4
      %v1180 = vshll.u32 %v921, 16
      %v1182 = vrot.slane %v1180, 5
      %v1183 = vsel %vm953, %v1178, %v1182
      %v1184 = vshrl.u32 %v921, 16
      %v1186 = vrot.slane %v1184, 4
      %v1187 = vor.u32 %v1186, %v1182
      %v1188 = vrot.slane %v1187, 4
      %v1190 = vshll.u32 %v944, 16
      %v1192 = vrot.slane %v1190, 5
      %v1193 = vsel %vm953, %v1188, %v1192
      %v1195 = vshrl.u32 %v922, 16
      %v1197 = vrot.slane %v1195, 4
      %v1198 = vshll.u32 %v922, 16
      %v1200 = vrot.slane %v1198, 5
      %v1201 = vor.u32 %v1197, %v1200
      %v1202 = vrot.slane %v1201, 4
      %v1204 = vshll.u32 %v923, 16
      %v1206 = vrot.slane %v1204, 5
      %v1207 = vsel %vm953, %v1202, %v1206
      %v1208 = vshrl.u32 %v923, 16
      %v1210 = vrot.slane %v1208, 4
      %v1211 = vor.u32 %v1210, %v1206
      %v1212 = vrot.slane %v1211, 4
      %v1214 = vshll.u32 %v945, 16
      %v1216 = vrot.slane %v1214, 5
      %v1217 = vsel %vm953, %v1212, %v1216
      %v1219 = vshrl.u32 %v924, 16
      %v1221 = vrot.slane %v1219, 4
      %v1222 = vshll.u32 %v924, 16
      %v1224 = vrot.slane %v1222, 5
      %v1225 = vor.u32 %v1221, %v1224
      %v1226 = vrot.slane %v1225, 4
      %v1228 = vshll.u32 %v925, 16
      %v1230 = vrot.slane %v1228, 5
      %v1231 = vsel %vm953, %v1226, %v1230
      %v1232 = vshrl.u32 %v925, 16
      %v1234 = vrot.slane %v1232, 4
      %v1235 = vor.u32 %v1234, %v1230
      %v1236 = vrot.slane %v1235, 4
      %v1238 = vshll.u32 %v946, 16
      %v1240 = vrot.slane %v1238, 5
      %v1241 = vsel %vm953, %v1236, %v1240
      %v1243 = vshrl.u32 %v926, 16
      %v1245 = vrot.slane %v1243, 4
      %v1246 = vshll.u32 %v926, 16
      %v1248 = vrot.slane %v1246, 5
      %v1249 = vor.u32 %v1245, %v1248
      %v1250 = vrot.slane %v1249, 4
      %v1252 = vshll.u32 %v927, 16
      %v1254 = vrot.slane %v1252, 5
      %v1255 = vsel %vm953, %v1250, %v1254
      %v1256 = vshrl.u32 %v927, 16
      %v1258 = vrot.slane %v1256, 4
      %v1259 = vor.u32 %v1258, %v1254
      %v1260 = vrot.slane %v1259, 4
      %v1262 = vshll.u32 %v947, 16
      %v1264 = vrot.slane %v1262, 5
      %v1265 = vsel %vm953, %v1260, %v1264
      %v1267 = vshrl.u32 %v928, 16
      %v1269 = vrot.slane %v1267, 4
      %v1270 = vshll.u32 %v928, 16
      %v1272 = vrot.slane %v1270, 5
      %v1273 = vor.u32 %v1269, %v1272
      %v1274 = vrot.slane %v1273, 4
      %v1276 = vshll.u32 %v929, 16
      %v1278 = vrot.slane %v1276, 5
      %v1279 = vsel %vm953, %v1274, %v1278
      %v1280 = vshrl.u32 %v929, 16
      %v1282 = vrot.slane %v1280, 4
      %v1283 = vor.u32 %v1282, %v1278
      %v1284 = vrot.slane %v1283, 4
      %v1286 = vshll.u32 %v948, 16
      %v1288 = vrot.slane %v1286, 5
      %v1289 = vsel %vm953, %v1284, %v1288
      %v1291 = vshrl.u32 %v930, 16
      %v1293 = vrot.slane %v1291, 4
      %v1294 = vshll.u32 %v930, 16
      %v1296 = vrot.slane %v1294, 5
      %v1297 = vor.u32 %v1293, %v1296
      %v1298 = vrot.slane %v1297, 4
      %v1300 = vshll.u32 %v931, 16
      %v1302 = vrot.slane %v1300, 5
      %v1303 = vsel %vm953, %v1298, %v1302
      %v1304 = vshrl.u32 %v931, 16
      %v1306 = vrot.slane %v1304, 4
      %v1307 = vor.u32 %v1306, %v1302
      %v1308 = vrot.slane %v1307, 4
      %v1310 = vshll.u32 %v949, 16
      %v1312 = vrot.slane %v1310, 5
      %v1313 = vsel %vm953, %v1308, %v1312
      %v1315 = vshrl.u32 %v932, 16
      %v1317 = vrot.slane %v1315, 4
      %v1318 = vshll.u32 %v932, 16
      %v1320 = vrot.slane %v1318, 5
      %v1321 = vor.u32 %v1317, %v1320
      %v1322 = vrot.slane %v1321, 4
      %v1324 = vshll.u32 %v933, 16
      %v1326 = vrot.slane %v1324, 5
      %v1327 = vsel %vm953, %v1322, %v1326
      %v1328 = vshrl.u32 %v933, 16
      %v1330 = vrot.slane %v1328, 4
      %v1331 = vor.u32 %v1330, %v1326
      %v1332 = vrot.slane %v1331, 4
      %v1334 = vshll.u32 %v950, 16
      %v1336 = vrot.slane %v1334, 5
      %v1337 = vsel %vm953, %v1332, %v1336
      %s1338 = scalar_lea.vmem %s1, 4
      %v1339 = vld [vmem:[%s1338] sm:$0xf]
      %v1340 = vunpack.c.l.b16 %v967
      %v1341 = vunpack.c.l.b16 %v977
      %v1342 = vunpack.c.l.b16 %v991
      %v1343 = vunpack.c.l.b16 %v1001
      %v1344 = vunpack.c.l.b16 %v1015
      %v1345 = vunpack.c.l.b16 %v1025
      %v1346 = vunpack.c.l.b16 %v1039
      %v1347 = vunpack.c.l.b16 %v1049
      %v1348 = vunpack.c.l.b16 %v1063
      %v1349 = vunpack.c.l.b16 %v1073
      %v1350 = vunpack.c.l.b16 %v1087
      %v1351 = vunpack.c.l.b16 %v1097
      %v1352 = vunpack.c.l.b16 %v1111
      %v1353 = vunpack.c.l.b16 %v1121
      %v1354 = vunpack.c.l.b16 %v1135
      %v1355 = vunpack.c.l.b16 %v1145
      %v1356 = vunpack.c.l.b16 %v1159
      %v1357 = vunpack.c.l.b16 %v1169
      %v1358 = vunpack.c.l.b16 %v1183
      %v1359 = vunpack.c.l.b16 %v1193
      %v1360 = vunpack.c.l.b16 %v1207
      %v1361 = vunpack.c.l.b16 %v1217
      %v1362 = vunpack.c.l.b16 %v1231
      %v1363 = vunpack.c.l.b16 %v1241
      %v1364 = vunpack.c.l.b16 %v1255
      %v1365 = vunpack.c.l.b16 %v1265
      %v1366 = vunpack.c.l.b16 %v1279
      %v1367 = vunpack.c.l.b16 %v1289
      %v1368 = vunpack.c.l.b16 %v1303
      %v1369 = vunpack.c.l.b16 %v1313
      %v1370 = vunpack.c.l.b16 %v1327
      %v1371 = vunpack.c.l.b16 %v1337
      %v1372 = vpack.c.b16 %v1341, %v1340
      %v1373 = vpack.c.b16 %v1343, %v1342
      %v1374 = vpack.c.b16 %v1345, %v1344
      %v1375 = vpack.c.b16 %v1347, %v1346
      %v1376 = vpack.c.b16 %v1349, %v1348
      %v1377 = vpack.c.b16 %v1351, %v1350
      %v1378 = vpack.c.b16 %v1353, %v1352
      %v1379 = vpack.c.b16 %v1355, %v1354
      %v1380 = vpack.c.b16 %v1357, %v1356
      %v1381 = vpack.c.b16 %v1359, %v1358
      %v1382 = vpack.c.b16 %v1361, %v1360
      %v1383 = vpack.c.b16 %v1363, %v1362
      %v1384 = vpack.c.b16 %v1365, %v1364
      %v1385 = vpack.c.b16 %v1367, %v1366
      %v1386 = vpack.c.b16 %v1369, %v1368
      %v1387 = vpack.c.b16 %v1371, %v1370
      %vm1388 = vcmask 64512
      %v1390 = vsel %vm1388, %v1372, 0
      %v1393 = vsel %vm1388, %v1373, 0
      %v1396 = vsel %vm1388, %v1374, 0
      %v1399 = vsel %vm1388, %v1375, 0
      %v1402 = vsel %vm1388, %v1376, 0
      %v1405 = vsel %vm1388, %v1377, 0
      %v1408 = vsel %vm1388, %v1378, 0
      %v1411 = vsel %vm1388, %v1379, 0
      %v1414 = vsel %vm1388, %v1380, 0
      %v1417 = vsel %vm1388, %v1381, 0
      %v1420 = vsel %vm1388, %v1382, 0
      %v1423 = vsel %vm1388, %v1383, 0
      %v1426 = vsel %vm1388, %v1384, 0
      %v1429 = vsel %vm1388, %v1385, 0
      %v1432 = vsel %vm1388, %v1386, 0
      %v1435 = vsel %vm1388, %v1387, 0
      %vm1437 = vcmask 1043456
      %v1439 = vsel %vm1437, %v1339, 0
      %1441 = vmatprep.subr.bf16.mxu0 0
      %1442 = vmatpush1.bf16.msra.mxu0 %v1439
      %1443 = vmatprep.subr.bf16.mxu0 0
      %1444 = vmatpush1.bf16.msra.mxu0 0
      %1445 = vmatprep.subr.bf16.mxu0 0
      %1446 = vmatpush1.bf16.msra.mxu0 0
      %1447 = vmatprep.subr.bf16.mxu0 0
      %1448 = vmatpush1.bf16.msra.mxu0 0
      %1449 = vmatprep.subr.bf16.mxu0 0
      %1450 = vmatpush1.bf16.msra.mxu0 0
      %1451 = vmatprep.subr.bf16.mxu0 0
      %1452 = vmatpush1.bf16.msra.mxu0 0
      %1453 = vmatprep.subr.bf16.mxu0 0
      %1454 = vmatpush1.bf16.msra.mxu0 0
      %1455 = vmatprep.subr.bf16.mxu0 0
      %1456 = vmatpush1.bf16.msra.mxu0 0
      %1457 = vmatprep.subr.bf16.mxu0 0
      %1458 = vmatpush1.bf16.msra.mxu0 0
      %1459 = vmatprep.subr.bf16.mxu0 0
      %1460 = vmatpush1.bf16.msra.mxu0 0
      %1461 = vmatprep.subr.bf16.mxu0 0
      %1462 = vmatpush1.bf16.msra.mxu0 0
      %1463 = vmatprep.subr.bf16.mxu0 0
      %1464 = vmatpush1.bf16.msra.mxu0 0
      %1465 = vmatprep.subr.bf16.mxu0 0
      %1466 = vmatpush1.bf16.msra.mxu0 0
      %1467 = vmatprep.subr.bf16.mxu0 0
      %1468 = vmatpush1.bf16.msra.mxu0 0
      %1469 = vmatprep.subr.bf16.mxu0 0
      %1470 = vmatpush1.bf16.msra.mxu0 0
      %1471 = vmatprep.subr.bf16.mxu0 0
      %1472 = vmatpush1.bf16.msra.mxu0 0
      %1473 = vmatprep.mubr.bf16.mxu0 0
      %1474 = vmatmul.mubr.bf16.gmra.mrb[0].mxu0 %v1390
      %v1475 = vpop.f32.mrb[0].mxu0
      %v1476 = vadd.f32 0.0, %v1475
      %v1477 = vpop.f32.mrb[0].mxu0
      %v1478 = vpop.f32.mrb[0].mxu0
      %v1479 = vadd.f32 0.0, %v1478
      %v1480 = vpop.f32.mrb[0].mxu0
      %1481 = vmatprep.mubr.bf16.mxu0 0
      %1482 = vmatmul.mubr.bf16.gmra.mrb[0].mxu0 %v1393
      %v1483 = vpop.f32.mrb[0].mxu0
      %v1484 = vadd.f32 0.0, %v1483
      %v1485 = vpop.f32.mrb[0].mxu0
      %v1486 = vpop.f32.mrb[0].mxu0
      %v1487 = vadd.f32 0.0, %v1486
      %v1488 = vpop.f32.mrb[0].mxu0
      %1489 = vmatprep.mubr.bf16.mxu0 0
      %1490 = vmatmul.mubr.bf16.gmra.mrb[0].mxu0 %v1396
      %v1491 = vpop.f32.mrb[0].mxu0
      %v1492 = vadd.f32 0.0, %v1491
      %v1493 = vpop.f32.mrb[0].mxu0
      %v1494 = vpop.f32.mrb[0].mxu0
      %v1495 = vadd.f32 0.0, %v1494
      %v1496 = vpop.f32.mrb[0].mxu0
      %1497 = vmatprep.mubr.bf16.mxu0 0
      %1498 = vmatmul.mubr.bf16.gmra.mrb[0].mxu0 %v1399
      %v1499 = vpop.f32.mrb[0].mxu0
      %v1500 = vadd.f32 0.0, %v1499
      %v1501 = vpop.f32.mrb[0].mxu0
      %v1502 = vpop.f32.mrb[0].mxu0
      %v1503 = vadd.f32 0.0, %v1502
      %v1504 = vpop.f32.mrb[0].mxu0
      %1505 = vmatprep.mubr.bf16.mxu0 0
      %1506 = vmatmul.mubr.bf16.gmra.mrb[0].mxu0 %v1402
      %v1507 = vpop.f32.mrb[0].mxu0
      %v1508 = vadd.f32 0.0, %v1507
      %v1509 = vpop.f32.mrb[0].mxu0
      %v1510 = vpop.f32.mrb[0].mxu0
      %v1511 = vadd.f32 0.0, %v1510
      %v1512 = vpop.f32.mrb[0].mxu0
      %1513 = vmatprep.mubr.bf16.mxu0 0
      %1514 = vmatmul.mubr.bf16.gmra.mrb[0].mxu0 %v1405
      %v1515 = vpop.f32.mrb[0].mxu0
      %v1516 = vadd.f32 0.0, %v1515
      %v1517 = vpop.f32.mrb[0].mxu0
      %v1518 = vpop.f32.mrb[0].mxu0
      %v1519 = vadd.f32 0.0, %v1518
      %v1520 = vpop.f32.mrb[0].mxu0
      %1521 = vmatprep.mubr.bf16.mxu0 0
      %1522 = vmatmul.mubr.bf16.gmra.mrb[0].mxu0 %v1408
      %v1523 = vpop.f32.mrb[0].mxu0
      %v1524 = vadd.f32 0.0, %v1523
      %v1525 = vpop.f32.mrb[0].mxu0
      %v1526 = vpop.f32.mrb[0].mxu0
      %v1527 = vadd.f32 0.0, %v1526
      %v1528 = vpop.f32.mrb[0].mxu0
      %1529 = vmatprep.mubr.bf16.mxu0 0
      %1530 = vmatmul.mubr.bf16.gmra.mrb[0].mxu0 %v1411
      %v1531 = vpop.f32.mrb[0].mxu0
      %v1532 = vadd.f32 0.0, %v1531
      %v1533 = vpop.f32.mrb[0].mxu0
      %v1534 = vpop.f32.mrb[0].mxu0
      %v1535 = vadd.f32 0.0, %v1534
      %v1536 = vpop.f32.mrb[0].mxu0
      %1537 = vmatprep.mubr.bf16.mxu0 0
      %1538 = vmatmul.mubr.bf16.gmra.mrb[0].mxu0 %v1414
      %v1539 = vpop.f32.mrb[0].mxu0
      %v1540 = vadd.f32 0.0, %v1539
      %v1541 = vpop.f32.mrb[0].mxu0
      %v1542 = vpop.f32.mrb[0].mxu0
      %v1543 = vadd.f32 0.0, %v1542
      %v1544 = vpop.f32.mrb[0].mxu0
      %1545 = vmatprep.mubr.bf16.mxu0 0
      %1546 = vmatmul.mubr.bf16.gmra.mrb[0].mxu0 %v1417
      %v1547 = vpop.f32.mrb[0].mxu0
      %v1548 = vadd.f32 0.0, %v1547
      %v1549 = vpop.f32.mrb[0].mxu0
      %v1550 = vpop.f32.mrb[0].mxu0
      %v1551 = vadd.f32 0.0, %v1550
      %v1552 = vpop.f32.mrb[0].mxu0
      %1553 = vmatprep.mubr.bf16.mxu0 0
      %1554 = vmatmul.mubr.bf16.gmra.mrb[0].mxu0 %v1420
      %v1555 = vpop.f32.mrb[0].mxu0
      %v1556 = vadd.f32 0.0, %v1555
      %v1557 = vpop.f32.mrb[0].mxu0
      %v1558 = vpop.f32.mrb[0].mxu0
      %v1559 = vadd.f32 0.0, %v1558
      %v1560 = vpop.f32.mrb[0].mxu0
      %1561 = vmatprep.mubr.bf16.mxu0 0
      %1562 = vmatmul.mubr.bf16.gmra.mrb[0].mxu0 %v1423
      %v1563 = vpop.f32.mrb[0].mxu0
      %v1564 = vadd.f32 0.0, %v1563
      %v1565 = vpop.f32.mrb[0].mxu0
      %v1566 = vpop.f32.mrb[0].mxu0
      %v1567 = vadd.f32 0.0, %v1566
      %v1568 = vpop.f32.mrb[0].mxu0
      %1569 = vmatprep.mubr.bf16.mxu0 0
      %1570 = vmatmul.mubr.bf16.gmra.mrb[0].mxu0 %v1426
      %v1571 = vpop.f32.mrb[0].mxu0
      %v1572 = vadd.f32 0.0, %v1571
      %v1573 = vpop.f32.mrb[0].mxu0
      %v1574 = vpop.f32.mrb[0].mxu0
      %v1575 = vadd.f32 0.0, %v1574
      %v1576 = vpop.f32.mrb[0].mxu0
      %1577 = vmatprep.mubr.bf16.mxu0 0
      %1578 = vmatmul.mubr.bf16.gmra.mrb[0].mxu0 %v1429
      %v1579 = vpop.f32.mrb[0].mxu0
      %v1580 = vadd.f32 0.0, %v1579
      %v1581 = vpop.f32.mrb[0].mxu0
      %v1582 = vpop.f32.mrb[0].mxu0
      %v1583 = vadd.f32 0.0, %v1582
      %v1584 = vpop.f32.mrb[0].mxu0
      %1585 = vmatprep.mubr.bf16.mxu0 0
      %1586 = vmatmul.mubr.bf16.gmra.mrb[0].mxu0 %v1432
      %v1587 = vpop.f32.mrb[0].mxu0
      %v1588 = vadd.f32 0.0, %v1587
      %v1589 = vpop.f32.mrb[0].mxu0
      %v1590 = vpop.f32.mrb[0].mxu0
      %v1591 = vadd.f32 0.0, %v1590
      %v1592 = vpop.f32.mrb[0].mxu0
      %1593 = vmatprep.mubr.bf16.mxu0 0
      %1594 = vmatmul.mubr.bf16.gmra.mrb[0].mxu0 %v1435
      %v1595 = vpop.f32.mrb[0].mxu0
      %v1596 = vadd.f32 0.0, %v1595
      %v1597 = vpop.f32.mrb[0].mxu0
      %v1598 = vpop.f32.mrb[0].mxu0
      %v1599 = vadd.f32 0.0, %v1598
      %v1600 = vpop.f32.mrb[0].mxu0
      %1601 = vdwg.mxu0
      %v1634 = vunpack.c.l.b16 %v902
      %v1635 = vunpack.c.l.b16 %v903
      %v1636 = vunpack.c.l.b16 %v904
      %v1637 = vunpack.c.l.b16 %v905
      %v1638 = vunpack.c.l.b16 %v906
      %v1639 = vunpack.c.l.b16 %v907
      %v1640 = vunpack.c.l.b16 %v908
      %v1641 = vunpack.c.l.b16 %v909
      %v1642 = vunpack.c.l.b16 %v910
      %v1643 = vunpack.c.l.b16 %v911
      %v1644 = vunpack.c.l.b16 %v912
      %v1645 = vunpack.c.l.b16 %v913
      %v1646 = vunpack.c.l.b16 %v914
      %v1647 = vunpack.c.l.b16 %v915
      %v1648 = vunpack.c.l.b16 %v916
      %v1649 = vunpack.c.l.b16 %v917
      %v1650 = vunpack.c.l.b16 %v918
      %v1651 = vunpack.c.l.b16 %v919
      %v1652 = vunpack.c.l.b16 %v920
      %v1653 = vunpack.c.l.b16 %v921
      %v1654 = vunpack.c.l.b16 %v922
      %v1655 = vunpack.c.l.b16 %v923
      %v1656 = vunpack.c.l.b16 %v924
      %v1657 = vunpack.c.l.b16 %v925
      %v1658 = vunpack.c.l.b16 %v926
      %v1659 = vunpack.c.l.b16 %v927
      %v1660 = vunpack.c.l.b16 %v928
      %v1661 = vunpack.c.l.b16 %v929
      %v1662 = vunpack.c.l.b16 %v930
      %v1663 = vunpack.c.l.b16 %v931
      %v1664 = vunpack.c.l.b16 %v932
      %v1665 = vunpack.c.l.b16 %v933
      %v1666 = vpack.c.b16 %v1635, %v1634
      %v1667 = vpack.c.b16 %v1637, %v1636
      %v1668 = vpack.c.b16 %v1639, %v1638
      %v1669 = vpack.c.b16 %v1641, %v1640
      %v1670 = vpack.c.b16 %v1643, %v1642
      %v1671 = vpack.c.b16 %v1645, %v1644
      %v1672 = vpack.c.b16 %v1647, %v1646
      %v1673 = vpack.c.b16 %v1649, %v1648
      %v1674 = vpack.c.b16 %v1651, %v1650
      %v1675 = vpack.c.b16 %v1653, %v1652
      %v1676 = vpack.c.b16 %v1655, %v1654
      %v1677 = vpack.c.b16 %v1657, %v1656
      %v1678 = vpack.c.b16 %v1659, %v1658
      %v1679 = vpack.c.b16 %v1661, %v1660
      %v1680 = vpack.c.b16 %v1663, %v1662
      %v1681 = vpack.c.b16 %v1665, %v1664
      %v1683 = vsel %vm1388, %v1666, 0
      %v1686 = vsel %vm1388, %v1667, 0
      %v1689 = vsel %vm1388, %v1668, 0
      %v1692 = vsel %vm1388, %v1669, 0
      %v1695 = vsel %vm1388, %v1670, 0
      %v1698 = vsel %vm1388, %v1671, 0
      %v1701 = vsel %vm1388, %v1672, 0
      %v1704 = vsel %vm1388, %v1673, 0
      %v1707 = vsel %vm1388, %v1674, 0
      %v1710 = vsel %vm1388, %v1675, 0
      %v1713 = vsel %vm1388, %v1676, 0
      %v1716 = vsel %vm1388, %v1677, 0
      %v1719 = vsel %vm1388, %v1678, 0
      %v1722 = vsel %vm1388, %v1679, 0
      %v1725 = vsel %vm1388, %v1680, 0
      %v1728 = vsel %vm1388, %v1681, 0
      %v1731 = vsel %vm1437, %v934, 0
      %1733 = vmatprep.subr.bf16.mxu0 0
      %1734 = vmatpush1.bf16.msra.mxu0 %v1731
      %1735 = vmatprep.subr.bf16.mxu0 0
      %1736 = vmatpush1.bf16.msra.mxu0 0
      %1737 = vmatprep.subr.bf16.mxu0 0
      %1738 = vmatpush1.bf16.msra.mxu0 0
      %1739 = vmatprep.subr.bf16.mxu0 0
      %1740 = vmatpush1.bf16.msra.mxu0 0
      %1741 = vmatprep.subr.bf16.mxu0 0
      %1742 = vmatpush1.bf16.msra.mxu0 0
      %1743 = vmatprep.subr.bf16.mxu0 0
      %1744 = vmatpush1.bf16.msra.mxu0 0
      %1745 = vmatprep.subr.bf16.mxu0 0
      %1746 = vmatpush1.bf16.msra.mxu0 0
      %1747 = vmatprep.subr.bf16.mxu0 0
      %1748 = vmatpush1.bf16.msra.mxu0 0
      %1749 = vmatprep.subr.bf16.mxu0 0
      %1750 = vmatpush1.bf16.msra.mxu0 0
      %1751 = vmatprep.subr.bf16.mxu0 0
      %1752 = vmatpush1.bf16.msra.mxu0 0
      %1753 = vmatprep.subr.bf16.mxu0 0
      %1754 = vmatpush1.bf16.msra.mxu0 0
      %1755 = vmatprep.subr.bf16.mxu0 0
      %1756 = vmatpush1.bf16.msra.mxu0 0
      %1757 = vmatprep.subr.bf16.mxu0 0
      %1758 = vmatpush1.bf16.msra.mxu0 0
      %1759 = vmatprep.subr.bf16.mxu0 0
      %1760 = vmatpush1.bf16.msra.mxu0 0
      %1761 = vmatprep.subr.bf16.mxu0 0
      %1762 = vmatpush1.bf16.msra.mxu0 0
      %1763 = vmatprep.subr.bf16.mxu0 0
      %1764 = vmatpush1.bf16.msra.mxu0 0
      %1765 = vmatprep.mubr.bf16.mxu0 0
      %1766 = vmatmul.mubr.bf16.gmra.mrb[0].mxu0 %v1683
      %v1767 = vpop.f32.mrb[0].mxu0
      %v1768 = vadd.f32 %v1476, %v1767
      %v1769 = vpop.f32.mrb[0].mxu0
      %v1770 = vpop.f32.mrb[0].mxu0
      %v1771 = vadd.f32 %v1479, %v1770
      %v1772 = vpop.f32.mrb[0].mxu0
      %1773 = vmatprep.mubr.bf16.mxu0 0
      %1774 = vmatmul.mubr.bf16.gmra.mrb[0].mxu0 %v1686
      %v1775 = vpop.f32.mrb[0].mxu0
      %v1776 = vadd.f32 %v1484, %v1775
      %v1777 = vpop.f32.mrb[0].mxu0
      %v1778 = vpop.f32.mrb[0].mxu0
      %v1779 = vadd.f32 %v1487, %v1778
      %v1780 = vpop.f32.mrb[0].mxu0
      %1781 = vmatprep.mubr.bf16.mxu0 0
      %1782 = vmatmul.mubr.bf16.gmra.mrb[0].mxu0 %v1689
      %v1783 = vpop.f32.mrb[0].mxu0
      %v1784 = vadd.f32 %v1492, %v1783
      %v1785 = vpop.f32.mrb[0].mxu0
      %v1786 = vpop.f32.mrb[0].mxu0
      %v1787 = vadd.f32 %v1495, %v1786
      %v1788 = vpop.f32.mrb[0].mxu0
      %1789 = vmatprep.mubr.bf16.mxu0 0
      %1790 = vmatmul.mubr.bf16.gmra.mrb[0].mxu0 %v1692
      %v1791 = vpop.f32.mrb[0].mxu0
      %v1792 = vadd.f32 %v1500, %v1791
      %v1793 = vpop.f32.mrb[0].mxu0
      %v1794 = vpop.f32.mrb[0].mxu0
      %v1795 = vadd.f32 %v1503, %v1794
      %v1796 = vpop.f32.mrb[0].mxu0
      %1797 = vmatprep.mubr.bf16.mxu0 0
      %1798 = vmatmul.mubr.bf16.gmra.mrb[0].mxu0 %v1695
      %v1799 = vpop.f32.mrb[0].mxu0
      %v1800 = vadd.f32 %v1508, %v1799
      %v1801 = vpop.f32.mrb[0].mxu0
      %v1802 = vpop.f32.mrb[0].mxu0
      %v1803 = vadd.f32 %v1511, %v1802
      %v1804 = vpop.f32.mrb[0].mxu0
      %1805 = vmatprep.mubr.bf16.mxu0 0
      %1806 = vmatmul.mubr.bf16.gmra.mrb[0].mxu0 %v1698
      %v1807 = vpop.f32.mrb[0].mxu0
      %v1808 = vadd.f32 %v1516, %v1807
      %v1809 = vpop.f32.mrb[0].mxu0
      %v1810 = vpop.f32.mrb[0].mxu0
      %v1811 = vadd.f32 %v1519, %v1810
      %v1812 = vpop.f32.mrb[0].mxu0
      %1813 = vmatprep.mubr.bf16.mxu0 0
      %1814 = vmatmul.mubr.bf16.gmra.mrb[0].mxu0 %v1701
      %v1815 = vpop.f32.mrb[0].mxu0
      %v1816 = vadd.f32 %v1524, %v1815
      %v1817 = vpop.f32.mrb[0].mxu0
      %v1818 = vpop.f32.mrb[0].mxu0
      %v1819 = vadd.f32 %v1527, %v1818
      %v1820 = vpop.f32.mrb[0].mxu0
      %1821 = vmatprep.mubr.bf16.mxu0 0
      %1822 = vmatmul.mubr.bf16.gmra.mrb[0].mxu0 %v1704
      %v1823 = vpop.f32.mrb[0].mxu0
      %v1824 = vadd.f32 %v1532, %v1823
      %v1825 = vpop.f32.mrb[0].mxu0
      %v1826 = vpop.f32.mrb[0].mxu0
      %v1827 = vadd.f32 %v1535, %v1826
      %v1828 = vpop.f32.mrb[0].mxu0
      %1829 = vmatprep.mubr.bf16.mxu0 0
      %1830 = vmatmul.mubr.bf16.gmra.mrb[0].mxu0 %v1707
      %v1831 = vpop.f32.mrb[0].mxu0
      %v1832 = vadd.f32 %v1540, %v1831
      %v1833 = vpop.f32.mrb[0].mxu0
      %v1834 = vpop.f32.mrb[0].mxu0
      %v1835 = vadd.f32 %v1543, %v1834
      %v1836 = vpop.f32.mrb[0].mxu0
      %1837 = vmatprep.mubr.bf16.mxu0 0
      %1838 = vmatmul.mubr.bf16.gmra.mrb[0].mxu0 %v1710
      %v1839 = vpop.f32.mrb[0].mxu0
      %v1840 = vadd.f32 %v1548, %v1839
      %v1841 = vpop.f32.mrb[0].mxu0
      %v1842 = vpop.f32.mrb[0].mxu0
      %v1843 = vadd.f32 %v1551, %v1842
      %v1844 = vpop.f32.mrb[0].mxu0
      %1845 = vmatprep.mubr.bf16.mxu0 0
      %1846 = vmatmul.mubr.bf16.gmra.mrb[0].mxu0 %v1713
      %v1847 = vpop.f32.mrb[0].mxu0
      %v1848 = vadd.f32 %v1556, %v1847
      %v1849 = vpop.f32.mrb[0].mxu0
      %v1850 = vpop.f32.mrb[0].mxu0
      %v1851 = vadd.f32 %v1559, %v1850
      %v1852 = vpop.f32.mrb[0].mxu0
      %1853 = vmatprep.mubr.bf16.mxu0 0
      %1854 = vmatmul.mubr.bf16.gmra.mrb[0].mxu0 %v1716
      %v1855 = vpop.f32.mrb[0].mxu0
      %v1856 = vadd.f32 %v1564, %v1855
      %v1857 = vpop.f32.mrb[0].mxu0
      %v1858 = vpop.f32.mrb[0].mxu0
      %v1859 = vadd.f32 %v1567, %v1858
      %v1860 = vpop.f32.mrb[0].mxu0
      %1861 = vmatprep.mubr.bf16.mxu0 0
      %1862 = vmatmul.mubr.bf16.gmra.mrb[0].mxu0 %v1719
      %v1863 = vpop.f32.mrb[0].mxu0
      %v1864 = vadd.f32 %v1572, %v1863
      %v1865 = vpop.f32.mrb[0].mxu0
      %v1866 = vpop.f32.mrb[0].mxu0
      %v1867 = vadd.f32 %v1575, %v1866
      %v1868 = vpop.f32.mrb[0].mxu0
      %1869 = vmatprep.mubr.bf16.mxu0 0
      %1870 = vmatmul.mubr.bf16.gmra.mrb[0].mxu0 %v1722
      %v1871 = vpop.f32.mrb[0].mxu0
      %v1872 = vadd.f32 %v1580, %v1871
      %v1873 = vpop.f32.mrb[0].mxu0
      %v1874 = vpop.f32.mrb[0].mxu0
      %v1875 = vadd.f32 %v1583, %v1874
      %v1876 = vpop.f32.mrb[0].mxu0
      %1877 = vmatprep.mubr.bf16.mxu0 0
      %1878 = vmatmul.mubr.bf16.gmra.mrb[0].mxu0 %v1725
      %v1879 = vpop.f32.mrb[0].mxu0
      %v1880 = vadd.f32 %v1588, %v1879
      %v1881 = vpop.f32.mrb[0].mxu0
      %v1882 = vpop.f32.mrb[0].mxu0
      %v1883 = vadd.f32 %v1591, %v1882
      %v1884 = vpop.f32.mrb[0].mxu0
      %1885 = vmatprep.mubr.bf16.mxu0 0
      %1886 = vmatmul.mubr.bf16.gmra.mrb[0].mxu0 %v1728
      %v1887 = vpop.f32.mrb[0].mxu0
      %v1888 = vadd.f32 %v1596, %v1887
      %v1889 = vpop.f32.mrb[0].mxu0
      %v1890 = vpop.f32.mrb[0].mxu0
      %v1891 = vadd.f32 %v1599, %v1890
      %v1892 = vpop.f32.mrb[0].mxu0
      %1893 = vdwg.mxu0
      %v1894 = vld [vmem:[#allocation2] sm:$0xe]
      %v1895 = vld [vmem:[#allocation2 + $0xc] sm:$0xe]
      %v1896 = vld [vmem:[#allocation2 + $0x18] sm:$0xe]
      %v1897 = vld [vmem:[#allocation2 + $0x24] sm:$0xe]
      %v1898 = vld [vmem:[#allocation2 + $0x30] sm:$0xe]
      %v1899 = vld [vmem:[#allocation2 + $0x3c] sm:$0xe]
      %v1900 = vld [vmem:[#allocation2 + $0x48] sm:$0xe]
      %v1901 = vld [vmem:[#allocation2 + $0x54] sm:$0xe]
      %v1902 = vld [vmem:[#allocation2 + $0x60] sm:$0xe]
      %v1903 = vld [vmem:[#allocation2 + $0x6c] sm:$0xe]
      %v1904 = vld [vmem:[#allocation2 + $0x78] sm:$0xe]
      %v1905 = vld [vmem:[#allocation2 + $0x84] sm:$0xe]
      %v1906 = vld [vmem:[#allocation2 + $0x90] sm:$0xe]
      %v1907 = vld [vmem:[#allocation2 + $0x9c] sm:$0xe]
      %v1908 = vld [vmem:[#allocation2 + $0xa8] sm:$0xe]
      %v1909 = vld [vmem:[#allocation2 + $0xb4] sm:$0xe]
      %vm1942 = vcmask 1042432
      %vm1943 = vcmask 1046532
      %vm1944 = vmor %vm1942, %vm1943
      %v1945 = vrot.slane %v1894, 5
      %v1946 = vrot.slane %v1945, 4
      %v1947 = vrot.slane %v903, 5
      %v1948 = vsel %vm1944, %v1946, %v1947
      %v1949 = vrot.slane %v1947, 4
      %v1950 = vrot.slane %v935, 5
      %v1951 = vsel %vm1944, %v1949, %v1950
      %v1952 = vrot.slane %v1895, 5
      %v1953 = vrot.slane %v1952, 4
      %v1954 = vrot.slane %v905, 5
      %v1955 = vsel %vm1944, %v1953, %v1954
      %v1956 = vrot.slane %v1954, 4
      %v1957 = vrot.slane %v936, 5
      %v1958 = vsel %vm1944, %v1956, %v1957
      %v1959 = vrot.slane %v1896, 5
      %v1960 = vrot.slane %v1959, 4
      %v1961 = vrot.slane %v907, 5
      %v1962 = vsel %vm1944, %v1960, %v1961
      %v1963 = vrot.slane %v1961, 4
      %v1964 = vrot.slane %v937, 5
      %v1965 = vsel %vm1944, %v1963, %v1964
      %v1966 = vrot.slane %v1897, 5
      %v1967 = vrot.slane %v1966, 4
      %v1968 = vrot.slane %v909, 5
      %v1969 = vsel %vm1944, %v1967, %v1968
      %v1970 = vrot.slane %v1968, 4
      %v1971 = vrot.slane %v938, 5
      %v1972 = vsel %vm1944, %v1970, %v1971
      %v1973 = vrot.slane %v1898, 5
      %v1974 = vrot.slane %v1973, 4
      %v1975 = vrot.slane %v911, 5
      %v1976 = vsel %vm1944, %v1974, %v1975
      %v1977 = vrot.slane %v1975, 4
      %v1978 = vrot.slane %v939, 5
      %v1979 = vsel %vm1944, %v1977, %v1978
      %v1980 = vrot.slane %v1899, 5
      %v1981 = vrot.slane %v1980, 4
      %v1982 = vrot.slane %v913, 5
      %v1983 = vsel %vm1944, %v1981, %v1982
      %v1984 = vrot.slane %v1982, 4
      %v1985 = vrot.slane %v940, 5
      %v1986 = vsel %vm1944, %v1984, %v1985
      %v1987 = vrot.slane %v1900, 5
      %v1988 = vrot.slane %v1987, 4
      %v1989 = vrot.slane %v915, 5
      %v1990 = vsel %vm1944, %v1988, %v1989
      %v1991 = vrot.slane %v1989, 4
      %v1992 = vrot.slane %v941, 5
      %v1993 = vsel %vm1944, %v1991, %v1992
      %v1994 = vrot.slane %v1901, 5
      %v1995 = vrot.slane %v1994, 4
      %v1996 = vrot.slane %v917, 5
      %v1997 = vsel %vm1944, %v1995, %v1996
      %v1998 = vrot.slane %v1996, 4
      %v1999 = vrot.slane %v942, 5
      %v2000 = vsel %vm1944, %v1998, %v1999
      %v2001 = vrot.slane %v1902, 5
      %v2002 = vrot.slane %v2001, 4
      %v2003 = vrot.slane %v919, 5
      %v2004 = vsel %vm1944, %v2002, %v2003
      %v2005 = vrot.slane %v2003, 4
      %v2006 = vrot.slane %v943, 5
      %v2007 = vsel %vm1944, %v2005, %v2006
      %v2008 = vrot.slane %v1903, 5
      %v2009 = vrot.slane %v2008, 4
      %v2010 = vrot.slane %v921, 5
      %v2011 = vsel %vm1944, %v2009, %v2010
      %v2012 = vrot.slane %v2010, 4
      %v2013 = vrot.slane %v944, 5
      %v2014 = vsel %vm1944, %v2012, %v2013
      %v2015 = vrot.slane %v1904, 5
      %v2016 = vrot.slane %v2015, 4
      %v2017 = vrot.slane %v923, 5
      %v2018 = vsel %vm1944, %v2016, %v2017
      %v2019 = vrot.slane %v2017, 4
      %v2020 = vrot.slane %v945, 5
      %v2021 = vsel %vm1944, %v2019, %v2020
      %v2022 = vrot.slane %v1905, 5
      %v2023 = vrot.slane %v2022, 4
      %v2024 = vrot.slane %v925, 5
      %v2025 = vsel %vm1944, %v2023, %v2024
      %v2026 = vrot.slane %v2024, 4
      %v2027 = vrot.slane %v946, 5
      %v2028 = vsel %vm1944, %v2026, %v2027
      %v2029 = vrot.slane %v1906, 5
      %v2030 = vrot.slane %v2029, 4
      %v2031 = vrot.slane %v927, 5
      %v2032 = vsel %vm1944, %v2030, %v2031
      %v2033 = vrot.slane %v2031, 4
      %v2034 = vrot.slane %v947, 5
      %v2035 = vsel %vm1944, %v2033, %v2034
      %v2036 = vrot.slane %v1907, 5
      %v2037 = vrot.slane %v2036, 4
      %v2038 = vrot.slane %v929, 5
      %v2039 = vsel %vm1944, %v2037, %v2038
      %v2040 = vrot.slane %v2038, 4
      %v2041 = vrot.slane %v948, 5
      %v2042 = vsel %vm1944, %v2040, %v2041
      %v2043 = vrot.slane %v1908, 5
      %v2044 = vrot.slane %v2043, 4
      %v2045 = vrot.slane %v931, 5
      %v2046 = vsel %vm1944, %v2044, %v2045
      %v2047 = vrot.slane %v2045, 4
      %v2048 = vrot.slane %v949, 5
      %v2049 = vsel %vm1944, %v2047, %v2048
      %v2050 = vrot.slane %v1909, 5
      %v2051 = vrot.slane %v2050, 4
      %v2052 = vrot.slane %v933, 5
      %v2053 = vsel %vm1944, %v2051, %v2052
      %v2054 = vrot.slane %v2052, 4
      %v2055 = vrot.slane %v950, 5
      %v2056 = vsel %vm1944, %v2054, %v2055
      %s2057 = scalar_lea.vmem %s1, 8
      %v2058 = vld [vmem:[%s2057] sm:$0xf]
      %v2059 = vunpack.c.l.b16 %v1948
      %v2060 = vunpack.c.l.b16 %v1951
      %v2061 = vunpack.c.l.b16 %v1955
      %v2062 = vunpack.c.l.b16 %v1958
      %v2063 = vunpack.c.l.b16 %v1962
      %v2064 = vunpack.c.l.b16 %v1965
      %v2065 = vunpack.c.l.b16 %v1969
      %v2066 = vunpack.c.l.b16 %v1972
      %v2067 = vunpack.c.l.b16 %v1976
      %v2068 = vunpack.c.l.b16 %v1979
      %v2069 = vunpack.c.l.b16 %v1983
      %v2070 = vunpack.c.l.b16 %v1986
      %v2071 = vunpack.c.l.b16 %v1990
      %v2072 = vunpack.c.l.b16 %v1993
      %v2073 = vunpack.c.l.b16 %v1997
      %v2074 = vunpack.c.l.b16 %v2000
      %v2075 = vunpack.c.l.b16 %v2004
      %v2076 = vunpack.c.l.b16 %v2007
      %v2077 = vunpack.c.l.b16 %v2011
      %v2078 = vunpack.c.l.b16 %v2014
      %v2079 = vunpack.c.l.b16 %v2018
      %v2080 = vunpack.c.l.b16 %v2021
      %v2081 = vunpack.c.l.b16 %v2025
      %v2082 = vunpack.c.l.b16 %v2028
      %v2083 = vunpack.c.l.b16 %v2032
      %v2084 = vunpack.c.l.b16 %v2035
      %v2085 = vunpack.c.l.b16 %v2039
      %v2086 = vunpack.c.l.b16 %v2042
      %v2087 = vunpack.c.l.b16 %v2046
      %v2088 = vunpack.c.l.b16 %v2049
      %v2089 = vunpack.c.l.b16 %v2053
      %v2090 = vunpack.c.l.b16 %v2056
      %v2091 = vpack.c.b16 %v2060, %v2059
      %v2092 = vpack.c.b16 %v2062, %v2061
      %v2093 = vpack.c.b16 %v2064, %v2063
      %v2094 = vpack.c.b16 %v2066, %v2065
      %v2095 = vpack.c.b16 %v2068, %v2067
      %v2096 = vpack.c.b16 %v2070, %v2069
      %v2097 = vpack.c.b16 %v2072, %v2071
      %v2098 = vpack.c.b16 %v2074, %v2073
      %v2099 = vpack.c.b16 %v2076, %v2075
      %v2100 = vpack.c.b16 %v2078, %v2077
      %v2101 = vpack.c.b16 %v2080, %v2079
      %v2102 = vpack.c.b16 %v2082, %v2081
      %v2103 = vpack.c.b16 %v2084, %v2083
      %v2104 = vpack.c.b16 %v2086, %v2085
      %v2105 = vpack.c.b16 %v2088, %v2087
      %v2106 = vpack.c.b16 %v2090, %v2089
      %v2108 = vsel %vm1388, %v2091, 0
      %v2111 = vsel %vm1388, %v2092, 0
      %v2114 = vsel %vm1388, %v2093, 0
      %v2117 = vsel %vm1388, %v2094, 0
      %v2120 = vsel %vm1388, %v2095, 0
      %v2123 = vsel %vm1388, %v2096, 0
      %v2126 = vsel %vm1388, %v2097, 0
      %v2129 = vsel %vm1388, %v2098, 0
      %v2132 = vsel %vm1388, %v2099, 0
      %v2135 = vsel %vm1388, %v2100, 0
      %v2138 = vsel %vm1388, %v2101, 0
      %v2141 = vsel %vm1388, %v2102, 0
      %v2144 = vsel %vm1388, %v2103, 0
      %v2147 = vsel %vm1388, %v2104, 0
      %v2150 = vsel %vm1388, %v2105, 0
      %v2153 = vsel %vm1388, %v2106, 0
      %v2156 = vsel %vm1437, %v2058, 0
      %2158 = vmatprep.subr.bf16.mxu0 0
      %2159 = vmatpush1.bf16.msra.mxu0 %v2156
      %2160 = vmatprep.subr.bf16.mxu0 0
      %2161 = vmatpush1.bf16.msra.mxu0 0
      %2162 = vmatprep.subr.bf16.mxu0 0
      %2163 = vmatpush1.bf16.msra.mxu0 0
      %2164 = vmatprep.subr.bf16.mxu0 0
      %2165 = vmatpush1.bf16.msra.mxu0 0
      %2166 = vmatprep.subr.bf16.mxu0 0
      %2167 = vmatpush1.bf16.msra.mxu0 0
      %2168 = vmatprep.subr.bf16.mxu0 0
      %2169 = vmatpush1.bf16.msra.mxu0 0
      %2170 = vmatprep.subr.bf16.mxu0 0
      %2171 = vmatpush1.bf16.msra.mxu0 0
      %2172 = vmatprep.subr.bf16.mxu0 0
      %2173 = vmatpush1.bf16.msra.mxu0 0
      %2174 = vmatprep.subr.bf16.mxu0 0
      %2175 = vmatpush1.bf16.msra.mxu0 0
      %2176 = vmatprep.subr.bf16.mxu0 0
      %2177 = vmatpush1.bf16.msra.mxu0 0
      %2178 = vmatprep.subr.bf16.mxu0 0
      %2179 = vmatpush1.bf16.msra.mxu0 0
      %2180 = vmatprep.subr.bf16.mxu0 0
      %2181 = vmatpush1.bf16.msra.mxu0 0
      %2182 = vmatprep.subr.bf16.mxu0 0
      %2183 = vmatpush1.bf16.msra.mxu0 0
      %2184 = vmatprep.subr.bf16.mxu0 0
      %2185 = vmatpush1.bf16.msra.mxu0 0
      %2186 = vmatprep.subr.bf16.mxu0 0
      %2187 = vmatpush1.bf16.msra.mxu0 0
      %2188 = vmatprep.subr.bf16.mxu0 0
      %2189 = vmatpush1.bf16.msra.mxu0 0
      %2190 = vmatprep.mubr.bf16.mxu0 0
      %2191 = vmatmul.mubr.bf16.gmra.mrb[0].mxu0 %v2108
      %v2192 = vpop.f32.mrb[0].mxu0
      %v2193 = vadd.f32 0.0, %v2192
      %v2194 = vpop.f32.mrb[0].mxu0
      %v2195 = vpop.f32.mrb[0].mxu0
      %v2196 = vadd.f32 0.0, %v2195
      %v2197 = vpop.f32.mrb[0].mxu0
      %2198 = vmatprep.mubr.bf16.mxu0 0
      %2199 = vmatmul.mubr.bf16.gmra.mrb[0].mxu0 %v2111
      %v2200 = vpop.f32.mrb[0].mxu0
      %v2201 = vadd.f32 0.0, %v2200
      %v2202 = vpop.f32.mrb[0].mxu0
      %v2203 = vpop.f32.mrb[0].mxu0
      %v2204 = vadd.f32 0.0, %v2203
      %v2205 = vpop.f32.mrb[0].mxu0
      %2206 = vmatprep.mubr.bf16.mxu0 0
      %2207 = vmatmul.mubr.bf16.gmra.mrb[0].mxu0 %v2114
      %v2208 = vpop.f32.mrb[0].mxu0
      %v2209 = vadd.f32 0.0, %v2208
      %v2210 = vpop.f32.mrb[0].mxu0
      %v2211 = vpop.f32.mrb[0].mxu0
      %v2212 = vadd.f32 0.0, %v2211
      %v2213 = vpop.f32.mrb[0].mxu0
      %2214 = vmatprep.mubr.bf16.mxu0 0
      %2215 = vmatmul.mubr.bf16.gmra.mrb[0].mxu0 %v2117
      %v2216 = vpop.f32.mrb[0].mxu0
      %v2217 = vadd.f32 0.0, %v2216
      %v2218 = vpop.f32.mrb[0].mxu0
      %v2219 = vpop.f32.mrb[0].mxu0
      %v2220 = vadd.f32 0.0, %v2219
      %v2221 = vpop.f32.mrb[0].mxu0
      %2222 = vmatprep.mubr.bf16.mxu0 0
      %2223 = vmatmul.mubr.bf16.gmra.mrb[0].mxu0 %v2120
      %v2224 = vpop.f32.mrb[0].mxu0
      %v2225 = vadd.f32 0.0, %v2224
      %v2226 = vpop.f32.mrb[0].mxu0
      %v2227 = vpop.f32.mrb[0].mxu0
      %v2228 = vadd.f32 0.0, %v2227
      %v2229 = vpop.f32.mrb[0].mxu0
      %2230 = vmatprep.mubr.bf16.mxu0 0
      %2231 = vmatmul.mubr.bf16.gmra.mrb[0].mxu0 %v2123
      %v2232 = vpop.f32.mrb[0].mxu0
      %v2233 = vadd.f32 0.0, %v2232
      %v2234 = vpop.f32.mrb[0].mxu0
      %v2235 = vpop.f32.mrb[0].mxu0
      %v2236 = vadd.f32 0.0, %v2235
      %v2237 = vpop.f32.mrb[0].mxu0
      %2238 = vmatprep.mubr.bf16.mxu0 0
      %2239 = vmatmul.mubr.bf16.gmra.mrb[0].mxu0 %v2126
      %v2240 = vpop.f32.mrb[0].mxu0
      %v2241 = vadd.f32 0.0, %v2240
      %v2242 = vpop.f32.mrb[0].mxu0
      %v2243 = vpop.f32.mrb[0].mxu0
      %v2244 = vadd.f32 0.0, %v2243
      %v2245 = vpop.f32.mrb[0].mxu0
      %2246 = vmatprep.mubr.bf16.mxu0 0
      %2247 = vmatmul.mubr.bf16.gmra.mrb[0].mxu0 %v2129
      %v2248 = vpop.f32.mrb[0].mxu0
      %v2249 = vadd.f32 0.0, %v2248
      %v2250 = vpop.f32.mrb[0].mxu0
      %v2251 = vpop.f32.mrb[0].mxu0
      %v2252 = vadd.f32 0.0, %v2251
      %v2253 = vpop.f32.mrb[0].mxu0
      %2254 = vmatprep.mubr.bf16.mxu0 0
      %2255 = vmatmul.mubr.bf16.gmra.mrb[0].mxu0 %v2132
      %v2256 = vpop.f32.mrb[0].mxu0
      %v2257 = vadd.f32 0.0, %v2256
      %v2258 = vpop.f32.mrb[0].mxu0
      %v2259 = vpop.f32.mrb[0].mxu0
      %v2260 = vadd.f32 0.0, %v2259
      %v2261 = vpop.f32.mrb[0].mxu0
      %2262 = vmatprep.mubr.bf16.mxu0 0
      %2263 = vmatmul.mubr.bf16.gmra.mrb[0].mxu0 %v2135
      %v2264 = vpop.f32.mrb[0].mxu0
      %v2265 = vadd.f32 0.0, %v2264
      %v2266 = vpop.f32.mrb[0].mxu0
      %v2267 = vpop.f32.mrb[0].mxu0
      %v2268 = vadd.f32 0.0, %v2267
      %v2269 = vpop.f32.mrb[0].mxu0
      %2270 = vmatprep.mubr.bf16.mxu0 0
      %2271 = vmatmul.mubr.bf16.gmra.mrb[0].mxu0 %v2138
      %v2272 = vpop.f32.mrb[0].mxu0
      %v2273 = vadd.f32 0.0, %v2272
      %v2274 = vpop.f32.mrb[0].mxu0
      %v2275 = vpop.f32.mrb[0].mxu0
      %v2276 = vadd.f32 0.0, %v2275
      %v2277 = vpop.f32.mrb[0].mxu0
      %2278 = vmatprep.mubr.bf16.mxu0 0
      %2279 = vmatmul.mubr.bf16.gmra.mrb[0].mxu0 %v2141
      %v2280 = vpop.f32.mrb[0].mxu0
      %v2281 = vadd.f32 0.0, %v2280
      %v2282 = vpop.f32.mrb[0].mxu0
      %v2283 = vpop.f32.mrb[0].mxu0
      %v2284 = vadd.f32 0.0, %v2283
      %v2285 = vpop.f32.mrb[0].mxu0
      %2286 = vmatprep.mubr.bf16.mxu0 0
      %2287 = vmatmul.mubr.bf16.gmra.mrb[0].mxu0 %v2144
      %v2288 = vpop.f32.mrb[0].mxu0
      %v2289 = vadd.f32 0.0, %v2288
      %v2290 = vpop.f32.mrb[0].mxu0
      %v2291 = vpop.f32.mrb[0].mxu0
      %v2292 = vadd.f32 0.0, %v2291
      %v2293 = vpop.f32.mrb[0].mxu0
      %2294 = vmatprep.mubr.bf16.mxu0 0
      %2295 = vmatmul.mubr.bf16.gmra.mrb[0].mxu0 %v2147
      %v2296 = vpop.f32.mrb[0].mxu0
      %v2297 = vadd.f32 0.0, %v2296
      %v2298 = vpop.f32.mrb[0].mxu0
      %v2299 = vpop.f32.mrb[0].mxu0
      %v2300 = vadd.f32 0.0, %v2299
      %v2301 = vpop.f32.mrb[0].mxu0
      %2302 = vmatprep.mubr.bf16.mxu0 0
      %2303 = vmatmul.mubr.bf16.gmra.mrb[0].mxu0 %v2150
      %v2304 = vpop.f32.mrb[0].mxu0
      %v2305 = vadd.f32 0.0, %v2304
      %v2306 = vpop.f32.mrb[0].mxu0
      %v2307 = vpop.f32.mrb[0].mxu0
      %v2308 = vadd.f32 0.0, %v2307
      %v2309 = vpop.f32.mrb[0].mxu0
      %2310 = vmatprep.mubr.bf16.mxu0 0
      %2311 = vmatmul.mubr.bf16.gmra.mrb[0].mxu0 %v2153
      %v2312 = vpop.f32.mrb[0].mxu0
      %v2313 = vadd.f32 0.0, %v2312
      %v2314 = vpop.f32.mrb[0].mxu0
      %v2315 = vpop.f32.mrb[0].mxu0
      %v2316 = vadd.f32 0.0, %v2315
      %v2317 = vpop.f32.mrb[0].mxu0
      %2318 = vdwg.mxu0
      %v2319 = vadd.f32 %v1768, %v2193
      %v2320 = vadd.f32 %v1771, %v2196
      %v2321 = vadd.f32 %v1776, %v2201
      %v2322 = vadd.f32 %v1779, %v2204
      %v2323 = vadd.f32 %v1784, %v2209
      %v2324 = vadd.f32 %v1787, %v2212
      %v2325 = vadd.f32 %v1792, %v2217
      %v2326 = vadd.f32 %v1795, %v2220
      %v2327 = vadd.f32 %v1800, %v2225
      %v2328 = vadd.f32 %v1803, %v2228
      %v2329 = vadd.f32 %v1808, %v2233
      %v2330 = vadd.f32 %v1811, %v2236
      %v2331 = vadd.f32 %v1816, %v2241
      %v2332 = vadd.f32 %v1819, %v2244
      %v2333 = vadd.f32 %v1824, %v2249
      %v2334 = vadd.f32 %v1827, %v2252
      %v2335 = vadd.f32 %v1832, %v2257
      %v2336 = vadd.f32 %v1835, %v2260
      %v2337 = vadd.f32 %v1840, %v2265
      %v2338 = vadd.f32 %v1843, %v2268
      %v2339 = vadd.f32 %v1848, %v2273
      %v2340 = vadd.f32 %v1851, %v2276
      %v2341 = vadd.f32 %v1856, %v2281
      %v2342 = vadd.f32 %v1859, %v2284
      %v2343 = vadd.f32 %v1864, %v2289
      %v2344 = vadd.f32 %v1867, %v2292
      %v2345 = vadd.f32 %v1872, %v2297
      %v2346 = vadd.f32 %v1875, %v2300
      %v2347 = vadd.f32 %v1880, %v2305
      %v2348 = vadd.f32 %v1883, %v2308
      %v2349 = vadd.f32 %v1888, %v2313
      %v2350 = vadd.f32 %v1891, %v2316
      %v2351 = vld [vmem:[%s787] sm:$0xf]
      %v2352 = vld [vmem:[%s787 + $0x4] sm:$0xf]
      %v2353 = vld [vmem:[%s787 + $0xc] sm:$0xf]
      %v2354 = vld [vmem:[%s787 + $0x10] sm:$0xf]
      %v2355 = vld [vmem:[%s787 + $0x18] sm:$0xf]
      %v2356 = vld [vmem:[%s787 + $0x1c] sm:$0xf]
      %v2357 = vld [vmem:[%s787 + $0x24] sm:$0xf]
      %v2358 = vld [vmem:[%s787 + $0x28] sm:$0xf]
      %v2359 = vld [vmem:[%s787 + $0x30] sm:$0xf]
      %v2360 = vld [vmem:[%s787 + $0x34] sm:$0xf]
      %v2361 = vld [vmem:[%s787 + $0x3c] sm:$0xf]
      %v2362 = vld [vmem:[%s787 + $0x40] sm:$0xf]
      %v2363 = vld [vmem:[%s787 + $0x48] sm:$0xf]
      %v2364 = vld [vmem:[%s787 + $0x4c] sm:$0xf]
      %v2365 = vld [vmem:[%s787 + $0x54] sm:$0xf]
      %v2366 = vld [vmem:[%s787 + $0x58] sm:$0xf]
      %v2367 = vld [vmem:[%s787 + $0x60] sm:$0xf]
      %v2368 = vld [vmem:[%s787 + $0x64] sm:$0xf]
      %v2369 = vld [vmem:[%s787 + $0x6c] sm:$0xf]
      %v2370 = vld [vmem:[%s787 + $0x70] sm:$0xf]
      %v2371 = vld [vmem:[%s787 + $0x78] sm:$0xf]
      %v2372 = vld [vmem:[%s787 + $0x7c] sm:$0xf]
      %v2373 = vld [vmem:[%s787 + $0x84] sm:$0xf]
      %v2374 = vld [vmem:[%s787 + $0x88] sm:$0xf]
      %v2375 = vld [vmem:[%s787 + $0x90] sm:$0xf]
      %v2376 = vld [vmem:[%s787 + $0x94] sm:$0xf]
      %v2377 = vld [vmem:[%s787 + $0x9c] sm:$0xf]
      %v2378 = vld [vmem:[%s787 + $0xa0] sm:$0xf]
      %v2379 = vld [vmem:[%s787 + $0xa8] sm:$0xf]
      %v2380 = vld [vmem:[%s787 + $0xac] sm:$0xf]
      %v2381 = vld [vmem:[%s787 + $0xb4] sm:$0xf]
      %v2382 = vld [vmem:[%s787 + $0xb8] sm:$0xf]
      %s2383 = scalar_lea.vmem %s1, 12
      %v2384 = vld [vmem:[%s2383] sm:$0xf]
      %v2417 = vunpack.c.l.b16 %v2351
      %v2418 = vunpack.c.l.b16 %v2352
      %v2419 = vunpack.c.l.b16 %v2353
      %v2420 = vunpack.c.l.b16 %v2354
      %v2421 = vunpack.c.l.b16 %v2355
      %v2422 = vunpack.c.l.b16 %v2356
      %v2423 = vunpack.c.l.b16 %v2357
      %v2424 = vunpack.c.l.b16 %v2358
      %v2425 = vunpack.c.l.b16 %v2359
      %v2426 = vunpack.c.l.b16 %v2360
      %v2427 = vunpack.c.l.b16 %v2361
      %v2428 = vunpack.c.l.b16 %v2362
      %v2429 = vunpack.c.l.b16 %v2363
      %v2430 = vunpack.c.l.b16 %v2364
      %v2431 = vunpack.c.l.b16 %v2365
      %v2432 = vunpack.c.l.b16 %v2366
      %v2433 = vunpack.c.l.b16 %v2367
      %v2434 = vunpack.c.l.b16 %v2368
      %v2435 = vunpack.c.l.b16 %v2369
      %v2436 = vunpack.c.l.b16 %v2370
      %v2437 = vunpack.c.l.b16 %v2371
      %v2438 = vunpack.c.l.b16 %v2372
      %v2439 = vunpack.c.l.b16 %v2373
      %v2440 = vunpack.c.l.b16 %v2374
      %v2441 = vunpack.c.l.b16 %v2375
      %v2442 = vunpack.c.l.b16 %v2376
      %v2443 = vunpack.c.l.b16 %v2377
      %v2444 = vunpack.c.l.b16 %v2378
      %v2445 = vunpack.c.l.b16 %v2379
      %v2446 = vunpack.c.l.b16 %v2380
      %v2447 = vunpack.c.l.b16 %v2381
      %v2448 = vunpack.c.l.b16 %v2382
      %v2449 = vpack.c.b16 %v2418, %v2417
      %v2450 = vpack.c.b16 %v2420, %v2419
      %v2451 = vpack.c.b16 %v2422, %v2421
      %v2452 = vpack.c.b16 %v2424, %v2423
      %v2453 = vpack.c.b16 %v2426, %v2425
      %v2454 = vpack.c.b16 %v2428, %v2427
      %v2455 = vpack.c.b16 %v2430, %v2429
      %v2456 = vpack.c.b16 %v2432, %v2431
      %v2457 = vpack.c.b16 %v2434, %v2433
      %v2458 = vpack.c.b16 %v2436, %v2435
      %v2459 = vpack.c.b16 %v2438, %v2437
      %v2460 = vpack.c.b16 %v2440, %v2439
      %v2461 = vpack.c.b16 %v2442, %v2441
      %v2462 = vpack.c.b16 %v2444, %v2443
      %v2463 = vpack.c.b16 %v2446, %v2445
      %v2464 = vpack.c.b16 %v2448, %v2447
      %v2466 = vsel %vm1388, %v2449, 0
      %v2469 = vsel %vm1388, %v2450, 0
      %v2472 = vsel %vm1388, %v2451, 0
      %v2475 = vsel %vm1388, %v2452, 0
      %v2478 = vsel %vm1388, %v2453, 0
      %v2481 = vsel %vm1388, %v2454, 0
      %v2484 = vsel %vm1388, %v2455, 0
      %v2487 = vsel %vm1388, %v2456, 0
      %v2490 = vsel %vm1388, %v2457, 0
      %v2493 = vsel %vm1388, %v2458, 0
      %v2496 = vsel %vm1388, %v2459, 0
      %v2499 = vsel %vm1388, %v2460, 0
      %v2502 = vsel %vm1388, %v2461, 0
      %v2505 = vsel %vm1388, %v2462, 0
      %v2508 = vsel %vm1388, %v2463, 0
      %v2511 = vsel %vm1388, %v2464, 0
      %v2514 = vsel %vm1437, %v2384, 0
      %2516 = vmatprep.subr.bf16.mxu0 0
      %2517 = vmatpush1.bf16.msra.mxu0 %v2514
      %2518 = vmatprep.subr.bf16.mxu0 0
      %2519 = vmatpush1.bf16.msra.mxu0 0
      %2520 = vmatprep.subr.bf16.mxu0 0
      %2521 = vmatpush1.bf16.msra.mxu0 0
      %2522 = vmatprep.subr.bf16.mxu0 0
      %2523 = vmatpush1.bf16.msra.mxu0 0
      %2524 = vmatprep.subr.bf16.mxu0 0
      %2525 = vmatpush1.bf16.msra.mxu0 0
      %2526 = vmatprep.subr.bf16.mxu0 0
      %2527 = vmatpush1.bf16.msra.mxu0 0
      %2528 = vmatprep.subr.bf16.mxu0 0
      %2529 = vmatpush1.bf16.msra.mxu0 0
      %2530 = vmatprep.subr.bf16.mxu0 0
      %2531 = vmatpush1.bf16.msra.mxu0 0
      %2532 = vmatprep.subr.bf16.mxu0 0
      %2533 = vmatpush1.bf16.msra.mxu0 0
      %2534 = vmatprep.subr.bf16.mxu0 0
      %2535 = vmatpush1.bf16.msra.mxu0 0
      %2536 = vmatprep.subr.bf16.mxu0 0
      %2537 = vmatpush1.bf16.msra.mxu0 0
      %2538 = vmatprep.subr.bf16.mxu0 0
      %2539 = vmatpush1.bf16.msra.mxu0 0
      %2540 = vmatprep.subr.bf16.mxu0 0
      %2541 = vmatpush1.bf16.msra.mxu0 0
      %2542 = vmatprep.subr.bf16.mxu0 0
      %2543 = vmatpush1.bf16.msra.mxu0 0
      %2544 = vmatprep.subr.bf16.mxu0 0
      %2545 = vmatpush1.bf16.msra.mxu0 0
      %2546 = vmatprep.subr.bf16.mxu0 0
      %2547 = vmatpush1.bf16.msra.mxu0 0
      %2548 = vmatprep.mubr.bf16.mxu0 0
      %2549 = vmatmul.mubr.bf16.gmra.mrb[0].mxu0 %v2466
      %v2550 = vpop.f32.mrb[0].mxu0
      %v2551 = vadd.f32 0.0, %v2550
      %v2552 = vpop.f32.mrb[0].mxu0
      %v2553 = vpop.f32.mrb[0].mxu0
      %v2554 = vadd.f32 0.0, %v2553
      %v2555 = vpop.f32.mrb[0].mxu0
      %2556 = vmatprep.mubr.bf16.mxu0 0
      %2557 = vmatmul.mubr.bf16.gmra.mrb[0].mxu0 %v2469
      %v2558 = vpop.f32.mrb[0].mxu0
      %v2559 = vadd.f32 0.0, %v2558
      %v2560 = vpop.f32.mrb[0].mxu0
      %v2561 = vpop.f32.mrb[0].mxu0
      %v2562 = vadd.f32 0.0, %v2561
      %v2563 = vpop.f32.mrb[0].mxu0
      %2564 = vmatprep.mubr.bf16.mxu0 0
      %2565 = vmatmul.mubr.bf16.gmra.mrb[0].mxu0 %v2472
      %v2566 = vpop.f32.mrb[0].mxu0
      %v2567 = vadd.f32 0.0, %v2566
      %v2568 = vpop.f32.mrb[0].mxu0
      %v2569 = vpop.f32.mrb[0].mxu0
      %v2570 = vadd.f32 0.0, %v2569
      %v2571 = vpop.f32.mrb[0].mxu0
      %2572 = vmatprep.mubr.bf16.mxu0 0
      %2573 = vmatmul.mubr.bf16.gmra.mrb[0].mxu0 %v2475
      %v2574 = vpop.f32.mrb[0].mxu0
      %v2575 = vadd.f32 0.0, %v2574
      %v2576 = vpop.f32.mrb[0].mxu0
      %v2577 = vpop.f32.mrb[0].mxu0
      %v2578 = vadd.f32 0.0, %v2577
      %v2579 = vpop.f32.mrb[0].mxu0
      %2580 = vmatprep.mubr.bf16.mxu0 0
      %2581 = vmatmul.mubr.bf16.gmra.mrb[0].mxu0 %v2478
      %v2582 = vpop.f32.mrb[0].mxu0
      %v2583 = vadd.f32 0.0, %v2582
      %v2584 = vpop.f32.mrb[0].mxu0
      %v2585 = vpop.f32.mrb[0].mxu0
      %v2586 = vadd.f32 0.0, %v2585
      %v2587 = vpop.f32.mrb[0].mxu0
      %2588 = vmatprep.mubr.bf16.mxu0 0
      %2589 = vmatmul.mubr.bf16.gmra.mrb[0].mxu0 %v2481
      %v2590 = vpop.f32.mrb[0].mxu0
      %v2591 = vadd.f32 0.0, %v2590
      %v2592 = vpop.f32.mrb[0].mxu0
      %v2593 = vpop.f32.mrb[0].mxu0
      %v2594 = vadd.f32 0.0, %v2593
      %v2595 = vpop.f32.mrb[0].mxu0
      %2596 = vmatprep.mubr.bf16.mxu0 0
      %2597 = vmatmul.mubr.bf16.gmra.mrb[0].mxu0 %v2484
      %v2598 = vpop.f32.mrb[0].mxu0
      %v2599 = vadd.f32 0.0, %v2598
      %v2600 = vpop.f32.mrb[0].mxu0
      %v2601 = vpop.f32.mrb[0].mxu0
      %v2602 = vadd.f32 0.0, %v2601
      %v2603 = vpop.f32.mrb[0].mxu0
      %2604 = vmatprep.mubr.bf16.mxu0 0
      %2605 = vmatmul.mubr.bf16.gmra.mrb[0].mxu0 %v2487
      %v2606 = vpop.f32.mrb[0].mxu0
      %v2607 = vadd.f32 0.0, %v2606
      %v2608 = vpop.f32.mrb[0].mxu0
      %v2609 = vpop.f32.mrb[0].mxu0
      %v2610 = vadd.f32 0.0, %v2609
      %v2611 = vpop.f32.mrb[0].mxu0
      %2612 = vmatprep.mubr.bf16.mxu0 0
      %2613 = vmatmul.mubr.bf16.gmra.mrb[0].mxu0 %v2490
      %v2614 = vpop.f32.mrb[0].mxu0
      %v2615 = vadd.f32 0.0, %v2614
      %v2616 = vpop.f32.mrb[0].mxu0
      %v2617 = vpop.f32.mrb[0].mxu0
      %v2618 = vadd.f32 0.0, %v2617
      %v2619 = vpop.f32.mrb[0].mxu0
      %2620 = vmatprep.mubr.bf16.mxu0 0
      %2621 = vmatmul.mubr.bf16.gmra.mrb[0].mxu0 %v2493
      %v2622 = vpop.f32.mrb[0].mxu0
      %v2623 = vadd.f32 0.0, %v2622
      %v2624 = vpop.f32.mrb[0].mxu0
      %v2625 = vpop.f32.mrb[0].mxu0
      %v2626 = vadd.f32 0.0, %v2625
      %v2627 = vpop.f32.mrb[0].mxu0
      %2628 = vmatprep.mubr.bf16.mxu0 0
      %2629 = vmatmul.mubr.bf16.gmra.mrb[0].mxu0 %v2496
      %v2630 = vpop.f32.mrb[0].mxu0
      %v2631 = vadd.f32 0.0, %v2630
      %v2632 = vpop.f32.mrb[0].mxu0
      %v2633 = vpop.f32.mrb[0].mxu0
      %v2634 = vadd.f32 0.0, %v2633
      %v2635 = vpop.f32.mrb[0].mxu0
      %2636 = vmatprep.mubr.bf16.mxu0 0
      %2637 = vmatmul.mubr.bf16.gmra.mrb[0].mxu0 %v2499
      %v2638 = vpop.f32.mrb[0].mxu0
      %v2639 = vadd.f32 0.0, %v2638
      %v2640 = vpop.f32.mrb[0].mxu0
      %v2641 = vpop.f32.mrb[0].mxu0
      %v2642 = vadd.f32 0.0, %v2641
      %v2643 = vpop.f32.mrb[0].mxu0
      %2644 = vmatprep.mubr.bf16.mxu0 0
      %2645 = vmatmul.mubr.bf16.gmra.mrb[0].mxu0 %v2502
      %v2646 = vpop.f32.mrb[0].mxu0
      %v2647 = vadd.f32 0.0, %v2646
      %v2648 = vpop.f32.mrb[0].mxu0
      %v2649 = vpop.f32.mrb[0].mxu0
      %v2650 = vadd.f32 0.0, %v2649
      %v2651 = vpop.f32.mrb[0].mxu0
      %2652 = vmatprep.mubr.bf16.mxu0 0
      %2653 = vmatmul.mubr.bf16.gmra.mrb[0].mxu0 %v2505
      %v2654 = vpop.f32.mrb[0].mxu0
      %v2655 = vadd.f32 0.0, %v2654
      %v2656 = vpop.f32.mrb[0].mxu0
      %v2657 = vpop.f32.mrb[0].mxu0
      %v2658 = vadd.f32 0.0, %v2657
      %v2659 = vpop.f32.mrb[0].mxu0
      %2660 = vmatprep.mubr.bf16.mxu0 0
      %2661 = vmatmul.mubr.bf16.gmra.mrb[0].mxu0 %v2508
      %v2662 = vpop.f32.mrb[0].mxu0
      %v2663 = vadd.f32 0.0, %v2662
      %v2664 = vpop.f32.mrb[0].mxu0
      %v2665 = vpop.f32.mrb[0].mxu0
      %v2666 = vadd.f32 0.0, %v2665
      %v2667 = vpop.f32.mrb[0].mxu0
      %2668 = vmatprep.mubr.bf16.mxu0 0
      %2669 = vmatmul.mubr.bf16.gmra.mrb[0].mxu0 %v2511
      %v2670 = vpop.f32.mrb[0].mxu0
      %v2671 = vadd.f32 0.0, %v2670
      %v2672 = vpop.f32.mrb[0].mxu0
      %v2673 = vpop.f32.mrb[0].mxu0
      %v2674 = vadd.f32 0.0, %v2673
      %v2675 = vpop.f32.mrb[0].mxu0
      %2676 = vdwg.mxu0
      %v2677 = vadd.f32 %v2319, %v2551
      %v2678 = vadd.f32 %v2320, %v2554
      %v2679 = vadd.f32 %v2321, %v2559
      %v2680 = vadd.f32 %v2322, %v2562
      %v2681 = vadd.f32 %v2323, %v2567
      %v2682 = vadd.f32 %v2324, %v2570
      %v2683 = vadd.f32 %v2325, %v2575
      %v2684 = vadd.f32 %v2326, %v2578
      %v2685 = vadd.f32 %v2327, %v2583
      %v2686 = vadd.f32 %v2328, %v2586
      %v2687 = vadd.f32 %v2329, %v2591
      %v2688 = vadd.f32 %v2330, %v2594
      %v2689 = vadd.f32 %v2331, %v2599
      %v2690 = vadd.f32 %v2332, %v2602
      %v2691 = vadd.f32 %v2333, %v2607
      %v2692 = vadd.f32 %v2334, %v2610
      %v2693 = vadd.f32 %v2335, %v2615
      %v2694 = vadd.f32 %v2336, %v2618
      %v2695 = vadd.f32 %v2337, %v2623
      %v2696 = vadd.f32 %v2338, %v2626
      %v2697 = vadd.f32 %v2339, %v2631
      %v2698 = vadd.f32 %v2340, %v2634
      %v2699 = vadd.f32 %v2341, %v2639
      %v2700 = vadd.f32 %v2342, %v2642
      %v2701 = vadd.f32 %v2343, %v2647
      %v2702 = vadd.f32 %v2344, %v2650
      %v2703 = vadd.f32 %v2345, %v2655
      %v2704 = vadd.f32 %v2346, %v2658
      %v2705 = vadd.f32 %v2347, %v2663
      %v2706 = vadd.f32 %v2348, %v2666
      %v2707 = vadd.f32 %v2349, %v2671
      %v2708 = vadd.f32 %v2350, %v2674
      %v2709 = vld [vmem:[%s787] sm:$0xf]
      %v2710 = vld [vmem:[%s787 + $0x4] sm:$0xf]
      %v2711 = vld [vmem:[%s787 + $0x8] sm:$0x1]
      %v2712 = vld [vmem:[%s787 + $0xc] sm:$0xf]
      %v2713 = vld [vmem:[%s787 + $0x10] sm:$0xf]
      %v2714 = vld [vmem:[%s787 + $0x14] sm:$0x1]
      %v2715 = vld [vmem:[%s787 + $0x18] sm:$0xf]
      %v2716 = vld [vmem:[%s787 + $0x1c] sm:$0xf]
      %v2717 = vld [vmem:[%s787 + $0x20] sm:$0x1]
      %v2718 = vld [vmem:[%s787 + $0x24] sm:$0xf]
      %v2719 = vld [vmem:[%s787 + $0x28] sm:$0xf]
      %v2720 = vld [vmem:[%s787 + $0x2c] sm:$0x1]
      %v2721 = vld [vmem:[%s787 + $0x30] sm:$0xf]
      %v2722 = vld [vmem:[%s787 + $0x34] sm:$0xf]
      %v2723 = vld [vmem:[%s787 + $0x38] sm:$0x1]
      %v2724 = vld [vmem:[%s787 + $0x3c] sm:$0xf]
      %v2725 = vld [vmem:[%s787 + $0x40] sm:$0xf]
      %v2726 = vld [vmem:[%s787 + $0x44] sm:$0x1]
      %v2727 = vld [vmem:[%s787 + $0x48] sm:$0xf]
      %v2728 = vld [vmem:[%s787 + $0x4c] sm:$0xf]
      %v2729 = vld [vmem:[%s787 + $0x50] sm:$0x1]
      %v2730 = vld [vmem:[%s787 + $0x54] sm:$0xf]
      %v2731 = vld [vmem:[%s787 + $0x58] sm:$0xf]
      %v2732 = vld [vmem:[%s787 + $0x5c] sm:$0x1]
      %v2733 = vld [vmem:[%s787 + $0x60] sm:$0xf]
      %v2734 = vld [vmem:[%s787 + $0x64] sm:$0xf]
      %v2735 = vld [vmem:[%s787 + $0x68] sm:$0x1]
      %v2736 = vld [vmem:[%s787 + $0x6c] sm:$0xf]
      %v2737 = vld [vmem:[%s787 + $0x70] sm:$0xf]
      %v2738 = vld [vmem:[%s787 + $0x74] sm:$0x1]
      %v2739 = vld [vmem:[%s787 + $0x78] sm:$0xf]
      %v2740 = vld [vmem:[%s787 + $0x7c] sm:$0xf]
      %v2741 = vld [vmem:[%s787 + $0x80] sm:$0x1]
      %v2742 = vld [vmem:[%s787 + $0x84] sm:$0xf]
      %v2743 = vld [vmem:[%s787 + $0x88] sm:$0xf]
      %v2744 = vld [vmem:[%s787 + $0x8c] sm:$0x1]
      %v2745 = vld [vmem:[%s787 + $0x90] sm:$0xf]
      %v2746 = vld [vmem:[%s787 + $0x94] sm:$0xf]
      %v2747 = vld [vmem:[%s787 + $0x98] sm:$0x1]
      %v2748 = vld [vmem:[%s787 + $0x9c] sm:$0xf]
      %v2749 = vld [vmem:[%s787 + $0xa0] sm:$0xf]
      %v2750 = vld [vmem:[%s787 + $0xa4] sm:$0x1]
      %v2751 = vld [vmem:[%s787 + $0xa8] sm:$0xf]
      %v2752 = vld [vmem:[%s787 + $0xac] sm:$0xf]
      %v2753 = vld [vmem:[%s787 + $0xb0] sm:$0x1]
      %v2754 = vld [vmem:[%s787 + $0xb4] sm:$0xf]
      %v2755 = vld [vmem:[%s787 + $0xb8] sm:$0xf]
      %v2756 = vld [vmem:[%s787 + $0xbc] sm:$0x1]
      %v2758 = vshrl.u32 %v2709, 16
      %v2760 = vrot.slane %v2758, 4
      %v2761 = vshll.u32 %v2709, 16
      %v2763 = vrot.slane %v2761, 5
      %v2764 = vor.u32 %v2760, %v2763
      %v2765 = vrot.slane %v2764, 4
      %v2767 = vshll.u32 %v2710, 16
      %v2769 = vrot.slane %v2767, 5
      %v2770 = vsel %vm953, %v2765, %v2769
      %v2771 = vshrl.u32 %v2710, 16
      %v2773 = vrot.slane %v2771, 4
      %v2774 = vor.u32 %v2773, %v2769
      %v2775 = vrot.slane %v2774, 4
      %v2777 = vshll.u32 %v2711, 16
      %v2779 = vrot.slane %v2777, 5
      %v2780 = vsel %vm953, %v2775, %v2779
      %v2782 = vshrl.u32 %v2712, 16
      %v2784 = vrot.slane %v2782, 4
      %v2785 = vshll.u32 %v2712, 16
      %v2787 = vrot.slane %v2785, 5
      %v2788 = vor.u32 %v2784, %v2787
      %v2789 = vrot.slane %v2788, 4
      %v2791 = vshll.u32 %v2713, 16
      %v2793 = vrot.slane %v2791, 5
      %v2794 = vsel %vm953, %v2789, %v2793
      %v2795 = vshrl.u32 %v2713, 16
      %v2797 = vrot.slane %v2795, 4
      %v2798 = vor.u32 %v2797, %v2793
      %v2799 = vrot.slane %v2798, 4
      %v2801 = vshll.u32 %v2714, 16
      %v2803 = vrot.slane %v2801, 5
      %v2804 = vsel %vm953, %v2799, %v2803
      %v2806 = vshrl.u32 %v2715, 16
      %v2808 = vrot.slane %v2806, 4
      %v2809 = vshll.u32 %v2715, 16
      %v2811 = vrot.slane %v2809, 5
      %v2812 = vor.u32 %v2808, %v2811
      %v2813 = vrot.slane %v2812, 4
      %v2815 = vshll.u32 %v2716, 16
      %v2817 = vrot.slane %v2815, 5
      %v2818 = vsel %vm953, %v2813, %v2817
      %v2819 = vshrl.u32 %v2716, 16
      %v2821 = vrot.slane %v2819, 4
      %v2822 = vor.u32 %v2821, %v2817
      %v2823 = vrot.slane %v2822, 4
      %v2825 = vshll.u32 %v2717, 16
      %v2827 = vrot.slane %v2825, 5
      %v2828 = vsel %vm953, %v2823, %v2827
      %v2830 = vshrl.u32 %v2718, 16
      %v2832 = vrot.slane %v2830, 4
      %v2833 = vshll.u32 %v2718, 16
      %v2835 = vrot.slane %v2833, 5
      %v2836 = vor.u32 %v2832, %v2835
      %v2837 = vrot.slane %v2836, 4
      %v2839 = vshll.u32 %v2719, 16
      %v2841 = vrot.slane %v2839, 5
      %v2842 = vsel %vm953, %v2837, %v2841
      %v2843 = vshrl.u32 %v2719, 16
      %v2845 = vrot.slane %v2843, 4
      %v2846 = vor.u32 %v2845, %v2841
      %v2847 = vrot.slane %v2846, 4
      %v2849 = vshll.u32 %v2720, 16
      %v2851 = vrot.slane %v2849, 5
      %v2852 = vsel %vm953, %v2847, %v2851
      %v2854 = vshrl.u32 %v2721, 16
      %v2856 = vrot.slane %v2854, 4
      %v2857 = vshll.u32 %v2721, 16
      %v2859 = vrot.slane %v2857, 5
      %v2860 = vor.u32 %v2856, %v2859
      %v2861 = vrot.slane %v2860, 4
      %v2863 = vshll.u32 %v2722, 16
      %v2865 = vrot.slane %v2863, 5
      %v2866 = vsel %vm953, %v2861, %v2865
      %v2867 = vshrl.u32 %v2722, 16
      %v2869 = vrot.slane %v2867, 4
      %v2870 = vor.u32 %v2869, %v2865
      %v2871 = vrot.slane %v2870, 4
      %v2873 = vshll.u32 %v2723, 16
      %v2875 = vrot.slane %v2873, 5
      %v2876 = vsel %vm953, %v2871, %v2875
      %v2878 = vshrl.u32 %v2724, 16
      %v2880 = vrot.slane %v2878, 4
      %v2881 = vshll.u32 %v2724, 16
      %v2883 = vrot.slane %v2881, 5
      %v2884 = vor.u32 %v2880, %v2883
      %v2885 = vrot.slane %v2884, 4
      %v2887 = vshll.u32 %v2725, 16
      %v2889 = vrot.slane %v2887, 5
      %v2890 = vsel %vm953, %v2885, %v2889
      %v2891 = vshrl.u32 %v2725, 16
      %v2893 = vrot.slane %v2891, 4
      %v2894 = vor.u32 %v2893, %v2889
      %v2895 = vrot.slane %v2894, 4
      %v2897 = vshll.u32 %v2726, 16
      %v2899 = vrot.slane %v2897, 5
      %v2900 = vsel %vm953, %v2895, %v2899
      %v2902 = vshrl.u32 %v2727, 16
      %v2904 = vrot.slane %v2902, 4
      %v2905 = vshll.u32 %v2727, 16
      %v2907 = vrot.slane %v2905, 5
      %v2908 = vor.u32 %v2904, %v2907
      %v2909 = vrot.slane %v2908, 4
      %v2911 = vshll.u32 %v2728, 16
      %v2913 = vrot.slane %v2911, 5
      %v2914 = vsel %vm953, %v2909, %v2913
      %v2915 = vshrl.u32 %v2728, 16
      %v2917 = vrot.slane %v2915, 4
      %v2918 = vor.u32 %v2917, %v2913
      %v2919 = vrot.slane %v2918, 4
      %v2921 = vshll.u32 %v2729, 16
      %v2923 = vrot.slane %v2921, 5
      %v2924 = vsel %vm953, %v2919, %v2923
      %v2926 = vshrl.u32 %v2730, 16
      %v2928 = vrot.slane %v2926, 4
      %v2929 = vshll.u32 %v2730, 16
      %v2931 = vrot.slane %v2929, 5
      %v2932 = vor.u32 %v2928, %v2931
      %v2933 = vrot.slane %v2932, 4
      %v2935 = vshll.u32 %v2731, 16
      %v2937 = vrot.slane %v2935, 5
      %v2938 = vsel %vm953, %v2933, %v2937
      %v2939 = vshrl.u32 %v2731, 16
      %v2941 = vrot.slane %v2939, 4
      %v2942 = vor.u32 %v2941, %v2937
      %v2943 = vrot.slane %v2942, 4
      %v2945 = vshll.u32 %v2732, 16
      %v2947 = vrot.slane %v2945, 5
      %v2948 = vsel %vm953, %v2943, %v2947
      %v2950 = vshrl.u32 %v2733, 16
      %v2952 = vrot.slane %v2950, 4
      %v2953 = vshll.u32 %v2733, 16
      %v2955 = vrot.slane %v2953, 5
      %v2956 = vor.u32 %v2952, %v2955
      %v2957 = vrot.slane %v2956, 4
      %v2959 = vshll.u32 %v2734, 16
      %v2961 = vrot.slane %v2959, 5
      %v2962 = vsel %vm953, %v2957, %v2961
      %v2963 = vshrl.u32 %v2734, 16
      %v2965 = vrot.slane %v2963, 4
      %v2966 = vor.u32 %v2965, %v2961
      %v2967 = vrot.slane %v2966, 4
      %v2969 = vshll.u32 %v2735, 16
      %v2971 = vrot.slane %v2969, 5
      %v2972 = vsel %vm953, %v2967, %v2971
      %v2974 = vshrl.u32 %v2736, 16
      %v2976 = vrot.slane %v2974, 4
      %v2977 = vshll.u32 %v2736, 16
      %v2979 = vrot.slane %v2977, 5
      %v2980 = vor.u32 %v2976, %v2979
      %v2981 = vrot.slane %v2980, 4
      %v2983 = vshll.u32 %v2737, 16
      %v2985 = vrot.slane %v2983, 5
      %v2986 = vsel %vm953, %v2981, %v2985
      %v2987 = vshrl.u32 %v2737, 16
      %v2989 = vrot.slane %v2987, 4
      %v2990 = vor.u32 %v2989, %v2985
      %v2991 = vrot.slane %v2990, 4
      %v2993 = vshll.u32 %v2738, 16
      %v2995 = vrot.slane %v2993, 5
      %v2996 = vsel %vm953, %v2991, %v2995
      %v2998 = vshrl.u32 %v2739, 16
      %v3000 = vrot.slane %v2998, 4
      %v3001 = vshll.u32 %v2739, 16
      %v3003 = vrot.slane %v3001, 5
      %v3004 = vor.u32 %v3000, %v3003
      %v3005 = vrot.slane %v3004, 4
      %v3007 = vshll.u32 %v2740, 16
      %v3009 = vrot.slane %v3007, 5
      %v3010 = vsel %vm953, %v3005, %v3009
      %v3011 = vshrl.u32 %v2740, 16
      %v3013 = vrot.slane %v3011, 4
      %v3014 = vor.u32 %v3013, %v3009
      %v3015 = vrot.slane %v3014, 4
      %v3017 = vshll.u32 %v2741, 16
      %v3019 = vrot.slane %v3017, 5
      %v3020 = vsel %vm953, %v3015, %v3019
      %v3022 = vshrl.u32 %v2742, 16
      %v3024 = vrot.slane %v3022, 4
      %v3025 = vshll.u32 %v2742, 16
      %v3027 = vrot.slane %v3025, 5
      %v3028 = vor.u32 %v3024, %v3027
      %v3029 = vrot.slane %v3028, 4
      %v3031 = vshll.u32 %v2743, 16
      %v3033 = vrot.slane %v3031, 5
      %v3034 = vsel %vm953, %v3029, %v3033
      %v3035 = vshrl.u32 %v2743, 16
      %v3037 = vrot.slane %v3035, 4
      %v3038 = vor.u32 %v3037, %v3033
      %v3039 = vrot.slane %v3038, 4
      %v3041 = vshll.u32 %v2744, 16
      %v3043 = vrot.slane %v3041, 5
      %v3044 = vsel %vm953, %v3039, %v3043
      %v3046 = vshrl.u32 %v2745, 16
      %v3048 = vrot.slane %v3046, 4
      %v3049 = vshll.u32 %v2745, 16
      %v3051 = vrot.slane %v3049, 5
      %v3052 = vor.u32 %v3048, %v3051
      %v3053 = vrot.slane %v3052, 4
      %v3055 = vshll.u32 %v2746, 16
      %v3057 = vrot.slane %v3055, 5
      %v3058 = vsel %vm953, %v3053, %v3057
      %v3059 = vshrl.u32 %v2746, 16
      %v3061 = vrot.slane %v3059, 4
      %v3062 = vor.u32 %v3061, %v3057
      %v3063 = vrot.slane %v3062, 4
      %v3065 = vshll.u32 %v2747, 16
      %v3067 = vrot.slane %v3065, 5
      %v3068 = vsel %vm953, %v3063, %v3067
      %v3070 = vshrl.u32 %v2748, 16
      %v3072 = vrot.slane %v3070, 4
      %v3073 = vshll.u32 %v2748, 16
      %v3075 = vrot.slane %v3073, 5
      %v3076 = vor.u32 %v3072, %v3075
      %v3077 = vrot.slane %v3076, 4
      %v3079 = vshll.u32 %v2749, 16
      %v3081 = vrot.slane %v3079, 5
      %v3082 = vsel %vm953, %v3077, %v3081
      %v3083 = vshrl.u32 %v2749, 16
      %v3085 = vrot.slane %v3083, 4
      %v3086 = vor.u32 %v3085, %v3081
      %v3087 = vrot.slane %v3086, 4
      %v3089 = vshll.u32 %v2750, 16
      %v3091 = vrot.slane %v3089, 5
      %v3092 = vsel %vm953, %v3087, %v3091
      %v3094 = vshrl.u32 %v2751, 16
      %v3096 = vrot.slane %v3094, 4
      %v3097 = vshll.u32 %v2751, 16
      %v3099 = vrot.slane %v3097, 5
      %v3100 = vor.u32 %v3096, %v3099
      %v3101 = vrot.slane %v3100, 4
      %v3103 = vshll.u32 %v2752, 16
      %v3105 = vrot.slane %v3103, 5
      %v3106 = vsel %vm953, %v3101, %v3105
      %v3107 = vshrl.u32 %v2752, 16
      %v3109 = vrot.slane %v3107, 4
      %v3110 = vor.u32 %v3109, %v3105
      %v3111 = vrot.slane %v3110, 4
      %v3113 = vshll.u32 %v2753, 16
      %v3115 = vrot.slane %v3113, 5
      %v3116 = vsel %vm953, %v3111, %v3115
      %v3118 = vshrl.u32 %v2754, 16
      %v3120 = vrot.slane %v3118, 4
      %v3121 = vshll.u32 %v2754, 16
      %v3123 = vrot.slane %v3121, 5
      %v3124 = vor.u32 %v3120, %v3123
      %v3125 = vrot.slane %v3124, 4
      %v3127 = vshll.u32 %v2755, 16
      %v3129 = vrot.slane %v3127, 5
      %v3130 = vsel %vm953, %v3125, %v3129
      %v3131 = vshrl.u32 %v2755, 16
      %v3133 = vrot.slane %v3131, 4
      %v3134 = vor.u32 %v3133, %v3129
      %v3135 = vrot.slane %v3134, 4
      %v3137 = vshll.u32 %v2756, 16
      %v3139 = vrot.slane %v3137, 5
      %v3140 = vsel %vm953, %v3135, %v3139
      %s3141 = scalar_lea.vmem %s1, 16
      %v3142 = vld [vmem:[%s3141] sm:$0xf]
      %v3143 = vunpack.c.l.b16 %v2770
      %v3144 = vunpack.c.l.b16 %v2780
      %v3145 = vunpack.c.l.b16 %v2794
      %v3146 = vunpack.c.l.b16 %v2804
      %v3147 = vunpack.c.l.b16 %v2818
      %v3148 = vunpack.c.l.b16 %v2828
      %v3149 = vunpack.c.l.b16 %v2842
      %v3150 = vunpack.c.l.b16 %v2852
      %v3151 = vunpack.c.l.b16 %v2866
      %v3152 = vunpack.c.l.b16 %v2876
      %v3153 = vunpack.c.l.b16 %v2890
      %v3154 = vunpack.c.l.b16 %v2900
      %v3155 = vunpack.c.l.b16 %v2914
      %v3156 = vunpack.c.l.b16 %v2924
      %v3157 = vunpack.c.l.b16 %v2938
      %v3158 = vunpack.c.l.b16 %v2948
      %v3159 = vunpack.c.l.b16 %v2962
      %v3160 = vunpack.c.l.b16 %v2972
      %v3161 = vunpack.c.l.b16 %v2986
      %v3162 = vunpack.c.l.b16 %v2996
      %v3163 = vunpack.c.l.b16 %v3010
      %v3164 = vunpack.c.l.b16 %v3020
      %v3165 = vunpack.c.l.b16 %v3034
      %v3166 = vunpack.c.l.b16 %v3044
      %v3167 = vunpack.c.l.b16 %v3058
      %v3168 = vunpack.c.l.b16 %v3068
      %v3169 = vunpack.c.l.b16 %v3082
      %v3170 = vunpack.c.l.b16 %v3092
      %v3171 = vunpack.c.l.b16 %v3106
      %v3172 = vunpack.c.l.b16 %v3116
      %v3173 = vunpack.c.l.b16 %v3130
      %v3174 = vunpack.c.l.b16 %v3140
      %v3175 = vpack.c.b16 %v3144, %v3143
      %v3176 = vpack.c.b16 %v3146, %v3145
      %v3177 = vpack.c.b16 %v3148, %v3147
      %v3178 = vpack.c.b16 %v3150, %v3149
      %v3179 = vpack.c.b16 %v3152, %v3151
      %v3180 = vpack.c.b16 %v3154, %v3153
      %v3181 = vpack.c.b16 %v3156, %v3155
      %v3182 = vpack.c.b16 %v3158, %v3157
      %v3183 = vpack.c.b16 %v3160, %v3159
      %v3184 = vpack.c.b16 %v3162, %v3161
      %v3185 = vpack.c.b16 %v3164, %v3163
      %v3186 = vpack.c.b16 %v3166, %v3165
      %v3187 = vpack.c.b16 %v3168, %v3167
      %v3188 = vpack.c.b16 %v3170, %v3169
      %v3189 = vpack.c.b16 %v3172, %v3171
      %v3190 = vpack.c.b16 %v3174, %v3173
      %v3192 = vsel %vm1388, %v3175, 0
      %v3195 = vsel %vm1388, %v3176, 0
      %v3198 = vsel %vm1388, %v3177, 0
      %v3201 = vsel %vm1388, %v3178, 0
      %v3204 = vsel %vm1388, %v3179, 0
      %v3207 = vsel %vm1388, %v3180, 0
      %v3210 = vsel %vm1388, %v3181, 0
      %v3213 = vsel %vm1388, %v3182, 0
      %v3216 = vsel %vm1388, %v3183, 0
      %v3219 = vsel %vm1388, %v3184, 0
      %v3222 = vsel %vm1388, %v3185, 0
      %v3225 = vsel %vm1388, %v3186, 0
      %v3228 = vsel %vm1388, %v3187, 0
      %v3231 = vsel %vm1388, %v3188, 0
      %v3234 = vsel %vm1388, %v3189, 0
      %v3237 = vsel %vm1388, %v3190, 0
      %v3240 = vsel %vm1437, %v3142, 0
      %3242 = vmatprep.subr.bf16.mxu0 0
      %3243 = vmatpush1.bf16.msra.mxu0 %v3240
      %3244 = vmatprep.subr.bf16.mxu0 0
      %3245 = vmatpush1.bf16.msra.mxu0 0
      %3246 = vmatprep.subr.bf16.mxu0 0
      %3247 = vmatpush1.bf16.msra.mxu0 0
      %3248 = vmatprep.subr.bf16.mxu0 0
      %3249 = vmatpush1.bf16.msra.mxu0 0
      %3250 = vmatprep.subr.bf16.mxu0 0
      %3251 = vmatpush1.bf16.msra.mxu0 0
      %3252 = vmatprep.subr.bf16.mxu0 0
      %3253 = vmatpush1.bf16.msra.mxu0 0
      %3254 = vmatprep.subr.bf16.mxu0 0
      %3255 = vmatpush1.bf16.msra.mxu0 0
      %3256 = vmatprep.subr.bf16.mxu0 0
      %3257 = vmatpush1.bf16.msra.mxu0 0
      %3258 = vmatprep.subr.bf16.mxu0 0
      %3259 = vmatpush1.bf16.msra.mxu0 0
      %3260 = vmatprep.subr.bf16.mxu0 0
      %3261 = vmatpush1.bf16.msra.mxu0 0
      %3262 = vmatprep.subr.bf16.mxu0 0
      %3263 = vmatpush1.bf16.msra.mxu0 0
      %3264 = vmatprep.subr.bf16.mxu0 0
      %3265 = vmatpush1.bf16.msra.mxu0 0
      %3266 = vmatprep.subr.bf16.mxu0 0
      %3267 = vmatpush1.bf16.msra.mxu0 0
      %3268 = vmatprep.subr.bf16.mxu0 0
      %3269 = vmatpush1.bf16.msra.mxu0 0
      %3270 = vmatprep.subr.bf16.mxu0 0
      %3271 = vmatpush1.bf16.msra.mxu0 0
      %3272 = vmatprep.subr.bf16.mxu0 0
      %3273 = vmatpush1.bf16.msra.mxu0 0
      %3274 = vmatprep.mubr.bf16.mxu0 0
      %3275 = vmatmul.mubr.bf16.gmra.mrb[0].mxu0 %v3192
      %v3276 = vpop.f32.mrb[0].mxu0
      %v3277 = vadd.f32 0.0, %v3276
      %v3278 = vpop.f32.mrb[0].mxu0
      %v3279 = vpop.f32.mrb[0].mxu0
      %v3280 = vadd.f32 0.0, %v3279
      %v3281 = vpop.f32.mrb[0].mxu0
      %3282 = vmatprep.mubr.bf16.mxu0 0
      %3283 = vmatmul.mubr.bf16.gmra.mrb[0].mxu0 %v3195
      %v3284 = vpop.f32.mrb[0].mxu0
      %v3285 = vadd.f32 0.0, %v3284
      %v3286 = vpop.f32.mrb[0].mxu0
      %v3287 = vpop.f32.mrb[0].mxu0
      %v3288 = vadd.f32 0.0, %v3287
      %v3289 = vpop.f32.mrb[0].mxu0
      %3290 = vmatprep.mubr.bf16.mxu0 0
      %3291 = vmatmul.mubr.bf16.gmra.mrb[0].mxu0 %v3198
      %v3292 = vpop.f32.mrb[0].mxu0
      %v3293 = vadd.f32 0.0, %v3292
      %v3294 = vpop.f32.mrb[0].mxu0
      %v3295 = vpop.f32.mrb[0].mxu0
      %v3296 = vadd.f32 0.0, %v3295
      %v3297 = vpop.f32.mrb[0].mxu0
      %3298 = vmatprep.mubr.bf16.mxu0 0
      %3299 = vmatmul.mubr.bf16.gmra.mrb[0].mxu0 %v3201
      %v3300 = vpop.f32.mrb[0].mxu0
      %v3301 = vadd.f32 0.0, %v3300
      %v3302 = vpop.f32.mrb[0].mxu0
      %v3303 = vpop.f32.mrb[0].mxu0
      %v3304 = vadd.f32 0.0, %v3303
      %v3305 = vpop.f32.mrb[0].mxu0
      %3306 = vmatprep.mubr.bf16.mxu0 0
      %3307 = vmatmul.mubr.bf16.gmra.mrb[0].mxu0 %v3204
      %v3308 = vpop.f32.mrb[0].mxu0
      %v3309 = vadd.f32 0.0, %v3308
      %v3310 = vpop.f32.mrb[0].mxu0
      %v3311 = vpop.f32.mrb[0].mxu0
      %v3312 = vadd.f32 0.0, %v3311
      %v3313 = vpop.f32.mrb[0].mxu0
      %3314 = vmatprep.mubr.bf16.mxu0 0
      %3315 = vmatmul.mubr.bf16.gmra.mrb[0].mxu0 %v3207
      %v3316 = vpop.f32.mrb[0].mxu0
      %v3317 = vadd.f32 0.0, %v3316
      %v3318 = vpop.f32.mrb[0].mxu0
      %v3319 = vpop.f32.mrb[0].mxu0
      %v3320 = vadd.f32 0.0, %v3319
      %v3321 = vpop.f32.mrb[0].mxu0
      %3322 = vmatprep.mubr.bf16.mxu0 0
      %3323 = vmatmul.mubr.bf16.gmra.mrb[0].mxu0 %v3210
      %v3324 = vpop.f32.mrb[0].mxu0
      %v3325 = vadd.f32 0.0, %v3324
      %v3326 = vpop.f32.mrb[0].mxu0
      %v3327 = vpop.f32.mrb[0].mxu0
      %v3328 = vadd.f32 0.0, %v3327
      %v3329 = vpop.f32.mrb[0].mxu0
      %3330 = vmatprep.mubr.bf16.mxu0 0
      %3331 = vmatmul.mubr.bf16.gmra.mrb[0].mxu0 %v3213
      %v3332 = vpop.f32.mrb[0].mxu0
      %v3333 = vadd.f32 0.0, %v3332
      %v3334 = vpop.f32.mrb[0].mxu0
      %v3335 = vpop.f32.mrb[0].mxu0
      %v3336 = vadd.f32 0.0, %v3335
      %v3337 = vpop.f32.mrb[0].mxu0
      %3338 = vmatprep.mubr.bf16.mxu0 0
      %3339 = vmatmul.mubr.bf16.gmra.mrb[0].mxu0 %v3216
      %v3340 = vpop.f32.mrb[0].mxu0
      %v3341 = vadd.f32 0.0, %v3340
      %v3342 = vpop.f32.mrb[0].mxu0
      %v3343 = vpop.f32.mrb[0].mxu0
      %v3344 = vadd.f32 0.0, %v3343
      %v3345 = vpop.f32.mrb[0].mxu0
      %3346 = vmatprep.mubr.bf16.mxu0 0
      %3347 = vmatmul.mubr.bf16.gmra.mrb[0].mxu0 %v3219
      %v3348 = vpop.f32.mrb[0].mxu0
      %v3349 = vadd.f32 0.0, %v3348
      %v3350 = vpop.f32.mrb[0].mxu0
      %v3351 = vpop.f32.mrb[0].mxu0
      %v3352 = vadd.f32 0.0, %v3351
      %v3353 = vpop.f32.mrb[0].mxu0
      %3354 = vmatprep.mubr.bf16.mxu0 0
      %3355 = vmatmul.mubr.bf16.gmra.mrb[0].mxu0 %v3222
      %v3356 = vpop.f32.mrb[0].mxu0
      %v3357 = vadd.f32 0.0, %v3356
      %v3358 = vpop.f32.mrb[0].mxu0
      %v3359 = vpop.f32.mrb[0].mxu0
      %v3360 = vadd.f32 0.0, %v3359
      %v3361 = vpop.f32.mrb[0].mxu0
      %3362 = vmatprep.mubr.bf16.mxu0 0
      %3363 = vmatmul.mubr.bf16.gmra.mrb[0].mxu0 %v3225
      %v3364 = vpop.f32.mrb[0].mxu0
      %v3365 = vadd.f32 0.0, %v3364
      %v3366 = vpop.f32.mrb[0].mxu0
      %v3367 = vpop.f32.mrb[0].mxu0
      %v3368 = vadd.f32 0.0, %v3367
      %v3369 = vpop.f32.mrb[0].mxu0
      %3370 = vmatprep.mubr.bf16.mxu0 0
      %3371 = vmatmul.mubr.bf16.gmra.mrb[0].mxu0 %v3228
      %v3372 = vpop.f32.mrb[0].mxu0
      %v3373 = vadd.f32 0.0, %v3372
      %v3374 = vpop.f32.mrb[0].mxu0
      %v3375 = vpop.f32.mrb[0].mxu0
      %v3376 = vadd.f32 0.0, %v3375
      %v3377 = vpop.f32.mrb[0].mxu0
      %3378 = vmatprep.mubr.bf16.mxu0 0
      %3379 = vmatmul.mubr.bf16.gmra.mrb[0].mxu0 %v3231
      %v3380 = vpop.f32.mrb[0].mxu0
      %v3381 = vadd.f32 0.0, %v3380
      %v3382 = vpop.f32.mrb[0].mxu0
      %v3383 = vpop.f32.mrb[0].mxu0
      %v3384 = vadd.f32 0.0, %v3383
      %v3385 = vpop.f32.mrb[0].mxu0
      %3386 = vmatprep.mubr.bf16.mxu0 0
      %3387 = vmatmul.mubr.bf16.gmra.mrb[0].mxu0 %v3234
      %v3388 = vpop.f32.mrb[0].mxu0
      %v3389 = vadd.f32 0.0, %v3388
      %v3390 = vpop.f32.mrb[0].mxu0
      %v3391 = vpop.f32.mrb[0].mxu0
      %v3392 = vadd.f32 0.0, %v3391
      %v3393 = vpop.f32.mrb[0].mxu0
      %3394 = vmatprep.mubr.bf16.mxu0 0
      %3395 = vmatmul.mubr.bf16.gmra.mrb[0].mxu0 %v3237
      %v3396 = vpop.f32.mrb[0].mxu0
      %v3397 = vadd.f32 0.0, %v3396
      %v3398 = vpop.f32.mrb[0].mxu0
      %v3399 = vpop.f32.mrb[0].mxu0
      %v3400 = vadd.f32 0.0, %v3399
      %v3401 = vpop.f32.mrb[0].mxu0
      %3402 = vdwg.mxu0
      %v3403 = vadd.f32 %v2677, %v3277
      %v3404 = vadd.f32 %v2678, %v3280
      %v3405 = vadd.f32 %v2679, %v3285
      %v3406 = vadd.f32 %v2680, %v3288
      %v3407 = vadd.f32 %v2681, %v3293
      %v3408 = vadd.f32 %v2682, %v3296
      %v3409 = vadd.f32 %v2683, %v3301
      %v3410 = vadd.f32 %v2684, %v3304
      %v3411 = vadd.f32 %v2685, %v3309
      %v3412 = vadd.f32 %v2686, %v3312
      %v3413 = vadd.f32 %v2687, %v3317
      %v3414 = vadd.f32 %v2688, %v3320
      %v3415 = vadd.f32 %v2689, %v3325
      %v3416 = vadd.f32 %v2690, %v3328
      %v3417 = vadd.f32 %v2691, %v3333
      %v3418 = vadd.f32 %v2692, %v3336
      %v3419 = vadd.f32 %v2693, %v3341
      %v3420 = vadd.f32 %v2694, %v3344
      %v3421 = vadd.f32 %v2695, %v3349
      %v3422 = vadd.f32 %v2696, %v3352
      %v3423 = vadd.f32 %v2697, %v3357
      %v3424 = vadd.f32 %v2698, %v3360
      %v3425 = vadd.f32 %v2699, %v3365
      %v3426 = vadd.f32 %v2700, %v3368
      %v3427 = vadd.f32 %v2701, %v3373
      %v3428 = vadd.f32 %v2702, %v3376
      %v3429 = vadd.f32 %v2703, %v3381
      %v3430 = vadd.f32 %v2704, %v3384
      %v3431 = vadd.f32 %v2705, %v3389
      %v3432 = vadd.f32 %v2706, %v3392
      %v3433 = vadd.f32 %v2707, %v3397
      %v3434 = vadd.f32 %v2708, %v3400
      %v3435 = vld [vmem:[%s787] sm:$0xe]
      %v3436 = vld [vmem:[%s787 + $0xc] sm:$0xe]
      %v3437 = vld [vmem:[%s787 + $0x18] sm:$0xe]
      %v3438 = vld [vmem:[%s787 + $0x24] sm:$0xe]
      %v3439 = vld [vmem:[%s787 + $0x30] sm:$0xe]
      %v3440 = vld [vmem:[%s787 + $0x3c] sm:$0xe]
      %v3441 = vld [vmem:[%s787 + $0x48] sm:$0xe]
      %v3442 = vld [vmem:[%s787 + $0x54] sm:$0xe]
      %v3443 = vld [vmem:[%s787 + $0x60] sm:$0xe]
      %v3444 = vld [vmem:[%s787 + $0x6c] sm:$0xe]
      %v3445 = vld [vmem:[%s787 + $0x78] sm:$0xe]
      %v3446 = vld [vmem:[%s787 + $0x84] sm:$0xe]
      %v3447 = vld [vmem:[%s787 + $0x90] sm:$0xe]
      %v3448 = vld [vmem:[%s787 + $0x9c] sm:$0xe]
      %v3449 = vld [vmem:[%s787 + $0xa8] sm:$0xe]
      %v3450 = vld [vmem:[%s787 + $0xb4] sm:$0xe]
      %v3499 = vrot.slane %v3435, 5
      %v3500 = vrot.slane %v3499, 4
      %v3501 = vrot.slane %v2710, 5
      %v3502 = vsel %vm1944, %v3500, %v3501
      %v3503 = vrot.slane %v3501, 4
      %v3504 = vrot.slane %v2711, 5
      %v3505 = vsel %vm1944, %v3503, %v3504
      %v3506 = vrot.slane %v3436, 5
      %v3507 = vrot.slane %v3506, 4
      %v3508 = vrot.slane %v2713, 5
      %v3509 = vsel %vm1944, %v3507, %v3508
      %v3510 = vrot.slane %v3508, 4
      %v3511 = vrot.slane %v2714, 5
      %v3512 = vsel %vm1944, %v3510, %v3511
      %v3513 = vrot.slane %v3437, 5
      %v3514 = vrot.slane %v3513, 4
      %v3515 = vrot.slane %v2716, 5
      %v3516 = vsel %vm1944, %v3514, %v3515
      %v3517 = vrot.slane %v3515, 4
      %v3518 = vrot.slane %v2717, 5
      %v3519 = vsel %vm1944, %v3517, %v3518
      %v3520 = vrot.slane %v3438, 5
      %v3521 = vrot.slane %v3520, 4
      %v3522 = vrot.slane %v2719, 5
      %v3523 = vsel %vm1944, %v3521, %v3522
      %v3524 = vrot.slane %v3522, 4
      %v3525 = vrot.slane %v2720, 5
      %v3526 = vsel %vm1944, %v3524, %v3525
      %v3527 = vrot.slane %v3439, 5
      %v3528 = vrot.slane %v3527, 4
      %v3529 = vrot.slane %v2722, 5
      %v3530 = vsel %vm1944, %v3528, %v3529
      %v3531 = vrot.slane %v3529, 4
      %v3532 = vrot.slane %v2723, 5
      %v3533 = vsel %vm1944, %v3531, %v3532
      %v3534 = vrot.slane %v3440, 5
      %v3535 = vrot.slane %v3534, 4
      %v3536 = vrot.slane %v2725, 5
      %v3537 = vsel %vm1944, %v3535, %v3536
      %v3538 = vrot.slane %v3536, 4
      %v3539 = vrot.slane %v2726, 5
      %v3540 = vsel %vm1944, %v3538, %v3539
      %v3541 = vrot.slane %v3441, 5
      %v3542 = vrot.slane %v3541, 4
      %v3543 = vrot.slane %v2728, 5
      %v3544 = vsel %vm1944, %v3542, %v3543
      %v3545 = vrot.slane %v3543, 4
      %v3546 = vrot.slane %v2729, 5
      %v3547 = vsel %vm1944, %v3545, %v3546
      %v3548 = vrot.slane %v3442, 5
      %v3549 = vrot.slane %v3548, 4
      %v3550 = vrot.slane %v2731, 5
      %v3551 = vsel %vm1944, %v3549, %v3550
      %v3552 = vrot.slane %v3550, 4
      %v3553 = vrot.slane %v2732, 5
      %v3554 = vsel %vm1944, %v3552, %v3553
      %v3555 = vrot.slane %v3443, 5
      %v3556 = vrot.slane %v3555, 4
      %v3557 = vrot.slane %v2734, 5
      %v3558 = vsel %vm1944, %v3556, %v3557
      %v3559 = vrot.slane %v3557, 4
      %v3560 = vrot.slane %v2735, 5
      %v3561 = vsel %vm1944, %v3559, %v3560
      %v3562 = vrot.slane %v3444, 5
      %v3563 = vrot.slane %v3562, 4
      %v3564 = vrot.slane %v2737, 5
      %v3565 = vsel %vm1944, %v3563, %v3564
      %v3566 = vrot.slane %v3564, 4
      %v3567 = vrot.slane %v2738, 5
      %v3568 = vsel %vm1944, %v3566, %v3567
      %v3569 = vrot.slane %v3445, 5
      %v3570 = vrot.slane %v3569, 4
      %v3571 = vrot.slane %v2740, 5
      %v3572 = vsel %vm1944, %v3570, %v3571
      %v3573 = vrot.slane %v3571, 4
      %v3574 = vrot.slane %v2741, 5
      %v3575 = vsel %vm1944, %v3573, %v3574
      %v3576 = vrot.slane %v3446, 5
      %v3577 = vrot.slane %v3576, 4
      %v3578 = vrot.slane %v2743, 5
      %v3579 = vsel %vm1944, %v3577, %v3578
      %v3580 = vrot.slane %v3578, 4
      %v3581 = vrot.slane %v2744, 5
      %v3582 = vsel %vm1944, %v3580, %v3581
      %v3583 = vrot.slane %v3447, 5
      %v3584 = vrot.slane %v3583, 4
      %v3585 = vrot.slane %v2746, 5
      %v3586 = vsel %vm1944, %v3584, %v3585
      %v3587 = vrot.slane %v3585, 4
      %v3588 = vrot.slane %v2747, 5
      %v3589 = vsel %vm1944, %v3587, %v3588
      %v3590 = vrot.slane %v3448, 5
      %v3591 = vrot.slane %v3590, 4
      %v3592 = vrot.slane %v2749, 5
      %v3593 = vsel %vm1944, %v3591, %v3592
      %v3594 = vrot.slane %v3592, 4
      %v3595 = vrot.slane %v2750, 5
      %v3596 = vsel %vm1944, %v3594, %v3595
      %v3597 = vrot.slane %v3449, 5
      %v3598 = vrot.slane %v3597, 4
      %v3599 = vrot.slane %v2752, 5
      %v3600 = vsel %vm1944, %v3598, %v3599
      %v3601 = vrot.slane %v3599, 4
      %v3602 = vrot.slane %v2753, 5
      %v3603 = vsel %vm1944, %v3601, %v3602
      %v3604 = vrot.slane %v3450, 5
      %v3605 = vrot.slane %v3604, 4
      %v3606 = vrot.slane %v2755, 5
      %v3607 = vsel %vm1944, %v3605, %v3606
      %v3608 = vrot.slane %v3606, 4
      %v3609 = vrot.slane %v2756, 5
      %v3610 = vsel %vm1944, %v3608, %v3609
      %s3611 = scalar_lea.vmem %s1, 20
      %v3612 = vld [vmem:[%s3611] sm:$0xf]
      %v3613 = vunpack.c.l.b16 %v3502
      %v3614 = vunpack.c.l.b16 %v3505
      %v3615 = vunpack.c.l.b16 %v3509
      %v3616 = vunpack.c.l.b16 %v3512
      %v3617 = vunpack.c.l.b16 %v3516
      %v3618 = vunpack.c.l.b16 %v3519
      %v3619 = vunpack.c.l.b16 %v3523
      %v3620 = vunpack.c.l.b16 %v3526
      %v3621 = vunpack.c.l.b16 %v3530
      %v3622 = vunpack.c.l.b16 %v3533
      %v3623 = vunpack.c.l.b16 %v3537
      %v3624 = vunpack.c.l.b16 %v3540
      %v3625 = vunpack.c.l.b16 %v3544
      %v3626 = vunpack.c.l.b16 %v3547
      %v3627 = vunpack.c.l.b16 %v3551
      %v3628 = vunpack.c.l.b16 %v3554
      %v3629 = vunpack.c.l.b16 %v3558
      %v3630 = vunpack.c.l.b16 %v3561
      %v3631 = vunpack.c.l.b16 %v3565
      %v3632 = vunpack.c.l.b16 %v3568
      %v3633 = vunpack.c.l.b16 %v3572
      %v3634 = vunpack.c.l.b16 %v3575
      %v3635 = vunpack.c.l.b16 %v3579
      %v3636 = vunpack.c.l.b16 %v3582
      %v3637 = vunpack.c.l.b16 %v3586
      %v3638 = vunpack.c.l.b16 %v3589
      %v3639 = vunpack.c.l.b16 %v3593
      %v3640 = vunpack.c.l.b16 %v3596
      %v3641 = vunpack.c.l.b16 %v3600
      %v3642 = vunpack.c.l.b16 %v3603
      %v3643 = vunpack.c.l.b16 %v3607
      %v3644 = vunpack.c.l.b16 %v3610
      %v3645 = vpack.c.b16 %v3614, %v3613
      %v3646 = vpack.c.b16 %v3616, %v3615
      %v3647 = vpack.c.b16 %v3618, %v3617
      %v3648 = vpack.c.b16 %v3620, %v3619
      %v3649 = vpack.c.b16 %v3622, %v3621
      %v3650 = vpack.c.b16 %v3624, %v3623
      %v3651 = vpack.c.b16 %v3626, %v3625
      %v3652 = vpack.c.b16 %v3628, %v3627
      %v3653 = vpack.c.b16 %v3630, %v3629
      %v3654 = vpack.c.b16 %v3632, %v3631
      %v3655 = vpack.c.b16 %v3634, %v3633
      %v3656 = vpack.c.b16 %v3636, %v3635
      %v3657 = vpack.c.b16 %v3638, %v3637
      %v3658 = vpack.c.b16 %v3640, %v3639
      %v3659 = vpack.c.b16 %v3642, %v3641
      %v3660 = vpack.c.b16 %v3644, %v3643
      %v3662 = vsel %vm1388, %v3645, 0
      %v3665 = vsel %vm1388, %v3646, 0
      %v3668 = vsel %vm1388, %v3647, 0
      %v3671 = vsel %vm1388, %v3648, 0
      %v3674 = vsel %vm1388, %v3649, 0
      %v3677 = vsel %vm1388, %v3650, 0
      %v3680 = vsel %vm1388, %v3651, 0
      %v3683 = vsel %vm1388, %v3652, 0
      %v3686 = vsel %vm1388, %v3653, 0
      %v3689 = vsel %vm1388, %v3654, 0
      %v3692 = vsel %vm1388, %v3655, 0
      %v3695 = vsel %vm1388, %v3656, 0
      %v3698 = vsel %vm1388, %v3657, 0
      %v3701 = vsel %vm1388, %v3658, 0
      %v3704 = vsel %vm1388, %v3659, 0
      %v3707 = vsel %vm1388, %v3660, 0
      %v3710 = vsel %vm1437, %v3612, 0
      %3712 = vmatprep.subr.bf16.mxu0 0
      %3713 = vmatpush1.bf16.msra.mxu0 %v3710
      %3714 = vmatprep.subr.bf16.mxu0 0
      %3715 = vmatpush1.bf16.msra.mxu0 0
      %3716 = vmatprep.subr.bf16.mxu0 0
      %3717 = vmatpush1.bf16.msra.mxu0 0
      %3718 = vmatprep.subr.bf16.mxu0 0
      %3719 = vmatpush1.bf16.msra.mxu0 0
      %3720 = vmatprep.subr.bf16.mxu0 0
      %3721 = vmatpush1.bf16.msra.mxu0 0
      %3722 = vmatprep.subr.bf16.mxu0 0
      %3723 = vmatpush1.bf16.msra.mxu0 0
      %3724 = vmatprep.subr.bf16.mxu0 0
      %3725 = vmatpush1.bf16.msra.mxu0 0
      %3726 = vmatprep.subr.bf16.mxu0 0
      %3727 = vmatpush1.bf16.msra.mxu0 0
      %3728 = vmatprep.subr.bf16.mxu0 0
      %3729 = vmatpush1.bf16.msra.mxu0 0
      %3730 = vmatprep.subr.bf16.mxu0 0
      %3731 = vmatpush1.bf16.msra.mxu0 0
      %3732 = vmatprep.subr.bf16.mxu0 0
      %3733 = vmatpush1.bf16.msra.mxu0 0
      %3734 = vmatprep.subr.bf16.mxu0 0
      %3735 = vmatpush1.bf16.msra.mxu0 0
      %3736 = vmatprep.subr.bf16.mxu0 0
      %3737 = vmatpush1.bf16.msra.mxu0 0
      %3738 = vmatprep.subr.bf16.mxu0 0
      %3739 = vmatpush1.bf16.msra.mxu0 0
      %3740 = vmatprep.subr.bf16.mxu0 0
      %3741 = vmatpush1.bf16.msra.mxu0 0
      %3742 = vmatprep.subr.bf16.mxu0 0
      %3743 = vmatpush1.bf16.msra.mxu0 0
      %3744 = vmatprep.mubr.bf16.mxu0 0
      %3745 = vmatmul.mubr.bf16.gmra.mrb[0].mxu0 %v3662
      %v3746 = vpop.f32.mrb[0].mxu0
      %v3747 = vadd.f32 0.0, %v3746
      %v3748 = vpop.f32.mrb[0].mxu0
      %v3749 = vpop.f32.mrb[0].mxu0
      %v3750 = vadd.f32 0.0, %v3749
      %v3751 = vpop.f32.mrb[0].mxu0
      %3752 = vmatprep.mubr.bf16.mxu0 0
      %3753 = vmatmul.mubr.bf16.gmra.mrb[0].mxu0 %v3665
      %v3754 = vpop.f32.mrb[0].mxu0
      %v3755 = vadd.f32 0.0, %v3754
      %v3756 = vpop.f32.mrb[0].mxu0
      %v3757 = vpop.f32.mrb[0].mxu0
      %v3758 = vadd.f32 0.0, %v3757
      %v3759 = vpop.f32.mrb[0].mxu0
      %3760 = vmatprep.mubr.bf16.mxu0 0
      %3761 = vmatmul.mubr.bf16.gmra.mrb[0].mxu0 %v3668
      %v3762 = vpop.f32.mrb[0].mxu0
      %v3763 = vadd.f32 0.0, %v3762
      %v3764 = vpop.f32.mrb[0].mxu0
      %v3765 = vpop.f32.mrb[0].mxu0
      %v3766 = vadd.f32 0.0, %v3765
      %v3767 = vpop.f32.mrb[0].mxu0
      %3768 = vmatprep.mubr.bf16.mxu0 0
      %3769 = vmatmul.mubr.bf16.gmra.mrb[0].mxu0 %v3671
      %v3770 = vpop.f32.mrb[0].mxu0
      %v3771 = vadd.f32 0.0, %v3770
      %v3772 = vpop.f32.mrb[0].mxu0
      %v3773 = vpop.f32.mrb[0].mxu0
      %v3774 = vadd.f32 0.0, %v3773
      %v3775 = vpop.f32.mrb[0].mxu0
      %3776 = vmatprep.mubr.bf16.mxu0 0
      %3777 = vmatmul.mubr.bf16.gmra.mrb[0].mxu0 %v3674
      %v3778 = vpop.f32.mrb[0].mxu0
      %v3779 = vadd.f32 0.0, %v3778
      %v3780 = vpop.f32.mrb[0].mxu0
      %v3781 = vpop.f32.mrb[0].mxu0
      %v3782 = vadd.f32 0.0, %v3781
      %v3783 = vpop.f32.mrb[0].mxu0
      %3784 = vmatprep.mubr.bf16.mxu0 0
      %3785 = vmatmul.mubr.bf16.gmra.mrb[0].mxu0 %v3677
      %v3786 = vpop.f32.mrb[0].mxu0
      %v3787 = vadd.f32 0.0, %v3786
      %v3788 = vpop.f32.mrb[0].mxu0
      %v3789 = vpop.f32.mrb[0].mxu0
      %v3790 = vadd.f32 0.0, %v3789
      %v3791 = vpop.f32.mrb[0].mxu0
      %3792 = vmatprep.mubr.bf16.mxu0 0
      %3793 = vmatmul.mubr.bf16.gmra.mrb[0].mxu0 %v3680
      %v3794 = vpop.f32.mrb[0].mxu0
      %v3795 = vadd.f32 0.0, %v3794
      %v3796 = vpop.f32.mrb[0].mxu0
      %v3797 = vpop.f32.mrb[0].mxu0
      %v3798 = vadd.f32 0.0, %v3797
      %v3799 = vpop.f32.mrb[0].mxu0
      %3800 = vmatprep.mubr.bf16.mxu0 0
      %3801 = vmatmul.mubr.bf16.gmra.mrb[0].mxu0 %v3683
      %v3802 = vpop.f32.mrb[0].mxu0
      %v3803 = vadd.f32 0.0, %v3802
      %v3804 = vpop.f32.mrb[0].mxu0
      %v3805 = vpop.f32.mrb[0].mxu0
      %v3806 = vadd.f32 0.0, %v3805
      %v3807 = vpop.f32.mrb[0].mxu0
      %3808 = vmatprep.mubr.bf16.mxu0 0
      %3809 = vmatmul.mubr.bf16.gmra.mrb[0].mxu0 %v3686
      %v3810 = vpop.f32.mrb[0].mxu0
      %v3811 = vadd.f32 0.0, %v3810
      %v3812 = vpop.f32.mrb[0].mxu0
      %v3813 = vpop.f32.mrb[0].mxu0
      %v3814 = vadd.f32 0.0, %v3813
      %v3815 = vpop.f32.mrb[0].mxu0
      %3816 = vmatprep.mubr.bf16.mxu0 0
      %3817 = vmatmul.mubr.bf16.gmra.mrb[0].mxu0 %v3689
      %v3818 = vpop.f32.mrb[0].mxu0
      %v3819 = vadd.f32 0.0, %v3818
      %v3820 = vpop.f32.mrb[0].mxu0
      %v3821 = vpop.f32.mrb[0].mxu0
      %v3822 = vadd.f32 0.0, %v3821
      %v3823 = vpop.f32.mrb[0].mxu0
      %3824 = vmatprep.mubr.bf16.mxu0 0
      %3825 = vmatmul.mubr.bf16.gmra.mrb[0].mxu0 %v3692
      %v3826 = vpop.f32.mrb[0].mxu0
      %v3827 = vadd.f32 0.0, %v3826
      %v3828 = vpop.f32.mrb[0].mxu0
      %v3829 = vpop.f32.mrb[0].mxu0
      %v3830 = vadd.f32 0.0, %v3829
      %v3831 = vpop.f32.mrb[0].mxu0
      %3832 = vmatprep.mubr.bf16.mxu0 0
      %3833 = vmatmul.mubr.bf16.gmra.mrb[0].mxu0 %v3695
      %v3834 = vpop.f32.mrb[0].mxu0
      %v3835 = vadd.f32 0.0, %v3834
      %v3836 = vpop.f32.mrb[0].mxu0
      %v3837 = vpop.f32.mrb[0].mxu0
      %v3838 = vadd.f32 0.0, %v3837
      %v3839 = vpop.f32.mrb[0].mxu0
      %3840 = vmatprep.mubr.bf16.mxu0 0
      %3841 = vmatmul.mubr.bf16.gmra.mrb[0].mxu0 %v3698
      %v3842 = vpop.f32.mrb[0].mxu0
      %v3843 = vadd.f32 0.0, %v3842
      %v3844 = vpop.f32.mrb[0].mxu0
      %v3845 = vpop.f32.mrb[0].mxu0
      %v3846 = vadd.f32 0.0, %v3845
      %v3847 = vpop.f32.mrb[0].mxu0
      %3848 = vmatprep.mubr.bf16.mxu0 0
      %3849 = vmatmul.mubr.bf16.gmra.mrb[0].mxu0 %v3701
      %v3850 = vpop.f32.mrb[0].mxu0
      %v3851 = vadd.f32 0.0, %v3850
      %v3852 = vpop.f32.mrb[0].mxu0
      %v3853 = vpop.f32.mrb[0].mxu0
      %v3854 = vadd.f32 0.0, %v3853
      %v3855 = vpop.f32.mrb[0].mxu0
      %3856 = vmatprep.mubr.bf16.mxu0 0
      %3857 = vmatmul.mubr.bf16.gmra.mrb[0].mxu0 %v3704
      %v3858 = vpop.f32.mrb[0].mxu0
      %v3859 = vadd.f32 0.0, %v3858
      %v3860 = vpop.f32.mrb[0].mxu0
      %v3861 = vpop.f32.mrb[0].mxu0
      %v3862 = vadd.f32 0.0, %v3861
      %v3863 = vpop.f32.mrb[0].mxu0
      %3864 = vmatprep.mubr.bf16.mxu0 0
      %3865 = vmatmul.mubr.bf16.gmra.mrb[0].mxu0 %v3707
      %v3866 = vpop.f32.mrb[0].mxu0
      %v3867 = vadd.f32 0.0, %v3866
      %v3868 = vpop.f32.mrb[0].mxu0
      %v3869 = vpop.f32.mrb[0].mxu0
      %v3870 = vadd.f32 0.0, %v3869
      %v3871 = vpop.f32.mrb[0].mxu0
      %3872 = vdwg.mxu0
      %v3873 = vadd.f32 %v3403, %v3747
      %v3874 = vadd.f32 %v3404, %v3750
      %v3875 = vadd.f32 %v3405, %v3755
      %v3876 = vadd.f32 %v3406, %v3758
      %v3877 = vadd.f32 %v3407, %v3763
      %v3878 = vadd.f32 %v3408, %v3766
      %v3879 = vadd.f32 %v3409, %v3771
      %v3880 = vadd.f32 %v3410, %v3774
      %v3881 = vadd.f32 %v3411, %v3779
      %v3882 = vadd.f32 %v3412, %v3782
      %v3883 = vadd.f32 %v3413, %v3787
      %v3884 = vadd.f32 %v3414, %v3790
      %v3885 = vadd.f32 %v3415, %v3795
      %v3886 = vadd.f32 %v3416, %v3798
      %v3887 = vadd.f32 %v3417, %v3803
      %v3888 = vadd.f32 %v3418, %v3806
      %v3889 = vadd.f32 %v3419, %v3811
      %v3890 = vadd.f32 %v3420, %v3814
      %v3891 = vadd.f32 %v3421, %v3819
      %v3892 = vadd.f32 %v3422, %v3822
      %v3893 = vadd.f32 %v3423, %v3827
      %v3894 = vadd.f32 %v3424, %v3830
      %v3895 = vadd.f32 %v3425, %v3835
      %v3896 = vadd.f32 %v3426, %v3838
      %v3897 = vadd.f32 %v3427, %v3843
      %v3898 = vadd.f32 %v3428, %v3846
      %v3899 = vadd.f32 %v3429, %v3851
      %v3900 = vadd.f32 %v3430, %v3854
      %v3901 = vadd.f32 %v3431, %v3859
      %v3902 = vadd.f32 %v3432, %v3862
      %v3903 = vadd.f32 %v3433, %v3867
      %v3904 = vadd.f32 %v3434, %v3870
      %s3905 = scalar_lea.vmem [#allocation2], 24
      %v3906 = vld [vmem:[%s3905] sm:$0xf]
      %v3907 = vld [vmem:[%s3905 + $0x4] sm:$0xf]
      %v3908 = vld [vmem:[%s3905 + $0xc] sm:$0xf]
      %v3909 = vld [vmem:[%s3905 + $0x10] sm:$0xf]
      %v3910 = vld [vmem:[%s3905 + $0x18] sm:$0xf]
      %v3911 = vld [vmem:[%s3905 + $0x1c] sm:$0xf]
      %v3912 = vld [vmem:[%s3905 + $0x24] sm:$0xf]
      %v3913 = vld [vmem:[%s3905 + $0x28] sm:$0xf]
      %v3914 = vld [vmem:[%s3905 + $0x30] sm:$0xf]
      %v3915 = vld [vmem:[%s3905 + $0x34] sm:$0xf]
      %v3916 = vld [vmem:[%s3905 + $0x3c] sm:$0xf]
      %v3917 = vld [vmem:[%s3905 + $0x40] sm:$0xf]
      %v3918 = vld [vmem:[%s3905 + $0x48] sm:$0xf]
      %v3919 = vld [vmem:[%s3905 + $0x4c] sm:$0xf]
      %v3920 = vld [vmem:[%s3905 + $0x54] sm:$0xf]
      %v3921 = vld [vmem:[%s3905 + $0x58] sm:$0xf]
      %v3922 = vld [vmem:[%s3905 + $0x60] sm:$0xf]
      %v3923 = vld [vmem:[%s3905 + $0x64] sm:$0xf]
      %v3924 = vld [vmem:[%s3905 + $0x6c] sm:$0xf]
      %v3925 = vld [vmem:[%s3905 + $0x70] sm:$0xf]
      %v3926 = vld [vmem:[%s3905 + $0x78] sm:$0xf]
      %v3927 = vld [vmem:[%s3905 + $0x7c] sm:$0xf]
      %v3928 = vld [vmem:[%s3905 + $0x84] sm:$0xf]
      %v3929 = vld [vmem:[%s3905 + $0x88] sm:$0xf]
      %v3930 = vld [vmem:[%s3905 + $0x90] sm:$0xf]
      %v3931 = vld [vmem:[%s3905 + $0x94] sm:$0xf]
      %v3932 = vld [vmem:[%s3905 + $0x9c] sm:$0xf]
      %v3933 = vld [vmem:[%s3905 + $0xa0] sm:$0xf]
      %v3934 = vld [vmem:[%s3905 + $0xa8] sm:$0xf]
      %v3935 = vld [vmem:[%s3905 + $0xac] sm:$0xf]
      %v3936 = vld [vmem:[%s3905 + $0xb4] sm:$0xf]
      %v3937 = vld [vmem:[%s3905 + $0xb8] sm:$0xf]
      %s3938 = scalar_lea.vmem %s1, 24
      %v3939 = vld [vmem:[%s3938] sm:$0xf]
      %v3972 = vunpack.c.l.b16 %v3906
      %v3973 = vunpack.c.l.b16 %v3907
      %v3974 = vunpack.c.l.b16 %v3908
      %v3975 = vunpack.c.l.b16 %v3909
      %v3976 = vunpack.c.l.b16 %v3910
      %v3977 = vunpack.c.l.b16 %v3911
      %v3978 = vunpack.c.l.b16 %v3912
      %v3979 = vunpack.c.l.b16 %v3913
      %v3980 = vunpack.c.l.b16 %v3914
      %v3981 = vunpack.c.l.b16 %v3915
      %v3982 = vunpack.c.l.b16 %v3916
      %v3983 = vunpack.c.l.b16 %v3917
      %v3984 = vunpack.c.l.b16 %v3918
      %v3985 = vunpack.c.l.b16 %v3919
      %v3986 = vunpack.c.l.b16 %v3920
      %v3987 = vunpack.c.l.b16 %v3921
      %v3988 = vunpack.c.l.b16 %v3922
      %v3989 = vunpack.c.l.b16 %v3923
      %v3990 = vunpack.c.l.b16 %v3924
      %v3991 = vunpack.c.l.b16 %v3925
      %v3992 = vunpack.c.l.b16 %v3926
      %v3993 = vunpack.c.l.b16 %v3927
      %v3994 = vunpack.c.l.b16 %v3928
      %v3995 = vunpack.c.l.b16 %v3929
      %v3996 = vunpack.c.l.b16 %v3930
      %v3997 = vunpack.c.l.b16 %v3931
      %v3998 = vunpack.c.l.b16 %v3932
      %v3999 = vunpack.c.l.b16 %v3933
      %v4000 = vunpack.c.l.b16 %v3934
      %v4001 = vunpack.c.l.b16 %v3935
      %v4002 = vunpack.c.l.b16 %v3936
      %v4003 = vunpack.c.l.b16 %v3937
      %v4004 = vpack.c.b16 %v3973, %v3972
      %v4005 = vpack.c.b16 %v3975, %v3974
      %v4006 = vpack.c.b16 %v3977, %v3976
      %v4007 = vpack.c.b16 %v3979, %v3978
      %v4008 = vpack.c.b16 %v3981, %v3980
      %v4009 = vpack.c.b16 %v3983, %v3982
      %v4010 = vpack.c.b16 %v3985, %v3984
      %v4011 = vpack.c.b16 %v3987, %v3986
      %v4012 = vpack.c.b16 %v3989, %v3988
      %v4013 = vpack.c.b16 %v3991, %v3990
      %v4014 = vpack.c.b16 %v3993, %v3992
      %v4015 = vpack.c.b16 %v3995, %v3994
      %v4016 = vpack.c.b16 %v3997, %v3996
      %v4017 = vpack.c.b16 %v3999, %v3998
      %v4018 = vpack.c.b16 %v4001, %v4000
      %v4019 = vpack.c.b16 %v4003, %v4002
      %v4021 = vsel %vm1388, %v4004, 0
      %v4024 = vsel %vm1388, %v4005, 0
      %v4027 = vsel %vm1388, %v4006, 0
      %v4030 = vsel %vm1388, %v4007, 0
      %v4033 = vsel %vm1388, %v4008, 0
      %v4036 = vsel %vm1388, %v4009, 0
      %v4039 = vsel %vm1388, %v4010, 0
      %v4042 = vsel %vm1388, %v4011, 0
      %v4045 = vsel %vm1388, %v4012, 0
      %v4048 = vsel %vm1388, %v4013, 0
      %v4051 = vsel %vm1388, %v4014, 0
      %v4054 = vsel %vm1388, %v4015, 0
      %v4057 = vsel %vm1388, %v4016, 0
      %v4060 = vsel %vm1388, %v4017, 0
      %v4063 = vsel %vm1388, %v4018, 0
      %v4066 = vsel %vm1388, %v4019, 0
      %v4069 = vsel %vm1437, %v3939, 0
      %4071 = vmatprep.subr.bf16.mxu0 0
      %4072 = vmatpush1.bf16.msra.mxu0 %v4069
      %4073 = vmatprep.subr.bf16.mxu0 0
      %4074 = vmatpush1.bf16.msra.mxu0 0
      %4075 = vmatprep.subr.bf16.mxu0 0
      %4076 = vmatpush1.bf16.msra.mxu0 0
      %4077 = vmatprep.subr.bf16.mxu0 0
      %4078 = vmatpush1.bf16.msra.mxu0 0
      %4079 = vmatprep.subr.bf16.mxu0 0
      %4080 = vmatpush1.bf16.msra.mxu0 0
      %4081 = vmatprep.subr.bf16.mxu0 0
      %4082 = vmatpush1.bf16.msra.mxu0 0
      %4083 = vmatprep.subr.bf16.mxu0 0
      %4084 = vmatpush1.bf16.msra.mxu0 0
      %4085 = vmatprep.subr.bf16.mxu0 0
      %4086 = vmatpush1.bf16.msra.mxu0 0
      %4087 = vmatprep.subr.bf16.mxu0 0
      %4088 = vmatpush1.bf16.msra.mxu0 0
      %4089 = vmatprep.subr.bf16.mxu0 0
      %4090 = vmatpush1.bf16.msra.mxu0 0
      %4091 = vmatprep.subr.bf16.mxu0 0
      %4092 = vmatpush1.bf16.msra.mxu0 0
      %4093 = vmatprep.subr.bf16.mxu0 0
      %4094 = vmatpush1.bf16.msra.mxu0 0
      %4095 = vmatprep.subr.bf16.mxu0 0
      %4096 = vmatpush1.bf16.msra.mxu0 0
      %4097 = vmatprep.subr.bf16.mxu0 0
      %4098 = vmatpush1.bf16.msra.mxu0 0
      %4099 = vmatprep.subr.bf16.mxu0 0
      %4100 = vmatpush1.bf16.msra.mxu0 0
      %4101 = vmatprep.subr.bf16.mxu0 0
      %4102 = vmatpush1.bf16.msra.mxu0 0
      %4103 = vmatprep.mubr.bf16.mxu0 0
      %4104 = vmatmul.mubr.bf16.gmra.mrb[0].mxu0 %v4021
      %v4105 = vpop.f32.mrb[0].mxu0
      %v4106 = vadd.f32 0.0, %v4105
      %v4107 = vpop.f32.mrb[0].mxu0
      %v4108 = vpop.f32.mrb[0].mxu0
      %v4109 = vadd.f32 0.0, %v4108
      %v4110 = vpop.f32.mrb[0].mxu0
      %4111 = vmatprep.mubr.bf16.mxu0 0
      %4112 = vmatmul.mubr.bf16.gmra.mrb[0].mxu0 %v4024
      %v4113 = vpop.f32.mrb[0].mxu0
      %v4114 = vadd.f32 0.0, %v4113
      %v4115 = vpop.f32.mrb[0].mxu0
      %v4116 = vpop.f32.mrb[0].mxu0
      %v4117 = vadd.f32 0.0, %v4116
      %v4118 = vpop.f32.mrb[0].mxu0
      %4119 = vmatprep.mubr.bf16.mxu0 0
      %4120 = vmatmul.mubr.bf16.gmra.mrb[0].mxu0 %v4027
      %v4121 = vpop.f32.mrb[0].mxu0
      %v4122 = vadd.f32 0.0, %v4121
      %v4123 = vpop.f32.mrb[0].mxu0
      %v4124 = vpop.f32.mrb[0].mxu0
      %v4125 = vadd.f32 0.0, %v4124
      %v4126 = vpop.f32.mrb[0].mxu0
      %4127 = vmatprep.mubr.bf16.mxu0 0
      %4128 = vmatmul.mubr.bf16.gmra.mrb[0].mxu0 %v4030
      %v4129 = vpop.f32.mrb[0].mxu0
      %v4130 = vadd.f32 0.0, %v4129
      %v4131 = vpop.f32.mrb[0].mxu0
      %v4132 = vpop.f32.mrb[0].mxu0
      %v4133 = vadd.f32 0.0, %v4132
      %v4134 = vpop.f32.mrb[0].mxu0
      %4135 = vmatprep.mubr.bf16.mxu0 0
      %4136 = vmatmul.mubr.bf16.gmra.mrb[0].mxu0 %v4033
      %v4137 = vpop.f32.mrb[0].mxu0
      %v4138 = vadd.f32 0.0, %v4137
      %v4139 = vpop.f32.mrb[0].mxu0
      %v4140 = vpop.f32.mrb[0].mxu0
      %v4141 = vadd.f32 0.0, %v4140
      %v4142 = vpop.f32.mrb[0].mxu0
      %4143 = vmatprep.mubr.bf16.mxu0 0
      %4144 = vmatmul.mubr.bf16.gmra.mrb[0].mxu0 %v4036
      %v4145 = vpop.f32.mrb[0].mxu0
      %v4146 = vadd.f32 0.0, %v4145
      %v4147 = vpop.f32.mrb[0].mxu0
      %v4148 = vpop.f32.mrb[0].mxu0
      %v4149 = vadd.f32 0.0, %v4148
      %v4150 = vpop.f32.mrb[0].mxu0
      %4151 = vmatprep.mubr.bf16.mxu0 0
      %4152 = vmatmul.mubr.bf16.gmra.mrb[0].mxu0 %v4039
      %v4153 = vpop.f32.mrb[0].mxu0
      %v4154 = vadd.f32 0.0, %v4153
      %v4155 = vpop.f32.mrb[0].mxu0
      %v4156 = vpop.f32.mrb[0].mxu0
      %v4157 = vadd.f32 0.0, %v4156
      %v4158 = vpop.f32.mrb[0].mxu0
      %4159 = vmatprep.mubr.bf16.mxu0 0
      %4160 = vmatmul.mubr.bf16.gmra.mrb[0].mxu0 %v4042
      %v4161 = vpop.f32.mrb[0].mxu0
      %v4162 = vadd.f32 0.0, %v4161
      %v4163 = vpop.f32.mrb[0].mxu0
      %v4164 = vpop.f32.mrb[0].mxu0
      %v4165 = vadd.f32 0.0, %v4164
      %v4166 = vpop.f32.mrb[0].mxu0
      %4167 = vmatprep.mubr.bf16.mxu0 0
      %4168 = vmatmul.mubr.bf16.gmra.mrb[0].mxu0 %v4045
      %v4169 = vpop.f32.mrb[0].mxu0
      %v4170 = vadd.f32 0.0, %v4169
      %v4171 = vpop.f32.mrb[0].mxu0
      %v4172 = vpop.f32.mrb[0].mxu0
      %v4173 = vadd.f32 0.0, %v4172
      %v4174 = vpop.f32.mrb[0].mxu0
      %4175 = vmatprep.mubr.bf16.mxu0 0
      %4176 = vmatmul.mubr.bf16.gmra.mrb[0].mxu0 %v4048
      %v4177 = vpop.f32.mrb[0].mxu0
      %v4178 = vadd.f32 0.0, %v4177
      %v4179 = vpop.f32.mrb[0].mxu0
      %v4180 = vpop.f32.mrb[0].mxu0
      %v4181 = vadd.f32 0.0, %v4180
      %v4182 = vpop.f32.mrb[0].mxu0
      %4183 = vmatprep.mubr.bf16.mxu0 0
      %4184 = vmatmul.mubr.bf16.gmra.mrb[0].mxu0 %v4051
      %v4185 = vpop.f32.mrb[0].mxu0
      %v4186 = vadd.f32 0.0, %v4185
      %v4187 = vpop.f32.mrb[0].mxu0
      %v4188 = vpop.f32.mrb[0].mxu0
      %v4189 = vadd.f32 0.0, %v4188
      %v4190 = vpop.f32.mrb[0].mxu0
      %4191 = vmatprep.mubr.bf16.mxu0 0
      %4192 = vmatmul.mubr.bf16.gmra.mrb[0].mxu0 %v4054
      %v4193 = vpop.f32.mrb[0].mxu0
      %v4194 = vadd.f32 0.0, %v4193
      %v4195 = vpop.f32.mrb[0].mxu0
      %v4196 = vpop.f32.mrb[0].mxu0
      %v4197 = vadd.f32 0.0, %v4196
      %v4198 = vpop.f32.mrb[0].mxu0
      %4199 = vmatprep.mubr.bf16.mxu0 0
      %4200 = vmatmul.mubr.bf16.gmra.mrb[0].mxu0 %v4057
      %v4201 = vpop.f32.mrb[0].mxu0
      %v4202 = vadd.f32 0.0, %v4201
      %v4203 = vpop.f32.mrb[0].mxu0
      %v4204 = vpop.f32.mrb[0].mxu0
      %v4205 = vadd.f32 0.0, %v4204
      %v4206 = vpop.f32.mrb[0].mxu0
      %4207 = vmatprep.mubr.bf16.mxu0 0
      %4208 = vmatmul.mubr.bf16.gmra.mrb[0].mxu0 %v4060
      %v4209 = vpop.f32.mrb[0].mxu0
      %v4210 = vadd.f32 0.0, %v4209
      %v4211 = vpop.f32.mrb[0].mxu0
      %v4212 = vpop.f32.mrb[0].mxu0
      %v4213 = vadd.f32 0.0, %v4212
      %v4214 = vpop.f32.mrb[0].mxu0
      %4215 = vmatprep.mubr.bf16.mxu0 0
      %4216 = vmatmul.mubr.bf16.gmra.mrb[0].mxu0 %v4063
      %v4217 = vpop.f32.mrb[0].mxu0
      %v4218 = vadd.f32 0.0, %v4217
      %v4219 = vpop.f32.mrb[0].mxu0
      %v4220 = vpop.f32.mrb[0].mxu0
      %v4221 = vadd.f32 0.0, %v4220
      %v4222 = vpop.f32.mrb[0].mxu0
      %4223 = vmatprep.mubr.bf16.mxu0 0
      %4224 = vmatmul.mubr.bf16.gmra.mrb[0].mxu0 %v4066
      %v4225 = vpop.f32.mrb[0].mxu0
      %v4226 = vadd.f32 0.0, %v4225
      %v4227 = vpop.f32.mrb[0].mxu0
      %v4228 = vpop.f32.mrb[0].mxu0
      %v4229 = vadd.f32 0.0, %v4228
      %v4230 = vpop.f32.mrb[0].mxu0
      %4231 = vdwg.mxu0
      %v4232 = vadd.f32 %v3873, %v4106
      %v4233 = vadd.f32 %v3874, %v4109
      %v4234 = vadd.f32 %v3875, %v4114
      %v4235 = vadd.f32 %v3876, %v4117
      %v4236 = vadd.f32 %v3877, %v4122
      %v4237 = vadd.f32 %v3878, %v4125
      %v4238 = vadd.f32 %v3879, %v4130
      %v4239 = vadd.f32 %v3880, %v4133
      %v4240 = vadd.f32 %v3881, %v4138
      %v4241 = vadd.f32 %v3882, %v4141
      %v4242 = vadd.f32 %v3883, %v4146
      %v4243 = vadd.f32 %v3884, %v4149
      %v4244 = vadd.f32 %v3885, %v4154
      %v4245 = vadd.f32 %v3886, %v4157
      %v4246 = vadd.f32 %v3887, %v4162
      %v4247 = vadd.f32 %v3888, %v4165
      %v4248 = vadd.f32 %v3889, %v4170
      %v4249 = vadd.f32 %v3890, %v4173
      %v4250 = vadd.f32 %v3891, %v4178
      %v4251 = vadd.f32 %v3892, %v4181
      %v4252 = vadd.f32 %v3893, %v4186
      %v4253 = vadd.f32 %v3894, %v4189
      %v4254 = vadd.f32 %v3895, %v4194
      %v4255 = vadd.f32 %v3896, %v4197
      %v4256 = vadd.f32 %v3897, %v4202
      %v4257 = vadd.f32 %v3898, %v4205
      %v4258 = vadd.f32 %v3899, %v4210
      %v4259 = vadd.f32 %v3900, %v4213
      %v4260 = vadd.f32 %v3901, %v4218
      %v4261 = vadd.f32 %v3902, %v4221
      %v4262 = vadd.f32 %v3903, %v4226
      %v4263 = vadd.f32 %v3904, %v4229
      %v4264 = vld [vmem:[%s3905] sm:$0xf]
      %v4265 = vld [vmem:[%s3905 + $0x4] sm:$0xf]
      %v4266 = vld [vmem:[%s3905 + $0x8] sm:$0x1]
      %v4267 = vld [vmem:[%s3905 + $0xc] sm:$0xf]
      %v4268 = vld [vmem:[%s3905 + $0x10] sm:$0xf]
      %v4269 = vld [vmem:[%s3905 + $0x14] sm:$0x1]
      %v4270 = vld [vmem:[%s3905 + $0x18] sm:$0xf]
      %v4271 = vld [vmem:[%s3905 + $0x1c] sm:$0xf]
      %v4272 = vld [vmem:[%s3905 + $0x20] sm:$0x1]
      %v4273 = vld [vmem:[%s3905 + $0x24] sm:$0xf]
      %v4274 = vld [vmem:[%s3905 + $0x28] sm:$0xf]
      %v4275 = vld [vmem:[%s3905 + $0x2c] sm:$0x1]
      %v4276 = vld [vmem:[%s3905 + $0x30] sm:$0xf]
      %v4277 = vld [vmem:[%s3905 + $0x34] sm:$0xf]
      %v4278 = vld [vmem:[%s3905 + $0x38] sm:$0x1]
      %v4279 = vld [vmem:[%s3905 + $0x3c] sm:$0xf]
      %v4280 = vld [vmem:[%s3905 + $0x40] sm:$0xf]
      %v4281 = vld [vmem:[%s3905 + $0x44] sm:$0x1]
      %v4282 = vld [vmem:[%s3905 + $0x48] sm:$0xf]
      %v4283 = vld [vmem:[%s3905 + $0x4c] sm:$0xf]
      %v4284 = vld [vmem:[%s3905 + $0x50] sm:$0x1]
      %v4285 = vld [vmem:[%s3905 + $0x54] sm:$0xf]
      %v4286 = vld [vmem:[%s3905 + $0x58] sm:$0xf]
      %v4287 = vld [vmem:[%s3905 + $0x5c] sm:$0x1]
      %v4288 = vld [vmem:[%s3905 + $0x60] sm:$0xf]
      %v4289 = vld [vmem:[%s3905 + $0x64] sm:$0xf]
      %v4290 = vld [vmem:[%s3905 + $0x68] sm:$0x1]
      %v4291 = vld [vmem:[%s3905 + $0x6c] sm:$0xf]
      %v4292 = vld [vmem:[%s3905 + $0x70] sm:$0xf]
      %v4293 = vld [vmem:[%s3905 + $0x74] sm:$0x1]
      %v4294 = vld [vmem:[%s3905 + $0x78] sm:$0xf]
      %v4295 = vld [vmem:[%s3905 + $0x7c] sm:$0xf]
      %v4296 = vld [vmem:[%s3905 + $0x80] sm:$0x1]
      %v4297 = vld [vmem:[%s3905 + $0x84] sm:$0xf]
      %v4298 = vld [vmem:[%s3905 + $0x88] sm:$0xf]
      %v4299 = vld [vmem:[%s3905 + $0x8c] sm:$0x1]
      %v4300 = vld [vmem:[%s3905 + $0x90] sm:$0xf]
      %v4301 = vld [vmem:[%s3905 + $0x94] sm:$0xf]
      %v4302 = vld [vmem:[%s3905 + $0x98] sm:$0x1]
      %v4303 = vld [vmem:[%s3905 + $0x9c] sm:$0xf]
      %v4304 = vld [vmem:[%s3905 + $0xa0] sm:$0xf]
      %v4305 = vld [vmem:[%s3905 + $0xa4] sm:$0x1]
      %v4306 = vld [vmem:[%s3905 + $0xa8] sm:$0xf]
      %v4307 = vld [vmem:[%s3905 + $0xac] sm:$0xf]
      %v4308 = vld [vmem:[%s3905 + $0xb0] sm:$0x1]
      %v4309 = vld [vmem:[%s3905 + $0xb4] sm:$0xf]
      %v4310 = vld [vmem:[%s3905 + $0xb8] sm:$0xf]
      %v4311 = vld [vmem:[%s3905 + $0xbc] sm:$0x1]
      %v4313 = vshrl.u32 %v4264, 16
      %v4315 = vrot.slane %v4313, 4
      %v4316 = vshll.u32 %v4264, 16
      %v4318 = vrot.slane %v4316, 5
      %v4319 = vor.u32 %v4315, %v4318
      %v4320 = vrot.slane %v4319, 4
      %v4322 = vshll.u32 %v4265, 16
      %v4324 = vrot.slane %v4322, 5
      %v4325 = vsel %vm953, %v4320, %v4324
      %v4326 = vshrl.u32 %v4265, 16
      %v4328 = vrot.slane %v4326, 4
      %v4329 = vor.u32 %v4328, %v4324
      %v4330 = vrot.slane %v4329, 4
      %v4332 = vshll.u32 %v4266, 16
      %v4334 = vrot.slane %v4332, 5
      %v4335 = vsel %vm953, %v4330, %v4334
      %v4337 = vshrl.u32 %v4267, 16
      %v4339 = vrot.slane %v4337, 4
      %v4340 = vshll.u32 %v4267, 16
      %v4342 = vrot.slane %v4340, 5
      %v4343 = vor.u32 %v4339, %v4342
      %v4344 = vrot.slane %v4343, 4
      %v4346 = vshll.u32 %v4268, 16
      %v4348 = vrot.slane %v4346, 5
      %v4349 = vsel %vm953, %v4344, %v4348
      %v4350 = vshrl.u32 %v4268, 16
      %v4352 = vrot.slane %v4350, 4
      %v4353 = vor.u32 %v4352, %v4348
      %v4354 = vrot.slane %v4353, 4
      %v4356 = vshll.u32 %v4269, 16
      %v4358 = vrot.slane %v4356, 5
      %v4359 = vsel %vm953, %v4354, %v4358
      %v4361 = vshrl.u32 %v4270, 16
      %v4363 = vrot.slane %v4361, 4
      %v4364 = vshll.u32 %v4270, 16
      %v4366 = vrot.slane %v4364, 5
      %v4367 = vor.u32 %v4363, %v4366
      %v4368 = vrot.slane %v4367, 4
      %v4370 = vshll.u32 %v4271, 16
      %v4372 = vrot.slane %v4370, 5
      %v4373 = vsel %vm953, %v4368, %v4372
      %v4374 = vshrl.u32 %v4271, 16
      %v4376 = vrot.slane %v4374, 4
      %v4377 = vor.u32 %v4376, %v4372
      %v4378 = vrot.slane %v4377, 4
      %v4380 = vshll.u32 %v4272, 16
      %v4382 = vrot.slane %v4380, 5
      %v4383 = vsel %vm953, %v4378, %v4382
      %v4385 = vshrl.u32 %v4273, 16
      %v4387 = vrot.slane %v4385, 4
      %v4388 = vshll.u32 %v4273, 16
      %v4390 = vrot.slane %v4388, 5
      %v4391 = vor.u32 %v4387, %v4390
      %v4392 = vrot.slane %v4391, 4
      %v4394 = vshll.u32 %v4274, 16
      %v4396 = vrot.slane %v4394, 5
      %v4397 = vsel %vm953, %v4392, %v4396
      %v4398 = vshrl.u32 %v4274, 16
      %v4400 = vrot.slane %v4398, 4
      %v4401 = vor.u32 %v4400, %v4396
      %v4402 = vrot.slane %v4401, 4
      %v4404 = vshll.u32 %v4275, 16
      %v4406 = vrot.slane %v4404, 5
      %v4407 = vsel %vm953, %v4402, %v4406
      %v4409 = vshrl.u32 %v4276, 16
      %v4411 = vrot.slane %v4409, 4
      %v4412 = vshll.u32 %v4276, 16
      %v4414 = vrot.slane %v4412, 5
      %v4415 = vor.u32 %v4411, %v4414
      %v4416 = vrot.slane %v4415, 4
      %v4418 = vshll.u32 %v4277, 16
      %v4420 = vrot.slane %v4418, 5
      %v4421 = vsel %vm953, %v4416, %v4420
      %v4422 = vshrl.u32 %v4277, 16
      %v4424 = vrot.slane %v4422, 4
      %v4425 = vor.u32 %v4424, %v4420
      %v4426 = vrot.slane %v4425, 4
      %v4428 = vshll.u32 %v4278, 16
      %v4430 = vrot.slane %v4428, 5
      %v4431 = vsel %vm953, %v4426, %v4430
      %v4433 = vshrl.u32 %v4279, 16
      %v4435 = vrot.slane %v4433, 4
      %v4436 = vshll.u32 %v4279, 16
      %v4438 = vrot.slane %v4436, 5
      %v4439 = vor.u32 %v4435, %v4438
      %v4440 = vrot.slane %v4439, 4
      %v4442 = vshll.u32 %v4280, 16
      %v4444 = vrot.slane %v4442, 5
      %v4445 = vsel %vm953, %v4440, %v4444
      %v4446 = vshrl.u32 %v4280, 16
      %v4448 = vrot.slane %v4446, 4
      %v4449 = vor.u32 %v4448, %v4444
      %v4450 = vrot.slane %v4449, 4
      %v4452 = vshll.u32 %v4281, 16
      %v4454 = vrot.slane %v4452, 5
      %v4455 = vsel %vm953, %v4450, %v4454
      %v4457 = vshrl.u32 %v4282, 16
      %v4459 = vrot.slane %v4457, 4
      %v4460 = vshll.u32 %v4282, 16
      %v4462 = vrot.slane %v4460, 5
      %v4463 = vor.u32 %v4459, %v4462
      %v4464 = vrot.slane %v4463, 4
      %v4466 = vshll.u32 %v4283, 16
      %v4468 = vrot.slane %v4466, 5
      %v4469 = vsel %vm953, %v4464, %v4468
      %v4470 = vshrl.u32 %v4283, 16
      %v4472 = vrot.slane %v4470, 4
      %v4473 = vor.u32 %v4472, %v4468
      %v4474 = vrot.slane %v4473, 4
      %v4476 = vshll.u32 %v4284, 16
      %v4478 = vrot.slane %v4476, 5
      %v4479 = vsel %vm953, %v4474, %v4478
      %v4481 = vshrl.u32 %v4285, 16
      %v4483 = vrot.slane %v4481, 4
      %v4484 = vshll.u32 %v4285, 16
      %v4486 = vrot.slane %v4484, 5
      %v4487 = vor.u32 %v4483, %v4486
      %v4488 = vrot.slane %v4487, 4
      %v4490 = vshll.u32 %v4286, 16
      %v4492 = vrot.slane %v4490, 5
      %v4493 = vsel %vm953, %v4488, %v4492
      %v4494 = vshrl.u32 %v4286, 16
      %v4496 = vrot.slane %v4494, 4
      %v4497 = vor.u32 %v4496, %v4492
      %v4498 = vrot.slane %v4497, 4
      %v4500 = vshll.u32 %v4287, 16
      %v4502 = vrot.slane %v4500, 5
      %v4503 = vsel %vm953, %v4498, %v4502
      %v4505 = vshrl.u32 %v4288, 16
      %v4507 = vrot.slane %v4505, 4
      %v4508 = vshll.u32 %v4288, 16
      %v4510 = vrot.slane %v4508, 5
      %v4511 = vor.u32 %v4507, %v4510
      %v4512 = vrot.slane %v4511, 4
      %v4514 = vshll.u32 %v4289, 16
      %v4516 = vrot.slane %v4514, 5
      %v4517 = vsel %vm953, %v4512, %v4516
      %v4518 = vshrl.u32 %v4289, 16
      %v4520 = vrot.slane %v4518, 4
      %v4521 = vor.u32 %v4520, %v4516
      %v4522 = vrot.slane %v4521, 4
      %v4524 = vshll.u32 %v4290, 16
      %v4526 = vrot.slane %v4524, 5
      %v4527 = vsel %vm953, %v4522, %v4526
      %v4529 = vshrl.u32 %v4291, 16
      %v4531 = vrot.slane %v4529, 4
      %v4532 = vshll.u32 %v4291, 16
      %v4534 = vrot.slane %v4532, 5
      %v4535 = vor.u32 %v4531, %v4534
      %v4536 = vrot.slane %v4535, 4
      %v4538 = vshll.u32 %v4292, 16
      %v4540 = vrot.slane %v4538, 5
      %v4541 = vsel %vm953, %v4536, %v4540
      %v4542 = vshrl.u32 %v4292, 16
      %v4544 = vrot.slane %v4542, 4
      %v4545 = vor.u32 %v4544, %v4540
      %v4546 = vrot.slane %v4545, 4
      %v4548 = vshll.u32 %v4293, 16
      %v4550 = vrot.slane %v4548, 5
      %v4551 = vsel %vm953, %v4546, %v4550
      %v4553 = vshrl.u32 %v4294, 16
      %v4555 = vrot.slane %v4553, 4
      %v4556 = vshll.u32 %v4294, 16
      %v4558 = vrot.slane %v4556, 5
      %v4559 = vor.u32 %v4555, %v4558
      %v4560 = vrot.slane %v4559, 4
      %v4562 = vshll.u32 %v4295, 16
      %v4564 = vrot.slane %v4562, 5
      %v4565 = vsel %vm953, %v4560, %v4564
      %v4566 = vshrl.u32 %v4295, 16
      %v4568 = vrot.slane %v4566, 4
      %v4569 = vor.u32 %v4568, %v4564
      %v4570 = vrot.slane %v4569, 4
      %v4572 = vshll.u32 %v4296, 16
      %v4574 = vrot.slane %v4572, 5
      %v4575 = vsel %vm953, %v4570, %v4574
      %v4577 = vshrl.u32 %v4297, 16
      %v4579 = vrot.slane %v4577, 4
      %v4580 = vshll.u32 %v4297, 16
      %v4582 = vrot.slane %v4580, 5
      %v4583 = vor.u32 %v4579, %v4582
      %v4584 = vrot.slane %v4583, 4
      %v4586 = vshll.u32 %v4298, 16
      %v4588 = vrot.slane %v4586, 5
      %v4589 = vsel %vm953, %v4584, %v4588
      %v4590 = vshrl.u32 %v4298, 16
      %v4592 = vrot.slane %v4590, 4
      %v4593 = vor.u32 %v4592, %v4588
      %v4594 = vrot.slane %v4593, 4
      %v4596 = vshll.u32 %v4299, 16
      %v4598 = vrot.slane %v4596, 5
      %v4599 = vsel %vm953, %v4594, %v4598
      %v4601 = vshrl.u32 %v4300, 16
      %v4603 = vrot.slane %v4601, 4
      %v4604 = vshll.u32 %v4300, 16
      %v4606 = vrot.slane %v4604, 5
      %v4607 = vor.u32 %v4603, %v4606
      %v4608 = vrot.slane %v4607, 4
      %v4610 = vshll.u32 %v4301, 16
      %v4612 = vrot.slane %v4610, 5
      %v4613 = vsel %vm953, %v4608, %v4612
      %v4614 = vshrl.u32 %v4301, 16
      %v4616 = vrot.slane %v4614, 4
      %v4617 = vor.u32 %v4616, %v4612
      %v4618 = vrot.slane %v4617, 4
      %v4620 = vshll.u32 %v4302, 16
      %v4622 = vrot.slane %v4620, 5
      %v4623 = vsel %vm953, %v4618, %v4622
      %v4625 = vshrl.u32 %v4303, 16
      %v4627 = vrot.slane %v4625, 4
      %v4628 = vshll.u32 %v4303, 16
      %v4630 = vrot.slane %v4628, 5
      %v4631 = vor.u32 %v4627, %v4630
      %v4632 = vrot.slane %v4631, 4
      %v4634 = vshll.u32 %v4304, 16
      %v4636 = vrot.slane %v4634, 5
      %v4637 = vsel %vm953, %v4632, %v4636
      %v4638 = vshrl.u32 %v4304, 16
      %v4640 = vrot.slane %v4638, 4
      %v4641 = vor.u32 %v4640, %v4636
      %v4642 = vrot.slane %v4641, 4
      %v4644 = vshll.u32 %v4305, 16
      %v4646 = vrot.slane %v4644, 5
      %v4647 = vsel %vm953, %v4642, %v4646
      %v4649 = vshrl.u32 %v4306, 16
      %v4651 = vrot.slane %v4649, 4
      %v4652 = vshll.u32 %v4306, 16
      %v4654 = vrot.slane %v4652, 5
      %v4655 = vor.u32 %v4651, %v4654
      %v4656 = vrot.slane %v4655, 4
      %v4658 = vshll.u32 %v4307, 16
      %v4660 = vrot.slane %v4658, 5
      %v4661 = vsel %vm953, %v4656, %v4660
      %v4662 = vshrl.u32 %v4307, 16
      %v4664 = vrot.slane %v4662, 4
      %v4665 = vor.u32 %v4664, %v4660
      %v4666 = vrot.slane %v4665, 4
      %v4668 = vshll.u32 %v4308, 16
      %v4670 = vrot.slane %v4668, 5
      %v4671 = vsel %vm953, %v4666, %v4670
      %v4673 = vshrl.u32 %v4309, 16
      %v4675 = vrot.slane %v4673, 4
      %v4676 = vshll.u32 %v4309, 16
      %v4678 = vrot.slane %v4676, 5
      %v4679 = vor.u32 %v4675, %v4678
      %v4680 = vrot.slane %v4679, 4
      %v4682 = vshll.u32 %v4310, 16
      %v4684 = vrot.slane %v4682, 5
      %v4685 = vsel %vm953, %v4680, %v4684
      %v4686 = vshrl.u32 %v4310, 16
      %v4688 = vrot.slane %v4686, 4
      %v4689 = vor.u32 %v4688, %v4684
      %v4690 = vrot.slane %v4689, 4
      %v4692 = vshll.u32 %v4311, 16
      %v4694 = vrot.slane %v4692, 5
      %v4695 = vsel %vm953, %v4690, %v4694
      %s4696 = scalar_lea.vmem %s1, 28
      %v4697 = vld [vmem:[%s4696] sm:$0xf]
      %v4698 = vunpack.c.l.b16 %v4325
      %v4699 = vunpack.c.l.b16 %v4335
      %v4700 = vunpack.c.l.b16 %v4349
      %v4701 = vunpack.c.l.b16 %v4359
      %v4702 = vunpack.c.l.b16 %v4373
      %v4703 = vunpack.c.l.b16 %v4383
      %v4704 = vunpack.c.l.b16 %v4397
      %v4705 = vunpack.c.l.b16 %v4407
      %v4706 = vunpack.c.l.b16 %v4421
      %v4707 = vunpack.c.l.b16 %v4431
      %v4708 = vunpack.c.l.b16 %v4445
      %v4709 = vunpack.c.l.b16 %v4455
      %v4710 = vunpack.c.l.b16 %v4469
      %v4711 = vunpack.c.l.b16 %v4479
      %v4712 = vunpack.c.l.b16 %v4493
      %v4713 = vunpack.c.l.b16 %v4503
      %v4714 = vunpack.c.l.b16 %v4517
      %v4715 = vunpack.c.l.b16 %v4527
      %v4716 = vunpack.c.l.b16 %v4541
      %v4717 = vunpack.c.l.b16 %v4551
      %v4718 = vunpack.c.l.b16 %v4565
      %v4719 = vunpack.c.l.b16 %v4575
      %v4720 = vunpack.c.l.b16 %v4589
      %v4721 = vunpack.c.l.b16 %v4599
      %v4722 = vunpack.c.l.b16 %v4613
      %v4723 = vunpack.c.l.b16 %v4623
      %v4724 = vunpack.c.l.b16 %v4637
      %v4725 = vunpack.c.l.b16 %v4647
      %v4726 = vunpack.c.l.b16 %v4661
      %v4727 = vunpack.c.l.b16 %v4671
      %v4728 = vunpack.c.l.b16 %v4685
      %v4729 = vunpack.c.l.b16 %v4695
      %v4730 = vpack.c.b16 %v4699, %v4698
      %v4731 = vpack.c.b16 %v4701, %v4700
      %v4732 = vpack.c.b16 %v4703, %v4702
      %v4733 = vpack.c.b16 %v4705, %v4704
      %v4734 = vpack.c.b16 %v4707, %v4706
      %v4735 = vpack.c.b16 %v4709, %v4708
      %v4736 = vpack.c.b16 %v4711, %v4710
      %v4737 = vpack.c.b16 %v4713, %v4712
      %v4738 = vpack.c.b16 %v4715, %v4714
      %v4739 = vpack.c.b16 %v4717, %v4716
      %v4740 = vpack.c.b16 %v4719, %v4718
      %v4741 = vpack.c.b16 %v4721, %v4720
      %v4742 = vpack.c.b16 %v4723, %v4722
      %v4743 = vpack.c.b16 %v4725, %v4724
      %v4744 = vpack.c.b16 %v4727, %v4726
      %v4745 = vpack.c.b16 %v4729, %v4728
      %v4747 = vsel %vm1388, %v4730, 0
      %v4750 = vsel %vm1388, %v4731, 0
      %v4753 = vsel %vm1388, %v4732, 0
      %v4756 = vsel %vm1388, %v4733, 0
      %v4759 = vsel %vm1388, %v4734, 0
      %v4762 = vsel %vm1388, %v4735, 0
      %v4765 = vsel %vm1388, %v4736, 0
      %v4768 = vsel %vm1388, %v4737, 0
      %v4771 = vsel %vm1388, %v4738, 0
      %v4774 = vsel %vm1388, %v4739, 0
      %v4777 = vsel %vm1388, %v4740, 0
      %v4780 = vsel %vm1388, %v4741, 0
      %v4783 = vsel %vm1388, %v4742, 0
      %v4786 = vsel %vm1388, %v4743, 0
      %v4789 = vsel %vm1388, %v4744, 0
      %v4792 = vsel %vm1388, %v4745, 0
      %v4795 = vsel %vm1437, %v4697, 0
      %4797 = vmatprep.subr.bf16.mxu0 0
      %4798 = vmatpush1.bf16.msra.mxu0 %v4795
      %4799 = vmatprep.subr.bf16.mxu0 0
      %4800 = vmatpush1.bf16.msra.mxu0 0
      %4801 = vmatprep.subr.bf16.mxu0 0
      %4802 = vmatpush1.bf16.msra.mxu0 0
      %4803 = vmatprep.subr.bf16.mxu0 0
      %4804 = vmatpush1.bf16.msra.mxu0 0
      %4805 = vmatprep.subr.bf16.mxu0 0
      %4806 = vmatpush1.bf16.msra.mxu0 0
      %4807 = vmatprep.subr.bf16.mxu0 0
      %4808 = vmatpush1.bf16.msra.mxu0 0
      %4809 = vmatprep.subr.bf16.mxu0 0
      %4810 = vmatpush1.bf16.msra.mxu0 0
      %4811 = vmatprep.subr.bf16.mxu0 0
      %4812 = vmatpush1.bf16.msra.mxu0 0
      %4813 = vmatprep.subr.bf16.mxu0 0
      %4814 = vmatpush1.bf16.msra.mxu0 0
      %4815 = vmatprep.subr.bf16.mxu0 0
      %4816 = vmatpush1.bf16.msra.mxu0 0
      %4817 = vmatprep.subr.bf16.mxu0 0
      %4818 = vmatpush1.bf16.msra.mxu0 0
      %4819 = vmatprep.subr.bf16.mxu0 0
      %4820 = vmatpush1.bf16.msra.mxu0 0
      %4821 = vmatprep.subr.bf16.mxu0 0
      %4822 = vmatpush1.bf16.msra.mxu0 0
      %4823 = vmatprep.subr.bf16.mxu0 0
      %4824 = vmatpush1.bf16.msra.mxu0 0
      %4825 = vmatprep.subr.bf16.mxu0 0
      %4826 = vmatpush1.bf16.msra.mxu0 0
      %4827 = vmatprep.subr.bf16.mxu0 0
      %4828 = vmatpush1.bf16.msra.mxu0 0
      %4829 = vmatprep.mubr.bf16.mxu0 0
      %4830 = vmatmul.mubr.bf16.gmra.mrb[0].mxu0 %v4747
      %v4831 = vpop.f32.mrb[0].mxu0
      %v4832 = vadd.f32 0.0, %v4831
      %v4833 = vpop.f32.mrb[0].mxu0
      %v4834 = vpop.f32.mrb[0].mxu0
      %v4835 = vadd.f32 0.0, %v4834
      %v4836 = vpop.f32.mrb[0].mxu0
      %4837 = vmatprep.mubr.bf16.mxu0 0
      %4838 = vmatmul.mubr.bf16.gmra.mrb[0].mxu0 %v4750
      %v4839 = vpop.f32.mrb[0].mxu0
      %v4840 = vadd.f32 0.0, %v4839
      %v4841 = vpop.f32.mrb[0].mxu0
      %v4842 = vpop.f32.mrb[0].mxu0
      %v4843 = vadd.f32 0.0, %v4842
      %v4844 = vpop.f32.mrb[0].mxu0
      %4845 = vmatprep.mubr.bf16.mxu0 0
      %4846 = vmatmul.mubr.bf16.gmra.mrb[0].mxu0 %v4753
      %v4847 = vpop.f32.mrb[0].mxu0
      %v4848 = vadd.f32 0.0, %v4847
      %v4849 = vpop.f32.mrb[0].mxu0
      %v4850 = vpop.f32.mrb[0].mxu0
      %v4851 = vadd.f32 0.0, %v4850
      %v4852 = vpop.f32.mrb[0].mxu0
      %4853 = vmatprep.mubr.bf16.mxu0 0
      %4854 = vmatmul.mubr.bf16.gmra.mrb[0].mxu0 %v4756
      %v4855 = vpop.f32.mrb[0].mxu0
      %v4856 = vadd.f32 0.0, %v4855
      %v4857 = vpop.f32.mrb[0].mxu0
      %v4858 = vpop.f32.mrb[0].mxu0
      %v4859 = vadd.f32 0.0, %v4858
      %v4860 = vpop.f32.mrb[0].mxu0
      %4861 = vmatprep.mubr.bf16.mxu0 0
      %4862 = vmatmul.mubr.bf16.gmra.mrb[0].mxu0 %v4759
      %v4863 = vpop.f32.mrb[0].mxu0
      %v4864 = vadd.f32 0.0, %v4863
      %v4865 = vpop.f32.mrb[0].mxu0
      %v4866 = vpop.f32.mrb[0].mxu0
      %v4867 = vadd.f32 0.0, %v4866
      %v4868 = vpop.f32.mrb[0].mxu0
      %4869 = vmatprep.mubr.bf16.mxu0 0
      %4870 = vmatmul.mubr.bf16.gmra.mrb[0].mxu0 %v4762
      %v4871 = vpop.f32.mrb[0].mxu0
      %v4872 = vadd.f32 0.0, %v4871
      %v4873 = vpop.f32.mrb[0].mxu0
      %v4874 = vpop.f32.mrb[0].mxu0
      %v4875 = vadd.f32 0.0, %v4874
      %v4876 = vpop.f32.mrb[0].mxu0
      %4877 = vmatprep.mubr.bf16.mxu0 0
      %4878 = vmatmul.mubr.bf16.gmra.mrb[0].mxu0 %v4765
      %v4879 = vpop.f32.mrb[0].mxu0
      %v4880 = vadd.f32 0.0, %v4879
      %v4881 = vpop.f32.mrb[0].mxu0
      %v4882 = vpop.f32.mrb[0].mxu0
      %v4883 = vadd.f32 0.0, %v4882
      %v4884 = vpop.f32.mrb[0].mxu0
      %4885 = vmatprep.mubr.bf16.mxu0 0
      %4886 = vmatmul.mubr.bf16.gmra.mrb[0].mxu0 %v4768
      %v4887 = vpop.f32.mrb[0].mxu0
      %v4888 = vadd.f32 0.0, %v4887
      %v4889 = vpop.f32.mrb[0].mxu0
      %v4890 = vpop.f32.mrb[0].mxu0
      %v4891 = vadd.f32 0.0, %v4890
      %v4892 = vpop.f32.mrb[0].mxu0
      %4893 = vmatprep.mubr.bf16.mxu0 0
      %4894 = vmatmul.mubr.bf16.gmra.mrb[0].mxu0 %v4771
      %v4895 = vpop.f32.mrb[0].mxu0
      %v4896 = vadd.f32 0.0, %v4895
      %v4897 = vpop.f32.mrb[0].mxu0
      %v4898 = vpop.f32.mrb[0].mxu0
      %v4899 = vadd.f32 0.0, %v4898
      %v4900 = vpop.f32.mrb[0].mxu0
      %4901 = vmatprep.mubr.bf16.mxu0 0
      %4902 = vmatmul.mubr.bf16.gmra.mrb[0].mxu0 %v4774
      %v4903 = vpop.f32.mrb[0].mxu0
      %v4904 = vadd.f32 0.0, %v4903
      %v4905 = vpop.f32.mrb[0].mxu0
      %v4906 = vpop.f32.mrb[0].mxu0
      %v4907 = vadd.f32 0.0, %v4906
      %v4908 = vpop.f32.mrb[0].mxu0
      %4909 = vmatprep.mubr.bf16.mxu0 0
      %4910 = vmatmul.mubr.bf16.gmra.mrb[0].mxu0 %v4777
      %v4911 = vpop.f32.mrb[0].mxu0
      %v4912 = vadd.f32 0.0, %v4911
      %v4913 = vpop.f32.mrb[0].mxu0
      %v4914 = vpop.f32.mrb[0].mxu0
      %v4915 = vadd.f32 0.0, %v4914
      %v4916 = vpop.f32.mrb[0].mxu0
      %4917 = vmatprep.mubr.bf16.mxu0 0
      %4918 = vmatmul.mubr.bf16.gmra.mrb[0].mxu0 %v4780
      %v4919 = vpop.f32.mrb[0].mxu0
      %v4920 = vadd.f32 0.0, %v4919
      %v4921 = vpop.f32.mrb[0].mxu0
      %v4922 = vpop.f32.mrb[0].mxu0
      %v4923 = vadd.f32 0.0, %v4922
      %v4924 = vpop.f32.mrb[0].mxu0
      %4925 = vmatprep.mubr.bf16.mxu0 0
      %4926 = vmatmul.mubr.bf16.gmra.mrb[0].mxu0 %v4783
      %v4927 = vpop.f32.mrb[0].mxu0
      %v4928 = vadd.f32 0.0, %v4927
      %v4929 = vpop.f32.mrb[0].mxu0
      %v4930 = vpop.f32.mrb[0].mxu0
      %v4931 = vadd.f32 0.0, %v4930
      %v4932 = vpop.f32.mrb[0].mxu0
      %4933 = vmatprep.mubr.bf16.mxu0 0
      %4934 = vmatmul.mubr.bf16.gmra.mrb[0].mxu0 %v4786
      %v4935 = vpop.f32.mrb[0].mxu0
      %v4936 = vadd.f32 0.0, %v4935
      %v4937 = vpop.f32.mrb[0].mxu0
      %v4938 = vpop.f32.mrb[0].mxu0
      %v4939 = vadd.f32 0.0, %v4938
      %v4940 = vpop.f32.mrb[0].mxu0
      %4941 = vmatprep.mubr.bf16.mxu0 0
      %4942 = vmatmul.mubr.bf16.gmra.mrb[0].mxu0 %v4789
      %v4943 = vpop.f32.mrb[0].mxu0
      %v4944 = vadd.f32 0.0, %v4943
      %v4945 = vpop.f32.mrb[0].mxu0
      %v4946 = vpop.f32.mrb[0].mxu0
      %v4947 = vadd.f32 0.0, %v4946
      %v4948 = vpop.f32.mrb[0].mxu0
      %4949 = vmatprep.mubr.bf16.mxu0 0
      %4950 = vmatmul.mubr.bf16.gmra.mrb[0].mxu0 %v4792
      %v4951 = vpop.f32.mrb[0].mxu0
      %v4952 = vadd.f32 0.0, %v4951
      %v4953 = vpop.f32.mrb[0].mxu0
      %v4954 = vpop.f32.mrb[0].mxu0
      %v4955 = vadd.f32 0.0, %v4954
      %v4956 = vpop.f32.mrb[0].mxu0
      %4957 = vdwg.mxu0
      %v4958 = vadd.f32 %v4232, %v4832
      %v4959 = vadd.f32 %v4233, %v4835
      %v4960 = vadd.f32 %v4234, %v4840
      %v4961 = vadd.f32 %v4235, %v4843
      %v4962 = vadd.f32 %v4236, %v4848
      %v4963 = vadd.f32 %v4237, %v4851
      %v4964 = vadd.f32 %v4238, %v4856
      %v4965 = vadd.f32 %v4239, %v4859
      %v4966 = vadd.f32 %v4240, %v4864
      %v4967 = vadd.f32 %v4241, %v4867
      %v4968 = vadd.f32 %v4242, %v4872
      %v4969 = vadd.f32 %v4243, %v4875
      %v4970 = vadd.f32 %v4244, %v4880
      %v4971 = vadd.f32 %v4245, %v4883
      %v4972 = vadd.f32 %v4246, %v4888
      %v4973 = vadd.f32 %v4247, %v4891
      %v4974 = vadd.f32 %v4248, %v4896
      %v4975 = vadd.f32 %v4249, %v4899
      %v4976 = vadd.f32 %v4250, %v4904
      %v4977 = vadd.f32 %v4251, %v4907
      %v4978 = vadd.f32 %v4252, %v4912
      %v4979 = vadd.f32 %v4253, %v4915
      %v4980 = vadd.f32 %v4254, %v4920
      %v4981 = vadd.f32 %v4255, %v4923
      %v4982 = vadd.f32 %v4256, %v4928
      %v4983 = vadd.f32 %v4257, %v4931
      %v4984 = vadd.f32 %v4258, %v4936
      %v4985 = vadd.f32 %v4259, %v4939
      %v4986 = vadd.f32 %v4260, %v4944
      %v4987 = vadd.f32 %v4261, %v4947
      %v4988 = vadd.f32 %v4262, %v4952
      %v4989 = vadd.f32 %v4263, %v4955
      %v4990 = vld [vmem:[%s3905] sm:$0xe]
      %v4991 = vld [vmem:[%s3905 + $0xc] sm:$0xe]
      %v4992 = vld [vmem:[%s3905 + $0x18] sm:$0xe]
      %v4993 = vld [vmem:[%s3905 + $0x24] sm:$0xe]
      %v4994 = vld [vmem:[%s3905 + $0x30] sm:$0xe]
      %v4995 = vld [vmem:[%s3905 + $0x3c] sm:$0xe]
      %v4996 = vld [vmem:[%s3905 + $0x48] sm:$0xe]
      %v4997 = vld [vmem:[%s3905 + $0x54] sm:$0xe]
      %v4998 = vld [vmem:[%s3905 + $0x60] sm:$0xe]
      %v4999 = vld [vmem:[%s3905 + $0x6c] sm:$0xe]
      %v5000 = vld [vmem:[%s3905 + $0x78] sm:$0xe]
      %v5001 = vld [vmem:[%s3905 + $0x84] sm:$0xe]
      %v5002 = vld [vmem:[%s3905 + $0x90] sm:$0xe]
      %v5003 = vld [vmem:[%s3905 + $0x9c] sm:$0xe]
      %v5004 = vld [vmem:[%s3905 + $0xa8] sm:$0xe]
      %v5005 = vld [vmem:[%s3905 + $0xb4] sm:$0xe]
      %v5054 = vrot.slane %v4990, 5
      %v5055 = vrot.slane %v5054, 4
      %v5056 = vrot.slane %v4265, 5
      %v5057 = vsel %vm1944, %v5055, %v5056
      %v5058 = vrot.slane %v5056, 4
      %v5059 = vrot.slane %v4266, 5
      %v5060 = vsel %vm1944, %v5058, %v5059
      %v5061 = vrot.slane %v4991, 5
      %v5062 = vrot.slane %v5061, 4
      %v5063 = vrot.slane %v4268, 5
      %v5064 = vsel %vm1944, %v5062, %v5063
      %v5065 = vrot.slane %v5063, 4
      %v5066 = vrot.slane %v4269, 5
      %v5067 = vsel %vm1944, %v5065, %v5066
      %v5068 = vrot.slane %v4992, 5
      %v5069 = vrot.slane %v5068, 4
      %v5070 = vrot.slane %v4271, 5
      %v5071 = vsel %vm1944, %v5069, %v5070
      %v5072 = vrot.slane %v5070, 4
      %v5073 = vrot.slane %v4272, 5
      %v5074 = vsel %vm1944, %v5072, %v5073
      %v5075 = vrot.slane %v4993, 5
      %v5076 = vrot.slane %v5075, 4
      %v5077 = vrot.slane %v4274, 5
      %v5078 = vsel %vm1944, %v5076, %v5077
      %v5079 = vrot.slane %v5077, 4
      %v5080 = vrot.slane %v4275, 5
      %v5081 = vsel %vm1944, %v5079, %v5080
      %v5082 = vrot.slane %v4994, 5
      %v5083 = vrot.slane %v5082, 4
      %v5084 = vrot.slane %v4277, 5
      %v5085 = vsel %vm1944, %v5083, %v5084
      %v5086 = vrot.slane %v5084, 4
      %v5087 = vrot.slane %v4278, 5
      %v5088 = vsel %vm1944, %v5086, %v5087
      %v5089 = vrot.slane %v4995, 5
      %v5090 = vrot.slane %v5089, 4
      %v5091 = vrot.slane %v4280, 5
      %v5092 = vsel %vm1944, %v5090, %v5091
      %v5093 = vrot.slane %v5091, 4
      %v5094 = vrot.slane %v4281, 5
      %v5095 = vsel %vm1944, %v5093, %v5094
      %v5096 = vrot.slane %v4996, 5
      %v5097 = vrot.slane %v5096, 4
      %v5098 = vrot.slane %v4283, 5
      %v5099 = vsel %vm1944, %v5097, %v5098
      %v5100 = vrot.slane %v5098, 4
      %v5101 = vrot.slane %v4284, 5
      %v5102 = vsel %vm1944, %v5100, %v5101
      %v5103 = vrot.slane %v4997, 5
      %v5104 = vrot.slane %v5103, 4
      %v5105 = vrot.slane %v4286, 5
      %v5106 = vsel %vm1944, %v5104, %v5105
      %v5107 = vrot.slane %v5105, 4
      %v5108 = vrot.slane %v4287, 5
      %v5109 = vsel %vm1944, %v5107, %v5108
      %v5110 = vrot.slane %v4998, 5
      %v5111 = vrot.slane %v5110, 4
      %v5112 = vrot.slane %v4289, 5
      %v5113 = vsel %vm1944, %v5111, %v5112
      %v5114 = vrot.slane %v5112, 4
      %v5115 = vrot.slane %v4290, 5
      %v5116 = vsel %vm1944, %v5114, %v5115
      %v5117 = vrot.slane %v4999, 5
      %v5118 = vrot.slane %v5117, 4
      %v5119 = vrot.slane %v4292, 5
      %v5120 = vsel %vm1944, %v5118, %v5119
      %v5121 = vrot.slane %v5119, 4
      %v5122 = vrot.slane %v4293, 5
      %v5123 = vsel %vm1944, %v5121, %v5122
      %v5124 = vrot.slane %v5000, 5
      %v5125 = vrot.slane %v5124, 4
      %v5126 = vrot.slane %v4295, 5
      %v5127 = vsel %vm1944, %v5125, %v5126
      %v5128 = vrot.slane %v5126, 4
      %v5129 = vrot.slane %v4296, 5
      %v5130 = vsel %vm1944, %v5128, %v5129
      %v5131 = vrot.slane %v5001, 5
      %v5132 = vrot.slane %v5131, 4
      %v5133 = vrot.slane %v4298, 5
      %v5134 = vsel %vm1944, %v5132, %v5133
      %v5135 = vrot.slane %v5133, 4
      %v5136 = vrot.slane %v4299, 5
      %v5137 = vsel %vm1944, %v5135, %v5136
      %v5138 = vrot.slane %v5002, 5
      %v5139 = vrot.slane %v5138, 4
      %v5140 = vrot.slane %v4301, 5
      %v5141 = vsel %vm1944, %v5139, %v5140
      %v5142 = vrot.slane %v5140, 4
      %v5143 = vrot.slane %v4302, 5
      %v5144 = vsel %vm1944, %v5142, %v5143
      %v5145 = vrot.slane %v5003, 5
      %v5146 = vrot.slane %v5145, 4
      %v5147 = vrot.slane %v4304, 5
      %v5148 = vsel %vm1944, %v5146, %v5147
      %v5149 = vrot.slane %v5147, 4
      %v5150 = vrot.slane %v4305, 5
      %v5151 = vsel %vm1944, %v5149, %v5150
      %v5152 = vrot.slane %v5004, 5
      %v5153 = vrot.slane %v5152, 4
      %v5154 = vrot.slane %v4307, 5
      %v5155 = vsel %vm1944, %v5153, %v5154
      %v5156 = vrot.slane %v5154, 4
      %v5157 = vrot.slane %v4308, 5
      %v5158 = vsel %vm1944, %v5156, %v5157
      %v5159 = vrot.slane %v5005, 5
      %v5160 = vrot.slane %v5159, 4
      %v5161 = vrot.slane %v4310, 5
      %v5162 = vsel %vm1944, %v5160, %v5161
      %v5163 = vrot.slane %v5161, 4
      %v5164 = vrot.slane %v4311, 5
      %v5165 = vsel %vm1944, %v5163, %v5164
      %s5166 = scalar_lea.vmem %s1, 32
      %v5167 = vld [vmem:[%s5166] sm:$0xf]
      %v5168 = vunpack.c.l.b16 %v5057
      %v5169 = vunpack.c.l.b16 %v5060
      %v5170 = vunpack.c.l.b16 %v5064
      %v5171 = vunpack.c.l.b16 %v5067
      %v5172 = vunpack.c.l.b16 %v5071
      %v5173 = vunpack.c.l.b16 %v5074
      %v5174 = vunpack.c.l.b16 %v5078
      %v5175 = vunpack.c.l.b16 %v5081
      %v5176 = vunpack.c.l.b16 %v5085
      %v5177 = vunpack.c.l.b16 %v5088
      %v5178 = vunpack.c.l.b16 %v5092
      %v5179 = vunpack.c.l.b16 %v5095
      %v5180 = vunpack.c.l.b16 %v5099
      %v5181 = vunpack.c.l.b16 %v5102
      %v5182 = vunpack.c.l.b16 %v5106
      %v5183 = vunpack.c.l.b16 %v5109
      %v5184 = vunpack.c.l.b16 %v5113
      %v5185 = vunpack.c.l.b16 %v5116
      %v5186 = vunpack.c.l.b16 %v5120
      %v5187 = vunpack.c.l.b16 %v5123
      %v5188 = vunpack.c.l.b16 %v5127
      %v5189 = vunpack.c.l.b16 %v5130
      %v5190 = vunpack.c.l.b16 %v5134
      %v5191 = vunpack.c.l.b16 %v5137
      %v5192 = vunpack.c.l.b16 %v5141
      %v5193 = vunpack.c.l.b16 %v5144
      %v5194 = vunpack.c.l.b16 %v5148
      %v5195 = vunpack.c.l.b16 %v5151
      %v5196 = vunpack.c.l.b16 %v5155
      %v5197 = vunpack.c.l.b16 %v5158
      %v5198 = vunpack.c.l.b16 %v5162
      %v5199 = vunpack.c.l.b16 %v5165
      %v5200 = vpack.c.b16 %v5169, %v5168
      %v5201 = vpack.c.b16 %v5171, %v5170
      %v5202 = vpack.c.b16 %v5173, %v5172
      %v5203 = vpack.c.b16 %v5175, %v5174
      %v5204 = vpack.c.b16 %v5177, %v5176
      %v5205 = vpack.c.b16 %v5179, %v5178
      %v5206 = vpack.c.b16 %v5181, %v5180
      %v5207 = vpack.c.b16 %v5183, %v5182
      %v5208 = vpack.c.b16 %v5185, %v5184
      %v5209 = vpack.c.b16 %v5187, %v5186
      %v5210 = vpack.c.b16 %v5189, %v5188
      %v5211 = vpack.c.b16 %v5191, %v5190
      %v5212 = vpack.c.b16 %v5193, %v5192
      %v5213 = vpack.c.b16 %v5195, %v5194
      %v5214 = vpack.c.b16 %v5197, %v5196
      %v5215 = vpack.c.b16 %v5199, %v5198
      %v5217 = vsel %vm1388, %v5200, 0
      %v5220 = vsel %vm1388, %v5201, 0
      %v5223 = vsel %vm1388, %v5202, 0
      %v5226 = vsel %vm1388, %v5203, 0
      %v5229 = vsel %vm1388, %v5204, 0
      %v5232 = vsel %vm1388, %v5205, 0
      %v5235 = vsel %vm1388, %v5206, 0
      %v5238 = vsel %vm1388, %v5207, 0
      %v5241 = vsel %vm1388, %v5208, 0
      %v5244 = vsel %vm1388, %v5209, 0
      %v5247 = vsel %vm1388, %v5210, 0
      %v5250 = vsel %vm1388, %v5211, 0
      %v5253 = vsel %vm1388, %v5212, 0
      %v5256 = vsel %vm1388, %v5213, 0
      %v5259 = vsel %vm1388, %v5214, 0
      %v5262 = vsel %vm1388, %v5215, 0
      %v5265 = vsel %vm1437, %v5167, 0
      %5267 = vmatprep.subr.bf16.mxu0 0
      %5268 = vmatpush1.bf16.msra.mxu0 %v5265
      %5269 = vmatprep.subr.bf16.mxu0 0
      %5270 = vmatpush1.bf16.msra.mxu0 0
      %5271 = vmatprep.subr.bf16.mxu0 0
      %5272 = vmatpush1.bf16.msra.mxu0 0
      %5273 = vmatprep.subr.bf16.mxu0 0
      %5274 = vmatpush1.bf16.msra.mxu0 0
      %5275 = vmatprep.subr.bf16.mxu0 0
      %5276 = vmatpush1.bf16.msra.mxu0 0
      %5277 = vmatprep.subr.bf16.mxu0 0
      %5278 = vmatpush1.bf16.msra.mxu0 0
      %5279 = vmatprep.subr.bf16.mxu0 0
      %5280 = vmatpush1.bf16.msra.mxu0 0
      %5281 = vmatprep.subr.bf16.mxu0 0
      %5282 = vmatpush1.bf16.msra.mxu0 0
      %5283 = vmatprep.subr.bf16.mxu0 0
      %5284 = vmatpush1.bf16.msra.mxu0 0
      %5285 = vmatprep.subr.bf16.mxu0 0
      %5286 = vmatpush1.bf16.msra.mxu0 0
      %5287 = vmatprep.subr.bf16.mxu0 0
      %5288 = vmatpush1.bf16.msra.mxu0 0
      %5289 = vmatprep.subr.bf16.mxu0 0
      %5290 = vmatpush1.bf16.msra.mxu0 0
      %5291 = vmatprep.subr.bf16.mxu0 0
      %5292 = vmatpush1.bf16.msra.mxu0 0
      %5293 = vmatprep.subr.bf16.mxu0 0
      %5294 = vmatpush1.bf16.msra.mxu0 0
      %5295 = vmatprep.subr.bf16.mxu0 0
      %5296 = vmatpush1.bf16.msra.mxu0 0
      %5297 = vmatprep.subr.bf16.mxu0 0
      %5298 = vmatpush1.bf16.msra.mxu0 0
      %5299 = vmatprep.mubr.bf16.mxu0 0
      %5300 = vmatmul.mubr.bf16.gmra.mrb[0].mxu0 %v5217
      %v5301 = vpop.f32.mrb[0].mxu0
      %v5302 = vadd.f32 0.0, %v5301
      %v5303 = vpop.f32.mrb[0].mxu0
      %v5304 = vpop.f32.mrb[0].mxu0
      %v5305 = vadd.f32 0.0, %v5304
      %v5306 = vpop.f32.mrb[0].mxu0
      %5307 = vmatprep.mubr.bf16.mxu0 0
      %5308 = vmatmul.mubr.bf16.gmra.mrb[0].mxu0 %v5220
      %v5309 = vpop.f32.mrb[0].mxu0
      %v5310 = vadd.f32 0.0, %v5309
      %v5311 = vpop.f32.mrb[0].mxu0
      %v5312 = vpop.f32.mrb[0].mxu0
      %v5313 = vadd.f32 0.0, %v5312
      %v5314 = vpop.f32.mrb[0].mxu0
      %5315 = vmatprep.mubr.bf16.mxu0 0
      %5316 = vmatmul.mubr.bf16.gmra.mrb[0].mxu0 %v5223
      %v5317 = vpop.f32.mrb[0].mxu0
      %v5318 = vadd.f32 0.0, %v5317
      %v5319 = vpop.f32.mrb[0].mxu0
      %v5320 = vpop.f32.mrb[0].mxu0
      %v5321 = vadd.f32 0.0, %v5320
      %v5322 = vpop.f32.mrb[0].mxu0
      %5323 = vmatprep.mubr.bf16.mxu0 0
      %5324 = vmatmul.mubr.bf16.gmra.mrb[0].mxu0 %v5226
      %v5325 = vpop.f32.mrb[0].mxu0
      %v5326 = vadd.f32 0.0, %v5325
      %v5327 = vpop.f32.mrb[0].mxu0
      %v5328 = vpop.f32.mrb[0].mxu0
      %v5329 = vadd.f32 0.0, %v5328
      %v5330 = vpop.f32.mrb[0].mxu0
      %5331 = vmatprep.mubr.bf16.mxu0 0
      %5332 = vmatmul.mubr.bf16.gmra.mrb[0].mxu0 %v5229
      %v5333 = vpop.f32.mrb[0].mxu0
      %v5334 = vadd.f32 0.0, %v5333
      %v5335 = vpop.f32.mrb[0].mxu0
      %v5336 = vpop.f32.mrb[0].mxu0
      %v5337 = vadd.f32 0.0, %v5336
      %v5338 = vpop.f32.mrb[0].mxu0
      %5339 = vmatprep.mubr.bf16.mxu0 0
      %5340 = vmatmul.mubr.bf16.gmra.mrb[0].mxu0 %v5232
      %v5341 = vpop.f32.mrb[0].mxu0
      %v5342 = vadd.f32 0.0, %v5341
      %v5343 = vpop.f32.mrb[0].mxu0
      %v5344 = vpop.f32.mrb[0].mxu0
      %v5345 = vadd.f32 0.0, %v5344
      %v5346 = vpop.f32.mrb[0].mxu0
      %5347 = vmatprep.mubr.bf16.mxu0 0
      %5348 = vmatmul.mubr.bf16.gmra.mrb[0].mxu0 %v5235
      %v5349 = vpop.f32.mrb[0].mxu0
      %v5350 = vadd.f32 0.0, %v5349
      %v5351 = vpop.f32.mrb[0].mxu0
      %v5352 = vpop.f32.mrb[0].mxu0
      %v5353 = vadd.f32 0.0, %v5352
      %v5354 = vpop.f32.mrb[0].mxu0
      %5355 = vmatprep.mubr.bf16.mxu0 0
      %5356 = vmatmul.mubr.bf16.gmra.mrb[0].mxu0 %v5238
      %v5357 = vpop.f32.mrb[0].mxu0
      %v5358 = vadd.f32 0.0, %v5357
      %v5359 = vpop.f32.mrb[0].mxu0
      %v5360 = vpop.f32.mrb[0].mxu0
      %v5361 = vadd.f32 0.0, %v5360
      %v5362 = vpop.f32.mrb[0].mxu0
      %5363 = vmatprep.mubr.bf16.mxu0 0
      %5364 = vmatmul.mubr.bf16.gmra.mrb[0].mxu0 %v5241
      %v5365 = vpop.f32.mrb[0].mxu0
      %v5366 = vadd.f32 0.0, %v5365
      %v5367 = vpop.f32.mrb[0].mxu0
      %v5368 = vpop.f32.mrb[0].mxu0
      %v5369 = vadd.f32 0.0, %v5368
      %v5370 = vpop.f32.mrb[0].mxu0
      %5371 = vmatprep.mubr.bf16.mxu0 0
      %5372 = vmatmul.mubr.bf16.gmra.mrb[0].mxu0 %v5244
      %v5373 = vpop.f32.mrb[0].mxu0
      %v5374 = vadd.f32 0.0, %v5373
      %v5375 = vpop.f32.mrb[0].mxu0
      %v5376 = vpop.f32.mrb[0].mxu0
      %v5377 = vadd.f32 0.0, %v5376
      %v5378 = vpop.f32.mrb[0].mxu0
      %5379 = vmatprep.mubr.bf16.mxu0 0
      %5380 = vmatmul.mubr.bf16.gmra.mrb[0].mxu0 %v5247
      %v5381 = vpop.f32.mrb[0].mxu0
      %v5382 = vadd.f32 0.0, %v5381
      %v5383 = vpop.f32.mrb[0].mxu0
      %v5384 = vpop.f32.mrb[0].mxu0
      %v5385 = vadd.f32 0.0, %v5384
      %v5386 = vpop.f32.mrb[0].mxu0
      %5387 = vmatprep.mubr.bf16.mxu0 0
      %5388 = vmatmul.mubr.bf16.gmra.mrb[0].mxu0 %v5250
      %v5389 = vpop.f32.mrb[0].mxu0
      %v5390 = vadd.f32 0.0, %v5389
      %v5391 = vpop.f32.mrb[0].mxu0
      %v5392 = vpop.f32.mrb[0].mxu0
      %v5393 = vadd.f32 0.0, %v5392
      %v5394 = vpop.f32.mrb[0].mxu0
      %5395 = vmatprep.mubr.bf16.mxu0 0
      %5396 = vmatmul.mubr.bf16.gmra.mrb[0].mxu0 %v5253
      %v5397 = vpop.f32.mrb[0].mxu0
      %v5398 = vadd.f32 0.0, %v5397
      %v5399 = vpop.f32.mrb[0].mxu0
      %v5400 = vpop.f32.mrb[0].mxu0
      %v5401 = vadd.f32 0.0, %v5400
      %v5402 = vpop.f32.mrb[0].mxu0
      %5403 = vmatprep.mubr.bf16.mxu0 0
      %5404 = vmatmul.mubr.bf16.gmra.mrb[0].mxu0 %v5256
      %v5405 = vpop.f32.mrb[0].mxu0
      %v5406 = vadd.f32 0.0, %v5405
      %v5407 = vpop.f32.mrb[0].mxu0
      %v5408 = vpop.f32.mrb[0].mxu0
      %v5409 = vadd.f32 0.0, %v5408
      %v5410 = vpop.f32.mrb[0].mxu0
      %5411 = vmatprep.mubr.bf16.mxu0 0
      %5412 = vmatmul.mubr.bf16.gmra.mrb[0].mxu0 %v5259
      %v5413 = vpop.f32.mrb[0].mxu0
      %v5414 = vadd.f32 0.0, %v5413
      %v5415 = vpop.f32.mrb[0].mxu0
      %v5416 = vpop.f32.mrb[0].mxu0
      %v5417 = vadd.f32 0.0, %v5416
      %v5418 = vpop.f32.mrb[0].mxu0
      %5419 = vmatprep.mubr.bf16.mxu0 0
      %5420 = vmatmul.mubr.bf16.gmra.mrb[0].mxu0 %v5262
      %v5421 = vpop.f32.mrb[0].mxu0
      %v5422 = vadd.f32 0.0, %v5421
      %v5423 = vpop.f32.mrb[0].mxu0
      %v5424 = vpop.f32.mrb[0].mxu0
      %v5425 = vadd.f32 0.0, %v5424
      %v5426 = vpop.f32.mrb[0].mxu0
      %5427 = vdwg.mxu0
      %v5428 = vadd.f32 %v4958, %v5302
      %v5429 = vadd.f32 %v4959, %v5305
      %v5430 = vadd.f32 %v4960, %v5310
      %v5431 = vadd.f32 %v4961, %v5313
      %v5432 = vadd.f32 %v4962, %v5318
      %v5433 = vadd.f32 %v4963, %v5321
      %v5434 = vadd.f32 %v4964, %v5326
      %v5435 = vadd.f32 %v4965, %v5329
      %v5436 = vadd.f32 %v4966, %v5334
      %v5437 = vadd.f32 %v4967, %v5337
      %v5438 = vadd.f32 %v4968, %v5342
      %v5439 = vadd.f32 %v4969, %v5345
      %v5440 = vadd.f32 %v4970, %v5350
      %v5441 = vadd.f32 %v4971, %v5353
      %v5442 = vadd.f32 %v4972, %v5358
      %v5443 = vadd.f32 %v4973, %v5361
      %v5444 = vadd.f32 %v4974, %v5366
      %v5445 = vadd.f32 %v4975, %v5369
      %v5446 = vadd.f32 %v4976, %v5374
      %v5447 = vadd.f32 %v4977, %v5377
      %v5448 = vadd.f32 %v4978, %v5382
      %v5449 = vadd.f32 %v4979, %v5385
      %v5450 = vadd.f32 %v4980, %v5390
      %v5451 = vadd.f32 %v4981, %v5393
      %v5452 = vadd.f32 %v4982, %v5398
      %v5453 = vadd.f32 %v4983, %v5401
      %v5454 = vadd.f32 %v4984, %v5406
      %v5455 = vadd.f32 %v4985, %v5409
      %v5456 = vadd.f32 %v4986, %v5414
      %v5457 = vadd.f32 %v4987, %v5417
      %v5458 = vadd.f32 %v4988, %v5422
      %v5459 = vadd.f32 %v4989, %v5425
      %vm5460 = vcmask 130048
      %5461 = vst.msk [vmem:[%s177] sm:$0xff] %vm5460, %v5428
      %5462 = vst.msk [vmem:[%s177 + $0x8] sm:$0xff] %vm5460, %v5429
      %5463 = vst.msk [vmem:[%s177 + $0x10] sm:$0xff] %vm5460, %v5430
      %5464 = vst.msk [vmem:[%s177 + $0x18] sm:$0xff] %vm5460, %v5431
      %5465 = vst.msk [vmem:[%s177 + $0x20] sm:$0xff] %vm5460, %v5432
      %5466 = vst.msk [vmem:[%s177 + $0x28] sm:$0xff] %vm5460, %v5433
      %5467 = vst.msk [vmem:[%s177 + $0x30] sm:$0xff] %vm5460, %v5434
      %5468 = vst.msk [vmem:[%s177 + $0x38] sm:$0xff] %vm5460, %v5435
      %5469 = vst.msk [vmem:[%s177 + $0x40] sm:$0xff] %vm5460, %v5436
      %5470 = vst.msk [vmem:[%s177 + $0x48] sm:$0xff] %vm5460, %v5437
      %5471 = vst.msk [vmem:[%s177 + $0x50] sm:$0xff] %vm5460, %v5438
      %5472 = vst.msk [vmem:[%s177 + $0x58] sm:$0xff] %vm5460, %v5439
      %5473 = vst.msk [vmem:[%s177 + $0x60] sm:$0xff] %vm5460, %v5440
      %5474 = vst.msk [vmem:[%s177 + $0x68] sm:$0xff] %vm5460, %v5441
      %5475 = vst.msk [vmem:[%s177 + $0x70] sm:$0xff] %vm5460, %v5442
      %5476 = vst.msk [vmem:[%s177 + $0x78] sm:$0xff] %vm5460, %v5443
      %5477 = vst.msk [vmem:[%s177 + $0x80] sm:$0xff] %vm5460, %v5444
      %5478 = vst.msk [vmem:[%s177 + $0x88] sm:$0xff] %vm5460, %v5445
      %5479 = vst.msk [vmem:[%s177 + $0x90] sm:$0xff] %vm5460, %v5446
      %5480 = vst.msk [vmem:[%s177 + $0x98] sm:$0xff] %vm5460, %v5447
      %5481 = vst.msk [vmem:[%s177 + $0xa0] sm:$0xff] %vm5460, %v5448
      %5482 = vst.msk [vmem:[%s177 + $0xa8] sm:$0xff] %vm5460, %v5449
      %5483 = vst.msk [vmem:[%s177 + $0xb0] sm:$0xff] %vm5460, %v5450
      %5484 = vst.msk [vmem:[%s177 + $0xb8] sm:$0xff] %vm5460, %v5451
      %5485 = vst.msk [vmem:[%s177 + $0xc0] sm:$0xff] %vm5460, %v5452
      %5486 = vst.msk [vmem:[%s177 + $0xc8] sm:$0xff] %vm5460, %v5453
      %5487 = vst.msk [vmem:[%s177 + $0xd0] sm:$0xff] %vm5460, %v5454
      %5488 = vst.msk [vmem:[%s177 + $0xd8] sm:$0xff] %vm5460, %v5455
      %5489 = vst.msk [vmem:[%s177 + $0xe0] sm:$0xff] %vm5460, %v5456
      %5490 = vst.msk [vmem:[%s177 + $0xe8] sm:$0xff] %vm5460, %v5457
      %5491 = vst.msk [vmem:[%s177 + $0xf0] sm:$0xff] %vm5460, %v5458
      %5492 = vst.msk [vmem:[%s177 + $0xf8] sm:$0xff] %vm5460, %v5459
      %v5493 = vsel %vm5460, %v5428, 0.0
      %v5494 = vsel %vm5460, %v5429, 0.0
      %v5495 = vadd.f32 %v5493, %v5494
      %v5496 = vsel %vm5460, %v5430, 0.0
      %v5497 = vadd.f32 %v5495, %v5496
      %v5498 = vsel %vm5460, %v5431, 0.0
      %v5499 = vadd.f32 %v5497, %v5498
      %v5500 = vsel %vm5460, %v5432, 0.0
      %v5501 = vadd.f32 %v5499, %v5500
      %v5502 = vsel %vm5460, %v5433, 0.0
      %v5503 = vadd.f32 %v5501, %v5502
      %v5504 = vsel %vm5460, %v5434, 0.0
      %v5505 = vadd.f32 %v5503, %v5504
      %v5506 = vsel %vm5460, %v5435, 0.0
      %v5507 = vadd.f32 %v5505, %v5506
      %v5508 = vsel %vm5460, %v5436, 0.0
      %v5509 = vadd.f32 %v5507, %v5508
      %v5510 = vsel %vm5460, %v5437, 0.0
      %v5511 = vadd.f32 %v5509, %v5510
      %v5512 = vsel %vm5460, %v5438, 0.0
      %v5513 = vadd.f32 %v5511, %v5512
      %v5514 = vsel %vm5460, %v5439, 0.0
      %v5515 = vadd.f32 %v5513, %v5514
      %v5516 = vsel %vm5460, %v5440, 0.0
      %v5517 = vadd.f32 %v5515, %v5516
      %v5518 = vsel %vm5460, %v5441, 0.0
      %v5519 = vadd.f32 %v5517, %v5518
      %v5520 = vsel %vm5460, %v5442, 0.0
      %v5521 = vadd.f32 %v5519, %v5520
      %v5522 = vsel %vm5460, %v5443, 0.0
      %v5523 = vadd.f32 %v5521, %v5522
      %v5524 = vsel %vm5460, %v5444, 0.0
      %v5525 = vadd.f32 %v5523, %v5524
      %v5526 = vsel %vm5460, %v5445, 0.0
      %v5527 = vadd.f32 %v5525, %v5526
      %v5528 = vsel %vm5460, %v5446, 0.0
      %v5529 = vadd.f32 %v5527, %v5528
      %v5530 = vsel %vm5460, %v5447, 0.0
      %v5531 = vadd.f32 %v5529, %v5530
      %v5532 = vsel %vm5460, %v5448, 0.0
      %v5533 = vadd.f32 %v5531, %v5532
      %v5534 = vsel %vm5460, %v5449, 0.0
      %v5535 = vadd.f32 %v5533, %v5534
      %v5536 = vsel %vm5460, %v5450, 0.0
      %v5537 = vadd.f32 %v5535, %v5536
      %v5538 = vsel %vm5460, %v5451, 0.0
      %v5539 = vadd.f32 %v5537, %v5538
      %v5540 = vsel %vm5460, %v5452, 0.0
      %v5541 = vadd.f32 %v5539, %v5540
      %v5542 = vsel %vm5460, %v5453, 0.0
      %v5543 = vadd.f32 %v5541, %v5542
      %v5544 = vsel %vm5460, %v5454, 0.0
      %v5545 = vadd.f32 %v5543, %v5544
      %v5546 = vsel %vm5460, %v5455, 0.0
      %v5547 = vadd.f32 %v5545, %v5546
      %v5548 = vsel %vm5460, %v5456, 0.0
      %v5549 = vadd.f32 %v5547, %v5548
      %v5550 = vsel %vm5460, %v5457, 0.0
      %v5551 = vadd.f32 %v5549, %v5550
      %v5552 = vsel %vm5460, %v5458, 0.0
      %v5553 = vadd.f32 %v5551, %v5552
      %v5554 = vsel %vm5460, %v5459, 0.0
      %v5555 = vadd.f32 %v5553, %v5554
      %v5556 = vrot.slane %v5555, 4
      %v5557 = vadd.f32 %v5555, %v5556
      %v5558 = vrot.slane %v5557, 2
      %v5559 = vadd.f32 %v5557, %v5558
      %v5560 = vrot.slane %v5559, 1
      %v5561 = vadd.f32 %v5559, %v5560
      %vm5562 = vcmask 122880
      %5563 = vst.msk [vmem:[%s181] sm:$0x1] %vm5562, %v5561
      %v5564 = vmul.f32 %v5428, %v5428
      %v5565 = vmul.f32 %v5429, %v5429
      %v5566 = vmul.f32 %v5430, %v5430
      %v5567 = vmul.f32 %v5431, %v5431
      %v5568 = vmul.f32 %v5432, %v5432
      %v5569 = vmul.f32 %v5433, %v5433
      %v5570 = vmul.f32 %v5434, %v5434
      %v5571 = vmul.f32 %v5435, %v5435
      %v5572 = vmul.f32 %v5436, %v5436
      %v5573 = vmul.f32 %v5437, %v5437
      %v5574 = vmul.f32 %v5438, %v5438
      %v5575 = vmul.f32 %v5439, %v5439
      %v5576 = vmul.f32 %v5440, %v5440
      %v5577 = vmul.f32 %v5441, %v5441
      %v5578 = vmul.f32 %v5442, %v5442
      %v5579 = vmul.f32 %v5443, %v5443
      %v5580 = vmul.f32 %v5444, %v5444
      %v5581 = vmul.f32 %v5445, %v5445
      %v5582 = vmul.f32 %v5446, %v5446
      %v5583 = vmul.f32 %v5447, %v5447
      %v5584 = vmul.f32 %v5448, %v5448
      %v5585 = vmul.f32 %v5449, %v5449
      %v5586 = vmul.f32 %v5450, %v5450
      %v5587 = vmul.f32 %v5451, %v5451
      %v5588 = vmul.f32 %v5452, %v5452
      %v5589 = vmul.f32 %v5453, %v5453
      %v5590 = vmul.f32 %v5454, %v5454
      %v5591 = vmul.f32 %v5455, %v5455
      %v5592 = vmul.f32 %v5456, %v5456
      %v5593 = vmul.f32 %v5457, %v5457
      %v5594 = vmul.f32 %v5458, %v5458
      %v5595 = vmul.f32 %v5459, %v5459
      %v5596 = vsel %vm5460, %v5564, 0.0
      %v5597 = vsel %vm5460, %v5565, 0.0
      %v5598 = vadd.f32 %v5596, %v5597
      %v5599 = vsel %vm5460, %v5566, 0.0
      %v5600 = vadd.f32 %v5598, %v5599
      %v5601 = vsel %vm5460, %v5567, 0.0
      %v5602 = vadd.f32 %v5600, %v5601
      %v5603 = vsel %vm5460, %v5568, 0.0
      %v5604 = vadd.f32 %v5602, %v5603
      %v5605 = vsel %vm5460, %v5569, 0.0
      %v5606 = vadd.f32 %v5604, %v5605
      %v5607 = vsel %vm5460, %v5570, 0.0
      %v5608 = vadd.f32 %v5606, %v5607
      %v5609 = vsel %vm5460, %v5571, 0.0
      %v5610 = vadd.f32 %v5608, %v5609
      %v5611 = vsel %vm5460, %v5572, 0.0
      %v5612 = vadd.f32 %v5610, %v5611
      %v5613 = vsel %vm5460, %v5573, 0.0
      %v5614 = vadd.f32 %v5612, %v5613
      %v5615 = vsel %vm5460, %v5574, 0.0
      %v5616 = vadd.f32 %v5614, %v5615
      %v5617 = vsel %vm5460, %v5575, 0.0
      %v5618 = vadd.f32 %v5616, %v5617
      %v5619 = vsel %vm5460, %v5576, 0.0
      %v5620 = vadd.f32 %v5618, %v5619
      %v5621 = vsel %vm5460, %v5577, 0.0
      %v5622 = vadd.f32 %v5620, %v5621
      %v5623 = vsel %vm5460, %v5578, 0.0
      %v5624 = vadd.f32 %v5622, %v5623
      %v5625 = vsel %vm5460, %v5579, 0.0
      %v5626 = vadd.f32 %v5624, %v5625
      %v5627 = vsel %vm5460, %v5580, 0.0
      %v5628 = vadd.f32 %v5626, %v5627
      %v5629 = vsel %vm5460, %v5581, 0.0
      %v5630 = vadd.f32 %v5628, %v5629
      %v5631 = vsel %vm5460, %v5582, 0.0
      %v5632 = vadd.f32 %v5630, %v5631
      %v5633 = vsel %vm5460, %v5583, 0.0
      %v5634 = vadd.f32 %v5632, %v5633
      %v5635 = vsel %vm5460, %v5584, 0.0
      %v5636 = vadd.f32 %v5634, %v5635
      %v5637 = vsel %vm5460, %v5585, 0.0
      %v5638 = vadd.f32 %v5636, %v5637
      %v5639 = vsel %vm5460, %v5586, 0.0
      %v5640 = vadd.f32 %v5638, %v5639
      %v5641 = vsel %vm5460, %v5587, 0.0
      %v5642 = vadd.f32 %v5640, %v5641
      %v5643 = vsel %vm5460, %v5588, 0.0
      %v5644 = vadd.f32 %v5642, %v5643
      %v5645 = vsel %vm5460, %v5589, 0.0
      %v5646 = vadd.f32 %v5644, %v5645
      %v5647 = vsel %vm5460, %v5590, 0.0
      %v5648 = vadd.f32 %v5646, %v5647
      %v5649 = vsel %vm5460, %v5591, 0.0
      %v5650 = vadd.f32 %v5648, %v5649
      %v5651 = vsel %vm5460, %v5592, 0.0
      %v5652 = vadd.f32 %v5650, %v5651
      %v5653 = vsel %vm5460, %v5593, 0.0
      %v5654 = vadd.f32 %v5652, %v5653
      %v5655 = vsel %vm5460, %v5594, 0.0
      %v5656 = vadd.f32 %v5654, %v5655
      %v5657 = vsel %vm5460, %v5595, 0.0
      %v5658 = vadd.f32 %v5656, %v5657
      %v5659 = vrot.slane %v5658, 4
      %v5660 = vadd.f32 %v5658, %v5659
      %v5661 = vrot.slane %v5660, 2
      %v5662 = vadd.f32 %v5660, %v5661
      %v5663 = vrot.slane %v5662, 1
      %v5664 = vadd.f32 %v5662, %v5663
      %5665 = vst.msk [vmem:[%s181 + $0x1] sm:$0x1] %vm5562, %v5664
      %p5666 = scmp.lt.s32.totalorder %s15, 3
      %s5667 = scalar_select %p5666, %s15, 3
      %s5668 = smul.addr %s5667, 32
      %s5669 = smul.addr %s5668, 8
      %s5670 = scalar_lea.vmem %s2, %s5669
      %p5671 = scmp.lt.s32.totalorder %s15, 3
      %s5672 = scalar_select %p5671, %s15, 3
      %s5673 = smul.addr %s5672, 2
      %s5674 = scalar_lea.vmem %s3, %s5673
      // Predicated region
      $region29: #{residual_block.6} parent=27 // pred_check
        %p5675 = pneg %p80
      $region30: #{residual_block.6} parent=27 // pred_check_branch
        %5677 = sbr.rel (%p5675) target = $region32
      $region31: #{residual_block.6} parent=27 // pred_region
        _
      $region32: #{residual_block.6} parent=27 // pred_fallthru
        _
      // Predicated region
      $region33: #{residual_block.6} parent=27 // pred_check
        %p5678 = pneg %p106
      $region34: #{residual_block.6} parent=27 // pred_check_branch
        %5680 = sbr.rel (%p5678) target = $region36
      $region35: #{residual_block.6} parent=27 // pred_region
        _
      $region36: #{residual_block.6} parent=27 // pred_fallthru
        _
    $region28: #{residual_block.6} parent=5 // pred_fallthru
      _
    %p5681 = scmp.le.s32.totalorder 2, %s10
    // Predicated region
    $region37: #{residual_block.6} parent=5 // pred_check
      %p5682 = pneg %p5681
    $region38: #{residual_block.6} parent=5 // pred_check_branch
      %5684 = sbr.rel (%p5682) target = $region40
    $region39: #{residual_block.6} parent=5 // pred_region
      %s5685 = ssub.s32 %s10, 2
      // Predicated region
      $region41: #{residual_block.6} parent=39 // pred_check
        %p5686 = pneg %p86
      $region42: #{residual_block.6} parent=39 // pred_check_branch
        %5688 = sbr.rel (%p5686) target = $region44
      $region43: #{residual_block.6} parent=39 // pred_region
        %p5689 = scmp.lt.s32.totalorder %s16, 3
        %s5690 = scalar_select %p5689, %s16, 3
        %s5691 = smul.addr %s5690, 32
        %s5692 = smul.addr %s5691, 8
        %s5693 = scalar_lea.vmem %s2, %s5692
      $region44: #{residual_block.6} parent=39 // pred_fallthru
        _
      // Predicated region
      $region45: #{residual_block.6} parent=39 // pred_check
        %p5694 = pneg %p112
      $region46: #{residual_block.6} parent=39 // pred_check_branch
        %5696 = sbr.rel (%p5694) target = $region48
      $region47: #{residual_block.6} parent=39 // pred_region
        %p5697 = scmp.lt.s32.totalorder %s16, 3
        %s5698 = scalar_select %p5697, %s16, 3
        %s5699 = smul.addr %s5698, 2
        %s5700 = scalar_lea.vmem %s3, %s5699
      $region48: #{residual_block.6} parent=39 // pred_fallthru
        _
    $region40: #{residual_block.6} parent=5 // pred_fallthru
      _
  $region6: #{residual_block.6} parent=0 // loop_footer
    %s14 = sadd.s32 1, %s10
  $region7: #{residual_block.6} parent=0 // loop_footer_branch
    %9 = sbr.rel target = $region3
  $region8: #{residual_block.6} parent=0 // loop_exit
    _

</llo_original>
